<compile_context>
chip_gen: v5e
topology: v5e:2x2
jax: 0.10.0
libtpu: 0.0.40
codegen_flags: <defaults>
</compile_context>

<pallas_src>
import functools

import jax
import jax.numpy as jnp
from jax.experimental import pallas as pl
from jax.experimental.pallas import tpu as pltpu


# --------------------------------------------------------------------------
# Fused conv kernel (im2col folded into the kernel via the flat-offset trick)
# --------------------------------------------------------------------------

def _conv_kernel(x_ref, w_ref, b_ref, o_ref, *, kh, kw, Wp, Ho, Wo, relu):
    """One image per grid step.

    x_ref: (Hp*Wp + kw-1, Cin) f32   flattened padded image (+kw-1 slack rows)
    w_ref: (kh*kw, Cin, Cout)  bf16
    b_ref: (1, Cout)           f32
    o_ref: (Ho, Wo, Cout)      f32

    For tap (ki,kj) the contribution to flat output row r = oh*Wp + ow is
    x_flat[r + ki*Wp + kj] @ W[ki,kj]; rows with ow >= Wo are garbage and are
    simply not stored.
    """
    Mp = Ho * Wp
    acc = None
    for ki in range(kh):
        for kj in range(kw):
            off = ki * Wp + kj
            lhs = x_ref[off:off + Mp, :].astype(jnp.bfloat16)           # (Mp, Cin)
            term = jnp.dot(lhs, w_ref[ki * kw + kj],
                           preferred_element_type=jnp.float32)          # (Mp, Cout)
            acc = term if acc is None else acc + term
    acc = acc + b_ref[...]
    if relu:
        acc = jnp.maximum(acc, 0.0)
    for oh in range(Ho):                      # drop the Wp-Wo garbage columns
        o_ref[oh] = acc[oh * Wp: oh * Wp + Wo, :].astype(o_ref.dtype)


def _space_to_depth2(xp):
    """(B, Hp, Wp, C) -> (B, Hp/2, Wp/2, 4C), channel order (ri, rj, c)."""
    B, Hp, Wp, C = xp.shape
    x = xp.reshape(B, Hp // 2, 2, Wp // 2, 2, C)
    x = jnp.transpose(x, (0, 1, 3, 2, 4, 5))
    return x.reshape(B, Hp // 2, Wp // 2, 4 * C)


def _s2d_weight(w):
    """Remap a (3,3,C,Co) stride-2 weight to a (2,2,4C,Co) stride-1 weight."""
    kh, kw, C, Co = w.shape
    w2 = jnp.zeros((2, 2, 2, 2, C, Co), w.dtype)
    for ki in range(kh):
        for kj in range(kw):
            w2 = w2.at[ki // 2, kj // 2, ki % 2, kj % 2].set(w[ki, kj])
    return w2.reshape(2, 2, 4 * C, Co)


def conv2d(x, w, b, *, stride=1, relu=False):
    """x: NHWC f32, w: (3,3,Cin,Cout), pad=1, stride in {1,2}."""
    assert w.shape[0] == 3 and w.shape[1] == 3 and stride in (1, 2)
    xp = jnp.pad(x, ((0, 0), (1, 1), (1, 1), (0, 0)))
    if stride == 2:
        # stride-2 3x3 conv == stride-1 2x2 conv on space-to-depth input;
        # avoids strided in-kernel loads entirely.
        xp = _space_to_depth2(xp)
        w_eff, kh, kw = _s2d_weight(w), 2, 2
    else:
        w_eff, kh, kw = w, 3, 3

    B, Hp, Wp, Cin = xp.shape
    Cout = w_eff.shape[-1]
    Ho, Wo = Hp - kh + 1, Wp - kw + 1
    Lf = Hp * Wp + (kw - 1)                                   # + slack for last tap

    xf = jnp.pad(xp.reshape(B, Hp * Wp, Cin), ((0, 0), (0, kw - 1), (0, 0)))
    wf = w_eff.reshape(kh * kw, Cin, Cout).astype(jnp.bfloat16)
    bf = b.reshape(1, Cout).astype(jnp.float32)

    kern = functools.partial(_conv_kernel, kh=kh, kw=kw, Wp=Wp,
                             Ho=Ho, Wo=Wo, relu=relu)
    flops = 2 * B * kh * kw * Ho * Wp * Cin * Cout
    bytes_acc = 4 * B * Lf * Cin + 2 * kh * kw * Cin * Cout \
        + 4 * Cout + 4 * B * Ho * Wo * Cout

    return pl.pallas_call(
        kern,
        out_shape=jax.ShapeDtypeStruct((B, Ho, Wo, Cout), jnp.float32),
        grid=(B,),
        in_specs=[
            pl.BlockSpec((None, Lf, Cin), lambda bi: (bi, 0, 0)),
            pl.BlockSpec((kh * kw, Cin, Cout), lambda bi: (0, 0, 0)),
            pl.BlockSpec((1, Cout), lambda bi: (0, 0)),
        ],
        out_specs=pl.BlockSpec((None, Ho, Wo, Cout), lambda bi: (bi, 0, 0, 0)),
        compiler_params=pltpu.CompilerParams(
            dimension_semantics=("parallel",),
            vmem_limit_bytes=32 * 1024 * 1024),
        cost_estimate=pl.CostEstimate(flops=flops, transcendentals=0,
                                      bytes_accessed=bytes_acc),
    )(xf, wf, bf)


# --------------------------------------------------------------------------
# VQ kernel: nearest-codebook lookup + fused squared-error partial sum
# --------------------------------------------------------------------------

def _vq_kernel(x_ref, cb_ref, emb_ref, sq_ref, *, k_real):
    x = x_ref[...]                                             # (N, D) f32
    cb = cb_ref[...]                                           # (Kp, D) f32 (zero-padded)
    kp = cb.shape[0]
    x2 = jnp.sum(x * x, axis=-1, keepdims=True)                # (N, 1)
    c2 = jnp.sum(cb * cb, axis=-1)[None, :]                    # (1, Kp)
    # contract last dims of both -> no in-kernel transpose of the codebook
    xc = jax.lax.dot_general(x, cb, (((1,), (1,)), ((), ())),
                             preferred_element_type=jnp.float32)   # (N, Kp)
    dist = x2 - 2.0 * xc + c2
    lane = jax.lax.broadcasted_iota(jnp.int32, dist.shape, 1)
    dist = jnp.where(lane < k_real, dist, jnp.inf)             # mask padded codes
    min_d = jnp.min(dist, axis=-1, keepdims=True)
    idx = jnp.min(jnp.where(dist == min_d, lane, kp), axis=-1, keepdims=True)
    one_hot = (lane == idx).astype(jnp.float32)                # (N, Kp) lane-dense
    emb = jnp.dot(one_hot, cb, preferred_element_type=jnp.float32)
    emb_ref[...] = emb
    d = x - emb
    sq_ref[0, 0] = jnp.sum(d * d)                              # fused VQ-MSE partial


def vq_apply(x_nhwc, codebook):
    """Returns (embedded, embedded_pt, sum((x-emb)^2)).  Forward-pass only."""
    B, H, W, D = x_nhwc.shape
    N = B * H * W
    K = codebook.shape[0]
    Kp = max(128, ((K + 127) // 128) * 128)
    cb_p = jnp.pad(codebook.astype(jnp.float32), ((0, Kp - K), (0, 0)))
    xf = x_nhwc.reshape(N, D).astype(jnp.float32)
    emb, sq = pl.pallas_call(
        functools.partial(_vq_kernel, k_real=K),
        out_shape=(jax.ShapeDtypeStruct((N, D), jnp.float32),
                   jax.ShapeDtypeStruct((1, 1), jnp.float32)),
        in_specs=[pl.BlockSpec(memory_space=pltpu.MemorySpace.VMEM)] * 2,
        out_specs=(pl.BlockSpec(memory_space=pltpu.MemorySpace.VMEM),
                   pl.BlockSpec(memory_space=pltpu.MemorySpace.SMEM)),
    )(xf, cb_p)
    embedded = emb.reshape(B, H, W, D)
    # forward value of the straight-through output equals the quantized output
    return embedded, embedded, sq[0, 0]


# --------------------------------------------------------------------------
# Reconstruction MSE (lane-dense single-block reduction; inputs are tiny)
# --------------------------------------------------------------------------

def _sq_err_sum_kernel(a_ref, b_ref, o_ref):
    d = a_ref[...] - b_ref[...]
    o_ref[0, 0] = jnp.sum(d * d)


def mse(a, b):
    af = a.astype(jnp.float32).reshape(-1)
    bf = b.astype(jnp.float32).reshape(-1)
    n = af.size
    lanes = 128 if n % 128 == 0 else a.shape[-1]
    a2 = af.reshape(-1, lanes)
    b2 = bf.reshape(-1, lanes)
    s = pl.pallas_call(
        _sq_err_sum_kernel,
        out_shape=jax.ShapeDtypeStruct((1, 1), jnp.float32),
        in_specs=[pl.BlockSpec(memory_space=pltpu.MemorySpace.VMEM)] * 2,
        out_specs=pl.BlockSpec(memory_space=pltpu.MemorySpace.SMEM),
    )(a2, b2)
    return s[0, 0] / n


# --------------------------------------------------------------------------
# Plain-JAX glue
# --------------------------------------------------------------------------

def upsample2(x):
    # XLA fuses this with the pad/reshape feeding the next conv's pallas_call,
    # so only one materialization happens between layers.
    return jnp.repeat(jnp.repeat(x, 2, axis=1), 2, axis=2)


def init_params(key, c_in=4, d=32, k=64):
    ks = jax.random.split(key, 10)

    def w(kk, kh, kw, ci, co):
        return jax.random.normal(kk, (kh, kw, ci, co), jnp.float32) / jnp.sqrt(kh * kw * ci)

    def z(n):
        return jnp.zeros((n,), jnp.float32)

    return {
        'enc0': dict(w1=w(ks[0], 3, 3, c_in, d), b1=z(d),
                     w2=w(ks[1], 3, 3, d, d), b2=z(d),
                     codebook=jax.random.normal(ks[2], (k, d), jnp.float32)),
        'enc1': dict(w1=w(ks[3], 3, 3, d, d), b1=z(d),
                     w2=w(ks[4], 3, 3, d, d), b2=z(d),
                     codebook=jax.random.normal(ks[5], (k, d), jnp.float32)),
        'dec0': dict(w1=w(ks[6], 3, 3, d, d), b1=z(d),
                     w2=w(ks[7], 3, 3, d, d), b2=z(d)),
        'dec1': dict(w1=w(ks[8], 3, 3, 2 * d, d), b1=z(d),
                     w2=w(ks[9], 3, 3, d, c_in), b2=z(c_in)),
    }


# --------------------------------------------------------------------------
# VQVAE.forward
# --------------------------------------------------------------------------

def vqvae_forward(params, inputs_nchw, commitment=0.25):
    x = jnp.transpose(inputs_nchw, (0, 2, 3, 1)).astype(jnp.float32)   # NHWC

    def encode(level, h):
        p = params['enc%d' % level]
        h = conv2d(h, p['w1'], p['b1'], stride=2, relu=True)
        return conv2d(h, p['w2'], p['b2'], stride=1, relu=False)

    all_encoded = [x]
    all_vq_outs = []
    total_vq_loss = 0.0
    for level in range(2):
        encoded = encode(level, all_encoded[-1])
        embedded, embedded_pt, sqerr = vq_apply(encoded, params['enc%d' % level]['codebook'])
        all_encoded.append(encoded)
        all_vq_outs.append(embedded_pt)
        # vq_loss = mse(encoded.detach(), embedded) + commitment*mse(encoded, embedded.detach())
        # detach is identity in the forward pass -> both terms share one value.
        m = sqerr / encoded.size
        total_vq_loss = total_vq_loss + (1.0 + commitment) * m

    def decode0(dec_inputs):                        # top decoder
        (top,) = dec_inputs
        p = params['dec0']
        h = upsample2(top)
        h = conv2d(h, p['w1'], p['b1'], stride=1, relu=True)
        return conv2d(h, p['w2'], p['b2'], stride=1, relu=False)

    def decode1(dec_inputs):                        # bottom decoder
        top, bottom = dec_inputs
        p = params['dec1']
        h = jnp.concatenate([upsample2(top), bottom], axis=-1)
        h = conv2d(h, p['w1'], p['b1'], stride=1, relu=True)
        h = upsample2(h)
        return conv2d(h, p['w2'], p['b2'], stride=1, relu=False)

    decoders = [decode0, decode1]

    losses = []
    reconstructions = []
    total_recon_loss = 0.0
    for i, decoder in enumerate(decoders):
        dec_inputs = all_vq_outs[::-1][:i + 1]
        target = all_encoded[::-1][i + 1]
        recon = decoder(dec_inputs)
        reconstructions.append(recon)
        # TODO(synk): integer-input cross-entropy branch of forward() not implemented
        # (inputs here are floating point -> MSE branch, matching the reference).
        recon_loss = mse(recon, target)
        total_recon_loss = total_recon_loss + recon_loss
        losses.append(recon_loss)

    to_nchw = lambda t: jnp.transpose(t, (0, 3, 1, 2))
    return {
        'loss': total_vq_loss + total_recon_loss,
        'losses': losses,
        'reconstructions': [to_nchw(r) for r in reconstructions],
        'embedded': [to_nchw(e) for e in all_vq_outs],
    }


# --------------------------------------------------------------------------

if __name__ == "__main__":
    key = jax.random.PRNGKey(0)
    pkey, xkey = jax.random.split(key)
    params = init_params(pkey, c_in=4, d=32, k=64)
    x = jax.random.normal(xkey, (2, 4, 16, 16), jnp.float32)   # NCHW like PyTorch

    fwd = jax.jit(vqvae_forward)
    out = fwd(params, x, 0.25)
    jax.block_until_ready(out['loss'])
    for r in out['reconstructions']:
        jax.block_until_ready(r)
    for e in out['embedded']:
        jax.block_until_ready(e)

    assert out['reconstructions'][0].shape == (2, 32, 8, 8)
    assert out['reconstructions'][1].shape == (2, 4, 16, 16)
    assert out['embedded'][0].shape == (2, 32, 8, 8)
    assert out['embedded'][1].shape == (2, 32, 4, 4)
    assert jnp.isfinite(out['loss'])
    print("KERNEL_OK")
</pallas_src>

<mosaic_0001>
module attributes {stable_mosaic.version = 11 : i64} {
  func.func @_conv_kernel(%arg0: i32, %arg1: memref<1x82x16xf32, #tpu.memory_space<vmem>>, %arg2: memref<4x16x32xbf16, #tpu.memory_space<vmem>>, %arg3: memref<1x32xf32, #tpu.memory_space<vmem>>, %arg4: memref<1x8x8x32xf32, #tpu.memory_space<vmem>>) attributes {dimension_semantics = [#tpu.dimension_semantics<parallel>], iteration_bounds = array<i64: 2>, scalar_prefetch = 0 : i64, scratch_operands = 0 : i64, tpu.core_type = #tpu.core_type<tc>, window_params = [{transform_indices = @transform_0, window_bounds = array<i64: 1, 82, 16>}, {pipeline_mode = #tpu.pipeline_mode<synchronous>, transform_indices = @transform_1, window_bounds = array<i64: 4, 16, 32>}, {pipeline_mode = #tpu.pipeline_mode<synchronous>, transform_indices = @transform_2, window_bounds = array<i64: 1, 32>}, {transform_indices = @transform_3, window_bounds = array<i64: 1, 8, 8, 32>}]} {
    %c0 = arith.constant 0 : index
    %c0_0 = arith.constant 0 : index
    %c0_1 = arith.constant 0 : index
    %0 = vector.load %arg1[%c0, %c0_0, %c0_1] : memref<1x82x16xf32, #tpu.memory_space<vmem>>, vector<1x72x16xf32>
    %1 = vector.shape_cast %0 : vector<1x72x16xf32> to vector<72x16xf32>
    %2 = arith.truncf %1 : vector<72x16xf32> to vector<72x16xbf16>
    %c0_2 = arith.constant 0 : index
    %c0_3 = arith.constant 0 : index
    %c0_4 = arith.constant 0 : index
    %3 = vector.load %arg2[%c0_2, %c0_3, %c0_4] : memref<4x16x32xbf16, #tpu.memory_space<vmem>>, vector<1x16x32xbf16>
    %4 = vector.shape_cast %3 : vector<1x16x32xbf16> to vector<16x32xbf16>
    %cst = arith.constant dense<0.000000e+00> : vector<72x32xf32>
    %5 = tpu.matmul %2, %4, %cst {dimension_numbers = #tpu.dot_dimension_numbers<[1], [0], [0], [1], [0, 0, 1, 1], [], []>} : vector<72x16xbf16>, vector<16x32xbf16>, vector<72x32xf32> -> vector<72x32xf32>
    %c0_5 = arith.constant 0 : index
    %c1 = arith.constant 1 : index
    %c0_6 = arith.constant 0 : index
    %6 = vector.load %arg1[%c0_5, %c1, %c0_6] : memref<1x82x16xf32, #tpu.memory_space<vmem>>, vector<1x72x16xf32>
    %7 = vector.shape_cast %6 : vector<1x72x16xf32> to vector<72x16xf32>
    %8 = arith.truncf %7 : vector<72x16xf32> to vector<72x16xbf16>
    %c1_7 = arith.constant 1 : index
    %c0_8 = arith.constant 0 : index
    %c0_9 = arith.constant 0 : index
    %9 = vector.load %arg2[%c1_7, %c0_8, %c0_9] : memref<4x16x32xbf16, #tpu.memory_space<vmem>>, vector<1x16x32xbf16>
    %10 = vector.shape_cast %9 : vector<1x16x32xbf16> to vector<16x32xbf16>
    %cst_10 = arith.constant dense<0.000000e+00> : vector<72x32xf32>
    %11 = tpu.matmul %8, %10, %cst_10 {dimension_numbers = #tpu.dot_dimension_numbers<[1], [0], [0], [1], [0, 0, 1, 1], [], []>} : vector<72x16xbf16>, vector<16x32xbf16>, vector<72x32xf32> -> vector<72x32xf32>
    %12 = arith.addf %5, %11 : vector<72x32xf32>
    %c0_11 = arith.constant 0 : index
    %c9 = arith.constant 9 : index
    %c0_12 = arith.constant 0 : index
    %13 = vector.load %arg1[%c0_11, %c9, %c0_12] : memref<1x82x16xf32, #tpu.memory_space<vmem>>, vector<1x72x16xf32>
    %14 = vector.shape_cast %13 : vector<1x72x16xf32> to vector<72x16xf32>
    %15 = arith.truncf %14 : vector<72x16xf32> to vector<72x16xbf16>
    %c2 = arith.constant 2 : index
    %c0_13 = arith.constant 0 : index
    %c0_14 = arith.constant 0 : index
    %16 = vector.load %arg2[%c2, %c0_13, %c0_14] : memref<4x16x32xbf16, #tpu.memory_space<vmem>>, vector<1x16x32xbf16>
    %17 = vector.shape_cast %16 : vector<1x16x32xbf16> to vector<16x32xbf16>
    %cst_15 = arith.constant dense<0.000000e+00> : vector<72x32xf32>
    %18 = tpu.matmul %15, %17, %cst_15 {dimension_numbers = #tpu.dot_dimension_numbers<[1], [0], [0], [1], [0, 0, 1, 1], [], []>} : vector<72x16xbf16>, vector<16x32xbf16>, vector<72x32xf32> -> vector<72x32xf32>
    %19 = arith.addf %12, %18 : vector<72x32xf32>
    %c0_16 = arith.constant 0 : index
    %c10 = arith.constant 10 : index
    %c0_17 = arith.constant 0 : index
    %20 = vector.load %arg1[%c0_16, %c10, %c0_17] : memref<1x82x16xf32, #tpu.memory_space<vmem>>, vector<1x72x16xf32>
    %21 = vector.shape_cast %20 : vector<1x72x16xf32> to vector<72x16xf32>
    %22 = arith.truncf %21 : vector<72x16xf32> to vector<72x16xbf16>
    %c3 = arith.constant 3 : index
    %c0_18 = arith.constant 0 : index
    %c0_19 = arith.constant 0 : index
    %23 = vector.load %arg2[%c3, %c0_18, %c0_19] : memref<4x16x32xbf16, #tpu.memory_space<vmem>>, vector<1x16x32xbf16>
    %24 = vector.shape_cast %23 : vector<1x16x32xbf16> to vector<16x32xbf16>
    %cst_20 = arith.constant dense<0.000000e+00> : vector<72x32xf32>
    %25 = tpu.matmul %22, %24, %cst_20 {dimension_numbers = #tpu.dot_dimension_numbers<[1], [0], [0], [1], [0, 0, 1, 1], [], []>} : vector<72x16xbf16>, vector<16x32xbf16>, vector<72x32xf32> -> vector<72x32xf32>
    %26 = arith.addf %19, %25 : vector<72x32xf32>
    %c0_21 = arith.constant 0 : index
    %c0_22 = arith.constant 0 : index
    %27 = vector.load %arg3[%c0_21, %c0_22] : memref<1x32xf32, #tpu.memory_space<vmem>>, vector<1x32xf32>
    %28 = vector.broadcast %27 : vector<1x32xf32> to vector<72x32xf32>
    %29 = arith.addf %26, %28 : vector<72x32xf32>
    %cst_23 = arith.constant 0.000000e+00 : f32
    %30 = vector.broadcast %cst_23 : f32 to vector<72x32xf32>
    %31 = arith.maximumf %29, %30 : vector<72x32xf32>
    %32 = vector.extract_strided_slice %31 {offsets = [0, 0], sizes = [8, 32], strides = [1, 1]} : vector<72x32xf32> to vector<8x32xf32>
    %c0_24 = arith.constant 0 : index
    %c0_25 = arith.constant 0 : index
    %c0_26 = arith.constant 0 : index
    %c0_27 = arith.constant 0 : index
    %33 = vector.load %arg4[%c0_24, %c0_25, %c0_26, %c0_27] : memref<1x8x8x32xf32, #tpu.memory_space<vmem>>, vector<1x1x8x32xf32>
    %34 = vector.shape_cast %33 : vector<1x1x8x32xf32> to vector<8x32xf32>
    %35 = vector.shape_cast %32 : vector<8x32xf32> to vector<1x1x8x32xf32>
    tpu.vector_store %arg4[%c0_24, %c0_25, %c0_26, %c0_27], %35 {strides = array<i32>} : memref<1x8x8x32xf32, #tpu.memory_space<vmem>>, vector<1x1x8x32xf32>,
    %36 = vector.extract_strided_slice %31 {offsets = [9, 0], sizes = [8, 32], strides = [1, 1]} : vector<72x32xf32> to vector<8x32xf32>
    %c0_28 = arith.constant 0 : index
    %c1_29 = arith.constant 1 : index
    %c0_30 = arith.constant 0 : index
    %c0_31 = arith.constant 0 : index
    %37 = vector.load %arg4[%c0_28, %c1_29, %c0_30, %c0_31] : memref<1x8x8x32xf32, #tpu.memory_space<vmem>>, vector<1x1x8x32xf32>
    %38 = vector.shape_cast %37 : vector<1x1x8x32xf32> to vector<8x32xf32>
    %39 = vector.shape_cast %36 : vector<8x32xf32> to vector<1x1x8x32xf32>
    tpu.vector_store %arg4[%c0_28, %c1_29, %c0_30, %c0_31], %39 {strides = array<i32>} : memref<1x8x8x32xf32, #tpu.memory_space<vmem>>, vector<1x1x8x32xf32>,
    %40 = vector.extract_strided_slice %31 {offsets = [18, 0], sizes = [8, 32], strides = [1, 1]} : vector<72x32xf32> to vector<8x32xf32>
    %c0_32 = arith.constant 0 : index
    %c2_33 = arith.constant 2 : index
    %c0_34 = arith.constant 0 : index
    %c0_35 = arith.constant 0 : index
    %41 = vector.load %arg4[%c0_32, %c2_33, %c0_34, %c0_35] : memref<1x8x8x32xf32, #tpu.memory_space<vmem>>, vector<1x1x8x32xf32>
    %42 = vector.shape_cast %41 : vector<1x1x8x32xf32> to vector<8x32xf32>
    %43 = vector.shape_cast %40 : vector<8x32xf32> to vector<1x1x8x32xf32>
    tpu.vector_store %arg4[%c0_32, %c2_33, %c0_34, %c0_35], %43 {strides = array<i32>} : memref<1x8x8x32xf32, #tpu.memory_space<vmem>>, vector<1x1x8x32xf32>,
    %44 = vector.extract_strided_slice %31 {offsets = [27, 0], sizes = [8, 32], strides = [1, 1]} : vector<72x32xf32> to vector<8x32xf32>
    %c0_36 = arith.constant 0 : index
    %c3_37 = arith.constant 3 : index
    %c0_38 = arith.constant 0 : index
    %c0_39 = arith.constant 0 : index
    %45 = vector.load %arg4[%c0_36, %c3_37, %c0_38, %c0_39] : memref<1x8x8x32xf32, #tpu.memory_space<vmem>>, vector<1x1x8x32xf32>
    %46 = vector.shape_cast %45 : vector<1x1x8x32xf32> to vector<8x32xf32>
    %47 = vector.shape_cast %44 : vector<8x32xf32> to vector<1x1x8x32xf32>
    tpu.vector_store %arg4[%c0_36, %c3_37, %c0_38, %c0_39], %47 {strides = array<i32>} : memref<1x8x8x32xf32, #tpu.memory_space<vmem>>, vector<1x1x8x32xf32>,
    %48 = vector.extract_strided_slice %31 {offsets = [36, 0], sizes = [8, 32], strides = [1, 1]} : vector<72x32xf32> to vector<8x32xf32>
    %c0_40 = arith.constant 0 : index
    %c4 = arith.constant 4 : index
    %c0_41 = arith.constant 0 : index
    %c0_42 = arith.constant 0 : index
    %49 = vector.load %arg4[%c0_40, %c4, %c0_41, %c0_42] : memref<1x8x8x32xf32, #tpu.memory_space<vmem>>, vector<1x1x8x32xf32>
    %50 = vector.shape_cast %49 : vector<1x1x8x32xf32> to vector<8x32xf32>
    %51 = vector.shape_cast %48 : vector<8x32xf32> to vector<1x1x8x32xf32>
    tpu.vector_store %arg4[%c0_40, %c4, %c0_41, %c0_42], %51 {strides = array<i32>} : memref<1x8x8x32xf32, #tpu.memory_space<vmem>>, vector<1x1x8x32xf32>,
    %52 = vector.extract_strided_slice %31 {offsets = [45, 0], sizes = [8, 32], strides = [1, 1]} : vector<72x32xf32> to vector<8x32xf32>
    %c0_43 = arith.constant 0 : index
    %c5 = arith.constant 5 : index
    %c0_44 = arith.constant 0 : index
    %c0_45 = arith.constant 0 : index
    %53 = vector.load %arg4[%c0_43, %c5, %c0_44, %c0_45] : memref<1x8x8x32xf32, #tpu.memory_space<vmem>>, vector<1x1x8x32xf32>
    %54 = vector.shape_cast %53 : vector<1x1x8x32xf32> to vector<8x32xf32>
    %55 = vector.shape_cast %52 : vector<8x32xf32> to vector<1x1x8x32xf32>
    tpu.vector_store %arg4[%c0_43, %c5, %c0_44, %c0_45], %55 {strides = array<i32>} : memref<1x8x8x32xf32, #tpu.memory_space<vmem>>, vector<1x1x8x32xf32>,
    %56 = vector.extract_strided_slice %31 {offsets = [54, 0], sizes = [8, 32], strides = [1, 1]} : vector<72x32xf32> to vector<8x32xf32>
    %c0_46 = arith.constant 0 : index
    %c6 = arith.constant 6 : index
    %c0_47 = arith.constant 0 : index
    %c0_48 = arith.constant 0 : index
    %57 = vector.load %arg4[%c0_46, %c6, %c0_47, %c0_48] : memref<1x8x8x32xf32, #tpu.memory_space<vmem>>, vector<1x1x8x32xf32>
    %58 = vector.shape_cast %57 : vector<1x1x8x32xf32> to vector<8x32xf32>
    %59 = vector.shape_cast %56 : vector<8x32xf32> to vector<1x1x8x32xf32>
    tpu.vector_store %arg4[%c0_46, %c6, %c0_47, %c0_48], %59 {strides = array<i32>} : memref<1x8x8x32xf32, #tpu.memory_space<vmem>>, vector<1x1x8x32xf32>,
    %60 = vector.extract_strided_slice %31 {offsets = [63, 0], sizes = [8, 32], strides = [1, 1]} : vector<72x32xf32> to vector<8x32xf32>
    %c0_49 = arith.constant 0 : index
    %c7 = arith.constant 7 : index
    %c0_50 = arith.constant 0 : index
    %c0_51 = arith.constant 0 : index
    %61 = vector.load %arg4[%c0_49, %c7, %c0_50, %c0_51] : memref<1x8x8x32xf32, #tpu.memory_space<vmem>>, vector<1x1x8x32xf32>
    %62 = vector.shape_cast %61 : vector<1x1x8x32xf32> to vector<8x32xf32>
    %63 = vector.shape_cast %60 : vector<8x32xf32> to vector<1x1x8x32xf32>
    tpu.vector_store %arg4[%c0_49, %c7, %c0_50, %c0_51], %63 {strides = array<i32>} : memref<1x8x8x32xf32, #tpu.memory_space<vmem>>, vector<1x1x8x32xf32>,
    return
  }
  func.func @transform_0(%arg0: i32) -> (i32, i32, i32) {
    %c0_i32 = arith.constant 0 : i32
    %c0_i32_0 = arith.constant 0 : i32
    %c0_i32_1 = arith.constant 0 : i32
    return %arg0, %c0_i32, %c0_i32_0 : i32, i32, i32
  }
  func.func @transform_1(%arg0: i32) -> (i32, i32, i32) {
    %c0_i32 = arith.constant 0 : i32
    %c0_i32_0 = arith.constant 0 : i32
    %c0_i32_1 = arith.constant 0 : i32
    %c0_i32_2 = arith.constant 0 : i32
    return %c0_i32, %c0_i32_0, %c0_i32_1 : i32, i32, i32
  }
  func.func @transform_2(%arg0: i32) -> (i32, i32) {
    %c0_i32 = arith.constant 0 : i32
    %c0_i32_0 = arith.constant 0 : i32
    %c0_i32_1 = arith.constant 0 : i32
    return %c0_i32, %c0_i32_0 : i32, i32
  }
  func.func @transform_3(%arg0: i32) -> (i32, i32, i32, i32) {
    %c0_i32 = arith.constant 0 : i32
    %c0_i32_0 = arith.constant 0 : i32
    %c0_i32_1 = arith.constant 0 : i32
    %c0_i32_2 = arith.constant 0 : i32
    return %arg0, %c0_i32, %c0_i32_0, %c0_i32_1 : i32, i32, i32, i32
  }
}

module attributes {stable_mosaic.version = 11 : i64} {
  func.func @_vq_kernel(%arg0: memref<128x32xf32, #tpu.memory_space<vmem>>, %arg1: memref<128x32xf32, #tpu.memory_space<vmem>>, %arg2: memref<128x32xf32, #tpu.memory_space<vmem>>, %arg3: memref<1x1xf32, #tpu.memory_space<smem>>) attributes {dimension_semantics = [], scalar_prefetch = 0 : i64, scratch_operands = 0 : i64, tpu.core_type = #tpu.core_type<tc>} {
    %c0 = arith.constant 0 : index
    %c0_0 = arith.constant 0 : index
    %0 = vector.load %arg0[%c0, %c0_0] : memref<128x32xf32, #tpu.memory_space<vmem>>, vector<128x32xf32>
    %c0_1 = arith.constant 0 : index
    %c0_2 = arith.constant 0 : index
    %1 = vector.load %arg1[%c0_1, %c0_2] : memref<128x32xf32, #tpu.memory_space<vmem>>, vector<128x32xf32>
    %2 = arith.mulf %0, %0 : vector<128x32xf32>
    %cst = arith.constant dense<0.000000e+00> : vector<128xf32>
    %3 = vector.multi_reduction <add>, %2, %cst [1] : vector<128x32xf32> to vector<128xf32>
    %4 = vector.shape_cast %3 : vector<128xf32> to vector<128x1xf32>
    %5 = arith.mulf %1, %1 : vector<128x32xf32>
    %cst_3 = arith.constant dense<0.000000e+00> : vector<128xf32>
    %6 = vector.multi_reduction <add>, %5, %cst_3 [1] : vector<128x32xf32> to vector<128xf32>
    %7 = vector.shape_cast %6 : vector<128xf32> to vector<1x128xf32>
    %cst_4 = arith.constant dense<0.000000e+00> : vector<128x128xf32>
    %8 = tpu.matmul %0, %1, %cst_4 {dimension_numbers = #tpu.dot_dimension_numbers<[1], [1], [0], [0], [0, 0, 1, 0], [], []>} : vector<128x32xf32>, vector<128x32xf32>, vector<128x128xf32> -> vector<128x128xf32>
    %cst_5 = arith.constant 2.000000e+00 : f32
    %9 = vector.broadcast %cst_5 : f32 to vector<128x128xf32>
    %10 = arith.mulf %9, %8 : vector<128x128xf32>
    %11 = vector.broadcast %4 : vector<128x1xf32> to vector<128x128xf32>
    %12 = arith.subf %11, %10 : vector<128x128xf32>
    %13 = vector.broadcast %7 : vector<1x128xf32> to vector<128x128xf32>
    %14 = arith.addf %12, %13 : vector<128x128xf32>
    %15 = tpu.iota {dimensions = array<i32: 1>} : vector<128x128xi32>
    %c64_i32 = arith.constant 64 : i32
    %16 = vector.broadcast %c64_i32 : i32 to vector<128x128xi32>
    %17 = arith.cmpi slt, %15, %16 : vector<128x128xi32>
    %cst_6 = arith.constant 0x7F800000 : f32
    %18 = vector.broadcast %cst_6 : f32 to vector<128x128xf32>
    %19 = arith.select %17, %14, %18 : vector<128x128xi1>, vector<128x128xf32>
    %cst_7 = arith.constant dense<0x7F800000> : vector<128xf32>
    %20 = vector.multi_reduction <minimumf>, %19, %cst_7 [1] : vector<128x128xf32> to vector<128xf32>
    %21 = vector.shape_cast %20 : vector<128xf32> to vector<128x1xf32>
    %22 = vector.broadcast %21 : vector<128x1xf32> to vector<128x128xf32>
    %23 = arith.cmpf oeq, %19, %22 : vector<128x128xf32>
    %c128_i32 = arith.constant 128 : i32
    %24 = vector.broadcast %c128_i32 : i32 to vector<128x128xi32>
    %25 = arith.select %23, %15, %24 : vector<128x128xi1>, vector<128x128xi32>
    %cst_8 = arith.constant dense<2147483647> : vector<128xi32>
    %26 = vector.multi_reduction <minsi>, %25, %cst_8 [1] : vector<128x128xi32> to vector<128xi32>
    %27 = vector.shape_cast %26 : vector<128xi32> to vector<128x1xi32>
    %28 = vector.broadcast %27 : vector<128x1xi32> to vector<128x128xi32>
    %29 = arith.cmpi eq, %15, %28 : vector<128x128xi32>
    %30 = arith.extui %29 : vector<128x128xi1> to vector<128x128xi32>
    %31 = arith.sitofp %30 : vector<128x128xi32> to vector<128x128xf32>
    %cst_9 = arith.constant dense<0.000000e+00> : vector<128x32xf32>
    %32 = tpu.matmul %31, %1, %cst_9 {dimension_numbers = #tpu.dot_dimension_numbers<[1], [0], [0], [1], [0, 0, 1, 1], [], []>} : vector<128x128xf32>, vector<128x32xf32>, vector<128x32xf32> -> vector<128x32xf32>
    %c0_10 = arith.constant 0 : index
    %c0_11 = arith.constant 0 : index
    %33 = vector.load %arg2[%c0_10, %c0_11] : memref<128x32xf32, #tpu.memory_space<vmem>>, vector<128x32xf32>
    tpu.vector_store %arg2[%c0_10, %c0_11], %32 {strides = array<i32>} : memref<128x32xf32, #tpu.memory_space<vmem>>, vector<128x32xf32>,
    %34 = arith.subf %0, %32 : vector<128x32xf32>
    %35 = arith.mulf %34, %34 : vector<128x32xf32>
    %36 = vector.shape_cast %35 : vector<128x32xf32> to vector<1x128x32xf32>
    %cst_12 = arith.constant dense<0.000000e+00> : vector<1xf32>
    %37 = vector.multi_reduction <add>, %36, %cst_12 [1, 2] : vector<1x128x32xf32> to vector<1xf32>
    %38 = vector.shape_cast %37 : vector<1xf32> to vector<1x1x1xf32>
    %39 = vector.extract %38[0, 0, 0] : f32 from vector<1x1x1xf32>
    %c0_13 = arith.constant 0 : index
    %c0_14 = arith.constant 0 : index
    %40 = memref.load %arg3[%c0_13, %c0_14] : memref<1x1xf32, #tpu.memory_space<smem>>
    memref.store %39, %arg3[%c0_13, %c0_14] : memref<1x1xf32, #tpu.memory_space<smem>>
    return
  }
}

module attributes {stable_mosaic.version = 11 : i64} {
  func.func @_conv_kernel(%arg0: i32, %arg1: memref<1x102x32xf32, #tpu.memory_space<vmem>>, %arg2: memref<9x32x32xbf16, #tpu.memory_space<vmem>>, %arg3: memref<1x32xf32, #tpu.memory_space<vmem>>, %arg4: memref<1x8x8x32xf32, #tpu.memory_space<vmem>>) attributes {dimension_semantics = [#tpu.dimension_semantics<parallel>], iteration_bounds = array<i64: 2>, scalar_prefetch = 0 : i64, scratch_operands = 0 : i64, tpu.core_type = #tpu.core_type<tc>, window_params = [{transform_indices = @transform_0, window_bounds = array<i64: 1, 102, 32>}, {pipeline_mode = #tpu.pipeline_mode<synchronous>, transform_indices = @transform_1, window_bounds = array<i64: 9, 32, 32>}, {pipeline_mode = #tpu.pipeline_mode<synchronous>, transform_indices = @transform_2, window_bounds = array<i64: 1, 32>}, {transform_indices = @transform_3, window_bounds = array<i64: 1, 8, 8, 32>}]} {
    %c0 = arith.constant 0 : index
    %c0_0 = arith.constant 0 : index
    %c0_1 = arith.constant 0 : index
    %0 = vector.load %arg1[%c0, %c0_0, %c0_1] : memref<1x102x32xf32, #tpu.memory_space<vmem>>, vector<1x80x32xf32>
    %1 = vector.shape_cast %0 : vector<1x80x32xf32> to vector<80x32xf32>
    %2 = arith.truncf %1 : vector<80x32xf32> to vector<80x32xbf16>
    %c0_2 = arith.constant 0 : index
    %c0_3 = arith.constant 0 : index
    %c0_4 = arith.constant 0 : index
    %3 = vector.load %arg2[%c0_2, %c0_3, %c0_4] : memref<9x32x32xbf16, #tpu.memory_space<vmem>>, vector<1x32x32xbf16>
    %4 = vector.shape_cast %3 : vector<1x32x32xbf16> to vector<32x32xbf16>
    %cst = arith.constant dense<0.000000e+00> : vector<80x32xf32>
    %5 = tpu.matmul %2, %4, %cst {dimension_numbers = #tpu.dot_dimension_numbers<[1], [0], [0], [1], [0, 0, 1, 1], [], []>} : vector<80x32xbf16>, vector<32x32xbf16>, vector<80x32xf32> -> vector<80x32xf32>
    %c0_5 = arith.constant 0 : index
    %c1 = arith.constant 1 : index
    %c0_6 = arith.constant 0 : index
    %6 = vector.load %arg1[%c0_5, %c1, %c0_6] : memref<1x102x32xf32, #tpu.memory_space<vmem>>, vector<1x80x32xf32>
    %7 = vector.shape_cast %6 : vector<1x80x32xf32> to vector<80x32xf32>
    %8 = arith.truncf %7 : vector<80x32xf32> to vector<80x32xbf16>
    %c1_7 = arith.constant 1 : index
    %c0_8 = arith.constant 0 : index
    %c0_9 = arith.constant 0 : index
    %9 = vector.load %arg2[%c1_7, %c0_8, %c0_9] : memref<9x32x32xbf16, #tpu.memory_space<vmem>>, vector<1x32x32xbf16>
    %10 = vector.shape_cast %9 : vector<1x32x32xbf16> to vector<32x32xbf16>
    %cst_10 = arith.constant dense<0.000000e+00> : vector<80x32xf32>
    %11 = tpu.matmul %8, %10, %cst_10 {dimension_numbers = #tpu.dot_dimension_numbers<[1], [0], [0], [1], [0, 0, 1, 1], [], []>} : vector<80x32xbf16>, vector<32x32xbf16>, vector<80x32xf32> -> vector<80x32xf32>
    %12 = arith.addf %5, %11 : vector<80x32xf32>
    %c0_11 = arith.constant 0 : index
    %c2 = arith.constant 2 : index
    %c0_12 = arith.constant 0 : index
    %13 = vector.load %arg1[%c0_11, %c2, %c0_12] : memref<1x102x32xf32, #tpu.memory_space<vmem>>, vector<1x80x32xf32>
    %14 = vector.shape_cast %13 : vector<1x80x32xf32> to vector<80x32xf32>
    %15 = arith.truncf %14 : vector<80x32xf32> to vector<80x32xbf16>
    %c2_13 = arith.constant 2 : index
    %c0_14 = arith.constant 0 : index
    %c0_15 = arith.constant 0 : index
    %16 = vector.load %arg2[%c2_13, %c0_14, %c0_15] : memref<9x32x32xbf16, #tpu.memory_space<vmem>>, vector<1x32x32xbf16>
    %17 = vector.shape_cast %16 : vector<1x32x32xbf16> to vector<32x32xbf16>
    %cst_16 = arith.constant dense<0.000000e+00> : vector<80x32xf32>
    %18 = tpu.matmul %15, %17, %cst_16 {dimension_numbers = #tpu.dot_dimension_numbers<[1], [0], [0], [1], [0, 0, 1, 1], [], []>} : vector<80x32xbf16>, vector<32x32xbf16>, vector<80x32xf32> -> vector<80x32xf32>
    %19 = arith.addf %12, %18 : vector<80x32xf32>
    %c0_17 = arith.constant 0 : index
    %c10 = arith.constant 10 : index
    %c0_18 = arith.constant 0 : index
    %20 = vector.load %arg1[%c0_17, %c10, %c0_18] : memref<1x102x32xf32, #tpu.memory_space<vmem>>, vector<1x80x32xf32>
    %21 = vector.shape_cast %20 : vector<1x80x32xf32> to vector<80x32xf32>
    %22 = arith.truncf %21 : vector<80x32xf32> to vector<80x32xbf16>
    %c3 = arith.constant 3 : index
    %c0_19 = arith.constant 0 : index
    %c0_20 = arith.constant 0 : index
    %23 = vector.load %arg2[%c3, %c0_19, %c0_20] : memref<9x32x32xbf16, #tpu.memory_space<vmem>>, vector<1x32x32xbf16>
    %24 = vector.shape_cast %23 : vector<1x32x32xbf16> to vector<32x32xbf16>
    %cst_21 = arith.constant dense<0.000000e+00> : vector<80x32xf32>
    %25 = tpu.matmul %22, %24, %cst_21 {dimension_numbers = #tpu.dot_dimension_numbers<[1], [0], [0], [1], [0, 0, 1, 1], [], []>} : vector<80x32xbf16>, vector<32x32xbf16>, vector<80x32xf32> -> vector<80x32xf32>
    %26 = arith.addf %19, %25 : vector<80x32xf32>
    %c0_22 = arith.constant 0 : index
    %c11 = arith.constant 11 : index
    %c0_23 = arith.constant 0 : index
    %27 = vector.load %arg1[%c0_22, %c11, %c0_23] : memref<1x102x32xf32, #tpu.memory_space<vmem>>, vector<1x80x32xf32>
    %28 = vector.shape_cast %27 : vector<1x80x32xf32> to vector<80x32xf32>
    %29 = arith.truncf %28 : vector<80x32xf32> to vector<80x32xbf16>
    %c4 = arith.constant 4 : index
    %c0_24 = arith.constant 0 : index
    %c0_25 = arith.constant 0 : index
    %30 = vector.load %arg2[%c4, %c0_24, %c0_25] : memref<9x32x32xbf16, #tpu.memory_space<vmem>>, vector<1x32x32xbf16>
    %31 = vector.shape_cast %30 : vector<1x32x32xbf16> to vector<32x32xbf16>
    %cst_26 = arith.constant dense<0.000000e+00> : vector<80x32xf32>
    %32 = tpu.matmul %29, %31, %cst_26 {dimension_numbers = #tpu.dot_dimension_numbers<[1], [0], [0], [1], [0, 0, 1, 1], [], []>} : vector<80x32xbf16>, vector<32x32xbf16>, vector<80x32xf32> -> vector<80x32xf32>
    %33 = arith.addf %26, %32 : vector<80x32xf32>
    %c0_27 = arith.constant 0 : index
    %c12 = arith.constant 12 : index
    %c0_28 = arith.constant 0 : index
    %34 = vector.load %arg1[%c0_27, %c12, %c0_28] : memref<1x102x32xf32, #tpu.memory_space<vmem>>, vector<1x80x32xf32>
    %35 = vector.shape_cast %34 : vector<1x80x32xf32> to vector<80x32xf32>
    %36 = arith.truncf %35 : vector<80x32xf32> to vector<80x32xbf16>
    %c5 = arith.constant 5 : index
    %c0_29 = arith.constant 0 : index
    %c0_30 = arith.constant 0 : index
    %37 = vector.load %arg2[%c5, %c0_29, %c0_30] : memref<9x32x32xbf16, #tpu.memory_space<vmem>>, vector<1x32x32xbf16>
    %38 = vector.shape_cast %37 : vector<1x32x32xbf16> to vector<32x32xbf16>
    %cst_31 = arith.constant dense<0.000000e+00> : vector<80x32xf32>
    %39 = tpu.matmul %36, %38, %cst_31 {dimension_numbers = #tpu.dot_dimension_numbers<[1], [0], [0], [1], [0, 0, 1, 1], [], []>} : vector<80x32xbf16>, vector<32x32xbf16>, vector<80x32xf32> -> vector<80x32xf32>
    %40 = arith.addf %33, %39 : vector<80x32xf32>
    %c0_32 = arith.constant 0 : index
    %c20 = arith.constant 20 : index
    %c0_33 = arith.constant 0 : index
    %41 = vector.load %arg1[%c0_32, %c20, %c0_33] : memref<1x102x32xf32, #tpu.memory_space<vmem>>, vector<1x80x32xf32>
    %42 = vector.shape_cast %41 : vector<1x80x32xf32> to vector<80x32xf32>
    %43 = arith.truncf %42 : vector<80x32xf32> to vector<80x32xbf16>
    %c6 = arith.constant 6 : index
    %c0_34 = arith.constant 0 : index
    %c0_35 = arith.constant 0 : index
    %44 = vector.load %arg2[%c6, %c0_34, %c0_35] : memref<9x32x32xbf16, #tpu.memory_space<vmem>>, vector<1x32x32xbf16>
    %45 = vector.shape_cast %44 : vector<1x32x32xbf16> to vector<32x32xbf16>
    %cst_36 = arith.constant dense<0.000000e+00> : vector<80x32xf32>
    %46 = tpu.matmul %43, %45, %cst_36 {dimension_numbers = #tpu.dot_dimension_numbers<[1], [0], [0], [1], [0, 0, 1, 1], [], []>} : vector<80x32xbf16>, vector<32x32xbf16>, vector<80x32xf32> -> vector<80x32xf32>
    %47 = arith.addf %40, %46 : vector<80x32xf32>
    %c0_37 = arith.constant 0 : index
    %c21 = arith.constant 21 : index
    %c0_38 = arith.constant 0 : index
    %48 = vector.load %arg1[%c0_37, %c21, %c0_38] : memref<1x102x32xf32, #tpu.memory_space<vmem>>, vector<1x80x32xf32>
    %49 = vector.shape_cast %48 : vector<1x80x32xf32> to vector<80x32xf32>
    %50 = arith.truncf %49 : vector<80x32xf32> to vector<80x32xbf16>
    %c7 = arith.constant 7 : index
    %c0_39 = arith.constant 0 : index
    %c0_40 = arith.constant 0 : index
    %51 = vector.load %arg2[%c7, %c0_39, %c0_40] : memref<9x32x32xbf16, #tpu.memory_space<vmem>>, vector<1x32x32xbf16>
    %52 = vector.shape_cast %51 : vector<1x32x32xbf16> to vector<32x32xbf16>
    %cst_41 = arith.constant dense<0.000000e+00> : vector<80x32xf32>
    %53 = tpu.matmul %50, %52, %cst_41 {dimension_numbers = #tpu.dot_dimension_numbers<[1], [0], [0], [1], [0, 0, 1, 1], [], []>} : vector<80x32xbf16>, vector<32x32xbf16>, vector<80x32xf32> -> vector<80x32xf32>
    %54 = arith.addf %47, %53 : vector<80x32xf32>
    %c0_42 = arith.constant 0 : index
    %c22 = arith.constant 22 : index
    %c0_43 = arith.constant 0 : index
    %55 = vector.load %arg1[%c0_42, %c22, %c0_43] : memref<1x102x32xf32, #tpu.memory_space<vmem>>, vector<1x80x32xf32>
    %56 = vector.shape_cast %55 : vector<1x80x32xf32> to vector<80x32xf32>
    %57 = arith.truncf %56 : vector<80x32xf32> to vector<80x32xbf16>
    %c8 = arith.constant 8 : index
    %c0_44 = arith.constant 0 : index
    %c0_45 = arith.constant 0 : index
    %58 = vector.load %arg2[%c8, %c0_44, %c0_45] : memref<9x32x32xbf16, #tpu.memory_space<vmem>>, vector<1x32x32xbf16>
    %59 = vector.shape_cast %58 : vector<1x32x32xbf16> to vector<32x32xbf16>
    %cst_46 = arith.constant dense<0.000000e+00> : vector<80x32xf32>
    %60 = tpu.matmul %57, %59, %cst_46 {dimension_numbers = #tpu.dot_dimension_numbers<[1], [0], [0], [1], [0, 0, 1, 1], [], []>} : vector<80x32xbf16>, vector<32x32xbf16>, vector<80x32xf32> -> vector<80x32xf32>
    %61 = arith.addf %54, %60 : vector<80x32xf32>
    %c0_47 = arith.constant 0 : index
    %c0_48 = arith.constant 0 : index
    %62 = vector.load %arg3[%c0_47, %c0_48] : memref<1x32xf32, #tpu.memory_space<vmem>>, vector<1x32xf32>
    %63 = vector.broadcast %62 : vector<1x32xf32> to vector<80x32xf32>
    %64 = arith.addf %61, %63 : vector<80x32xf32>
    %65 = vector.extract_strided_slice %64 {offsets = [0, 0], sizes = [8, 32], strides = [1, 1]} : vector<80x32xf32> to vector<8x32xf32>
    %c0_49 = arith.constant 0 : index
    %c0_50 = arith.constant 0 : index
    %c0_51 = arith.constant 0 : index
    %c0_52 = arith.constant 0 : index
    %66 = vector.load %arg4[%c0_49, %c0_50, %c0_51, %c0_52] : memref<1x8x8x32xf32, #tpu.memory_space<vmem>>, vector<1x1x8x32xf32>
    %67 = vector.shape_cast %66 : vector<1x1x8x32xf32> to vector<8x32xf32>
    %68 = vector.shape_cast %65 : vector<8x32xf32> to vector<1x1x8x32xf32>
    tpu.vector_store %arg4[%c0_49, %c0_50, %c0_51, %c0_52], %68 {strides = array<i32>} : memref<1x8x8x32xf32, #tpu.memory_space<vmem>>, vector<1x1x8x32xf32>,
    %69 = vector.extract_strided_slice %64 {offsets = [10, 0], sizes = [8, 32], strides = [1, 1]} : vector<80x32xf32> to vector<8x32xf32>
    %c0_53 = arith.constant 0 : index
    %c1_54 = arith.constant 1 : index
    %c0_55 = arith.constant 0 : index
    %c0_56 = arith.constant 0 : index
    %70 = vector.load %arg4[%c0_53, %c1_54, %c0_55, %c0_56] : memref<1x8x8x32xf32, #tpu.memory_space<vmem>>, vector<1x1x8x32xf32>
    %71 = vector.shape_cast %70 : vector<1x1x8x32xf32> to vector<8x32xf32>
    %72 = vector.shape_cast %69 : vector<8x32xf32> to vector<1x1x8x32xf32>
    tpu.vector_store %arg4[%c0_53, %c1_54, %c0_55, %c0_56], %72 {strides = array<i32>} : memref<1x8x8x32xf32, #tpu.memory_space<vmem>>, vector<1x1x8x32xf32>,
    %73 = vector.extract_strided_slice %64 {offsets = [20, 0], sizes = [8, 32], strides = [1, 1]} : vector<80x32xf32> to vector<8x32xf32>
    %c0_57 = arith.constant 0 : index
    %c2_58 = arith.constant 2 : index
    %c0_59 = arith.constant 0 : index
    %c0_60 = arith.constant 0 : index
    %74 = vector.load %arg4[%c0_57, %c2_58, %c0_59, %c0_60] : memref<1x8x8x32xf32, #tpu.memory_space<vmem>>, vector<1x1x8x32xf32>
    %75 = vector.shape_cast %74 : vector<1x1x8x32xf32> to vector<8x32xf32>
    %76 = vector.shape_cast %73 : vector<8x32xf32> to vector<1x1x8x32xf32>
    tpu.vector_store %arg4[%c0_57, %c2_58, %c0_59, %c0_60], %76 {strides = array<i32>} : memref<1x8x8x32xf32, #tpu.memory_space<vmem>>, vector<1x1x8x32xf32>,
    %77 = vector.extract_strided_slice %64 {offsets = [30, 0], sizes = [8, 32], strides = [1, 1]} : vector<80x32xf32> to vector<8x32xf32>
    %c0_61 = arith.constant 0 : index
    %c3_62 = arith.constant 3 : index
    %c0_63 = arith.constant 0 : index
    %c0_64 = arith.constant 0 : index
    %78 = vector.load %arg4[%c0_61, %c3_62, %c0_63, %c0_64] : memref<1x8x8x32xf32, #tpu.memory_space<vmem>>, vector<1x1x8x32xf32>
    %79 = vector.shape_cast %78 : vector<1x1x8x32xf32> to vector<8x32xf32>
    %80 = vector.shape_cast %77 : vector<8x32xf32> to vector<1x1x8x32xf32>
    tpu.vector_store %arg4[%c0_61, %c3_62, %c0_63, %c0_64], %80 {strides = array<i32>} : memref<1x8x8x32xf32, #tpu.memory_space<vmem>>, vector<1x1x8x32xf32>,
    %81 = vector.extract_strided_slice %64 {offsets = [40, 0], sizes = [8, 32], strides = [1, 1]} : vector<80x32xf32> to vector<8x32xf32>
    %c0_65 = arith.constant 0 : index
    %c4_66 = arith.constant 4 : index
    %c0_67 = arith.constant 0 : index
    %c0_68 = arith.constant 0 : index
    %82 = vector.load %arg4[%c0_65, %c4_66, %c0_67, %c0_68] : memref<1x8x8x32xf32, #tpu.memory_space<vmem>>, vector<1x1x8x32xf32>
    %83 = vector.shape_cast %82 : vector<1x1x8x32xf32> to vector<8x32xf32>
    %84 = vector.shape_cast %81 : vector<8x32xf32> to vector<1x1x8x32xf32>
    tpu.vector_store %arg4[%c0_65, %c4_66, %c0_67, %c0_68], %84 {strides = array<i32>} : memref<1x8x8x32xf32, #tpu.memory_space<vmem>>, vector<1x1x8x32xf32>,
    %85 = vector.extract_strided_slice %64 {offsets = [50, 0], sizes = [8, 32], strides = [1, 1]} : vector<80x32xf32> to vector<8x32xf32>
    %c0_69 = arith.constant 0 : index
    %c5_70 = arith.constant 5 : index
    %c0_71 = arith.constant 0 : index
    %c0_72 = arith.constant 0 : index
    %86 = vector.load %arg4[%c0_69, %c5_70, %c0_71, %c0_72] : memref<1x8x8x32xf32, #tpu.memory_space<vmem>>, vector<1x1x8x32xf32>
    %87 = vector.shape_cast %86 : vector<1x1x8x32xf32> to vector<8x32xf32>
    %88 = vector.shape_cast %85 : vector<8x32xf32> to vector<1x1x8x32xf32>
    tpu.vector_store %arg4[%c0_69, %c5_70, %c0_71, %c0_72], %88 {strides = array<i32>} : memref<1x8x8x32xf32, #tpu.memory_space<vmem>>, vector<1x1x8x32xf32>,
    %89 = vector.extract_strided_slice %64 {offsets = [60, 0], sizes = [8, 32], strides = [1, 1]} : vector<80x32xf32> to vector<8x32xf32>
    %c0_73 = arith.constant 0 : index
    %c6_74 = arith.constant 6 : index
    %c0_75 = arith.constant 0 : index
    %c0_76 = arith.constant 0 : index
    %90 = vector.load %arg4[%c0_73, %c6_74, %c0_75, %c0_76] : memref<1x8x8x32xf32, #tpu.memory_space<vmem>>, vector<1x1x8x32xf32>
    %91 = vector.shape_cast %90 : vector<1x1x8x32xf32> to vector<8x32xf32>
    %92 = vector.shape_cast %89 : vector<8x32xf32> to vector<1x1x8x32xf32>
    tpu.vector_store %arg4[%c0_73, %c6_74, %c0_75, %c0_76], %92 {strides = array<i32>} : memref<1x8x8x32xf32, #tpu.memory_space<vmem>>, vector<1x1x8x32xf32>,
    %93 = vector.extract_strided_slice %64 {offsets = [70, 0], sizes = [8, 32], strides = [1, 1]} : vector<80x32xf32> to vector<8x32xf32>
    %c0_77 = arith.constant 0 : index
    %c7_78 = arith.constant 7 : index
    %c0_79 = arith.constant 0 : index
    %c0_80 = arith.constant 0 : index
    %94 = vector.load %arg4[%c0_77, %c7_78, %c0_79, %c0_80] : memref<1x8x8x32xf32, #tpu.memory_space<vmem>>, vector<1x1x8x32xf32>
    %95 = vector.shape_cast %94 : vector<1x1x8x32xf32> to vector<8x32xf32>
    %96 = vector.shape_cast %93 : vector<8x32xf32> to vector<1x1x8x32xf32>
    tpu.vector_store %arg4[%c0_77, %c7_78, %c0_79, %c0_80], %96 {strides = array<i32>} : memref<1x8x8x32xf32, #tpu.memory_space<vmem>>, vector<1x1x8x32xf32>,
    return
  }
  func.func @transform_0(%arg0: i32) -> (i32, i32, i32) {
    %c0_i32 = arith.constant 0 : i32
    %c0_i32_0 = arith.constant 0 : i32
    %c0_i32_1 = arith.constant 0 : i32
    return %arg0, %c0_i32, %c0_i32_0 : i32, i32, i32
  }
  func.func @transform_1(%arg0: i32) -> (i32, i32, i32) {
    %c0_i32 = arith.constant 0 : i32
    %c0_i32_0 = arith.constant 0 : i32
    %c0_i32_1 = arith.constant 0 : i32
    %c0_i32_2 = arith.constant 0 : i32
    return %c0_i32, %c0_i32_0, %c0_i32_1 : i32, i32, i32
  }
  func.func @transform_2(%arg0: i32) -> (i32, i32) {
    %c0_i32 = arith.constant 0 : i32
    %c0_i32_0 = arith.constant 0 : i32
    %c0_i32_1 = arith.constant 0 : i32
    return %c0_i32, %c0_i32_0 : i32, i32
  }
  func.func @transform_3(%arg0: i32) -> (i32, i32, i32, i32) {
    %c0_i32 = arith.constant 0 : i32
    %c0_i32_0 = arith.constant 0 : i32
    %c0_i32_1 = arith.constant 0 : i32
    %c0_i32_2 = arith.constant 0 : i32
    return %arg0, %c0_i32, %c0_i32_0, %c0_i32_1 : i32, i32, i32, i32
  }
}

module attributes {stable_mosaic.version = 11 : i64} {
  func.func @_conv_kernel(%arg0: i32, %arg1: memref<1x26x128xf32, #tpu.memory_space<vmem>>, %arg2: memref<4x128x32xbf16, #tpu.memory_space<vmem>>, %arg3: memref<1x32xf32, #tpu.memory_space<vmem>>, %arg4: memref<1x4x4x32xf32, #tpu.memory_space<vmem>>) attributes {dimension_semantics = [#tpu.dimension_semantics<parallel>], iteration_bounds = array<i64: 2>, scalar_prefetch = 0 : i64, scratch_operands = 0 : i64, tpu.core_type = #tpu.core_type<tc>, window_params = [{transform_indices = @transform_0, window_bounds = array<i64: 1, 26, 128>}, {pipeline_mode = #tpu.pipeline_mode<synchronous>, transform_indices = @transform_1, window_bounds = array<i64: 4, 128, 32>}, {pipeline_mode = #tpu.pipeline_mode<synchronous>, transform_indices = @transform_2, window_bounds = array<i64: 1, 32>}, {transform_indices = @transform_3, window_bounds = array<i64: 1, 4, 4, 32>}]} {
    %c0 = arith.constant 0 : index
    %c0_0 = arith.constant 0 : index
    %c0_1 = arith.constant 0 : index
    %0 = vector.load %arg1[%c0, %c0_0, %c0_1] : memref<1x26x128xf32, #tpu.memory_space<vmem>>, vector<1x20x128xf32>
    %1 = vector.shape_cast %0 : vector<1x20x128xf32> to vector<20x128xf32>
    %2 = arith.truncf %1 : vector<20x128xf32> to vector<20x128xbf16>
    %c0_2 = arith.constant 0 : index
    %c0_3 = arith.constant 0 : index
    %c0_4 = arith.constant 0 : index
    %3 = vector.load %arg2[%c0_2, %c0_3, %c0_4] : memref<4x128x32xbf16, #tpu.memory_space<vmem>>, vector<1x128x32xbf16>
    %4 = vector.shape_cast %3 : vector<1x128x32xbf16> to vector<128x32xbf16>
    %cst = arith.constant dense<0.000000e+00> : vector<20x32xf32>
    %5 = tpu.matmul %2, %4, %cst {dimension_numbers = #tpu.dot_dimension_numbers<[1], [0], [0], [1], [0, 0, 1, 1], [], []>} : vector<20x128xbf16>, vector<128x32xbf16>, vector<20x32xf32> -> vector<20x32xf32>
    %c0_5 = arith.constant 0 : index
    %c1 = arith.constant 1 : index
    %c0_6 = arith.constant 0 : index
    %6 = vector.load %arg1[%c0_5, %c1, %c0_6] : memref<1x26x128xf32, #tpu.memory_space<vmem>>, vector<1x20x128xf32>
    %7 = vector.shape_cast %6 : vector<1x20x128xf32> to vector<20x128xf32>
    %8 = arith.truncf %7 : vector<20x128xf32> to vector<20x128xbf16>
    %c1_7 = arith.constant 1 : index
    %c0_8 = arith.constant 0 : index
    %c0_9 = arith.constant 0 : index
    %9 = vector.load %arg2[%c1_7, %c0_8, %c0_9] : memref<4x128x32xbf16, #tpu.memory_space<vmem>>, vector<1x128x32xbf16>
    %10 = vector.shape_cast %9 : vector<1x128x32xbf16> to vector<128x32xbf16>
    %cst_10 = arith.constant dense<0.000000e+00> : vector<20x32xf32>
    %11 = tpu.matmul %8, %10, %cst_10 {dimension_numbers = #tpu.dot_dimension_numbers<[1], [0], [0], [1], [0, 0, 1, 1], [], []>} : vector<20x128xbf16>, vector<128x32xbf16>, vector<20x32xf32> -> vector<20x32xf32>
    %12 = arith.addf %5, %11 : vector<20x32xf32>
    %c0_11 = arith.constant 0 : index
    %c5 = arith.constant 5 : index
    %c0_12 = arith.constant 0 : index
    %13 = vector.load %arg1[%c0_11, %c5, %c0_12] : memref<1x26x128xf32, #tpu.memory_space<vmem>>, vector<1x20x128xf32>
    %14 = vector.shape_cast %13 : vector<1x20x128xf32> to vector<20x128xf32>
    %15 = arith.truncf %14 : vector<20x128xf32> to vector<20x128xbf16>
    %c2 = arith.constant 2 : index
    %c0_13 = arith.constant 0 : index
    %c0_14 = arith.constant 0 : index
    %16 = vector.load %arg2[%c2, %c0_13, %c0_14] : memref<4x128x32xbf16, #tpu.memory_space<vmem>>, vector<1x128x32xbf16>
    %17 = vector.shape_cast %16 : vector<1x128x32xbf16> to vector<128x32xbf16>
    %cst_15 = arith.constant dense<0.000000e+00> : vector<20x32xf32>
    %18 = tpu.matmul %15, %17, %cst_15 {dimension_numbers = #tpu.dot_dimension_numbers<[1], [0], [0], [1], [0, 0, 1, 1], [], []>} : vector<20x128xbf16>, vector<128x32xbf16>, vector<20x32xf32> -> vector<20x32xf32>
    %19 = arith.addf %12, %18 : vector<20x32xf32>
    %c0_16 = arith.constant 0 : index
    %c6 = arith.constant 6 : index
    %c0_17 = arith.constant 0 : index
    %20 = vector.load %arg1[%c0_16, %c6, %c0_17] : memref<1x26x128xf32, #tpu.memory_space<vmem>>, vector<1x20x128xf32>
    %21 = vector.shape_cast %20 : vector<1x20x128xf32> to vector<20x128xf32>
    %22 = arith.truncf %21 : vector<20x128xf32> to vector<20x128xbf16>
    %c3 = arith.constant 3 : index
    %c0_18 = arith.constant 0 : index
    %c0_19 = arith.constant 0 : index
    %23 = vector.load %arg2[%c3, %c0_18, %c0_19] : memref<4x128x32xbf16, #tpu.memory_space<vmem>>, vector<1x128x32xbf16>
    %24 = vector.shape_cast %23 : vector<1x128x32xbf16> to vector<128x32xbf16>
    %cst_20 = arith.constant dense<0.000000e+00> : vector<20x32xf32>
    %25 = tpu.matmul %22, %24, %cst_20 {dimension_numbers = #tpu.dot_dimension_numbers<[1], [0], [0], [1], [0, 0, 1, 1], [], []>} : vector<20x128xbf16>, vector<128x32xbf16>, vector<20x32xf32> -> vector<20x32xf32>
    %26 = arith.addf %19, %25 : vector<20x32xf32>
    %c0_21 = arith.constant 0 : index
    %c0_22 = arith.constant 0 : index
    %27 = vector.load %arg3[%c0_21, %c0_22] : memref<1x32xf32, #tpu.memory_space<vmem>>, vector<1x32xf32>
    %28 = vector.broadcast %27 : vector<1x32xf32> to vector<20x32xf32>
    %29 = arith.addf %26, %28 : vector<20x32xf32>
    %cst_23 = arith.constant 0.000000e+00 : f32
    %30 = vector.broadcast %cst_23 : f32 to vector<20x32xf32>
    %31 = arith.maximumf %29, %30 : vector<20x32xf32>
    %32 = vector.extract_strided_slice %31 {offsets = [0, 0], sizes = [4, 32], strides = [1, 1]} : vector<20x32xf32> to vector<4x32xf32>
    %c0_24 = arith.constant 0 : index
    %c0_25 = arith.constant 0 : index
    %c0_26 = arith.constant 0 : index
    %c0_27 = arith.constant 0 : index
    %33 = vector.load %arg4[%c0_24, %c0_25, %c0_26, %c0_27] : memref<1x4x4x32xf32, #tpu.memory_space<vmem>>, vector<1x1x4x32xf32>
    %34 = vector.shape_cast %33 : vector<1x1x4x32xf32> to vector<4x32xf32>
    %35 = vector.shape_cast %32 : vector<4x32xf32> to vector<1x1x4x32xf32>
    tpu.vector_store %arg4[%c0_24, %c0_25, %c0_26, %c0_27], %35 {strides = array<i32>} : memref<1x4x4x32xf32, #tpu.memory_space<vmem>>, vector<1x1x4x32xf32>,
    %36 = vector.extract_strided_slice %31 {offsets = [5, 0], sizes = [4, 32], strides = [1, 1]} : vector<20x32xf32> to vector<4x32xf32>
    %c0_28 = arith.constant 0 : index
    %c1_29 = arith.constant 1 : index
    %c0_30 = arith.constant 0 : index
    %c0_31 = arith.constant 0 : index
    %37 = vector.load %arg4[%c0_28, %c1_29, %c0_30, %c0_31] : memref<1x4x4x32xf32, #tpu.memory_space<vmem>>, vector<1x1x4x32xf32>
    %38 = vector.shape_cast %37 : vector<1x1x4x32xf32> to vector<4x32xf32>
    %39 = vector.shape_cast %36 : vector<4x32xf32> to vector<1x1x4x32xf32>
    tpu.vector_store %arg4[%c0_28, %c1_29, %c0_30, %c0_31], %39 {strides = array<i32>} : memref<1x4x4x32xf32, #tpu.memory_space<vmem>>, vector<1x1x4x32xf32>,
    %40 = vector.extract_strided_slice %31 {offsets = [10, 0], sizes = [4, 32], strides = [1, 1]} : vector<20x32xf32> to vector<4x32xf32>
    %c0_32 = arith.constant 0 : index
    %c2_33 = arith.constant 2 : index
    %c0_34 = arith.constant 0 : index
    %c0_35 = arith.constant 0 : index
    %41 = vector.load %arg4[%c0_32, %c2_33, %c0_34, %c0_35] : memref<1x4x4x32xf32, #tpu.memory_space<vmem>>, vector<1x1x4x32xf32>
    %42 = vector.shape_cast %41 : vector<1x1x4x32xf32> to vector<4x32xf32>
    %43 = vector.shape_cast %40 : vector<4x32xf32> to vector<1x1x4x32xf32>
    tpu.vector_store %arg4[%c0_32, %c2_33, %c0_34, %c0_35], %43 {strides = array<i32>} : memref<1x4x4x32xf32, #tpu.memory_space<vmem>>, vector<1x1x4x32xf32>,
    %44 = vector.extract_strided_slice %31 {offsets = [15, 0], sizes = [4, 32], strides = [1, 1]} : vector<20x32xf32> to vector<4x32xf32>
    %c0_36 = arith.constant 0 : index
    %c3_37 = arith.constant 3 : index
    %c0_38 = arith.constant 0 : index
    %c0_39 = arith.constant 0 : index
    %45 = vector.load %arg4[%c0_36, %c3_37, %c0_38, %c0_39] : memref<1x4x4x32xf32, #tpu.memory_space<vmem>>, vector<1x1x4x32xf32>
    %46 = vector.shape_cast %45 : vector<1x1x4x32xf32> to vector<4x32xf32>
    %47 = vector.shape_cast %44 : vector<4x32xf32> to vector<1x1x4x32xf32>
    tpu.vector_store %arg4[%c0_36, %c3_37, %c0_38, %c0_39], %47 {strides = array<i32>} : memref<1x4x4x32xf32, #tpu.memory_space<vmem>>, vector<1x1x4x32xf32>,
    return
  }
  func.func @transform_0(%arg0: i32) -> (i32, i32, i32) {
    %c0_i32 = arith.constant 0 : i32
    %c0_i32_0 = arith.constant 0 : i32
    %c0_i32_1 = arith.constant 0 : i32
    return %arg0, %c0_i32, %c0_i32_0 : i32, i32, i32
  }
  func.func @transform_1(%arg0: i32) -> (i32, i32, i32) {
    %c0_i32 = arith.constant 0 : i32
    %c0_i32_0 = arith.constant 0 : i32
    %c0_i32_1 = arith.constant 0 : i32
    %c0_i32_2 = arith.constant 0 : i32
    return %c0_i32, %c0_i32_0, %c0_i32_1 : i32, i32, i32
  }
  func.func @transform_2(%arg0: i32) -> (i32, i32) {
    %c0_i32 = arith.constant 0 : i32
    %c0_i32_0 = arith.constant 0 : i32
    %c0_i32_1 = arith.constant 0 : i32
    return %c0_i32, %c0_i32_0 : i32, i32
  }
  func.func @transform_3(%arg0: i32) -> (i32, i32, i32, i32) {
    %c0_i32 = arith.constant 0 : i32
    %c0_i32_0 = arith.constant 0 : i32
    %c0_i32_1 = arith.constant 0 : i32
    %c0_i32_2 = arith.constant 0 : i32
    return %arg0, %c0_i32, %c0_i32_0, %c0_i32_1 : i32, i32, i32, i32
  }
}

module attributes {stable_mosaic.version = 11 : i64} {
  func.func @_conv_kernel(%arg0: i32, %arg1: memref<1x38x32xf32, #tpu.memory_space<vmem>>, %arg2: memref<9x32x32xbf16, #tpu.memory_space<vmem>>, %arg3: memref<1x32xf32, #tpu.memory_space<vmem>>, %arg4: memref<1x4x4x32xf32, #tpu.memory_space<vmem>>) attributes {dimension_semantics = [#tpu.dimension_semantics<parallel>], iteration_bounds = array<i64: 2>, scalar_prefetch = 0 : i64, scratch_operands = 0 : i64, tpu.core_type = #tpu.core_type<tc>, window_params = [{transform_indices = @transform_0, window_bounds = array<i64: 1, 38, 32>}, {pipeline_mode = #tpu.pipeline_mode<synchronous>, transform_indices = @transform_1, window_bounds = array<i64: 9, 32, 32>}, {pipeline_mode = #tpu.pipeline_mode<synchronous>, transform_indices = @transform_2, window_bounds = array<i64: 1, 32>}, {transform_indices = @transform_3, window_bounds = array<i64: 1, 4, 4, 32>}]} {
    %c0 = arith.constant 0 : index
    %c0_0 = arith.constant 0 : index
    %c0_1 = arith.constant 0 : index
    %0 = vector.load %arg1[%c0, %c0_0, %c0_1] : memref<1x38x32xf32, #tpu.memory_space<vmem>>, vector<1x24x32xf32>
    %1 = vector.shape_cast %0 : vector<1x24x32xf32> to vector<24x32xf32>
    %2 = arith.truncf %1 : vector<24x32xf32> to vector<24x32xbf16>
    %c0_2 = arith.constant 0 : index
    %c0_3 = arith.constant 0 : index
    %c0_4 = arith.constant 0 : index
    %3 = vector.load %arg2[%c0_2, %c0_3, %c0_4] : memref<9x32x32xbf16, #tpu.memory_space<vmem>>, vector<1x32x32xbf16>
    %4 = vector.shape_cast %3 : vector<1x32x32xbf16> to vector<32x32xbf16>
    %cst = arith.constant dense<0.000000e+00> : vector<24x32xf32>
    %5 = tpu.matmul %2, %4, %cst {dimension_numbers = #tpu.dot_dimension_numbers<[1], [0], [0], [1], [0, 0, 1, 1], [], []>} : vector<24x32xbf16>, vector<32x32xbf16>, vector<24x32xf32> -> vector<24x32xf32>
    %c0_5 = arith.constant 0 : index
    %c1 = arith.constant 1 : index
    %c0_6 = arith.constant 0 : index
    %6 = vector.load %arg1[%c0_5, %c1, %c0_6] : memref<1x38x32xf32, #tpu.memory_space<vmem>>, vector<1x24x32xf32>
    %7 = vector.shape_cast %6 : vector<1x24x32xf32> to vector<24x32xf32>
    %8 = arith.truncf %7 : vector<24x32xf32> to vector<24x32xbf16>
    %c1_7 = arith.constant 1 : index
    %c0_8 = arith.constant 0 : index
    %c0_9 = arith.constant 0 : index
    %9 = vector.load %arg2[%c1_7, %c0_8, %c0_9] : memref<9x32x32xbf16, #tpu.memory_space<vmem>>, vector<1x32x32xbf16>
    %10 = vector.shape_cast %9 : vector<1x32x32xbf16> to vector<32x32xbf16>
    %cst_10 = arith.constant dense<0.000000e+00> : vector<24x32xf32>
    %11 = tpu.matmul %8, %10, %cst_10 {dimension_numbers = #tpu.dot_dimension_numbers<[1], [0], [0], [1], [0, 0, 1, 1], [], []>} : vector<24x32xbf16>, vector<32x32xbf16>, vector<24x32xf32> -> vector<24x32xf32>
    %12 = arith.addf %5, %11 : vector<24x32xf32>
    %c0_11 = arith.constant 0 : index
    %c2 = arith.constant 2 : index
    %c0_12 = arith.constant 0 : index
    %13 = vector.load %arg1[%c0_11, %c2, %c0_12] : memref<1x38x32xf32, #tpu.memory_space<vmem>>, vector<1x24x32xf32>
    %14 = vector.shape_cast %13 : vector<1x24x32xf32> to vector<24x32xf32>
    %15 = arith.truncf %14 : vector<24x32xf32> to vector<24x32xbf16>
    %c2_13 = arith.constant 2 : index
    %c0_14 = arith.constant 0 : index
    %c0_15 = arith.constant 0 : index
    %16 = vector.load %arg2[%c2_13, %c0_14, %c0_15] : memref<9x32x32xbf16, #tpu.memory_space<vmem>>, vector<1x32x32xbf16>
    %17 = vector.shape_cast %16 : vector<1x32x32xbf16> to vector<32x32xbf16>
    %cst_16 = arith.constant dense<0.000000e+00> : vector<24x32xf32>
    %18 = tpu.matmul %15, %17, %cst_16 {dimension_numbers = #tpu.dot_dimension_numbers<[1], [0], [0], [1], [0, 0, 1, 1], [], []>} : vector<24x32xbf16>, vector<32x32xbf16>, vector<24x32xf32> -> vector<24x32xf32>
    %19 = arith.addf %12, %18 : vector<24x32xf32>
    %c0_17 = arith.constant 0 : index
    %c6 = arith.constant 6 : index
    %c0_18 = arith.constant 0 : index
    %20 = vector.load %arg1[%c0_17, %c6, %c0_18] : memref<1x38x32xf32, #tpu.memory_space<vmem>>, vector<1x24x32xf32>
    %21 = vector.shape_cast %20 : vector<1x24x32xf32> to vector<24x32xf32>
    %22 = arith.truncf %21 : vector<24x32xf32> to vector<24x32xbf16>
    %c3 = arith.constant 3 : index
    %c0_19 = arith.constant 0 : index
    %c0_20 = arith.constant 0 : index
    %23 = vector.load %arg2[%c3, %c0_19, %c0_20] : memref<9x32x32xbf16, #tpu.memory_space<vmem>>, vector<1x32x32xbf16>
    %24 = vector.shape_cast %23 : vector<1x32x32xbf16> to vector<32x32xbf16>
    %cst_21 = arith.constant dense<0.000000e+00> : vector<24x32xf32>
    %25 = tpu.matmul %22, %24, %cst_21 {dimension_numbers = #tpu.dot_dimension_numbers<[1], [0], [0], [1], [0, 0, 1, 1], [], []>} : vector<24x32xbf16>, vector<32x32xbf16>, vector<24x32xf32> -> vector<24x32xf32>
    %26 = arith.addf %19, %25 : vector<24x32xf32>
    %c0_22 = arith.constant 0 : index
    %c7 = arith.constant 7 : index
    %c0_23 = arith.constant 0 : index
    %27 = vector.load %arg1[%c0_22, %c7, %c0_23] : memref<1x38x32xf32, #tpu.memory_space<vmem>>, vector<1x24x32xf32>
    %28 = vector.shape_cast %27 : vector<1x24x32xf32> to vector<24x32xf32>
    %29 = arith.truncf %28 : vector<24x32xf32> to vector<24x32xbf16>
    %c4 = arith.constant 4 : index
    %c0_24 = arith.constant 0 : index
    %c0_25 = arith.constant 0 : index
    %30 = vector.load %arg2[%c4, %c0_24, %c0_25] : memref<9x32x32xbf16, #tpu.memory_space<vmem>>, vector<1x32x32xbf16>
    %31 = vector.shape_cast %30 : vector<1x32x32xbf16> to vector<32x32xbf16>
    %cst_26 = arith.constant dense<0.000000e+00> : vector<24x32xf32>
    %32 = tpu.matmul %29, %31, %cst_26 {dimension_numbers = #tpu.dot_dimension_numbers<[1], [0], [0], [1], [0, 0, 1, 1], [], []>} : vector<24x32xbf16>, vector<32x32xbf16>, vector<24x32xf32> -> vector<24x32xf32>
    %33 = arith.addf %26, %32 : vector<24x32xf32>
    %c0_27 = arith.constant 0 : index
    %c8 = arith.constant 8 : index
    %c0_28 = arith.constant 0 : index
    %34 = vector.load %arg1[%c0_27, %c8, %c0_28] : memref<1x38x32xf32, #tpu.memory_space<vmem>>, vector<1x24x32xf32>
    %35 = vector.shape_cast %34 : vector<1x24x32xf32> to vector<24x32xf32>
    %36 = arith.truncf %35 : vector<24x32xf32> to vector<24x32xbf16>
    %c5 = arith.constant 5 : index
    %c0_29 = arith.constant 0 : index
    %c0_30 = arith.constant 0 : index
    %37 = vector.load %arg2[%c5, %c0_29, %c0_30] : memref<9x32x32xbf16, #tpu.memory_space<vmem>>, vector<1x32x32xbf16>
    %38 = vector.shape_cast %37 : vector<1x32x32xbf16> to vector<32x32xbf16>
    %cst_31 = arith.constant dense<0.000000e+00> : vector<24x32xf32>
    %39 = tpu.matmul %36, %38, %cst_31 {dimension_numbers = #tpu.dot_dimension_numbers<[1], [0], [0], [1], [0, 0, 1, 1], [], []>} : vector<24x32xbf16>, vector<32x32xbf16>, vector<24x32xf32> -> vector<24x32xf32>
    %40 = arith.addf %33, %39 : vector<24x32xf32>
    %c0_32 = arith.constant 0 : index
    %c12 = arith.constant 12 : index
    %c0_33 = arith.constant 0 : index
    %41 = vector.load %arg1[%c0_32, %c12, %c0_33] : memref<1x38x32xf32, #tpu.memory_space<vmem>>, vector<1x24x32xf32>
    %42 = vector.shape_cast %41 : vector<1x24x32xf32> to vector<24x32xf32>
    %43 = arith.truncf %42 : vector<24x32xf32> to vector<24x32xbf16>
    %c6_34 = arith.constant 6 : index
    %c0_35 = arith.constant 0 : index
    %c0_36 = arith.constant 0 : index
    %44 = vector.load %arg2[%c6_34, %c0_35, %c0_36] : memref<9x32x32xbf16, #tpu.memory_space<vmem>>, vector<1x32x32xbf16>
    %45 = vector.shape_cast %44 : vector<1x32x32xbf16> to vector<32x32xbf16>
    %cst_37 = arith.constant dense<0.000000e+00> : vector<24x32xf32>
    %46 = tpu.matmul %43, %45, %cst_37 {dimension_numbers = #tpu.dot_dimension_numbers<[1], [0], [0], [1], [0, 0, 1, 1], [], []>} : vector<24x32xbf16>, vector<32x32xbf16>, vector<24x32xf32> -> vector<24x32xf32>
    %47 = arith.addf %40, %46 : vector<24x32xf32>
    %c0_38 = arith.constant 0 : index
    %c13 = arith.constant 13 : index
    %c0_39 = arith.constant 0 : index
    %48 = vector.load %arg1[%c0_38, %c13, %c0_39] : memref<1x38x32xf32, #tpu.memory_space<vmem>>, vector<1x24x32xf32>
    %49 = vector.shape_cast %48 : vector<1x24x32xf32> to vector<24x32xf32>
    %50 = arith.truncf %49 : vector<24x32xf32> to vector<24x32xbf16>
    %c7_40 = arith.constant 7 : index
    %c0_41 = arith.constant 0 : index
    %c0_42 = arith.constant 0 : index
    %51 = vector.load %arg2[%c7_40, %c0_41, %c0_42] : memref<9x32x32xbf16, #tpu.memory_space<vmem>>, vector<1x32x32xbf16>
    %52 = vector.shape_cast %51 : vector<1x32x32xbf16> to vector<32x32xbf16>
    %cst_43 = arith.constant dense<0.000000e+00> : vector<24x32xf32>
    %53 = tpu.matmul %50, %52, %cst_43 {dimension_numbers = #tpu.dot_dimension_numbers<[1], [0], [0], [1], [0, 0, 1, 1], [], []>} : vector<24x32xbf16>, vector<32x32xbf16>, vector<24x32xf32> -> vector<24x32xf32>
    %54 = arith.addf %47, %53 : vector<24x32xf32>
    %c0_44 = arith.constant 0 : index
    %c14 = arith.constant 14 : index
    %c0_45 = arith.constant 0 : index
    %55 = vector.load %arg1[%c0_44, %c14, %c0_45] : memref<1x38x32xf32, #tpu.memory_space<vmem>>, vector<1x24x32xf32>
    %56 = vector.shape_cast %55 : vector<1x24x32xf32> to vector<24x32xf32>
    %57 = arith.truncf %56 : vector<24x32xf32> to vector<24x32xbf16>
    %c8_46 = arith.constant 8 : index
    %c0_47 = arith.constant 0 : index
    %c0_48 = arith.constant 0 : index
    %58 = vector.load %arg2[%c8_46, %c0_47, %c0_48] : memref<9x32x32xbf16, #tpu.memory_space<vmem>>, vector<1x32x32xbf16>
    %59 = vector.shape_cast %58 : vector<1x32x32xbf16> to vector<32x32xbf16>
    %cst_49 = arith.constant dense<0.000000e+00> : vector<24x32xf32>
    %60 = tpu.matmul %57, %59, %cst_49 {dimension_numbers = #tpu.dot_dimension_numbers<[1], [0], [0], [1], [0, 0, 1, 1], [], []>} : vector<24x32xbf16>, vector<32x32xbf16>, vector<24x32xf32> -> vector<24x32xf32>
    %61 = arith.addf %54, %60 : vector<24x32xf32>
    %c0_50 = arith.constant 0 : index
    %c0_51 = arith.constant 0 : index
    %62 = vector.load %arg3[%c0_50, %c0_51] : memref<1x32xf32, #tpu.memory_space<vmem>>, vector<1x32xf32>
    %63 = vector.broadcast %62 : vector<1x32xf32> to vector<24x32xf32>
    %64 = arith.addf %61, %63 : vector<24x32xf32>
    %65 = vector.extract_strided_slice %64 {offsets = [0, 0], sizes = [4, 32], strides = [1, 1]} : vector<24x32xf32> to vector<4x32xf32>
    %c0_52 = arith.constant 0 : index
    %c0_53 = arith.constant 0 : index
    %c0_54 = arith.constant 0 : index
    %c0_55 = arith.constant 0 : index
    %66 = vector.load %arg4[%c0_52, %c0_53, %c0_54, %c0_55] : memref<1x4x4x32xf32, #tpu.memory_space<vmem>>, vector<1x1x4x32xf32>
    %67 = vector.shape_cast %66 : vector<1x1x4x32xf32> to vector<4x32xf32>
    %68 = vector.shape_cast %65 : vector<4x32xf32> to vector<1x1x4x32xf32>
    tpu.vector_store %arg4[%c0_52, %c0_53, %c0_54, %c0_55], %68 {strides = array<i32>} : memref<1x4x4x32xf32, #tpu.memory_space<vmem>>, vector<1x1x4x32xf32>,
    %69 = vector.extract_strided_slice %64 {offsets = [6, 0], sizes = [4, 32], strides = [1, 1]} : vector<24x32xf32> to vector<4x32xf32>
    %c0_56 = arith.constant 0 : index
    %c1_57 = arith.constant 1 : index
    %c0_58 = arith.constant 0 : index
    %c0_59 = arith.constant 0 : index
    %70 = vector.load %arg4[%c0_56, %c1_57, %c0_58, %c0_59] : memref<1x4x4x32xf32, #tpu.memory_space<vmem>>, vector<1x1x4x32xf32>
    %71 = vector.shape_cast %70 : vector<1x1x4x32xf32> to vector<4x32xf32>
    %72 = vector.shape_cast %69 : vector<4x32xf32> to vector<1x1x4x32xf32>
    tpu.vector_store %arg4[%c0_56, %c1_57, %c0_58, %c0_59], %72 {strides = array<i32>} : memref<1x4x4x32xf32, #tpu.memory_space<vmem>>, vector<1x1x4x32xf32>,
    %73 = vector.extract_strided_slice %64 {offsets = [12, 0], sizes = [4, 32], strides = [1, 1]} : vector<24x32xf32> to vector<4x32xf32>
    %c0_60 = arith.constant 0 : index
    %c2_61 = arith.constant 2 : index
    %c0_62 = arith.constant 0 : index
    %c0_63 = arith.constant 0 : index
    %74 = vector.load %arg4[%c0_60, %c2_61, %c0_62, %c0_63] : memref<1x4x4x32xf32, #tpu.memory_space<vmem>>, vector<1x1x4x32xf32>
    %75 = vector.shape_cast %74 : vector<1x1x4x32xf32> to vector<4x32xf32>
    %76 = vector.shape_cast %73 : vector<4x32xf32> to vector<1x1x4x32xf32>
    tpu.vector_store %arg4[%c0_60, %c2_61, %c0_62, %c0_63], %76 {strides = array<i32>} : memref<1x4x4x32xf32, #tpu.memory_space<vmem>>, vector<1x1x4x32xf32>,
    %77 = vector.extract_strided_slice %64 {offsets = [18, 0], sizes = [4, 32], strides = [1, 1]} : vector<24x32xf32> to vector<4x32xf32>
    %c0_64 = arith.constant 0 : index
    %c3_65 = arith.constant 3 : index
    %c0_66 = arith.constant 0 : index
    %c0_67 = arith.constant 0 : index
    %78 = vector.load %arg4[%c0_64, %c3_65, %c0_66, %c0_67] : memref<1x4x4x32xf32, #tpu.memory_space<vmem>>, vector<1x1x4x32xf32>
    %79 = vector.shape_cast %78 : vector<1x1x4x32xf32> to vector<4x32xf32>
    %80 = vector.shape_cast %77 : vector<4x32xf32> to vector<1x1x4x32xf32>
    tpu.vector_store %arg4[%c0_64, %c3_65, %c0_66, %c0_67], %80 {strides = array<i32>} : memref<1x4x4x32xf32, #tpu.memory_space<vmem>>, vector<1x1x4x32xf32>,
    return
  }
  func.func @transform_0(%arg0: i32) -> (i32, i32, i32) {
    %c0_i32 = arith.constant 0 : i32
    %c0_i32_0 = arith.constant 0 : i32
    %c0_i32_1 = arith.constant 0 : i32
    return %arg0, %c0_i32, %c0_i32_0 : i32, i32, i32
  }
  func.func @transform_1(%arg0: i32) -> (i32, i32, i32) {
    %c0_i32 = arith.constant 0 : i32
    %c0_i32_0 = arith.constant 0 : i32
    %c0_i32_1 = arith.constant 0 : i32
    %c0_i32_2 = arith.constant 0 : i32
    return %c0_i32, %c0_i32_0, %c0_i32_1 : i32, i32, i32
  }
  func.func @transform_2(%arg0: i32) -> (i32, i32) {
    %c0_i32 = arith.constant 0 : i32
    %c0_i32_0 = arith.constant 0 : i32
    %c0_i32_1 = arith.constant 0 : i32
    return %c0_i32, %c0_i32_0 : i32, i32
  }
  func.func @transform_3(%arg0: i32) -> (i32, i32, i32, i32) {
    %c0_i32 = arith.constant 0 : i32
    %c0_i32_0 = arith.constant 0 : i32
    %c0_i32_1 = arith.constant 0 : i32
    %c0_i32_2 = arith.constant 0 : i32
    return %arg0, %c0_i32, %c0_i32_0, %c0_i32_1 : i32, i32, i32, i32
  }
}

module attributes {stable_mosaic.version = 11 : i64} {
  func.func @_vq_kernel(%arg0: memref<32x32xf32, #tpu.memory_space<vmem>>, %arg1: memref<128x32xf32, #tpu.memory_space<vmem>>, %arg2: memref<32x32xf32, #tpu.memory_space<vmem>>, %arg3: memref<1x1xf32, #tpu.memory_space<smem>>) attributes {dimension_semantics = [], scalar_prefetch = 0 : i64, scratch_operands = 0 : i64, tpu.core_type = #tpu.core_type<tc>} {
    %c0 = arith.constant 0 : index
    %c0_0 = arith.constant 0 : index
    %0 = vector.load %arg0[%c0, %c0_0] : memref<32x32xf32, #tpu.memory_space<vmem>>, vector<32x32xf32>
    %c0_1 = arith.constant 0 : index
    %c0_2 = arith.constant 0 : index
    %1 = vector.load %arg1[%c0_1, %c0_2] : memref<128x32xf32, #tpu.memory_space<vmem>>, vector<128x32xf32>
    %2 = arith.mulf %0, %0 : vector<32x32xf32>
    %cst = arith.constant dense<0.000000e+00> : vector<32xf32>
    %3 = vector.multi_reduction <add>, %2, %cst [1] : vector<32x32xf32> to vector<32xf32>
    %4 = vector.shape_cast %3 : vector<32xf32> to vector<32x1xf32>
    %5 = arith.mulf %1, %1 : vector<128x32xf32>
    %cst_3 = arith.constant dense<0.000000e+00> : vector<128xf32>
    %6 = vector.multi_reduction <add>, %5, %cst_3 [1] : vector<128x32xf32> to vector<128xf32>
    %7 = vector.shape_cast %6 : vector<128xf32> to vector<1x128xf32>
    %cst_4 = arith.constant dense<0.000000e+00> : vector<32x128xf32>
    %8 = tpu.matmul %0, %1, %cst_4 {dimension_numbers = #tpu.dot_dimension_numbers<[1], [1], [0], [0], [0, 0, 1, 0], [], []>} : vector<32x32xf32>, vector<128x32xf32>, vector<32x128xf32> -> vector<32x128xf32>
    %cst_5 = arith.constant 2.000000e+00 : f32
    %9 = vector.broadcast %cst_5 : f32 to vector<32x128xf32>
    %10 = arith.mulf %9, %8 : vector<32x128xf32>
    %11 = vector.broadcast %4 : vector<32x1xf32> to vector<32x128xf32>
    %12 = arith.subf %11, %10 : vector<32x128xf32>
    %13 = vector.broadcast %7 : vector<1x128xf32> to vector<32x128xf32>
    %14 = arith.addf %12, %13 : vector<32x128xf32>
    %15 = tpu.iota {dimensions = array<i32: 1>} : vector<32x128xi32>
    %c64_i32 = arith.constant 64 : i32
    %16 = vector.broadcast %c64_i32 : i32 to vector<32x128xi32>
    %17 = arith.cmpi slt, %15, %16 : vector<32x128xi32>
    %cst_6 = arith.constant 0x7F800000 : f32
    %18 = vector.broadcast %cst_6 : f32 to vector<32x128xf32>
    %19 = arith.select %17, %14, %18 : vector<32x128xi1>, vector<32x128xf32>
    %cst_7 = arith.constant dense<0x7F800000> : vector<32xf32>
    %20 = vector.multi_reduction <minimumf>, %19, %cst_7 [1] : vector<32x128xf32> to vector<32xf32>
    %21 = vector.shape_cast %20 : vector<32xf32> to vector<32x1xf32>
    %22 = vector.broadcast %21 : vector<32x1xf32> to vector<32x128xf32>
    %23 = arith.cmpf oeq, %19, %22 : vector<32x128xf32>
    %c128_i32 = arith.constant 128 : i32
    %24 = vector.broadcast %c128_i32 : i32 to vector<32x128xi32>
    %25 = arith.select %23, %15, %24 : vector<32x128xi1>, vector<32x128xi32>
    %cst_8 = arith.constant dense<2147483647> : vector<32xi32>
    %26 = vector.multi_reduction <minsi>, %25, %cst_8 [1] : vector<32x128xi32> to vector<32xi32>
    %27 = vector.shape_cast %26 : vector<32xi32> to vector<32x1xi32>
    %28 = vector.broadcast %27 : vector<32x1xi32> to vector<32x128xi32>
    %29 = arith.cmpi eq, %15, %28 : vector<32x128xi32>
    %30 = arith.extui %29 : vector<32x128xi1> to vector<32x128xi32>
    %31 = arith.sitofp %30 : vector<32x128xi32> to vector<32x128xf32>
    %cst_9 = arith.constant dense<0.000000e+00> : vector<32x32xf32>
    %32 = tpu.matmul %31, %1, %cst_9 {dimension_numbers = #tpu.dot_dimension_numbers<[1], [0], [0], [1], [0, 0, 1, 1], [], []>} : vector<32x128xf32>, vector<128x32xf32>, vector<32x32xf32> -> vector<32x32xf32>
    %c0_10 = arith.constant 0 : index
    %c0_11 = arith.constant 0 : index
    %33 = vector.load %arg2[%c0_10, %c0_11] : memref<32x32xf32, #tpu.memory_space<vmem>>, vector<32x32xf32>
    tpu.vector_store %arg2[%c0_10, %c0_11], %32 {strides = array<i32>} : memref<32x32xf32, #tpu.memory_space<vmem>>, vector<32x32xf32>,
    %34 = arith.subf %0, %32 : vector<32x32xf32>
    %35 = arith.mulf %34, %34 : vector<32x32xf32>
    %36 = vector.shape_cast %35 : vector<32x32xf32> to vector<1x32x32xf32>
    %cst_12 = arith.constant dense<0.000000e+00> : vector<1xf32>
    %37 = vector.multi_reduction <add>, %36, %cst_12 [1, 2] : vector<1x32x32xf32> to vector<1xf32>
    %38 = vector.shape_cast %37 : vector<1xf32> to vector<1x1x1xf32>
    %39 = vector.extract %38[0, 0, 0] : f32 from vector<1x1x1xf32>
    %c0_13 = arith.constant 0 : index
    %c0_14 = arith.constant 0 : index
    %40 = memref.load %arg3[%c0_13, %c0_14] : memref<1x1xf32, #tpu.memory_space<smem>>
    memref.store %39, %arg3[%c0_13, %c0_14] : memref<1x1xf32, #tpu.memory_space<smem>>
    return
  }
}

module attributes {stable_mosaic.version = 11 : i64} {
  func.func @_conv_kernel(%arg0: i32, %arg1: memref<1x102x32xf32, #tpu.memory_space<vmem>>, %arg2: memref<9x32x32xbf16, #tpu.memory_space<vmem>>, %arg3: memref<1x32xf32, #tpu.memory_space<vmem>>, %arg4: memref<1x8x8x32xf32, #tpu.memory_space<vmem>>) attributes {dimension_semantics = [#tpu.dimension_semantics<parallel>], iteration_bounds = array<i64: 2>, scalar_prefetch = 0 : i64, scratch_operands = 0 : i64, tpu.core_type = #tpu.core_type<tc>, window_params = [{transform_indices = @transform_0, window_bounds = array<i64: 1, 102, 32>}, {pipeline_mode = #tpu.pipeline_mode<synchronous>, transform_indices = @transform_1, window_bounds = array<i64: 9, 32, 32>}, {pipeline_mode = #tpu.pipeline_mode<synchronous>, transform_indices = @transform_2, window_bounds = array<i64: 1, 32>}, {transform_indices = @transform_3, window_bounds = array<i64: 1, 8, 8, 32>}]} {
    %c0 = arith.constant 0 : index
    %c0_0 = arith.constant 0 : index
    %c0_1 = arith.constant 0 : index
    %0 = vector.load %arg1[%c0, %c0_0, %c0_1] : memref<1x102x32xf32, #tpu.memory_space<vmem>>, vector<1x80x32xf32>
    %1 = vector.shape_cast %0 : vector<1x80x32xf32> to vector<80x32xf32>
    %2 = arith.truncf %1 : vector<80x32xf32> to vector<80x32xbf16>
    %c0_2 = arith.constant 0 : index
    %c0_3 = arith.constant 0 : index
    %c0_4 = arith.constant 0 : index
    %3 = vector.load %arg2[%c0_2, %c0_3, %c0_4] : memref<9x32x32xbf16, #tpu.memory_space<vmem>>, vector<1x32x32xbf16>
    %4 = vector.shape_cast %3 : vector<1x32x32xbf16> to vector<32x32xbf16>
    %cst = arith.constant dense<0.000000e+00> : vector<80x32xf32>
    %5 = tpu.matmul %2, %4, %cst {dimension_numbers = #tpu.dot_dimension_numbers<[1], [0], [0], [1], [0, 0, 1, 1], [], []>} : vector<80x32xbf16>, vector<32x32xbf16>, vector<80x32xf32> -> vector<80x32xf32>
    %c0_5 = arith.constant 0 : index
    %c1 = arith.constant 1 : index
    %c0_6 = arith.constant 0 : index
    %6 = vector.load %arg1[%c0_5, %c1, %c0_6] : memref<1x102x32xf32, #tpu.memory_space<vmem>>, vector<1x80x32xf32>
    %7 = vector.shape_cast %6 : vector<1x80x32xf32> to vector<80x32xf32>
    %8 = arith.truncf %7 : vector<80x32xf32> to vector<80x32xbf16>
    %c1_7 = arith.constant 1 : index
    %c0_8 = arith.constant 0 : index
    %c0_9 = arith.constant 0 : index
    %9 = vector.load %arg2[%c1_7, %c0_8, %c0_9] : memref<9x32x32xbf16, #tpu.memory_space<vmem>>, vector<1x32x32xbf16>
    %10 = vector.shape_cast %9 : vector<1x32x32xbf16> to vector<32x32xbf16>
    %cst_10 = arith.constant dense<0.000000e+00> : vector<80x32xf32>
    %11 = tpu.matmul %8, %10, %cst_10 {dimension_numbers = #tpu.dot_dimension_numbers<[1], [0], [0], [1], [0, 0, 1, 1], [], []>} : vector<80x32xbf16>, vector<32x32xbf16>, vector<80x32xf32> -> vector<80x32xf32>
    %12 = arith.addf %5, %11 : vector<80x32xf32>
    %c0_11 = arith.constant 0 : index
    %c2 = arith.constant 2 : index
    %c0_12 = arith.constant 0 : index
    %13 = vector.load %arg1[%c0_11, %c2, %c0_12] : memref<1x102x32xf32, #tpu.memory_space<vmem>>, vector<1x80x32xf32>
    %14 = vector.shape_cast %13 : vector<1x80x32xf32> to vector<80x32xf32>
    %15 = arith.truncf %14 : vector<80x32xf32> to vector<80x32xbf16>
    %c2_13 = arith.constant 2 : index
    %c0_14 = arith.constant 0 : index
    %c0_15 = arith.constant 0 : index
    %16 = vector.load %arg2[%c2_13, %c0_14, %c0_15] : memref<9x32x32xbf16, #tpu.memory_space<vmem>>, vector<1x32x32xbf16>
    %17 = vector.shape_cast %16 : vector<1x32x32xbf16> to vector<32x32xbf16>
    %cst_16 = arith.constant dense<0.000000e+00> : vector<80x32xf32>
    %18 = tpu.matmul %15, %17, %cst_16 {dimension_numbers = #tpu.dot_dimension_numbers<[1], [0], [0], [1], [0, 0, 1, 1], [], []>} : vector<80x32xbf16>, vector<32x32xbf16>, vector<80x32xf32> -> vector<80x32xf32>
    %19 = arith.addf %12, %18 : vector<80x32xf32>
    %c0_17 = arith.constant 0 : index
    %c10 = arith.constant 10 : index
    %c0_18 = arith.constant 0 : index
    %20 = vector.load %arg1[%c0_17, %c10, %c0_18] : memref<1x102x32xf32, #tpu.memory_space<vmem>>, vector<1x80x32xf32>
    %21 = vector.shape_cast %20 : vector<1x80x32xf32> to vector<80x32xf32>
    %22 = arith.truncf %21 : vector<80x32xf32> to vector<80x32xbf16>
    %c3 = arith.constant 3 : index
    %c0_19 = arith.constant 0 : index
    %c0_20 = arith.constant 0 : index
    %23 = vector.load %arg2[%c3, %c0_19, %c0_20] : memref<9x32x32xbf16, #tpu.memory_space<vmem>>, vector<1x32x32xbf16>
    %24 = vector.shape_cast %23 : vector<1x32x32xbf16> to vector<32x32xbf16>
    %cst_21 = arith.constant dense<0.000000e+00> : vector<80x32xf32>
    %25 = tpu.matmul %22, %24, %cst_21 {dimension_numbers = #tpu.dot_dimension_numbers<[1], [0], [0], [1], [0, 0, 1, 1], [], []>} : vector<80x32xbf16>, vector<32x32xbf16>, vector<80x32xf32> -> vector<80x32xf32>
    %26 = arith.addf %19, %25 : vector<80x32xf32>
    %c0_22 = arith.constant 0 : index
    %c11 = arith.constant 11 : index
    %c0_23 = arith.constant 0 : index
    %27 = vector.load %arg1[%c0_22, %c11, %c0_23] : memref<1x102x32xf32, #tpu.memory_space<vmem>>, vector<1x80x32xf32>
    %28 = vector.shape_cast %27 : vector<1x80x32xf32> to vector<80x32xf32>
    %29 = arith.truncf %28 : vector<80x32xf32> to vector<80x32xbf16>
    %c4 = arith.constant 4 : index
    %c0_24 = arith.constant 0 : index
    %c0_25 = arith.constant 0 : index
    %30 = vector.load %arg2[%c4, %c0_24, %c0_25] : memref<9x32x32xbf16, #tpu.memory_space<vmem>>, vector<1x32x32xbf16>
    %31 = vector.shape_cast %30 : vector<1x32x32xbf16> to vector<32x32xbf16>
    %cst_26 = arith.constant dense<0.000000e+00> : vector<80x32xf32>
    %32 = tpu.matmul %29, %31, %cst_26 {dimension_numbers = #tpu.dot_dimension_numbers<[1], [0], [0], [1], [0, 0, 1, 1], [], []>} : vector<80x32xbf16>, vector<32x32xbf16>, vector<80x32xf32> -> vector<80x32xf32>
    %33 = arith.addf %26, %32 : vector<80x32xf32>
    %c0_27 = arith.constant 0 : index
    %c12 = arith.constant 12 : index
    %c0_28 = arith.constant 0 : index
    %34 = vector.load %arg1[%c0_27, %c12, %c0_28] : memref<1x102x32xf32, #tpu.memory_space<vmem>>, vector<1x80x32xf32>
    %35 = vector.shape_cast %34 : vector<1x80x32xf32> to vector<80x32xf32>
    %36 = arith.truncf %35 : vector<80x32xf32> to vector<80x32xbf16>
    %c5 = arith.constant 5 : index
    %c0_29 = arith.constant 0 : index
    %c0_30 = arith.constant 0 : index
    %37 = vector.load %arg2[%c5, %c0_29, %c0_30] : memref<9x32x32xbf16, #tpu.memory_space<vmem>>, vector<1x32x32xbf16>
    %38 = vector.shape_cast %37 : vector<1x32x32xbf16> to vector<32x32xbf16>
    %cst_31 = arith.constant dense<0.000000e+00> : vector<80x32xf32>
    %39 = tpu.matmul %36, %38, %cst_31 {dimension_numbers = #tpu.dot_dimension_numbers<[1], [0], [0], [1], [0, 0, 1, 1], [], []>} : vector<80x32xbf16>, vector<32x32xbf16>, vector<80x32xf32> -> vector<80x32xf32>
    %40 = arith.addf %33, %39 : vector<80x32xf32>
    %c0_32 = arith.constant 0 : index
    %c20 = arith.constant 20 : index
    %c0_33 = arith.constant 0 : index
    %41 = vector.load %arg1[%c0_32, %c20, %c0_33] : memref<1x102x32xf32, #tpu.memory_space<vmem>>, vector<1x80x32xf32>
    %42 = vector.shape_cast %41 : vector<1x80x32xf32> to vector<80x32xf32>
    %43 = arith.truncf %42 : vector<80x32xf32> to vector<80x32xbf16>
    %c6 = arith.constant 6 : index
    %c0_34 = arith.constant 0 : index
    %c0_35 = arith.constant 0 : index
    %44 = vector.load %arg2[%c6, %c0_34, %c0_35] : memref<9x32x32xbf16, #tpu.memory_space<vmem>>, vector<1x32x32xbf16>
    %45 = vector.shape_cast %44 : vector<1x32x32xbf16> to vector<32x32xbf16>
    %cst_36 = arith.constant dense<0.000000e+00> : vector<80x32xf32>
    %46 = tpu.matmul %43, %45, %cst_36 {dimension_numbers = #tpu.dot_dimension_numbers<[1], [0], [0], [1], [0, 0, 1, 1], [], []>} : vector<80x32xbf16>, vector<32x32xbf16>, vector<80x32xf32> -> vector<80x32xf32>
    %47 = arith.addf %40, %46 : vector<80x32xf32>
    %c0_37 = arith.constant 0 : index
    %c21 = arith.constant 21 : index
    %c0_38 = arith.constant 0 : index
    %48 = vector.load %arg1[%c0_37, %c21, %c0_38] : memref<1x102x32xf32, #tpu.memory_space<vmem>>, vector<1x80x32xf32>
    %49 = vector.shape_cast %48 : vector<1x80x32xf32> to vector<80x32xf32>
    %50 = arith.truncf %49 : vector<80x32xf32> to vector<80x32xbf16>
    %c7 = arith.constant 7 : index
    %c0_39 = arith.constant 0 : index
    %c0_40 = arith.constant 0 : index
    %51 = vector.load %arg2[%c7, %c0_39, %c0_40] : memref<9x32x32xbf16, #tpu.memory_space<vmem>>, vector<1x32x32xbf16>
    %52 = vector.shape_cast %51 : vector<1x32x32xbf16> to vector<32x32xbf16>
    %cst_41 = arith.constant dense<0.000000e+00> : vector<80x32xf32>
    %53 = tpu.matmul %50, %52, %cst_41 {dimension_numbers = #tpu.dot_dimension_numbers<[1], [0], [0], [1], [0, 0, 1, 1], [], []>} : vector<80x32xbf16>, vector<32x32xbf16>, vector<80x32xf32> -> vector<80x32xf32>
    %54 = arith.addf %47, %53 : vector<80x32xf32>
    %c0_42 = arith.constant 0 : index
    %c22 = arith.constant 22 : index
    %c0_43 = arith.constant 0 : index
    %55 = vector.load %arg1[%c0_42, %c22, %c0_43] : memref<1x102x32xf32, #tpu.memory_space<vmem>>, vector<1x80x32xf32>
    %56 = vector.shape_cast %55 : vector<1x80x32xf32> to vector<80x32xf32>
    %57 = arith.truncf %56 : vector<80x32xf32> to vector<80x32xbf16>
    %c8 = arith.constant 8 : index
    %c0_44 = arith.constant 0 : index
    %c0_45 = arith.constant 0 : index
    %58 = vector.load %arg2[%c8, %c0_44, %c0_45] : memref<9x32x32xbf16, #tpu.memory_space<vmem>>, vector<1x32x32xbf16>
    %59 = vector.shape_cast %58 : vector<1x32x32xbf16> to vector<32x32xbf16>
    %cst_46 = arith.constant dense<0.000000e+00> : vector<80x32xf32>
    %60 = tpu.matmul %57, %59, %cst_46 {dimension_numbers = #tpu.dot_dimension_numbers<[1], [0], [0], [1], [0, 0, 1, 1], [], []>} : vector<80x32xbf16>, vector<32x32xbf16>, vector<80x32xf32> -> vector<80x32xf32>
    %61 = arith.addf %54, %60 : vector<80x32xf32>
    %c0_47 = arith.constant 0 : index
    %c0_48 = arith.constant 0 : index
    %62 = vector.load %arg3[%c0_47, %c0_48] : memref<1x32xf32, #tpu.memory_space<vmem>>, vector<1x32xf32>
    %63 = vector.broadcast %62 : vector<1x32xf32> to vector<80x32xf32>
    %64 = arith.addf %61, %63 : vector<80x32xf32>
    %cst_49 = arith.constant 0.000000e+00 : f32
    %65 = vector.broadcast %cst_49 : f32 to vector<80x32xf32>
    %66 = arith.maximumf %64, %65 : vector<80x32xf32>
    %67 = vector.extract_strided_slice %66 {offsets = [0, 0], sizes = [8, 32], strides = [1, 1]} : vector<80x32xf32> to vector<8x32xf32>
    %c0_50 = arith.constant 0 : index
    %c0_51 = arith.constant 0 : index
    %c0_52 = arith.constant 0 : index
    %c0_53 = arith.constant 0 : index
    %68 = vector.load %arg4[%c0_50, %c0_51, %c0_52, %c0_53] : memref<1x8x8x32xf32, #tpu.memory_space<vmem>>, vector<1x1x8x32xf32>
    %69 = vector.shape_cast %68 : vector<1x1x8x32xf32> to vector<8x32xf32>
    %70 = vector.shape_cast %67 : vector<8x32xf32> to vector<1x1x8x32xf32>
    tpu.vector_store %arg4[%c0_50, %c0_51, %c0_52, %c0_53], %70 {strides = array<i32>} : memref<1x8x8x32xf32, #tpu.memory_space<vmem>>, vector<1x1x8x32xf32>,
    %71 = vector.extract_strided_slice %66 {offsets = [10, 0], sizes = [8, 32], strides = [1, 1]} : vector<80x32xf32> to vector<8x32xf32>
    %c0_54 = arith.constant 0 : index
    %c1_55 = arith.constant 1 : index
    %c0_56 = arith.constant 0 : index
    %c0_57 = arith.constant 0 : index
    %72 = vector.load %arg4[%c0_54, %c1_55, %c0_56, %c0_57] : memref<1x8x8x32xf32, #tpu.memory_space<vmem>>, vector<1x1x8x32xf32>
    %73 = vector.shape_cast %72 : vector<1x1x8x32xf32> to vector<8x32xf32>
    %74 = vector.shape_cast %71 : vector<8x32xf32> to vector<1x1x8x32xf32>
    tpu.vector_store %arg4[%c0_54, %c1_55, %c0_56, %c0_57], %74 {strides = array<i32>} : memref<1x8x8x32xf32, #tpu.memory_space<vmem>>, vector<1x1x8x32xf32>,
    %75 = vector.extract_strided_slice %66 {offsets = [20, 0], sizes = [8, 32], strides = [1, 1]} : vector<80x32xf32> to vector<8x32xf32>
    %c0_58 = arith.constant 0 : index
    %c2_59 = arith.constant 2 : index
    %c0_60 = arith.constant 0 : index
    %c0_61 = arith.constant 0 : index
    %76 = vector.load %arg4[%c0_58, %c2_59, %c0_60, %c0_61] : memref<1x8x8x32xf32, #tpu.memory_space<vmem>>, vector<1x1x8x32xf32>
    %77 = vector.shape_cast %76 : vector<1x1x8x32xf32> to vector<8x32xf32>
    %78 = vector.shape_cast %75 : vector<8x32xf32> to vector<1x1x8x32xf32>
    tpu.vector_store %arg4[%c0_58, %c2_59, %c0_60, %c0_61], %78 {strides = array<i32>} : memref<1x8x8x32xf32, #tpu.memory_space<vmem>>, vector<1x1x8x32xf32>,
    %79 = vector.extract_strided_slice %66 {offsets = [30, 0], sizes = [8, 32], strides = [1, 1]} : vector<80x32xf32> to vector<8x32xf32>
    %c0_62 = arith.constant 0 : index
    %c3_63 = arith.constant 3 : index
    %c0_64 = arith.constant 0 : index
    %c0_65 = arith.constant 0 : index
    %80 = vector.load %arg4[%c0_62, %c3_63, %c0_64, %c0_65] : memref<1x8x8x32xf32, #tpu.memory_space<vmem>>, vector<1x1x8x32xf32>
    %81 = vector.shape_cast %80 : vector<1x1x8x32xf32> to vector<8x32xf32>
    %82 = vector.shape_cast %79 : vector<8x32xf32> to vector<1x1x8x32xf32>
    tpu.vector_store %arg4[%c0_62, %c3_63, %c0_64, %c0_65], %82 {strides = array<i32>} : memref<1x8x8x32xf32, #tpu.memory_space<vmem>>, vector<1x1x8x32xf32>,
    %83 = vector.extract_strided_slice %66 {offsets = [40, 0], sizes = [8, 32], strides = [1, 1]} : vector<80x32xf32> to vector<8x32xf32>
    %c0_66 = arith.constant 0 : index
    %c4_67 = arith.constant 4 : index
    %c0_68 = arith.constant 0 : index
    %c0_69 = arith.constant 0 : index
    %84 = vector.load %arg4[%c0_66, %c4_67, %c0_68, %c0_69] : memref<1x8x8x32xf32, #tpu.memory_space<vmem>>, vector<1x1x8x32xf32>
    %85 = vector.shape_cast %84 : vector<1x1x8x32xf32> to vector<8x32xf32>
    %86 = vector.shape_cast %83 : vector<8x32xf32> to vector<1x1x8x32xf32>
    tpu.vector_store %arg4[%c0_66, %c4_67, %c0_68, %c0_69], %86 {strides = array<i32>} : memref<1x8x8x32xf32, #tpu.memory_space<vmem>>, vector<1x1x8x32xf32>,
    %87 = vector.extract_strided_slice %66 {offsets = [50, 0], sizes = [8, 32], strides = [1, 1]} : vector<80x32xf32> to vector<8x32xf32>
    %c0_70 = arith.constant 0 : index
    %c5_71 = arith.constant 5 : index
    %c0_72 = arith.constant 0 : index
    %c0_73 = arith.constant 0 : index
    %88 = vector.load %arg4[%c0_70, %c5_71, %c0_72, %c0_73] : memref<1x8x8x32xf32, #tpu.memory_space<vmem>>, vector<1x1x8x32xf32>
    %89 = vector.shape_cast %88 : vector<1x1x8x32xf32> to vector<8x32xf32>
    %90 = vector.shape_cast %87 : vector<8x32xf32> to vector<1x1x8x32xf32>
    tpu.vector_store %arg4[%c0_70, %c5_71, %c0_72, %c0_73], %90 {strides = array<i32>} : memref<1x8x8x32xf32, #tpu.memory_space<vmem>>, vector<1x1x8x32xf32>,
    %91 = vector.extract_strided_slice %66 {offsets = [60, 0], sizes = [8, 32], strides = [1, 1]} : vector<80x32xf32> to vector<8x32xf32>
    %c0_74 = arith.constant 0 : index
    %c6_75 = arith.constant 6 : index
    %c0_76 = arith.constant 0 : index
    %c0_77 = arith.constant 0 : index
    %92 = vector.load %arg4[%c0_74, %c6_75, %c0_76, %c0_77] : memref<1x8x8x32xf32, #tpu.memory_space<vmem>>, vector<1x1x8x32xf32>
    %93 = vector.shape_cast %92 : vector<1x1x8x32xf32> to vector<8x32xf32>
    %94 = vector.shape_cast %91 : vector<8x32xf32> to vector<1x1x8x32xf32>
    tpu.vector_store %arg4[%c0_74, %c6_75, %c0_76, %c0_77], %94 {strides = array<i32>} : memref<1x8x8x32xf32, #tpu.memory_space<vmem>>, vector<1x1x8x32xf32>,
    %95 = vector.extract_strided_slice %66 {offsets = [70, 0], sizes = [8, 32], strides = [1, 1]} : vector<80x32xf32> to vector<8x32xf32>
    %c0_78 = arith.constant 0 : index
    %c7_79 = arith.constant 7 : index
    %c0_80 = arith.constant 0 : index
    %c0_81 = arith.constant 0 : index
    %96 = vector.load %arg4[%c0_78, %c7_79, %c0_80, %c0_81] : memref<1x8x8x32xf32, #tpu.memory_space<vmem>>, vector<1x1x8x32xf32>
    %97 = vector.shape_cast %96 : vector<1x1x8x32xf32> to vector<8x32xf32>
    %98 = vector.shape_cast %95 : vector<8x32xf32> to vector<1x1x8x32xf32>
    tpu.vector_store %arg4[%c0_78, %c7_79, %c0_80, %c0_81], %98 {strides = array<i32>} : memref<1x8x8x32xf32, #tpu.memory_space<vmem>>, vector<1x1x8x32xf32>,
    return
  }
  func.func @transform_0(%arg0: i32) -> (i32, i32, i32) {
    %c0_i32 = arith.constant 0 : i32
    %c0_i32_0 = arith.constant 0 : i32
    %c0_i32_1 = arith.constant 0 : i32
    return %arg0, %c0_i32, %c0_i32_0 : i32, i32, i32
  }
  func.func @transform_1(%arg0: i32) -> (i32, i32, i32) {
    %c0_i32 = arith.constant 0 : i32
    %c0_i32_0 = arith.constant 0 : i32
    %c0_i32_1 = arith.constant 0 : i32
    %c0_i32_2 = arith.constant 0 : i32
    return %c0_i32, %c0_i32_0, %c0_i32_1 : i32, i32, i32
  }
  func.func @transform_2(%arg0: i32) -> (i32, i32) {
    %c0_i32 = arith.constant 0 : i32
    %c0_i32_0 = arith.constant 0 : i32
    %c0_i32_1 = arith.constant 0 : i32
    return %c0_i32, %c0_i32_0 : i32, i32
  }
  func.func @transform_3(%arg0: i32) -> (i32, i32, i32, i32) {
    %c0_i32 = arith.constant 0 : i32
    %c0_i32_0 = arith.constant 0 : i32
    %c0_i32_1 = arith.constant 0 : i32
    %c0_i32_2 = arith.constant 0 : i32
    return %arg0, %c0_i32, %c0_i32_0, %c0_i32_1 : i32, i32, i32, i32
  }
}

module attributes {stable_mosaic.version = 11 : i64} {
  func.func @_sq_err_sum_kernel(%arg0: memref<32x128xf32, #tpu.memory_space<vmem>>, %arg1: memref<32x128xf32, #tpu.memory_space<vmem>>, %arg2: memref<1x1xf32, #tpu.memory_space<smem>>) attributes {dimension_semantics = [], scalar_prefetch = 0 : i64, scratch_operands = 0 : i64, tpu.core_type = #tpu.core_type<tc>} {
    %c0 = arith.constant 0 : index
    %c0_0 = arith.constant 0 : index
    %0 = vector.load %arg0[%c0, %c0_0] : memref<32x128xf32, #tpu.memory_space<vmem>>, vector<32x128xf32>
    %c0_1 = arith.constant 0 : index
    %c0_2 = arith.constant 0 : index
    %1 = vector.load %arg1[%c0_1, %c0_2] : memref<32x128xf32, #tpu.memory_space<vmem>>, vector<32x128xf32>
    %2 = arith.subf %0, %1 : vector<32x128xf32>
    %3 = arith.mulf %2, %2 : vector<32x128xf32>
    %4 = vector.shape_cast %3 : vector<32x128xf32> to vector<1x32x128xf32>
    %cst = arith.constant dense<0.000000e+00> : vector<1xf32>
    %5 = vector.multi_reduction <add>, %4, %cst [1, 2] : vector<1x32x128xf32> to vector<1xf32>
    %6 = vector.shape_cast %5 : vector<1xf32> to vector<1x1x1xf32>
    %7 = vector.extract %6[0, 0, 0] : f32 from vector<1x1x1xf32>
    %c0_3 = arith.constant 0 : index
    %c0_4 = arith.constant 0 : index
    %8 = memref.load %arg2[%c0_3, %c0_4] : memref<1x1xf32, #tpu.memory_space<smem>>
    memref.store %7, %arg2[%c0_3, %c0_4] : memref<1x1xf32, #tpu.memory_space<smem>>
    return
  }
}

module attributes {stable_mosaic.version = 11 : i64} {
  func.func @_conv_kernel(%arg0: i32, %arg1: memref<1x102x64xf32, #tpu.memory_space<vmem>>, %arg2: memref<9x64x32xbf16, #tpu.memory_space<vmem>>, %arg3: memref<1x32xf32, #tpu.memory_space<vmem>>, %arg4: memref<1x8x8x32xf32, #tpu.memory_space<vmem>>) attributes {dimension_semantics = [#tpu.dimension_semantics<parallel>], iteration_bounds = array<i64: 2>, scalar_prefetch = 0 : i64, scratch_operands = 0 : i64, tpu.core_type = #tpu.core_type<tc>, window_params = [{transform_indices = @transform_0, window_bounds = array<i64: 1, 102, 64>}, {pipeline_mode = #tpu.pipeline_mode<synchronous>, transform_indices = @transform_1, window_bounds = array<i64: 9, 64, 32>}, {pipeline_mode = #tpu.pipeline_mode<synchronous>, transform_indices = @transform_2, window_bounds = array<i64: 1, 32>}, {transform_indices = @transform_3, window_bounds = array<i64: 1, 8, 8, 32>}]} {
    %c0 = arith.constant 0 : index
    %c0_0 = arith.constant 0 : index
    %c0_1 = arith.constant 0 : index
    %0 = vector.load %arg1[%c0, %c0_0, %c0_1] : memref<1x102x64xf32, #tpu.memory_space<vmem>>, vector<1x80x64xf32>
    %1 = vector.shape_cast %0 : vector<1x80x64xf32> to vector<80x64xf32>
    %2 = arith.truncf %1 : vector<80x64xf32> to vector<80x64xbf16>
    %c0_2 = arith.constant 0 : index
    %c0_3 = arith.constant 0 : index
    %c0_4 = arith.constant 0 : index
    %3 = vector.load %arg2[%c0_2, %c0_3, %c0_4] : memref<9x64x32xbf16, #tpu.memory_space<vmem>>, vector<1x64x32xbf16>
    %4 = vector.shape_cast %3 : vector<1x64x32xbf16> to vector<64x32xbf16>
    %cst = arith.constant dense<0.000000e+00> : vector<80x32xf32>
    %5 = tpu.matmul %2, %4, %cst {dimension_numbers = #tpu.dot_dimension_numbers<[1], [0], [0], [1], [0, 0, 1, 1], [], []>} : vector<80x64xbf16>, vector<64x32xbf16>, vector<80x32xf32> -> vector<80x32xf32>
    %c0_5 = arith.constant 0 : index
    %c1 = arith.constant 1 : index
    %c0_6 = arith.constant 0 : index
    %6 = vector.load %arg1[%c0_5, %c1, %c0_6] : memref<1x102x64xf32, #tpu.memory_space<vmem>>, vector<1x80x64xf32>
    %7 = vector.shape_cast %6 : vector<1x80x64xf32> to vector<80x64xf32>
    %8 = arith.truncf %7 : vector<80x64xf32> to vector<80x64xbf16>
    %c1_7 = arith.constant 1 : index
    %c0_8 = arith.constant 0 : index
    %c0_9 = arith.constant 0 : index
    %9 = vector.load %arg2[%c1_7, %c0_8, %c0_9] : memref<9x64x32xbf16, #tpu.memory_space<vmem>>, vector<1x64x32xbf16>
    %10 = vector.shape_cast %9 : vector<1x64x32xbf16> to vector<64x32xbf16>
    %cst_10 = arith.constant dense<0.000000e+00> : vector<80x32xf32>
    %11 = tpu.matmul %8, %10, %cst_10 {dimension_numbers = #tpu.dot_dimension_numbers<[1], [0], [0], [1], [0, 0, 1, 1], [], []>} : vector<80x64xbf16>, vector<64x32xbf16>, vector<80x32xf32> -> vector<80x32xf32>
    %12 = arith.addf %5, %11 : vector<80x32xf32>
    %c0_11 = arith.constant 0 : index
    %c2 = arith.constant 2 : index
    %c0_12 = arith.constant 0 : index
    %13 = vector.load %arg1[%c0_11, %c2, %c0_12] : memref<1x102x64xf32, #tpu.memory_space<vmem>>, vector<1x80x64xf32>
    %14 = vector.shape_cast %13 : vector<1x80x64xf32> to vector<80x64xf32>
    %15 = arith.truncf %14 : vector<80x64xf32> to vector<80x64xbf16>
    %c2_13 = arith.constant 2 : index
    %c0_14 = arith.constant 0 : index
    %c0_15 = arith.constant 0 : index
    %16 = vector.load %arg2[%c2_13, %c0_14, %c0_15] : memref<9x64x32xbf16, #tpu.memory_space<vmem>>, vector<1x64x32xbf16>
    %17 = vector.shape_cast %16 : vector<1x64x32xbf16> to vector<64x32xbf16>
    %cst_16 = arith.constant dense<0.000000e+00> : vector<80x32xf32>
    %18 = tpu.matmul %15, %17, %cst_16 {dimension_numbers = #tpu.dot_dimension_numbers<[1], [0], [0], [1], [0, 0, 1, 1], [], []>} : vector<80x64xbf16>, vector<64x32xbf16>, vector<80x32xf32> -> vector<80x32xf32>
    %19 = arith.addf %12, %18 : vector<80x32xf32>
    %c0_17 = arith.constant 0 : index
    %c10 = arith.constant 10 : index
    %c0_18 = arith.constant 0 : index
    %20 = vector.load %arg1[%c0_17, %c10, %c0_18] : memref<1x102x64xf32, #tpu.memory_space<vmem>>, vector<1x80x64xf32>
    %21 = vector.shape_cast %20 : vector<1x80x64xf32> to vector<80x64xf32>
    %22 = arith.truncf %21 : vector<80x64xf32> to vector<80x64xbf16>
    %c3 = arith.constant 3 : index
    %c0_19 = arith.constant 0 : index
    %c0_20 = arith.constant 0 : index
    %23 = vector.load %arg2[%c3, %c0_19, %c0_20] : memref<9x64x32xbf16, #tpu.memory_space<vmem>>, vector<1x64x32xbf16>
    %24 = vector.shape_cast %23 : vector<1x64x32xbf16> to vector<64x32xbf16>
    %cst_21 = arith.constant dense<0.000000e+00> : vector<80x32xf32>
    %25 = tpu.matmul %22, %24, %cst_21 {dimension_numbers = #tpu.dot_dimension_numbers<[1], [0], [0], [1], [0, 0, 1, 1], [], []>} : vector<80x64xbf16>, vector<64x32xbf16>, vector<80x32xf32> -> vector<80x32xf32>
    %26 = arith.addf %19, %25 : vector<80x32xf32>
    %c0_22 = arith.constant 0 : index
    %c11 = arith.constant 11 : index
    %c0_23 = arith.constant 0 : index
    %27 = vector.load %arg1[%c0_22, %c11, %c0_23] : memref<1x102x64xf32, #tpu.memory_space<vmem>>, vector<1x80x64xf32>
    %28 = vector.shape_cast %27 : vector<1x80x64xf32> to vector<80x64xf32>
    %29 = arith.truncf %28 : vector<80x64xf32> to vector<80x64xbf16>
    %c4 = arith.constant 4 : index
    %c0_24 = arith.constant 0 : index
    %c0_25 = arith.constant 0 : index
    %30 = vector.load %arg2[%c4, %c0_24, %c0_25] : memref<9x64x32xbf16, #tpu.memory_space<vmem>>, vector<1x64x32xbf16>
    %31 = vector.shape_cast %30 : vector<1x64x32xbf16> to vector<64x32xbf16>
    %cst_26 = arith.constant dense<0.000000e+00> : vector<80x32xf32>
    %32 = tpu.matmul %29, %31, %cst_26 {dimension_numbers = #tpu.dot_dimension_numbers<[1], [0], [0], [1], [0, 0, 1, 1], [], []>} : vector<80x64xbf16>, vector<64x32xbf16>, vector<80x32xf32> -> vector<80x32xf32>
    %33 = arith.addf %26, %32 : vector<80x32xf32>
    %c0_27 = arith.constant 0 : index
    %c12 = arith.constant 12 : index
    %c0_28 = arith.constant 0 : index
    %34 = vector.load %arg1[%c0_27, %c12, %c0_28] : memref<1x102x64xf32, #tpu.memory_space<vmem>>, vector<1x80x64xf32>
    %35 = vector.shape_cast %34 : vector<1x80x64xf32> to vector<80x64xf32>
    %36 = arith.truncf %35 : vector<80x64xf32> to vector<80x64xbf16>
    %c5 = arith.constant 5 : index
    %c0_29 = arith.constant 0 : index
    %c0_30 = arith.constant 0 : index
    %37 = vector.load %arg2[%c5, %c0_29, %c0_30] : memref<9x64x32xbf16, #tpu.memory_space<vmem>>, vector<1x64x32xbf16>
    %38 = vector.shape_cast %37 : vector<1x64x32xbf16> to vector<64x32xbf16>
    %cst_31 = arith.constant dense<0.000000e+00> : vector<80x32xf32>
    %39 = tpu.matmul %36, %38, %cst_31 {dimension_numbers = #tpu.dot_dimension_numbers<[1], [0], [0], [1], [0, 0, 1, 1], [], []>} : vector<80x64xbf16>, vector<64x32xbf16>, vector<80x32xf32> -> vector<80x32xf32>
    %40 = arith.addf %33, %39 : vector<80x32xf32>
    %c0_32 = arith.constant 0 : index
    %c20 = arith.constant 20 : index
    %c0_33 = arith.constant 0 : index
    %41 = vector.load %arg1[%c0_32, %c20, %c0_33] : memref<1x102x64xf32, #tpu.memory_space<vmem>>, vector<1x80x64xf32>
    %42 = vector.shape_cast %41 : vector<1x80x64xf32> to vector<80x64xf32>
    %43 = arith.truncf %42 : vector<80x64xf32> to vector<80x64xbf16>
    %c6 = arith.constant 6 : index
    %c0_34 = arith.constant 0 : index
    %c0_35 = arith.constant 0 : index
    %44 = vector.load %arg2[%c6, %c0_34, %c0_35] : memref<9x64x32xbf16, #tpu.memory_space<vmem>>, vector<1x64x32xbf16>
    %45 = vector.shape_cast %44 : vector<1x64x32xbf16> to vector<64x32xbf16>
    %cst_36 = arith.constant dense<0.000000e+00> : vector<80x32xf32>
    %46 = tpu.matmul %43, %45, %cst_36 {dimension_numbers = #tpu.dot_dimension_numbers<[1], [0], [0], [1], [0, 0, 1, 1], [], []>} : vector<80x64xbf16>, vector<64x32xbf16>, vector<80x32xf32> -> vector<80x32xf32>
    %47 = arith.addf %40, %46 : vector<80x32xf32>
    %c0_37 = arith.constant 0 : index
    %c21 = arith.constant 21 : index
    %c0_38 = arith.constant 0 : index
    %48 = vector.load %arg1[%c0_37, %c21, %c0_38] : memref<1x102x64xf32, #tpu.memory_space<vmem>>, vector<1x80x64xf32>
    %49 = vector.shape_cast %48 : vector<1x80x64xf32> to vector<80x64xf32>
    %50 = arith.truncf %49 : vector<80x64xf32> to vector<80x64xbf16>
    %c7 = arith.constant 7 : index
    %c0_39 = arith.constant 0 : index
    %c0_40 = arith.constant 0 : index
    %51 = vector.load %arg2[%c7, %c0_39, %c0_40] : memref<9x64x32xbf16, #tpu.memory_space<vmem>>, vector<1x64x32xbf16>
    %52 = vector.shape_cast %51 : vector<1x64x32xbf16> to vector<64x32xbf16>
    %cst_41 = arith.constant dense<0.000000e+00> : vector<80x32xf32>
    %53 = tpu.matmul %50, %52, %cst_41 {dimension_numbers = #tpu.dot_dimension_numbers<[1], [0], [0], [1], [0, 0, 1, 1], [], []>} : vector<80x64xbf16>, vector<64x32xbf16>, vector<80x32xf32> -> vector<80x32xf32>
    %54 = arith.addf %47, %53 : vector<80x32xf32>
    %c0_42 = arith.constant 0 : index
    %c22 = arith.constant 22 : index
    %c0_43 = arith.constant 0 : index
    %55 = vector.load %arg1[%c0_42, %c22, %c0_43] : memref<1x102x64xf32, #tpu.memory_space<vmem>>, vector<1x80x64xf32>
    %56 = vector.shape_cast %55 : vector<1x80x64xf32> to vector<80x64xf32>
    %57 = arith.truncf %56 : vector<80x64xf32> to vector<80x64xbf16>
    %c8 = arith.constant 8 : index
    %c0_44 = arith.constant 0 : index
    %c0_45 = arith.constant 0 : index
    %58 = vector.load %arg2[%c8, %c0_44, %c0_45] : memref<9x64x32xbf16, #tpu.memory_space<vmem>>, vector<1x64x32xbf16>
    %59 = vector.shape_cast %58 : vector<1x64x32xbf16> to vector<64x32xbf16>
    %cst_46 = arith.constant dense<0.000000e+00> : vector<80x32xf32>
    %60 = tpu.matmul %57, %59, %cst_46 {dimension_numbers = #tpu.dot_dimension_numbers<[1], [0], [0], [1], [0, 0, 1, 1], [], []>} : vector<80x64xbf16>, vector<64x32xbf16>, vector<80x32xf32> -> vector<80x32xf32>
    %61 = arith.addf %54, %60 : vector<80x32xf32>
    %c0_47 = arith.constant 0 : index
    %c0_48 = arith.constant 0 : index
    %62 = vector.load %arg3[%c0_47, %c0_48] : memref<1x32xf32, #tpu.memory_space<vmem>>, vector<1x32xf32>
    %63 = vector.broadcast %62 : vector<1x32xf32> to vector<80x32xf32>
    %64 = arith.addf %61, %63 : vector<80x32xf32>
    %cst_49 = arith.constant 0.000000e+00 : f32
    %65 = vector.broadcast %cst_49 : f32 to vector<80x32xf32>
    %66 = arith.maximumf %64, %65 : vector<80x32xf32>
    %67 = vector.extract_strided_slice %66 {offsets = [0, 0], sizes = [8, 32], strides = [1, 1]} : vector<80x32xf32> to vector<8x32xf32>
    %c0_50 = arith.constant 0 : index
    %c0_51 = arith.constant 0 : index
    %c0_52 = arith.constant 0 : index
    %c0_53 = arith.constant 0 : index
    %68 = vector.load %arg4[%c0_50, %c0_51, %c0_52, %c0_53] : memref<1x8x8x32xf32, #tpu.memory_space<vmem>>, vector<1x1x8x32xf32>
    %69 = vector.shape_cast %68 : vector<1x1x8x32xf32> to vector<8x32xf32>
    %70 = vector.shape_cast %67 : vector<8x32xf32> to vector<1x1x8x32xf32>
    tpu.vector_store %arg4[%c0_50, %c0_51, %c0_52, %c0_53], %70 {strides = array<i32>} : memref<1x8x8x32xf32, #tpu.memory_space<vmem>>, vector<1x1x8x32xf32>,
    %71 = vector.extract_strided_slice %66 {offsets = [10, 0], sizes = [8, 32], strides = [1, 1]} : vector<80x32xf32> to vector<8x32xf32>
    %c0_54 = arith.constant 0 : index
    %c1_55 = arith.constant 1 : index
    %c0_56 = arith.constant 0 : index
    %c0_57 = arith.constant 0 : index
    %72 = vector.load %arg4[%c0_54, %c1_55, %c0_56, %c0_57] : memref<1x8x8x32xf32, #tpu.memory_space<vmem>>, vector<1x1x8x32xf32>
    %73 = vector.shape_cast %72 : vector<1x1x8x32xf32> to vector<8x32xf32>
    %74 = vector.shape_cast %71 : vector<8x32xf32> to vector<1x1x8x32xf32>
    tpu.vector_store %arg4[%c0_54, %c1_55, %c0_56, %c0_57], %74 {strides = array<i32>} : memref<1x8x8x32xf32, #tpu.memory_space<vmem>>, vector<1x1x8x32xf32>,
    %75 = vector.extract_strided_slice %66 {offsets = [20, 0], sizes = [8, 32], strides = [1, 1]} : vector<80x32xf32> to vector<8x32xf32>
    %c0_58 = arith.constant 0 : index
    %c2_59 = arith.constant 2 : index
    %c0_60 = arith.constant 0 : index
    %c0_61 = arith.constant 0 : index
    %76 = vector.load %arg4[%c0_58, %c2_59, %c0_60, %c0_61] : memref<1x8x8x32xf32, #tpu.memory_space<vmem>>, vector<1x1x8x32xf32>
    %77 = vector.shape_cast %76 : vector<1x1x8x32xf32> to vector<8x32xf32>
    %78 = vector.shape_cast %75 : vector<8x32xf32> to vector<1x1x8x32xf32>
    tpu.vector_store %arg4[%c0_58, %c2_59, %c0_60, %c0_61], %78 {strides = array<i32>} : memref<1x8x8x32xf32, #tpu.memory_space<vmem>>, vector<1x1x8x32xf32>,
    %79 = vector.extract_strided_slice %66 {offsets = [30, 0], sizes = [8, 32], strides = [1, 1]} : vector<80x32xf32> to vector<8x32xf32>
    %c0_62 = arith.constant 0 : index
    %c3_63 = arith.constant 3 : index
    %c0_64 = arith.constant 0 : index
    %c0_65 = arith.constant 0 : index
    %80 = vector.load %arg4[%c0_62, %c3_63, %c0_64, %c0_65] : memref<1x8x8x32xf32, #tpu.memory_space<vmem>>, vector<1x1x8x32xf32>
    %81 = vector.shape_cast %80 : vector<1x1x8x32xf32> to vector<8x32xf32>
    %82 = vector.shape_cast %79 : vector<8x32xf32> to vector<1x1x8x32xf32>
    tpu.vector_store %arg4[%c0_62, %c3_63, %c0_64, %c0_65], %82 {strides = array<i32>} : memref<1x8x8x32xf32, #tpu.memory_space<vmem>>, vector<1x1x8x32xf32>,
    %83 = vector.extract_strided_slice %66 {offsets = [40, 0], sizes = [8, 32], strides = [1, 1]} : vector<80x32xf32> to vector<8x32xf32>
    %c0_66 = arith.constant 0 : index
    %c4_67 = arith.constant 4 : index
    %c0_68 = arith.constant 0 : index
    %c0_69 = arith.constant 0 : index
    %84 = vector.load %arg4[%c0_66, %c4_67, %c0_68, %c0_69] : memref<1x8x8x32xf32, #tpu.memory_space<vmem>>, vector<1x1x8x32xf32>
    %85 = vector.shape_cast %84 : vector<1x1x8x32xf32> to vector<8x32xf32>
    %86 = vector.shape_cast %83 : vector<8x32xf32> to vector<1x1x8x32xf32>
    tpu.vector_store %arg4[%c0_66, %c4_67, %c0_68, %c0_69], %86 {strides = array<i32>} : memref<1x8x8x32xf32, #tpu.memory_space<vmem>>, vector<1x1x8x32xf32>,
    %87 = vector.extract_strided_slice %66 {offsets = [50, 0], sizes = [8, 32], strides = [1, 1]} : vector<80x32xf32> to vector<8x32xf32>
    %c0_70 = arith.constant 0 : index
    %c5_71 = arith.constant 5 : index
    %c0_72 = arith.constant 0 : index
    %c0_73 = arith.constant 0 : index
    %88 = vector.load %arg4[%c0_70, %c5_71, %c0_72, %c0_73] : memref<1x8x8x32xf32, #tpu.memory_space<vmem>>, vector<1x1x8x32xf32>
    %89 = vector.shape_cast %88 : vector<1x1x8x32xf32> to vector<8x32xf32>
    %90 = vector.shape_cast %87 : vector<8x32xf32> to vector<1x1x8x32xf32>
    tpu.vector_store %arg4[%c0_70, %c5_71, %c0_72, %c0_73], %90 {strides = array<i32>} : memref<1x8x8x32xf32, #tpu.memory_space<vmem>>, vector<1x1x8x32xf32>,
    %91 = vector.extract_strided_slice %66 {offsets = [60, 0], sizes = [8, 32], strides = [1, 1]} : vector<80x32xf32> to vector<8x32xf32>
    %c0_74 = arith.constant 0 : index
    %c6_75 = arith.constant 6 : index
    %c0_76 = arith.constant 0 : index
    %c0_77 = arith.constant 0 : index
    %92 = vector.load %arg4[%c0_74, %c6_75, %c0_76, %c0_77] : memref<1x8x8x32xf32, #tpu.memory_space<vmem>>, vector<1x1x8x32xf32>
    %93 = vector.shape_cast %92 : vector<1x1x8x32xf32> to vector<8x32xf32>
    %94 = vector.shape_cast %91 : vector<8x32xf32> to vector<1x1x8x32xf32>
    tpu.vector_store %arg4[%c0_74, %c6_75, %c0_76, %c0_77], %94 {strides = array<i32>} : memref<1x8x8x32xf32, #tpu.memory_space<vmem>>, vector<1x1x8x32xf32>,
    %95 = vector.extract_strided_slice %66 {offsets = [70, 0], sizes = [8, 32], strides = [1, 1]} : vector<80x32xf32> to vector<8x32xf32>
    %c0_78 = arith.constant 0 : index
    %c7_79 = arith.constant 7 : index
    %c0_80 = arith.constant 0 : index
    %c0_81 = arith.constant 0 : index
    %96 = vector.load %arg4[%c0_78, %c7_79, %c0_80, %c0_81] : memref<1x8x8x32xf32, #tpu.memory_space<vmem>>, vector<1x1x8x32xf32>
    %97 = vector.shape_cast %96 : vector<1x1x8x32xf32> to vector<8x32xf32>
    %98 = vector.shape_cast %95 : vector<8x32xf32> to vector<1x1x8x32xf32>
    tpu.vector_store %arg4[%c0_78, %c7_79, %c0_80, %c0_81], %98 {strides = array<i32>} : memref<1x8x8x32xf32, #tpu.memory_space<vmem>>, vector<1x1x8x32xf32>,
    return
  }
  func.func @transform_0(%arg0: i32) -> (i32, i32, i32) {
    %c0_i32 = arith.constant 0 : i32
    %c0_i32_0 = arith.constant 0 : i32
    %c0_i32_1 = arith.constant 0 : i32
    return %arg0, %c0_i32, %c0_i32_0 : i32, i32, i32
  }
  func.func @transform_1(%arg0: i32) -> (i32, i32, i32) {
    %c0_i32 = arith.constant 0 : i32
    %c0_i32_0 = arith.constant 0 : i32
    %c0_i32_1 = arith.constant 0 : i32
    %c0_i32_2 = arith.constant 0 : i32
    return %c0_i32, %c0_i32_0, %c0_i32_1 : i32, i32, i32
  }
  func.func @transform_2(%arg0: i32) -> (i32, i32) {
    %c0_i32 = arith.constant 0 : i32
    %c0_i32_0 = arith.constant 0 : i32
    %c0_i32_1 = arith.constant 0 : i32
    return %c0_i32, %c0_i32_0 : i32, i32
  }
  func.func @transform_3(%arg0: i32) -> (i32, i32, i32, i32) {
    %c0_i32 = arith.constant 0 : i32
    %c0_i32_0 = arith.constant 0 : i32
    %c0_i32_1 = arith.constant 0 : i32
    %c0_i32_2 = arith.constant 0 : i32
    return %arg0, %c0_i32, %c0_i32_0, %c0_i32_1 : i32, i32, i32, i32
  }
}

module attributes {stable_mosaic.version = 11 : i64} {
  func.func @_conv_kernel(%arg0: i32, %arg1: memref<1x326x32xf32, #tpu.memory_space<vmem>>, %arg2: memref<9x32x4xbf16, #tpu.memory_space<vmem>>, %arg3: memref<1x4xf32, #tpu.memory_space<vmem>>, %arg4: memref<1x16x16x4xf32, #tpu.memory_space<vmem>>) attributes {dimension_semantics = [#tpu.dimension_semantics<parallel>], iteration_bounds = array<i64: 2>, scalar_prefetch = 0 : i64, scratch_operands = 0 : i64, tpu.core_type = #tpu.core_type<tc>, window_params = [{transform_indices = @transform_0, window_bounds = array<i64: 1, 326, 32>}, {pipeline_mode = #tpu.pipeline_mode<synchronous>, transform_indices = @transform_1, window_bounds = array<i64: 9, 32, 4>}, {pipeline_mode = #tpu.pipeline_mode<synchronous>, transform_indices = @transform_2, window_bounds = array<i64: 1, 4>}, {transform_indices = @transform_3, window_bounds = array<i64: 1, 16, 16, 4>}]} {
    %c0 = arith.constant 0 : index
    %c0_0 = arith.constant 0 : index
    %c0_1 = arith.constant 0 : index
    %0 = vector.load %arg1[%c0, %c0_0, %c0_1] : memref<1x326x32xf32, #tpu.memory_space<vmem>>, vector<1x288x32xf32>
    %1 = vector.shape_cast %0 : vector<1x288x32xf32> to vector<288x32xf32>
    %2 = arith.truncf %1 : vector<288x32xf32> to vector<288x32xbf16>
    %c0_2 = arith.constant 0 : index
    %c0_3 = arith.constant 0 : index
    %c0_4 = arith.constant 0 : index
    %3 = vector.load %arg2[%c0_2, %c0_3, %c0_4] : memref<9x32x4xbf16, #tpu.memory_space<vmem>>, vector<1x32x4xbf16>
    %4 = vector.shape_cast %3 : vector<1x32x4xbf16> to vector<32x4xbf16>
    %cst = arith.constant dense<0.000000e+00> : vector<288x4xf32>
    %5 = tpu.matmul %2, %4, %cst {dimension_numbers = #tpu.dot_dimension_numbers<[1], [0], [0], [1], [0, 0, 1, 1], [], []>} : vector<288x32xbf16>, vector<32x4xbf16>, vector<288x4xf32> -> vector<288x4xf32>
    %c0_5 = arith.constant 0 : index
    %c1 = arith.constant 1 : index
    %c0_6 = arith.constant 0 : index
    %6 = vector.load %arg1[%c0_5, %c1, %c0_6] : memref<1x326x32xf32, #tpu.memory_space<vmem>>, vector<1x288x32xf32>
    %7 = vector.shape_cast %6 : vector<1x288x32xf32> to vector<288x32xf32>
    %8 = arith.truncf %7 : vector<288x32xf32> to vector<288x32xbf16>
    %c1_7 = arith.constant 1 : index
    %c0_8 = arith.constant 0 : index
    %c0_9 = arith.constant 0 : index
    %9 = vector.load %arg2[%c1_7, %c0_8, %c0_9] : memref<9x32x4xbf16, #tpu.memory_space<vmem>>, vector<1x32x4xbf16>
    %10 = vector.shape_cast %9 : vector<1x32x4xbf16> to vector<32x4xbf16>
    %cst_10 = arith.constant dense<0.000000e+00> : vector<288x4xf32>
    %11 = tpu.matmul %8, %10, %cst_10 {dimension_numbers = #tpu.dot_dimension_numbers<[1], [0], [0], [1], [0, 0, 1, 1], [], []>} : vector<288x32xbf16>, vector<32x4xbf16>, vector<288x4xf32> -> vector<288x4xf32>
    %12 = arith.addf %5, %11 : vector<288x4xf32>
    %c0_11 = arith.constant 0 : index
    %c2 = arith.constant 2 : index
    %c0_12 = arith.constant 0 : index
    %13 = vector.load %arg1[%c0_11, %c2, %c0_12] : memref<1x326x32xf32, #tpu.memory_space<vmem>>, vector<1x288x32xf32>
    %14 = vector.shape_cast %13 : vector<1x288x32xf32> to vector<288x32xf32>
    %15 = arith.truncf %14 : vector<288x32xf32> to vector<288x32xbf16>
    %c2_13 = arith.constant 2 : index
    %c0_14 = arith.constant 0 : index
    %c0_15 = arith.constant 0 : index
    %16 = vector.load %arg2[%c2_13, %c0_14, %c0_15] : memref<9x32x4xbf16, #tpu.memory_space<vmem>>, vector<1x32x4xbf16>
    %17 = vector.shape_cast %16 : vector<1x32x4xbf16> to vector<32x4xbf16>
    %cst_16 = arith.constant dense<0.000000e+00> : vector<288x4xf32>
    %18 = tpu.matmul %15, %17, %cst_16 {dimension_numbers = #tpu.dot_dimension_numbers<[1], [0], [0], [1], [0, 0, 1, 1], [], []>} : vector<288x32xbf16>, vector<32x4xbf16>, vector<288x4xf32> -> vector<288x4xf32>
    %19 = arith.addf %12, %18 : vector<288x4xf32>
    %c0_17 = arith.constant 0 : index
    %c18 = arith.constant 18 : index
    %c0_18 = arith.constant 0 : index
    %20 = vector.load %arg1[%c0_17, %c18, %c0_18] : memref<1x326x32xf32, #tpu.memory_space<vmem>>, vector<1x288x32xf32>
    %21 = vector.shape_cast %20 : vector<1x288x32xf32> to vector<288x32xf32>
    %22 = arith.truncf %21 : vector<288x32xf32> to vector<288x32xbf16>
    %c3 = arith.constant 3 : index
    %c0_19 = arith.constant 0 : index
    %c0_20 = arith.constant 0 : index
    %23 = vector.load %arg2[%c3, %c0_19, %c0_20] : memref<9x32x4xbf16, #tpu.memory_space<vmem>>, vector<1x32x4xbf16>
    %24 = vector.shape_cast %23 : vector<1x32x4xbf16> to vector<32x4xbf16>
    %cst_21 = arith.constant dense<0.000000e+00> : vector<288x4xf32>
    %25 = tpu.matmul %22, %24, %cst_21 {dimension_numbers = #tpu.dot_dimension_numbers<[1], [0], [0], [1], [0, 0, 1, 1], [], []>} : vector<288x32xbf16>, vector<32x4xbf16>, vector<288x4xf32> -> vector<288x4xf32>
    %26 = arith.addf %19, %25 : vector<288x4xf32>
    %c0_22 = arith.constant 0 : index
    %c19 = arith.constant 19 : index
    %c0_23 = arith.constant 0 : index
    %27 = vector.load %arg1[%c0_22, %c19, %c0_23] : memref<1x326x32xf32, #tpu.memory_space<vmem>>, vector<1x288x32xf32>
    %28 = vector.shape_cast %27 : vector<1x288x32xf32> to vector<288x32xf32>
    %29 = arith.truncf %28 : vector<288x32xf32> to vector<288x32xbf16>
    %c4 = arith.constant 4 : index
    %c0_24 = arith.constant 0 : index
    %c0_25 = arith.constant 0 : index
    %30 = vector.load %arg2[%c4, %c0_24, %c0_25] : memref<9x32x4xbf16, #tpu.memory_space<vmem>>, vector<1x32x4xbf16>
    %31 = vector.shape_cast %30 : vector<1x32x4xbf16> to vector<32x4xbf16>
    %cst_26 = arith.constant dense<0.000000e+00> : vector<288x4xf32>
    %32 = tpu.matmul %29, %31, %cst_26 {dimension_numbers = #tpu.dot_dimension_numbers<[1], [0], [0], [1], [0, 0, 1, 1], [], []>} : vector<288x32xbf16>, vector<32x4xbf16>, vector<288x4xf32> -> vector<288x4xf32>
    %33 = arith.addf %26, %32 : vector<288x4xf32>
    %c0_27 = arith.constant 0 : index
    %c20 = arith.constant 20 : index
    %c0_28 = arith.constant 0 : index
    %34 = vector.load %arg1[%c0_27, %c20, %c0_28] : memref<1x326x32xf32, #tpu.memory_space<vmem>>, vector<1x288x32xf32>
    %35 = vector.shape_cast %34 : vector<1x288x32xf32> to vector<288x32xf32>
    %36 = arith.truncf %35 : vector<288x32xf32> to vector<288x32xbf16>
    %c5 = arith.constant 5 : index
    %c0_29 = arith.constant 0 : index
    %c0_30 = arith.constant 0 : index
    %37 = vector.load %arg2[%c5, %c0_29, %c0_30] : memref<9x32x4xbf16, #tpu.memory_space<vmem>>, vector<1x32x4xbf16>
    %38 = vector.shape_cast %37 : vector<1x32x4xbf16> to vector<32x4xbf16>
    %cst_31 = arith.constant dense<0.000000e+00> : vector<288x4xf32>
    %39 = tpu.matmul %36, %38, %cst_31 {dimension_numbers = #tpu.dot_dimension_numbers<[1], [0], [0], [1], [0, 0, 1, 1], [], []>} : vector<288x32xbf16>, vector<32x4xbf16>, vector<288x4xf32> -> vector<288x4xf32>
    %40 = arith.addf %33, %39 : vector<288x4xf32>
    %c0_32 = arith.constant 0 : index
    %c36 = arith.constant 36 : index
    %c0_33 = arith.constant 0 : index
    %41 = vector.load %arg1[%c0_32, %c36, %c0_33] : memref<1x326x32xf32, #tpu.memory_space<vmem>>, vector<1x288x32xf32>
    %42 = vector.shape_cast %41 : vector<1x288x32xf32> to vector<288x32xf32>
    %43 = arith.truncf %42 : vector<288x32xf32> to vector<288x32xbf16>
    %c6 = arith.constant 6 : index
    %c0_34 = arith.constant 0 : index
    %c0_35 = arith.constant 0 : index
    %44 = vector.load %arg2[%c6, %c0_34, %c0_35] : memref<9x32x4xbf16, #tpu.memory_space<vmem>>, vector<1x32x4xbf16>
    %45 = vector.shape_cast %44 : vector<1x32x4xbf16> to vector<32x4xbf16>
    %cst_36 = arith.constant dense<0.000000e+00> : vector<288x4xf32>
    %46 = tpu.matmul %43, %45, %cst_36 {dimension_numbers = #tpu.dot_dimension_numbers<[1], [0], [0], [1], [0, 0, 1, 1], [], []>} : vector<288x32xbf16>, vector<32x4xbf16>, vector<288x4xf32> -> vector<288x4xf32>
    %47 = arith.addf %40, %46 : vector<288x4xf32>
    %c0_37 = arith.constant 0 : index
    %c37 = arith.constant 37 : index
    %c0_38 = arith.constant 0 : index
    %48 = vector.load %arg1[%c0_37, %c37, %c0_38] : memref<1x326x32xf32, #tpu.memory_space<vmem>>, vector<1x288x32xf32>
    %49 = vector.shape_cast %48 : vector<1x288x32xf32> to vector<288x32xf32>
    %50 = arith.truncf %49 : vector<288x32xf32> to vector<288x32xbf16>
    %c7 = arith.constant 7 : index
    %c0_39 = arith.constant 0 : index
    %c0_40 = arith.constant 0 : index
    %51 = vector.load %arg2[%c7, %c0_39, %c0_40] : memref<9x32x4xbf16, #tpu.memory_space<vmem>>, vector<1x32x4xbf16>
    %52 = vector.shape_cast %51 : vector<1x32x4xbf16> to vector<32x4xbf16>
    %cst_41 = arith.constant dense<0.000000e+00> : vector<288x4xf32>
    %53 = tpu.matmul %50, %52, %cst_41 {dimension_numbers = #tpu.dot_dimension_numbers<[1], [0], [0], [1], [0, 0, 1, 1], [], []>} : vector<288x32xbf16>, vector<32x4xbf16>, vector<288x4xf32> -> vector<288x4xf32>
    %54 = arith.addf %47, %53 : vector<288x4xf32>
    %c0_42 = arith.constant 0 : index
    %c38 = arith.constant 38 : index
    %c0_43 = arith.constant 0 : index
    %55 = vector.load %arg1[%c0_42, %c38, %c0_43] : memref<1x326x32xf32, #tpu.memory_space<vmem>>, vector<1x288x32xf32>
    %56 = vector.shape_cast %55 : vector<1x288x32xf32> to vector<288x32xf32>
    %57 = arith.truncf %56 : vector<288x32xf32> to vector<288x32xbf16>
    %c8 = arith.constant 8 : index
    %c0_44 = arith.constant 0 : index
    %c0_45 = arith.constant 0 : index
    %58 = vector.load %arg2[%c8, %c0_44, %c0_45] : memref<9x32x4xbf16, #tpu.memory_space<vmem>>, vector<1x32x4xbf16>
    %59 = vector.shape_cast %58 : vector<1x32x4xbf16> to vector<32x4xbf16>
    %cst_46 = arith.constant dense<0.000000e+00> : vector<288x4xf32>
    %60 = tpu.matmul %57, %59, %cst_46 {dimension_numbers = #tpu.dot_dimension_numbers<[1], [0], [0], [1], [0, 0, 1, 1], [], []>} : vector<288x32xbf16>, vector<32x4xbf16>, vector<288x4xf32> -> vector<288x4xf32>
    %61 = arith.addf %54, %60 : vector<288x4xf32>
    %c0_47 = arith.constant 0 : index
    %c0_48 = arith.constant 0 : index
    %62 = vector.load %arg3[%c0_47, %c0_48] : memref<1x4xf32, #tpu.memory_space<vmem>>, vector<1x4xf32>
    %63 = vector.broadcast %62 : vector<1x4xf32> to vector<288x4xf32>
    %64 = arith.addf %61, %63 : vector<288x4xf32>
    %65 = vector.extract_strided_slice %64 {offsets = [0, 0], sizes = [16, 4], strides = [1, 1]} : vector<288x4xf32> to vector<16x4xf32>
    %c0_49 = arith.constant 0 : index
    %c0_50 = arith.constant 0 : index
    %c0_51 = arith.constant 0 : index
    %c0_52 = arith.constant 0 : index
    %66 = vector.load %arg4[%c0_49, %c0_50, %c0_51, %c0_52] : memref<1x16x16x4xf32, #tpu.memory_space<vmem>>, vector<1x1x16x4xf32>
    %67 = vector.shape_cast %66 : vector<1x1x16x4xf32> to vector<16x4xf32>
    %68 = vector.shape_cast %65 : vector<16x4xf32> to vector<1x1x16x4xf32>
    tpu.vector_store %arg4[%c0_49, %c0_50, %c0_51, %c0_52], %68 {strides = array<i32>} : memref<1x16x16x4xf32, #tpu.memory_space<vmem>>, vector<1x1x16x4xf32>,
    %69 = vector.extract_strided_slice %64 {offsets = [18, 0], sizes = [16, 4], strides = [1, 1]} : vector<288x4xf32> to vector<16x4xf32>
    %c0_53 = arith.constant 0 : index
    %c1_54 = arith.constant 1 : index
    %c0_55 = arith.constant 0 : index
    %c0_56 = arith.constant 0 : index
    %70 = vector.load %arg4[%c0_53, %c1_54, %c0_55, %c0_56] : memref<1x16x16x4xf32, #tpu.memory_space<vmem>>, vector<1x1x16x4xf32>
    %71 = vector.shape_cast %70 : vector<1x1x16x4xf32> to vector<16x4xf32>
    %72 = vector.shape_cast %69 : vector<16x4xf32> to vector<1x1x16x4xf32>
    tpu.vector_store %arg4[%c0_53, %c1_54, %c0_55, %c0_56], %72 {strides = array<i32>} : memref<1x16x16x4xf32, #tpu.memory_space<vmem>>, vector<1x1x16x4xf32>,
    %73 = vector.extract_strided_slice %64 {offsets = [36, 0], sizes = [16, 4], strides = [1, 1]} : vector<288x4xf32> to vector<16x4xf32>
    %c0_57 = arith.constant 0 : index
    %c2_58 = arith.constant 2 : index
    %c0_59 = arith.constant 0 : index
    %c0_60 = arith.constant 0 : index
    %74 = vector.load %arg4[%c0_57, %c2_58, %c0_59, %c0_60] : memref<1x16x16x4xf32, #tpu.memory_space<vmem>>, vector<1x1x16x4xf32>
    %75 = vector.shape_cast %74 : vector<1x1x16x4xf32> to vector<16x4xf32>
    %76 = vector.shape_cast %73 : vector<16x4xf32> to vector<1x1x16x4xf32>
    tpu.vector_store %arg4[%c0_57, %c2_58, %c0_59, %c0_60], %76 {strides = array<i32>} : memref<1x16x16x4xf32, #tpu.memory_space<vmem>>, vector<1x1x16x4xf32>,
    %77 = vector.extract_strided_slice %64 {offsets = [54, 0], sizes = [16, 4], strides = [1, 1]} : vector<288x4xf32> to vector<16x4xf32>
    %c0_61 = arith.constant 0 : index
    %c3_62 = arith.constant 3 : index
    %c0_63 = arith.constant 0 : index
    %c0_64 = arith.constant 0 : index
    %78 = vector.load %arg4[%c0_61, %c3_62, %c0_63, %c0_64] : memref<1x16x16x4xf32, #tpu.memory_space<vmem>>, vector<1x1x16x4xf32>
    %79 = vector.shape_cast %78 : vector<1x1x16x4xf32> to vector<16x4xf32>
    %80 = vector.shape_cast %77 : vector<16x4xf32> to vector<1x1x16x4xf32>
    tpu.vector_store %arg4[%c0_61, %c3_62, %c0_63, %c0_64], %80 {strides = array<i32>} : memref<1x16x16x4xf32, #tpu.memory_space<vmem>>, vector<1x1x16x4xf32>,
    %81 = vector.extract_strided_slice %64 {offsets = [72, 0], sizes = [16, 4], strides = [1, 1]} : vector<288x4xf32> to vector<16x4xf32>
    %c0_65 = arith.constant 0 : index
    %c4_66 = arith.constant 4 : index
    %c0_67 = arith.constant 0 : index
    %c0_68 = arith.constant 0 : index
    %82 = vector.load %arg4[%c0_65, %c4_66, %c0_67, %c0_68] : memref<1x16x16x4xf32, #tpu.memory_space<vmem>>, vector<1x1x16x4xf32>
    %83 = vector.shape_cast %82 : vector<1x1x16x4xf32> to vector<16x4xf32>
    %84 = vector.shape_cast %81 : vector<16x4xf32> to vector<1x1x16x4xf32>
    tpu.vector_store %arg4[%c0_65, %c4_66, %c0_67, %c0_68], %84 {strides = array<i32>} : memref<1x16x16x4xf32, #tpu.memory_space<vmem>>, vector<1x1x16x4xf32>,
    %85 = vector.extract_strided_slice %64 {offsets = [90, 0], sizes = [16, 4], strides = [1, 1]} : vector<288x4xf32> to vector<16x4xf32>
    %c0_69 = arith.constant 0 : index
    %c5_70 = arith.constant 5 : index
    %c0_71 = arith.constant 0 : index
    %c0_72 = arith.constant 0 : index
    %86 = vector.load %arg4[%c0_69, %c5_70, %c0_71, %c0_72] : memref<1x16x16x4xf32, #tpu.memory_space<vmem>>, vector<1x1x16x4xf32>
    %87 = vector.shape_cast %86 : vector<1x1x16x4xf32> to vector<16x4xf32>
    %88 = vector.shape_cast %85 : vector<16x4xf32> to vector<1x1x16x4xf32>
    tpu.vector_store %arg4[%c0_69, %c5_70, %c0_71, %c0_72], %88 {strides = array<i32>} : memref<1x16x16x4xf32, #tpu.memory_space<vmem>>, vector<1x1x16x4xf32>,
    %89 = vector.extract_strided_slice %64 {offsets = [108, 0], sizes = [16, 4], strides = [1, 1]} : vector<288x4xf32> to vector<16x4xf32>
    %c0_73 = arith.constant 0 : index
    %c6_74 = arith.constant 6 : index
    %c0_75 = arith.constant 0 : index
    %c0_76 = arith.constant 0 : index
    %90 = vector.load %arg4[%c0_73, %c6_74, %c0_75, %c0_76] : memref<1x16x16x4xf32, #tpu.memory_space<vmem>>, vector<1x1x16x4xf32>
    %91 = vector.shape_cast %90 : vector<1x1x16x4xf32> to vector<16x4xf32>
    %92 = vector.shape_cast %89 : vector<16x4xf32> to vector<1x1x16x4xf32>
    tpu.vector_store %arg4[%c0_73, %c6_74, %c0_75, %c0_76], %92 {strides = array<i32>} : memref<1x16x16x4xf32, #tpu.memory_space<vmem>>, vector<1x1x16x4xf32>,
    %93 = vector.extract_strided_slice %64 {offsets = [126, 0], sizes = [16, 4], strides = [1, 1]} : vector<288x4xf32> to vector<16x4xf32>
    %c0_77 = arith.constant 0 : index
    %c7_78 = arith.constant 7 : index
    %c0_79 = arith.constant 0 : index
    %c0_80 = arith.constant 0 : index
    %94 = vector.load %arg4[%c0_77, %c7_78, %c0_79, %c0_80] : memref<1x16x16x4xf32, #tpu.memory_space<vmem>>, vector<1x1x16x4xf32>
    %95 = vector.shape_cast %94 : vector<1x1x16x4xf32> to vector<16x4xf32>
    %96 = vector.shape_cast %93 : vector<16x4xf32> to vector<1x1x16x4xf32>
    tpu.vector_store %arg4[%c0_77, %c7_78, %c0_79, %c0_80], %96 {strides = array<i32>} : memref<1x16x16x4xf32, #tpu.memory_space<vmem>>, vector<1x1x16x4xf32>,
    %97 = vector.extract_strided_slice %64 {offsets = [144, 0], sizes = [16, 4], strides = [1, 1]} : vector<288x4xf32> to vector<16x4xf32>
    %c0_81 = arith.constant 0 : index
    %c8_82 = arith.constant 8 : index
    %c0_83 = arith.constant 0 : index
    %c0_84 = arith.constant 0 : index
    %98 = vector.load %arg4[%c0_81, %c8_82, %c0_83, %c0_84] : memref<1x16x16x4xf32, #tpu.memory_space<vmem>>, vector<1x1x16x4xf32>
    %99 = vector.shape_cast %98 : vector<1x1x16x4xf32> to vector<16x4xf32>
    %100 = vector.shape_cast %97 : vector<16x4xf32> to vector<1x1x16x4xf32>
    tpu.vector_store %arg4[%c0_81, %c8_82, %c0_83, %c0_84], %100 {strides = array<i32>} : memref<1x16x16x4xf32, #tpu.memory_space<vmem>>, vector<1x1x16x4xf32>,
    %101 = vector.extract_strided_slice %64 {offsets = [162, 0], sizes = [16, 4], strides = [1, 1]} : vector<288x4xf32> to vector<16x4xf32>
    %c0_85 = arith.constant 0 : index
    %c9 = arith.constant 9 : index
    %c0_86 = arith.constant 0 : index
    %c0_87 = arith.constant 0 : index
    %102 = vector.load %arg4[%c0_85, %c9, %c0_86, %c0_87] : memref<1x16x16x4xf32, #tpu.memory_space<vmem>>, vector<1x1x16x4xf32>
    %103 = vector.shape_cast %102 : vector<1x1x16x4xf32> to vector<16x4xf32>
    %104 = vector.shape_cast %101 : vector<16x4xf32> to vector<1x1x16x4xf32>
    tpu.vector_store %arg4[%c0_85, %c9, %c0_86, %c0_87], %104 {strides = array<i32>} : memref<1x16x16x4xf32, #tpu.memory_space<vmem>>, vector<1x1x16x4xf32>,
    %105 = vector.extract_strided_slice %64 {offsets = [180, 0], sizes = [16, 4], strides = [1, 1]} : vector<288x4xf32> to vector<16x4xf32>
    %c0_88 = arith.constant 0 : index
    %c10 = arith.constant 10 : index
    %c0_89 = arith.constant 0 : index
    %c0_90 = arith.constant 0 : index
    %106 = vector.load %arg4[%c0_88, %c10, %c0_89, %c0_90] : memref<1x16x16x4xf32, #tpu.memory_space<vmem>>, vector<1x1x16x4xf32>
    %107 = vector.shape_cast %106 : vector<1x1x16x4xf32> to vector<16x4xf32>
    %108 = vector.shape_cast %105 : vector<16x4xf32> to vector<1x1x16x4xf32>
    tpu.vector_store %arg4[%c0_88, %c10, %c0_89, %c0_90], %108 {strides = array<i32>} : memref<1x16x16x4xf32, #tpu.memory_space<vmem>>, vector<1x1x16x4xf32>,
    %109 = vector.extract_strided_slice %64 {offsets = [198, 0], sizes = [16, 4], strides = [1, 1]} : vector<288x4xf32> to vector<16x4xf32>
    %c0_91 = arith.constant 0 : index
    %c11 = arith.constant 11 : index
    %c0_92 = arith.constant 0 : index
    %c0_93 = arith.constant 0 : index
    %110 = vector.load %arg4[%c0_91, %c11, %c0_92, %c0_93] : memref<1x16x16x4xf32, #tpu.memory_space<vmem>>, vector<1x1x16x4xf32>
    %111 = vector.shape_cast %110 : vector<1x1x16x4xf32> to vector<16x4xf32>
    %112 = vector.shape_cast %109 : vector<16x4xf32> to vector<1x1x16x4xf32>
    tpu.vector_store %arg4[%c0_91, %c11, %c0_92, %c0_93], %112 {strides = array<i32>} : memref<1x16x16x4xf32, #tpu.memory_space<vmem>>, vector<1x1x16x4xf32>,
    %113 = vector.extract_strided_slice %64 {offsets = [216, 0], sizes = [16, 4], strides = [1, 1]} : vector<288x4xf32> to vector<16x4xf32>
    %c0_94 = arith.constant 0 : index
    %c12 = arith.constant 12 : index
    %c0_95 = arith.constant 0 : index
    %c0_96 = arith.constant 0 : index
    %114 = vector.load %arg4[%c0_94, %c12, %c0_95, %c0_96] : memref<1x16x16x4xf32, #tpu.memory_space<vmem>>, vector<1x1x16x4xf32>
    %115 = vector.shape_cast %114 : vector<1x1x16x4xf32> to vector<16x4xf32>
    %116 = vector.shape_cast %113 : vector<16x4xf32> to vector<1x1x16x4xf32>
    tpu.vector_store %arg4[%c0_94, %c12, %c0_95, %c0_96], %116 {strides = array<i32>} : memref<1x16x16x4xf32, #tpu.memory_space<vmem>>, vector<1x1x16x4xf32>,
    %117 = vector.extract_strided_slice %64 {offsets = [234, 0], sizes = [16, 4], strides = [1, 1]} : vector<288x4xf32> to vector<16x4xf32>
    %c0_97 = arith.constant 0 : index
    %c13 = arith.constant 13 : index
    %c0_98 = arith.constant 0 : index
    %c0_99 = arith.constant 0 : index
    %118 = vector.load %arg4[%c0_97, %c13, %c0_98, %c0_99] : memref<1x16x16x4xf32, #tpu.memory_space<vmem>>, vector<1x1x16x4xf32>
    %119 = vector.shape_cast %118 : vector<1x1x16x4xf32> to vector<16x4xf32>
    %120 = vector.shape_cast %117 : vector<16x4xf32> to vector<1x1x16x4xf32>
    tpu.vector_store %arg4[%c0_97, %c13, %c0_98, %c0_99], %120 {strides = array<i32>} : memref<1x16x16x4xf32, #tpu.memory_space<vmem>>, vector<1x1x16x4xf32>,
    %121 = vector.extract_strided_slice %64 {offsets = [252, 0], sizes = [16, 4], strides = [1, 1]} : vector<288x4xf32> to vector<16x4xf32>
    %c0_100 = arith.constant 0 : index
    %c14 = arith.constant 14 : index
    %c0_101 = arith.constant 0 : index
    %c0_102 = arith.constant 0 : index
    %122 = vector.load %arg4[%c0_100, %c14, %c0_101, %c0_102] : memref<1x16x16x4xf32, #tpu.memory_space<vmem>>, vector<1x1x16x4xf32>
    %123 = vector.shape_cast %122 : vector<1x1x16x4xf32> to vector<16x4xf32>
    %124 = vector.shape_cast %121 : vector<16x4xf32> to vector<1x1x16x4xf32>
    tpu.vector_store %arg4[%c0_100, %c14, %c0_101, %c0_102], %124 {strides = array<i32>} : memref<1x16x16x4xf32, #tpu.memory_space<vmem>>, vector<1x1x16x4xf32>,
    %125 = vector.extract_strided_slice %64 {offsets = [270, 0], sizes = [16, 4], strides = [1, 1]} : vector<288x4xf32> to vector<16x4xf32>
    %c0_103 = arith.constant 0 : index
    %c15 = arith.constant 15 : index
    %c0_104 = arith.constant 0 : index
    %c0_105 = arith.constant 0 : index
    %126 = vector.load %arg4[%c0_103, %c15, %c0_104, %c0_105] : memref<1x16x16x4xf32, #tpu.memory_space<vmem>>, vector<1x1x16x4xf32>
    %127 = vector.shape_cast %126 : vector<1x1x16x4xf32> to vector<16x4xf32>
    %128 = vector.shape_cast %125 : vector<16x4xf32> to vector<1x1x16x4xf32>
    tpu.vector_store %arg4[%c0_103, %c15, %c0_104, %c0_105], %128 {strides = array<i32>} : memref<1x16x16x4xf32, #tpu.memory_space<vmem>>, vector<1x1x16x4xf32>,
    return
  }
  func.func @transform_0(%arg0: i32) -> (i32, i32, i32) {
    %c0_i32 = arith.constant 0 : i32
    %c0_i32_0 = arith.constant 0 : i32
    %c0_i32_1 = arith.constant 0 : i32
    return %arg0, %c0_i32, %c0_i32_0 : i32, i32, i32
  }
  func.func @transform_1(%arg0: i32) -> (i32, i32, i32) {
    %c0_i32 = arith.constant 0 : i32
    %c0_i32_0 = arith.constant 0 : i32
    %c0_i32_1 = arith.constant 0 : i32
    %c0_i32_2 = arith.constant 0 : i32
    return %c0_i32, %c0_i32_0, %c0_i32_1 : i32, i32, i32
  }
  func.func @transform_2(%arg0: i32) -> (i32, i32) {
    %c0_i32 = arith.constant 0 : i32
    %c0_i32_0 = arith.constant 0 : i32
    %c0_i32_1 = arith.constant 0 : i32
    return %c0_i32, %c0_i32_0 : i32, i32
  }
  func.func @transform_3(%arg0: i32) -> (i32, i32, i32, i32) {
    %c0_i32 = arith.constant 0 : i32
    %c0_i32_0 = arith.constant 0 : i32
    %c0_i32_1 = arith.constant 0 : i32
    %c0_i32_2 = arith.constant 0 : i32
    return %arg0, %c0_i32, %c0_i32_0, %c0_i32_1 : i32, i32, i32, i32
  }
}

module attributes {stable_mosaic.version = 11 : i64} {
  func.func @_sq_err_sum_kernel(%arg0: memref<16x128xf32, #tpu.memory_space<vmem>>, %arg1: memref<16x128xf32, #tpu.memory_space<vmem>>, %arg2: memref<1x1xf32, #tpu.memory_space<smem>>) attributes {dimension_semantics = [], scalar_prefetch = 0 : i64, scratch_operands = 0 : i64, tpu.core_type = #tpu.core_type<tc>} {
    %c0 = arith.constant 0 : index
    %c0_0 = arith.constant 0 : index
    %0 = vector.load %arg0[%c0, %c0_0] : memref<16x128xf32, #tpu.memory_space<vmem>>, vector<16x128xf32>
    %c0_1 = arith.constant 0 : index
    %c0_2 = arith.constant 0 : index
    %1 = vector.load %arg1[%c0_1, %c0_2] : memref<16x128xf32, #tpu.memory_space<vmem>>, vector<16x128xf32>
    %2 = arith.subf %0, %1 : vector<16x128xf32>
    %3 = arith.mulf %2, %2 : vector<16x128xf32>
    %4 = vector.shape_cast %3 : vector<16x128xf32> to vector<1x16x128xf32>
    %cst = arith.constant dense<0.000000e+00> : vector<1xf32>
    %5 = vector.multi_reduction <add>, %4, %cst [1, 2] : vector<1x16x128xf32> to vector<1xf32>
    %6 = vector.shape_cast %5 : vector<1xf32> to vector<1x1x1xf32>
    %7 = vector.extract %6[0, 0, 0] : f32 from vector<1x1x1xf32>
    %c0_3 = arith.constant 0 : index
    %c0_4 = arith.constant 0 : index
    %8 = memref.load %arg2[%c0_3, %c0_4] : memref<1x1xf32, #tpu.memory_space<smem>>
    memref.store %7, %arg2[%c0_3, %c0_4] : memref<1x1xf32, #tpu.memory_space<smem>>
    return
  }
}

</mosaic_0001>

<llo_original>
// kernel: vqvae_forward.12
$region0: #{vqvae_forward.12}
  #allocation0 [shape = 'u32[]', space=smem, size = 0x4, offset = 0x4, fixed_abs, tag = 'smem constant byte address 0x4 - core index']
  #allocation1 [shape = 'u32[72,128]{1,0:T(1,128)}', space=vmem, size = 0x9000, scoped, tag = 'internal scratch']
  %s0 = inlined_call_operand.vmem [shape: f32[2,82,16], index: 0, kind: input, shape index: {}]
  %s1 = inlined_call_operand.vmem [shape: bf16[4,16,32], index: 1, kind: input, shape index: {}]
  %s2 = inlined_call_operand.vmem [shape: f32[1,32], index: 2, kind: input, shape index: {}]
  %s3 = inlined_call_operand.vmem [shape: f32[2,8,8,32], index: 3, kind: output, shape index: {}]
  %s4 = sld [smem:[#allocation0]]
  $region45: #{vqvae_forward.12} parent=0
    _
  %s6 = ssub.s32 1, %s4
  %s7 = scalar_select 0, %s6, %s4
  loop: start=0, step=1, limit=4
  $region2: #{vqvae_forward.12} parent=0 // loop_pre_header
    _
  $region3: #{vqvae_forward.12} parent=0 // loop_header
    %s9 = sphi 0, %s13
    %p10 = scmp.ge.s32.totalorder %s9, 4
    %s19 = sphi 0, %s21
    %s22 = sphi 0, %s19
    %s23 = sphi 0, %s22
    %s39 = sphi 0, %s23
    %s43 = sphi 0, %s43
    %s45 = sphi 0, %s43
    %s46 = sphi 0, %s45
    %s60 = sphi 0, %s46
    %s64 = sphi 0, %s64
    %s66 = sphi 0, %s64
    %s67 = sphi 0, %s66
    %s81 = sphi 0, %s67
    %s87 = sphi 0, %s89
    %s90 = sphi 0, %s87
    %s91 = sphi 0, %s90
    %s107 = sphi 0, %s91
  $region4: #{vqvae_forward.12} parent=0 // loop_header_branch
    %12 = sbr.rel (%p10) target = $region8
  $region5: #{vqvae_forward.12} parent=0 // loop_body
    %s14 = ssub.s32 %s9, 1
    %s15 = ssub.s32 %s9, 2
    %s16 = sadd.s32 %s9, 1
    %s17 = ssub.s32 %s9, %s16
    %p18 = scmp.eq.s32.totalorder %s17, 0
    %s20 = sadd.s32 %s19, 1
    %s21 = scalar_select %p18, %s19, %s20
    %p24 = pneg %p18
    %p25 = scmp.eq.s32.totalorder %s9, 1
    %p26 = por %p24, %p25
    %p27 = scmp.ne.s32.totalorder %s19, %s22
    %p28 = scmp.eq.s32.totalorder %s9, 0
    %p29 = por %p27, %p28
    %p30 = scmp.ne.s32.totalorder %s19, %s22
    %p31 = scmp.eq.s32.totalorder %s14, 1
    %p32 = por %p30, %p31
    %p33 = scmp.ne.s32.totalorder %s22, %s23
    %p34 = scmp.eq.s32.totalorder %s14, 0
    %p35 = por %p33, %p34
    %p36 = scmp.ne.s32.totalorder %s22, %s23
    %p37 = scmp.eq.s32.totalorder %s15, 1
    %p38 = por %p36, %p37
    %p40 = scmp.ne.s32.totalorder %s23, %s39
    %p41 = scmp.eq.s32.totalorder %s15, 0
    %p42 = por %p40, %p41
    %s44 = sadd.s32 %s43, 1
    %p47 = scmp.eq.s32.totalorder %s9, 1
    %p48 = scmp.ne.s32.totalorder %s43, %s45
    %p49 = scmp.eq.s32.totalorder %s9, 0
    %p50 = por %p48, %p49
    %p51 = scmp.ne.s32.totalorder %s43, %s45
    %p52 = scmp.eq.s32.totalorder %s14, 1
    %p53 = por %p51, %p52
    %p54 = scmp.ne.s32.totalorder %s45, %s46
    %p55 = scmp.eq.s32.totalorder %s14, 0
    %p56 = por %p54, %p55
    %p57 = scmp.ne.s32.totalorder %s45, %s46
    %p58 = scmp.eq.s32.totalorder %s15, 1
    %p59 = por %p57, %p58
    %p61 = scmp.ne.s32.totalorder %s46, %s60
    %p62 = scmp.eq.s32.totalorder %s15, 0
    %p63 = por %p61, %p62
    %s65 = sadd.s32 %s64, 1
    %p68 = scmp.eq.s32.totalorder %s9, 1
    %p69 = scmp.ne.s32.totalorder %s64, %s66
    %p70 = scmp.eq.s32.totalorder %s9, 0
    %p71 = por %p69, %p70
    %p72 = scmp.ne.s32.totalorder %s64, %s66
    %p73 = scmp.eq.s32.totalorder %s14, 1
    %p74 = por %p72, %p73
    %p75 = scmp.ne.s32.totalorder %s66, %s67
    %p76 = scmp.eq.s32.totalorder %s14, 0
    %p77 = por %p75, %p76
    %p78 = scmp.ne.s32.totalorder %s66, %s67
    %p79 = scmp.eq.s32.totalorder %s15, 1
    %p80 = por %p78, %p79
    %p82 = scmp.ne.s32.totalorder %s67, %s81
    %p83 = scmp.eq.s32.totalorder %s15, 0
    %p84 = por %p82, %p83
    %s85 = ssub.s32 %s9, %s16
    %p86 = scmp.eq.s32.totalorder %s85, 0
    %s88 = sadd.s32 %s87, 1
    %s89 = scalar_select %p86, %s87, %s88
    %p92 = pneg %p86
    %p93 = scmp.eq.s32.totalorder %s9, 1
    %p94 = por %p92, %p93
    %p95 = scmp.ne.s32.totalorder %s87, %s90
    %p96 = scmp.eq.s32.totalorder %s9, 0
    %p97 = por %p95, %p96
    %p98 = scmp.ne.s32.totalorder %s87, %s90
    %p99 = scmp.eq.s32.totalorder %s14, 1
    %p100 = por %p98, %p99
    %p101 = scmp.ne.s32.totalorder %s90, %s91
    %p102 = scmp.eq.s32.totalorder %s14, 0
    %p103 = por %p101, %p102
    %p104 = scmp.ne.s32.totalorder %s90, %s91
    %p105 = scmp.eq.s32.totalorder %s15, 1
    %p106 = por %p104, %p105
    %p108 = scmp.ne.s32.totalorder %s91, %s107
    %p109 = scmp.eq.s32.totalorder %s15, 0
    %p110 = por %p108, %p109
    %p111 = scmp.le.s32.totalorder 1, %s9
    %p112 = scmp.lt.s32.totalorder %s9, 3
    %p113 = pnand %p111, %p112
    %p114 = pneg %p113
    // Predicated region
    $region9: #{vqvae_forward.12} parent=5 // pred_check
      _
    $region10: #{vqvae_forward.12} parent=5 // pred_check_branch
      %116 = sbr.rel (%p113) target = $region12
    $region11: #{vqvae_forward.12} parent=5 // pred_region
      %s117 = ssub.s32 %s9, 1
      // Predicated region
      $region13: #{vqvae_forward.12} parent=11 // pred_check
        %p118 = pneg %p56
      $region14: #{vqvae_forward.12} parent=11 // pred_check_branch
        %120 = sbr.rel (%p118) target = $region16
      $region15: #{vqvae_forward.12} parent=11 // pred_region
        _
      $region16: #{vqvae_forward.12} parent=11 // pred_fallthru
        _
      // Predicated region
      $region17: #{vqvae_forward.12} parent=11 // pred_check
        %p121 = pneg %p77
      $region18: #{vqvae_forward.12} parent=11 // pred_check_branch
        %123 = sbr.rel (%p121) target = $region20
      $region19: #{vqvae_forward.12} parent=11 // pred_region
        _
      $region20: #{vqvae_forward.12} parent=11 // pred_fallthru
        _
    $region12: #{vqvae_forward.12} parent=5 // pred_fallthru
      _
    %p124 = scmp.lt.s32.totalorder %s9, 2
    // Predicated region
    $region21: #{vqvae_forward.12} parent=5 // pred_check
      %p125 = pneg %p124
    $region22: #{vqvae_forward.12} parent=5 // pred_check_branch
      %127 = sbr.rel (%p125) target = $region24
    $region23: #{vqvae_forward.12} parent=5 // pred_region
      // Predicated region
      $region25: #{vqvae_forward.12} parent=23 // pred_check
        %p128 = pneg %p29
      $region26: #{vqvae_forward.12} parent=23 // pred_check_branch
        %130 = sbr.rel (%p128) target = $region28
      $region27: #{vqvae_forward.12} parent=23 // pred_region
        %p131 = scmp.lt.s32.totalorder %s9, 1
        %s132 = scalar_select %p131, %s9, 1
        %s133 = smul.addr %s132, 11
        %s134 = smul.addr %s133, 8
        %s135 = scalar_lea.vmem %s0, %s134
      $region28: #{vqvae_forward.12} parent=23 // pred_fallthru
        _
    $region24: #{vqvae_forward.12} parent=5 // pred_fallthru
      _
    %p136 = scmp.le.s32.totalorder 1, %s9
    %p137 = scmp.lt.s32.totalorder %s9, 3
    %p138 = pnand %p136, %p137
    %p139 = pneg %p138
    // Predicated region
    $region29: #{vqvae_forward.12} parent=5 // pred_check
      _
    $region30: #{vqvae_forward.12} parent=5 // pred_check_branch
      %141 = sbr.rel (%p138) target = $region32
    $region31: #{vqvae_forward.12} parent=5 // pred_region
      %s142 = ssub.s32 %s9, 1
      %p143 = scmp.lt.s32.totalorder %s14, 1
      %s144 = scalar_select %p143, %s14, 1
      %s145 = smul.addr %s144, 11
      %s146 = smul.addr %s145, 8
      %s147 = scalar_lea.vmem %s0, %s146
      %p148 = pneg %p35
      %p149 = pneg %p32
      %p150 = pneg %p56
      %p151 = pneg %p53
      %p152 = pneg %p77
      %p153 = pneg %p74
      %p154 = pneg %p103
      %p155 = pneg %p100
      %p156 = scmp.lt.s32.totalorder %s14, 1
      %s157 = scalar_select %p156, %s14, 1
      %s158 = smul.addr %s157, 8
      %s159 = smul.addr %s158, 8
      %s160 = scalar_lea.vmem %s3, %s159
      %p161 = scmp.lt.s32.totalorder %s14, 1
      %s162 = scalar_select %p161, %s14, 1
      %s163 = smul.addr %s162, 11
      %s164 = smul.addr %s163, 8
      %s165 = scalar_lea.vmem %s0, %s164
      %p166 = scmp.lt.s32.totalorder %s14, 1
      %s167 = scalar_select %p166, %s14, 1
      %s168 = smul.addr %s167, 8
      %s169 = smul.addr %s168, 8
      %s170 = scalar_lea.vmem %s3, %s169
      %v172 = vld [vmem:[%s165] sm:$0xff]
      %v173 = vld [vmem:[%s165 + $0x8] sm:$0xff]
      %v174 = vld [vmem:[%s165 + $0x10] sm:$0xff]
      %v175 = vld [vmem:[%s165 + $0x18] sm:$0xff]
      %v176 = vld [vmem:[%s165 + $0x20] sm:$0xff]
      %v177 = vld [vmem:[%s165 + $0x28] sm:$0xff]
      %v178 = vld [vmem:[%s165 + $0x30] sm:$0xff]
      %v179 = vld [vmem:[%s165 + $0x38] sm:$0xff]
      %v180 = vld [vmem:[%s165 + $0x40] sm:$0xff]
      %v181 = vpack.c.bf16 %v173, %v172
      %v182 = vpack.c.bf16 %v175, %v174
      %v183 = vpack.c.bf16 %v177, %v176
      %v184 = vpack.c.bf16 %v179, %v178
      %v185 = vpack.c.bf16 %v180, %v180
      %v186 = vld [vmem:[%s1] sm:$0xf]
      %v187 = vld [vmem:[%s1 + $0x4] sm:$0xf]
      %v188 = vld [vmem:[%s165 + $0x1] sm:$0xff]
      %v189 = vld [vmem:[%s165 + $0x9] sm:$0xff]
      %v190 = vld [vmem:[%s165 + $0x11] sm:$0xff]
      %v191 = vld [vmem:[%s165 + $0x19] sm:$0xff]
      %v192 = vld [vmem:[%s165 + $0x21] sm:$0xff]
      %v193 = vld [vmem:[%s165 + $0x29] sm:$0xff]
      %v194 = vld [vmem:[%s165 + $0x31] sm:$0xff]
      %v195 = vld [vmem:[%s165 + $0x39] sm:$0xff]
      %v196 = vld [vmem:[%s165 + $0x41] sm:$0xff]
      %v197 = vpack.c.bf16 %v189, %v188
      %v198 = vpack.c.bf16 %v191, %v190
      %v199 = vpack.c.bf16 %v193, %v192
      %v200 = vpack.c.bf16 %v195, %v194
      %v201 = vpack.c.bf16 %v196, %v196
      %s202 = scalar_lea.vmem %s1, 8
      %v203 = vld [vmem:[%s202] sm:$0xf]
      %v204 = vld [vmem:[%s202 + $0x4] sm:$0xf]
      %v207 = vunpack.c.l.b16 %v203
      %v208 = vunpack.c.l.b16 %v204
      %v209 = vpack.c.b16 %v208, %v207
      %vm211 = vcmask 130048
      %v213 = vsel %vm211, %v197, 0
      %v216 = vsel %vm211, %v198, 0
      %v219 = vsel %vm211, %v199, 0
      %v222 = vsel %vm211, %v200, 0
      %v225 = vsel %vm211, %v201, 0
      %227 = vmatpush.bf16.msra.mxu0 0
      %228 = vmatpush.bf16.msra.mxu0 0
      %229 = vmatpush.bf16.msra.mxu0 0
      %230 = vmatpush.bf16.msra.mxu0 0
      %231 = vmatpush.bf16.msra.mxu0 0
      %232 = vmatpush.bf16.msra.mxu0 0
      %233 = vmatpush.bf16.msra.mxu0 0
      %234 = vmatpush.bf16.msra.mxu0 %v209
      %235 = vmatmul.bf16.gmra.mxu0 %v213
      %v236 = vpop.f32.mrf.mxu0
      %v237 = vadd.f32 0.0, %v236
      %v238 = vpop.f32.mrf.mxu0
      %v239 = vadd.f32 0.0, %v238
      %240 = vmatmul.bf16.gmra.mxu0 %v216
      %v241 = vpop.f32.mrf.mxu0
      %v242 = vadd.f32 0.0, %v241
      %v243 = vpop.f32.mrf.mxu0
      %v244 = vadd.f32 0.0, %v243
      %245 = vmatmul.bf16.gmra.mxu0 %v219
      %v246 = vpop.f32.mrf.mxu0
      %v247 = vadd.f32 0.0, %v246
      %v248 = vpop.f32.mrf.mxu0
      %v249 = vadd.f32 0.0, %v248
      %250 = vmatmul.bf16.gmra.mxu0 %v222
      %v251 = vpop.f32.mrf.mxu0
      %v252 = vadd.f32 0.0, %v251
      %v253 = vpop.f32.mrf.mxu0
      %v254 = vadd.f32 0.0, %v253
      %255 = vmatmul.bf16.gmra.mxu0 %v225
      %v256 = vpop.f32.mrf.mxu0
      %v257 = vadd.f32 0.0, %v256
      %v258 = vpop.f32.mrf.mxu0
      %259 = vdwg.mxu0
      %v262 = vunpack.c.l.b16 %v186
      %v263 = vunpack.c.l.b16 %v187
      %v264 = vpack.c.b16 %v263, %v262
      %v267 = vsel %vm211, %v181, 0
      %v270 = vsel %vm211, %v182, 0
      %v273 = vsel %vm211, %v183, 0
      %v276 = vsel %vm211, %v184, 0
      %v279 = vsel %vm211, %v185, 0
      %281 = vmatpush.bf16.msra.mxu0 0
      %282 = vmatpush.bf16.msra.mxu0 0
      %283 = vmatpush.bf16.msra.mxu0 0
      %284 = vmatpush.bf16.msra.mxu0 0
      %285 = vmatpush.bf16.msra.mxu0 0
      %286 = vmatpush.bf16.msra.mxu0 0
      %287 = vmatpush.bf16.msra.mxu0 0
      %288 = vmatpush.bf16.msra.mxu0 %v264
      %289 = vmatmul.bf16.gmra.mxu0 %v267
      %v290 = vpop.f32.mrf.mxu0
      %v291 = vadd.f32 %v237, %v290
      %v292 = vpop.f32.mrf.mxu0
      %v293 = vadd.f32 %v239, %v292
      %294 = vmatmul.bf16.gmra.mxu0 %v270
      %v295 = vpop.f32.mrf.mxu0
      %v296 = vadd.f32 %v242, %v295
      %v297 = vpop.f32.mrf.mxu0
      %v298 = vadd.f32 %v244, %v297
      %299 = vmatmul.bf16.gmra.mxu0 %v273
      %v300 = vpop.f32.mrf.mxu0
      %v301 = vadd.f32 %v247, %v300
      %v302 = vpop.f32.mrf.mxu0
      %v303 = vadd.f32 %v249, %v302
      %304 = vmatmul.bf16.gmra.mxu0 %v276
      %v305 = vpop.f32.mrf.mxu0
      %v306 = vadd.f32 %v252, %v305
      %v307 = vpop.f32.mrf.mxu0
      %v308 = vadd.f32 %v254, %v307
      %309 = vmatmul.bf16.gmra.mxu0 %v279
      %v310 = vpop.f32.mrf.mxu0
      %v311 = vadd.f32 %v257, %v310
      %v312 = vpop.f32.mrf.mxu0
      %313 = vdwg.mxu0
      %v314 = vld [vmem:[%s165 + $0x9] sm:$0xff]
      %v315 = vld [vmem:[%s165 + $0x11] sm:$0xff]
      %v316 = vld [vmem:[%s165 + $0x19] sm:$0xff]
      %v317 = vld [vmem:[%s165 + $0x21] sm:$0xff]
      %v318 = vld [vmem:[%s165 + $0x29] sm:$0xff]
      %v319 = vld [vmem:[%s165 + $0x31] sm:$0xff]
      %v320 = vld [vmem:[%s165 + $0x39] sm:$0xff]
      %v321 = vld [vmem:[%s165 + $0x41] sm:$0xff]
      %v322 = vld [vmem:[%s165 + $0x49] sm:$0xff]
      %v323 = vpack.c.bf16 %v315, %v314
      %v324 = vpack.c.bf16 %v317, %v316
      %v325 = vpack.c.bf16 %v319, %v318
      %v326 = vpack.c.bf16 %v321, %v320
      %v327 = vpack.c.bf16 %v322, %v322
      %s328 = scalar_lea.vmem %s1, 16
      %v329 = vld [vmem:[%s328] sm:$0xf]
      %v330 = vld [vmem:[%s328 + $0x4] sm:$0xf]
      %v333 = vunpack.c.l.b16 %v329
      %v334 = vunpack.c.l.b16 %v330
      %v335 = vpack.c.b16 %v334, %v333
      %v338 = vsel %vm211, %v323, 0
      %v341 = vsel %vm211, %v324, 0
      %v344 = vsel %vm211, %v325, 0
      %v347 = vsel %vm211, %v326, 0
      %v350 = vsel %vm211, %v327, 0
      %352 = vmatpush.bf16.msra.mxu0 0
      %353 = vmatpush.bf16.msra.mxu0 0
      %354 = vmatpush.bf16.msra.mxu0 0
      %355 = vmatpush.bf16.msra.mxu0 0
      %356 = vmatpush.bf16.msra.mxu0 0
      %357 = vmatpush.bf16.msra.mxu0 0
      %358 = vmatpush.bf16.msra.mxu0 0
      %359 = vmatpush.bf16.msra.mxu0 %v335
      %360 = vmatmul.bf16.gmra.mxu0 %v338
      %v361 = vpop.f32.mrf.mxu0
      %v362 = vadd.f32 0.0, %v361
      %v363 = vpop.f32.mrf.mxu0
      %v364 = vadd.f32 0.0, %v363
      %365 = vmatmul.bf16.gmra.mxu0 %v341
      %v366 = vpop.f32.mrf.mxu0
      %v367 = vadd.f32 0.0, %v366
      %v368 = vpop.f32.mrf.mxu0
      %v369 = vadd.f32 0.0, %v368
      %370 = vmatmul.bf16.gmra.mxu0 %v344
      %v371 = vpop.f32.mrf.mxu0
      %v372 = vadd.f32 0.0, %v371
      %v373 = vpop.f32.mrf.mxu0
      %v374 = vadd.f32 0.0, %v373
      %375 = vmatmul.bf16.gmra.mxu0 %v347
      %v376 = vpop.f32.mrf.mxu0
      %v377 = vadd.f32 0.0, %v376
      %v378 = vpop.f32.mrf.mxu0
      %v379 = vadd.f32 0.0, %v378
      %380 = vmatmul.bf16.gmra.mxu0 %v350
      %v381 = vpop.f32.mrf.mxu0
      %v382 = vadd.f32 0.0, %v381
      %v383 = vpop.f32.mrf.mxu0
      %384 = vdwg.mxu0
      %v385 = vadd.f32 %v291, %v362
      %v386 = vadd.f32 %v293, %v364
      %v387 = vadd.f32 %v296, %v367
      %v388 = vadd.f32 %v298, %v369
      %v389 = vadd.f32 %v301, %v372
      %v390 = vadd.f32 %v303, %v374
      %v391 = vadd.f32 %v306, %v377
      %v392 = vadd.f32 %v308, %v379
      %v393 = vadd.f32 %v311, %v382
      %v394 = vld [vmem:[%s165 + $0xa] sm:$0xff]
      %v395 = vld [vmem:[%s165 + $0x12] sm:$0xff]
      %v396 = vld [vmem:[%s165 + $0x1a] sm:$0xff]
      %v397 = vld [vmem:[%s165 + $0x22] sm:$0xff]
      %v398 = vld [vmem:[%s165 + $0x2a] sm:$0xff]
      %v399 = vld [vmem:[%s165 + $0x32] sm:$0xff]
      %v400 = vld [vmem:[%s165 + $0x3a] sm:$0xff]
      %v401 = vld [vmem:[%s165 + $0x42] sm:$0xff]
      %v402 = vld [vmem:[%s165 + $0x4a] sm:$0xff]
      %v403 = vpack.c.bf16 %v395, %v394
      %v404 = vpack.c.bf16 %v397, %v396
      %v405 = vpack.c.bf16 %v399, %v398
      %v406 = vpack.c.bf16 %v401, %v400
      %v407 = vpack.c.bf16 %v402, %v402
      %s408 = scalar_lea.vmem %s1, 24
      %v409 = vld [vmem:[%s408] sm:$0xf]
      %v410 = vld [vmem:[%s408 + $0x4] sm:$0xf]
      %v413 = vunpack.c.l.b16 %v409
      %v414 = vunpack.c.l.b16 %v410
      %v415 = vpack.c.b16 %v414, %v413
      %v418 = vsel %vm211, %v403, 0
      %v421 = vsel %vm211, %v404, 0
      %v424 = vsel %vm211, %v405, 0
      %v427 = vsel %vm211, %v406, 0
      %v430 = vsel %vm211, %v407, 0
      %432 = vmatpush.bf16.msra.mxu0 0
      %433 = vmatpush.bf16.msra.mxu0 0
      %434 = vmatpush.bf16.msra.mxu0 0
      %435 = vmatpush.bf16.msra.mxu0 0
      %436 = vmatpush.bf16.msra.mxu0 0
      %437 = vmatpush.bf16.msra.mxu0 0
      %438 = vmatpush.bf16.msra.mxu0 0
      %439 = vmatpush.bf16.msra.mxu0 %v415
      %440 = vmatmul.bf16.gmra.mxu0 %v418
      %v441 = vpop.f32.mrf.mxu0
      %v442 = vadd.f32 0.0, %v441
      %v443 = vpop.f32.mrf.mxu0
      %v444 = vadd.f32 0.0, %v443
      %445 = vmatmul.bf16.gmra.mxu0 %v421
      %v446 = vpop.f32.mrf.mxu0
      %v447 = vadd.f32 0.0, %v446
      %v448 = vpop.f32.mrf.mxu0
      %v449 = vadd.f32 0.0, %v448
      %450 = vmatmul.bf16.gmra.mxu0 %v424
      %v451 = vpop.f32.mrf.mxu0
      %v452 = vadd.f32 0.0, %v451
      %v453 = vpop.f32.mrf.mxu0
      %v454 = vadd.f32 0.0, %v453
      %455 = vmatmul.bf16.gmra.mxu0 %v427
      %v456 = vpop.f32.mrf.mxu0
      %v457 = vadd.f32 0.0, %v456
      %v458 = vpop.f32.mrf.mxu0
      %v459 = vadd.f32 0.0, %v458
      %460 = vmatmul.bf16.gmra.mxu0 %v430
      %v461 = vpop.f32.mrf.mxu0
      %v462 = vadd.f32 0.0, %v461
      %v463 = vpop.f32.mrf.mxu0
      %464 = vdwg.mxu0
      %v465 = vadd.f32 %v385, %v442
      %v466 = vadd.f32 %v386, %v444
      %v467 = vadd.f32 %v387, %v447
      %v468 = vadd.f32 %v388, %v449
      %v469 = vadd.f32 %v389, %v452
      %v470 = vadd.f32 %v390, %v454
      %v471 = vadd.f32 %v391, %v457
      %v472 = vadd.f32 %v392, %v459
      %v473 = vadd.f32 %v393, %v462
      %v474 = vld [vmem:[%s2] sm:$0x1]
      %v476 = vperm.slane %v474, 0
      %v478 = vadd.f32 %v465, %v476
      %v479 = vadd.f32 %v466, %v476
      %v480 = vadd.f32 %v467, %v476
      %v481 = vadd.f32 %v468, %v476
      %v482 = vadd.f32 %v469, %v476
      %v483 = vadd.f32 %v470, %v476
      %v484 = vadd.f32 %v471, %v476
      %v485 = vadd.f32 %v472, %v476
      %v486 = vadd.f32 %v473, %v476
      %v487 = vmax.f32 %v478, 0.0
      %v488 = vmax.f32 %v479, 0.0
      %v489 = vmax.f32 %v480, 0.0
      %v490 = vmax.f32 %v481, 0.0
      %v491 = vmax.f32 %v482, 0.0
      %v492 = vmax.f32 %v483, 0.0
      %v493 = vmax.f32 %v484, 0.0
      %v494 = vmax.f32 %v485, 0.0
      %v495 = vmax.f32 %v486, 0.0
      %vm496 = vcmask 261120
      %497 = vst.msk [vmem:[%s170] sm:$0xff] %vm496, %v487
      %s498 = scalar_lea.vmem %s170, 8
      %vm499 = vcmask 261121
      %500 = vst.msk [vmem:[%s498 - $0x1] sm:$0xfe] %vm499, %v488
      %vm501 = vcmask 253952
      %502 = vst.msk [vmem:[%s498 + $0x7] sm:$0x1] %vm501, %v489
      %s503 = scalar_lea.vmem %s170, 16
      %vm504 = vcmask 261122
      %505 = vst.msk [vmem:[%s503 - $0x2] sm:$0xfc] %vm504, %v489
      %vm506 = vcmask 254976
      %507 = vst.msk [vmem:[%s503 + $0x6] sm:$0x3] %vm506, %v490
      %s508 = scalar_lea.vmem %s170, 24
      %vm509 = vcmask 261123
      %510 = vst.msk [vmem:[%s508 - $0x3] sm:$0xf8] %vm509, %v490
      %vm511 = vcmask 256000
      %512 = vst.msk [vmem:[%s508 + $0x5] sm:$0x7] %vm511, %v491
      %s513 = scalar_lea.vmem %s170, 32
      %vm514 = vcmask 261124
      %515 = vst.msk [vmem:[%s513 - $0x4] sm:$0xf0] %vm514, %v491
      %vm516 = vcmask 257024
      %517 = vst.msk [vmem:[%s513 + $0x4] sm:$0xf] %vm516, %v492
      %s518 = scalar_lea.vmem %s170, 40
      %vm519 = vcmask 261125
      %520 = vst.msk [vmem:[%s518 - $0x5] sm:$0xe0] %vm519, %v492
      %vm521 = vcmask 258048
      %522 = vst.msk [vmem:[%s518 + $0x3] sm:$0x1f] %vm521, %v493
      %s523 = scalar_lea.vmem %s170, 48
      %vm524 = vcmask 261126
      %525 = vst.msk [vmem:[%s523 - $0x6] sm:$0xc0] %vm524, %v493
      %vm526 = vcmask 259072
      %527 = vst.msk [vmem:[%s523 + $0x2] sm:$0x3f] %vm526, %v494
      %s528 = scalar_lea.vmem %s170, 56
      %vm529 = vcmask 261127
      %530 = vst.msk [vmem:[%s528 - $0x7] sm:$0x80] %vm529, %v494
      %vm531 = vcmask 260096
      %532 = vst.msk [vmem:[%s528 + $0x1] sm:$0x7f] %vm531, %v495
      %p533 = scmp.lt.s32.totalorder %s14, 1
      %s534 = scalar_select %p533, %s14, 1
      %s535 = smul.addr %s534, 8
      %s536 = smul.addr %s535, 8
      %s537 = scalar_lea.vmem %s3, %s536
      // Predicated region
      $region33: #{vqvae_forward.12} parent=31 // pred_check
        %p538 = pneg %p100
      $region34: #{vqvae_forward.12} parent=31 // pred_check_branch
        %540 = sbr.rel (%p538) target = $region36
      $region35: #{vqvae_forward.12} parent=31 // pred_region
        _
      $region36: #{vqvae_forward.12} parent=31 // pred_fallthru
        _
    $region32: #{vqvae_forward.12} parent=5 // pred_fallthru
      _
    %p541 = scmp.le.s32.totalorder 2, %s9
    // Predicated region
    $region37: #{vqvae_forward.12} parent=5 // pred_check
      %p542 = pneg %p541
    $region38: #{vqvae_forward.12} parent=5 // pred_check_branch
      %544 = sbr.rel (%p542) target = $region40
    $region39: #{vqvae_forward.12} parent=5 // pred_region
      %s545 = ssub.s32 %s9, 2
      // Predicated region
      $region41: #{vqvae_forward.12} parent=39 // pred_check
        %p546 = pneg %p106
      $region42: #{vqvae_forward.12} parent=39 // pred_check_branch
        %548 = sbr.rel (%p546) target = $region44
      $region43: #{vqvae_forward.12} parent=39 // pred_region
        %p549 = scmp.lt.s32.totalorder %s15, 1
        %s550 = scalar_select %p549, %s15, 1
        %s551 = smul.addr %s550, 8
        %s552 = smul.addr %s551, 8
        %s553 = scalar_lea.vmem %s3, %s552
      $region44: #{vqvae_forward.12} parent=39 // pred_fallthru
        _
    $region40: #{vqvae_forward.12} parent=5 // pred_fallthru
      _
  $region6: #{vqvae_forward.12} parent=0 // loop_footer
    %s13 = sadd.s32 1, %s9
  $region7: #{vqvae_forward.12} parent=0 // loop_footer_branch
    %8 = sbr.rel target = $region3
  $region8: #{vqvae_forward.12} parent=0 // loop_exit
    _

// kernel: vqvae_forward.13
$region0: #{vqvae_forward.13}
  #allocation0 [shape = 'u32[]', space=smem, size = 0x4, offset = 0x4, fixed_abs, tag = 'smem constant byte address 0x4 - core index']
  #allocation1 [shape = 'u32[72,128]{1,0:T(1,128)}', space=vmem, size = 0x9000, scoped, tag = 'internal scratch']
  %s0 = inlined_call_operand.vmem [shape: f32[2,102,32], index: 0, kind: input, shape index: {}]
  %s1 = inlined_call_operand.vmem [shape: bf16[9,32,32], index: 1, kind: input, shape index: {}]
  %s2 = inlined_call_operand.vmem [shape: f32[1,32], index: 2, kind: input, shape index: {}]
  %s3 = inlined_call_operand.vmem [shape: f32[2,8,8,32], index: 3, kind: output, shape index: {}]
  %s4 = sld [smem:[#allocation0]]
  $region45: #{vqvae_forward.13} parent=0
    _
  %s6 = ssub.s32 1, %s4
  %s7 = scalar_select 0, %s6, %s4
  loop: start=0, step=1, limit=4
  $region2: #{vqvae_forward.13} parent=0 // loop_pre_header
    _
  $region3: #{vqvae_forward.13} parent=0 // loop_header
    %s9 = sphi 0, %s13
    %p10 = scmp.ge.s32.totalorder %s9, 4
    %s19 = sphi 0, %s21
    %s22 = sphi 0, %s19
    %s23 = sphi 0, %s22
    %s39 = sphi 0, %s23
    %s43 = sphi 0, %s43
    %s45 = sphi 0, %s43
    %s46 = sphi 0, %s45
    %s60 = sphi 0, %s46
    %s64 = sphi 0, %s64
    %s66 = sphi 0, %s64
    %s67 = sphi 0, %s66
    %s81 = sphi 0, %s67
    %s87 = sphi 0, %s89
    %s90 = sphi 0, %s87
    %s91 = sphi 0, %s90
    %s107 = sphi 0, %s91
  $region4: #{vqvae_forward.13} parent=0 // loop_header_branch
    %12 = sbr.rel (%p10) target = $region8
  $region5: #{vqvae_forward.13} parent=0 // loop_body
    %s14 = ssub.s32 %s9, 1
    %s15 = ssub.s32 %s9, 2
    %s16 = sadd.s32 %s9, 1
    %s17 = ssub.s32 %s9, %s16
    %p18 = scmp.eq.s32.totalorder %s17, 0
    %s20 = sadd.s32 %s19, 1
    %s21 = scalar_select %p18, %s19, %s20
    %p24 = pneg %p18
    %p25 = scmp.eq.s32.totalorder %s9, 1
    %p26 = por %p24, %p25
    %p27 = scmp.ne.s32.totalorder %s19, %s22
    %p28 = scmp.eq.s32.totalorder %s9, 0
    %p29 = por %p27, %p28
    %p30 = scmp.ne.s32.totalorder %s19, %s22
    %p31 = scmp.eq.s32.totalorder %s14, 1
    %p32 = por %p30, %p31
    %p33 = scmp.ne.s32.totalorder %s22, %s23
    %p34 = scmp.eq.s32.totalorder %s14, 0
    %p35 = por %p33, %p34
    %p36 = scmp.ne.s32.totalorder %s22, %s23
    %p37 = scmp.eq.s32.totalorder %s15, 1
    %p38 = por %p36, %p37
    %p40 = scmp.ne.s32.totalorder %s23, %s39
    %p41 = scmp.eq.s32.totalorder %s15, 0
    %p42 = por %p40, %p41
    %s44 = sadd.s32 %s43, 1
    %p47 = scmp.eq.s32.totalorder %s9, 1
    %p48 = scmp.ne.s32.totalorder %s43, %s45
    %p49 = scmp.eq.s32.totalorder %s9, 0
    %p50 = por %p48, %p49
    %p51 = scmp.ne.s32.totalorder %s43, %s45
    %p52 = scmp.eq.s32.totalorder %s14, 1
    %p53 = por %p51, %p52
    %p54 = scmp.ne.s32.totalorder %s45, %s46
    %p55 = scmp.eq.s32.totalorder %s14, 0
    %p56 = por %p54, %p55
    %p57 = scmp.ne.s32.totalorder %s45, %s46
    %p58 = scmp.eq.s32.totalorder %s15, 1
    %p59 = por %p57, %p58
    %p61 = scmp.ne.s32.totalorder %s46, %s60
    %p62 = scmp.eq.s32.totalorder %s15, 0
    %p63 = por %p61, %p62
    %s65 = sadd.s32 %s64, 1
    %p68 = scmp.eq.s32.totalorder %s9, 1
    %p69 = scmp.ne.s32.totalorder %s64, %s66
    %p70 = scmp.eq.s32.totalorder %s9, 0
    %p71 = por %p69, %p70
    %p72 = scmp.ne.s32.totalorder %s64, %s66
    %p73 = scmp.eq.s32.totalorder %s14, 1
    %p74 = por %p72, %p73
    %p75 = scmp.ne.s32.totalorder %s66, %s67
    %p76 = scmp.eq.s32.totalorder %s14, 0
    %p77 = por %p75, %p76
    %p78 = scmp.ne.s32.totalorder %s66, %s67
    %p79 = scmp.eq.s32.totalorder %s15, 1
    %p80 = por %p78, %p79
    %p82 = scmp.ne.s32.totalorder %s67, %s81
    %p83 = scmp.eq.s32.totalorder %s15, 0
    %p84 = por %p82, %p83
    %s85 = ssub.s32 %s9, %s16
    %p86 = scmp.eq.s32.totalorder %s85, 0
    %s88 = sadd.s32 %s87, 1
    %s89 = scalar_select %p86, %s87, %s88
    %p92 = pneg %p86
    %p93 = scmp.eq.s32.totalorder %s9, 1
    %p94 = por %p92, %p93
    %p95 = scmp.ne.s32.totalorder %s87, %s90
    %p96 = scmp.eq.s32.totalorder %s9, 0
    %p97 = por %p95, %p96
    %p98 = scmp.ne.s32.totalorder %s87, %s90
    %p99 = scmp.eq.s32.totalorder %s14, 1
    %p100 = por %p98, %p99
    %p101 = scmp.ne.s32.totalorder %s90, %s91
    %p102 = scmp.eq.s32.totalorder %s14, 0
    %p103 = por %p101, %p102
    %p104 = scmp.ne.s32.totalorder %s90, %s91
    %p105 = scmp.eq.s32.totalorder %s15, 1
    %p106 = por %p104, %p105
    %p108 = scmp.ne.s32.totalorder %s91, %s107
    %p109 = scmp.eq.s32.totalorder %s15, 0
    %p110 = por %p108, %p109
    %p111 = scmp.le.s32.totalorder 1, %s9
    %p112 = scmp.lt.s32.totalorder %s9, 3
    %p113 = pnand %p111, %p112
    %p114 = pneg %p113
    // Predicated region
    $region9: #{vqvae_forward.13} parent=5 // pred_check
      _
    $region10: #{vqvae_forward.13} parent=5 // pred_check_branch
      %116 = sbr.rel (%p113) target = $region12
    $region11: #{vqvae_forward.13} parent=5 // pred_region
      %s117 = ssub.s32 %s9, 1
      // Predicated region
      $region13: #{vqvae_forward.13} parent=11 // pred_check
        %p118 = pneg %p56
      $region14: #{vqvae_forward.13} parent=11 // pred_check_branch
        %120 = sbr.rel (%p118) target = $region16
      $region15: #{vqvae_forward.13} parent=11 // pred_region
        _
      $region16: #{vqvae_forward.13} parent=11 // pred_fallthru
        _
      // Predicated region
      $region17: #{vqvae_forward.13} parent=11 // pred_check
        %p121 = pneg %p77
      $region18: #{vqvae_forward.13} parent=11 // pred_check_branch
        %123 = sbr.rel (%p121) target = $region20
      $region19: #{vqvae_forward.13} parent=11 // pred_region
        _
      $region20: #{vqvae_forward.13} parent=11 // pred_fallthru
        _
    $region12: #{vqvae_forward.13} parent=5 // pred_fallthru
      _
    %p124 = scmp.lt.s32.totalorder %s9, 2
    // Predicated region
    $region21: #{vqvae_forward.13} parent=5 // pred_check
      %p125 = pneg %p124
    $region22: #{vqvae_forward.13} parent=5 // pred_check_branch
      %127 = sbr.rel (%p125) target = $region24
    $region23: #{vqvae_forward.13} parent=5 // pred_region
      // Predicated region
      $region25: #{vqvae_forward.13} parent=23 // pred_check
        %p128 = pneg %p29
      $region26: #{vqvae_forward.13} parent=23 // pred_check_branch
        %130 = sbr.rel (%p128) target = $region28
      $region27: #{vqvae_forward.13} parent=23 // pred_region
        %p131 = scmp.lt.s32.totalorder %s9, 1
        %s132 = scalar_select %p131, %s9, 1
        %s133 = smul.addr %s132, 13
        %s134 = smul.addr %s133, 8
        %s135 = scalar_lea.vmem %s0, %s134
      $region28: #{vqvae_forward.13} parent=23 // pred_fallthru
        _
    $region24: #{vqvae_forward.13} parent=5 // pred_fallthru
      _
    %p136 = scmp.le.s32.totalorder 1, %s9
    %p137 = scmp.lt.s32.totalorder %s9, 3
    %p138 = pnand %p136, %p137
    %p139 = pneg %p138
    // Predicated region
    $region29: #{vqvae_forward.13} parent=5 // pred_check
      _
    $region30: #{vqvae_forward.13} parent=5 // pred_check_branch
      %141 = sbr.rel (%p138) target = $region32
    $region31: #{vqvae_forward.13} parent=5 // pred_region
      %s142 = ssub.s32 %s9, 1
      %p143 = scmp.lt.s32.totalorder %s14, 1
      %s144 = scalar_select %p143, %s14, 1
      %s145 = smul.addr %s144, 13
      %s146 = smul.addr %s145, 8
      %s147 = scalar_lea.vmem %s0, %s146
      %p148 = pneg %p35
      %p149 = pneg %p32
      %p150 = pneg %p56
      %p151 = pneg %p53
      %p152 = pneg %p77
      %p153 = pneg %p74
      %p154 = pneg %p103
      %p155 = pneg %p100
      %p156 = scmp.lt.s32.totalorder %s14, 1
      %s157 = scalar_select %p156, %s14, 1
      %s158 = smul.addr %s157, 8
      %s159 = smul.addr %s158, 8
      %s160 = scalar_lea.vmem %s3, %s159
      %p161 = scmp.lt.s32.totalorder %s14, 1
      %s162 = scalar_select %p161, %s14, 1
      %s163 = smul.addr %s162, 13
      %s164 = smul.addr %s163, 8
      %s165 = scalar_lea.vmem %s0, %s164
      %p166 = scmp.lt.s32.totalorder %s14, 1
      %s167 = scalar_select %p166, %s14, 1
      %s168 = smul.addr %s167, 8
      %s169 = smul.addr %s168, 8
      %s170 = scalar_lea.vmem %s3, %s169
      %v172 = vld [vmem:[%s165] sm:$0xff]
      %v173 = vld [vmem:[%s165 + $0x8] sm:$0xff]
      %v174 = vld [vmem:[%s165 + $0x10] sm:$0xff]
      %v175 = vld [vmem:[%s165 + $0x18] sm:$0xff]
      %v176 = vld [vmem:[%s165 + $0x20] sm:$0xff]
      %v177 = vld [vmem:[%s165 + $0x28] sm:$0xff]
      %v178 = vld [vmem:[%s165 + $0x30] sm:$0xff]
      %v179 = vld [vmem:[%s165 + $0x38] sm:$0xff]
      %v180 = vld [vmem:[%s165 + $0x40] sm:$0xff]
      %v181 = vld [vmem:[%s165 + $0x48] sm:$0xff]
      %v182 = vpack.c.bf16 %v173, %v172
      %v183 = vpack.c.bf16 %v175, %v174
      %v184 = vpack.c.bf16 %v177, %v176
      %v185 = vpack.c.bf16 %v179, %v178
      %v186 = vpack.c.bf16 %v181, %v180
      %v187 = vld [vmem:[%s1] sm:$0xf]
      %v188 = vld [vmem:[%s1 + $0x4] sm:$0xf]
      %v189 = vld [vmem:[%s1 + $0x8] sm:$0xf]
      %v190 = vld [vmem:[%s1 + $0xc] sm:$0xf]
      %v191 = vld [vmem:[%s165 + $0x1] sm:$0xff]
      %v192 = vld [vmem:[%s165 + $0x9] sm:$0xff]
      %v193 = vld [vmem:[%s165 + $0x11] sm:$0xff]
      %v194 = vld [vmem:[%s165 + $0x19] sm:$0xff]
      %v195 = vld [vmem:[%s165 + $0x21] sm:$0xff]
      %v196 = vld [vmem:[%s165 + $0x29] sm:$0xff]
      %v197 = vld [vmem:[%s165 + $0x31] sm:$0xff]
      %v198 = vld [vmem:[%s165 + $0x39] sm:$0xff]
      %v199 = vld [vmem:[%s165 + $0x41] sm:$0xff]
      %v200 = vld [vmem:[%s165 + $0x49] sm:$0xff]
      %v201 = vpack.c.bf16 %v192, %v191
      %v202 = vpack.c.bf16 %v194, %v193
      %v203 = vpack.c.bf16 %v196, %v195
      %v204 = vpack.c.bf16 %v198, %v197
      %v205 = vpack.c.bf16 %v200, %v199
      %s206 = scalar_lea.vmem %s1, 16
      %v207 = vld [vmem:[%s206] sm:$0xf]
      %v208 = vld [vmem:[%s206 + $0x4] sm:$0xf]
      %v209 = vld [vmem:[%s206 + $0x8] sm:$0xf]
      %v210 = vld [vmem:[%s206 + $0xc] sm:$0xf]
      %v215 = vunpack.c.l.b16 %v207
      %v216 = vunpack.c.l.b16 %v208
      %v217 = vunpack.c.l.b16 %v209
      %v218 = vunpack.c.l.b16 %v210
      %v219 = vpack.c.b16 %v216, %v215
      %v220 = vpack.c.b16 %v218, %v217
      %vm223 = vcmask 261120
      %v225 = vsel %vm223, %v201, 0
      %v228 = vsel %vm223, %v202, 0
      %v231 = vsel %vm223, %v203, 0
      %v234 = vsel %vm223, %v204, 0
      %v237 = vsel %vm223, %v205, 0
      %239 = vmatpush.bf16.msra.mxu0 0
      %240 = vmatpush.bf16.msra.mxu0 0
      %241 = vmatpush.bf16.msra.mxu0 0
      %242 = vmatpush.bf16.msra.mxu0 0
      %243 = vmatpush.bf16.msra.mxu0 0
      %244 = vmatpush.bf16.msra.mxu0 0
      %245 = vmatpush.bf16.msra.mxu0 %v220
      %246 = vmatpush.bf16.msra.mxu0 %v219
      %247 = vmatmul.bf16.gmra.mxu0 %v225
      %v248 = vpop.f32.mrf.mxu0
      %v249 = vadd.f32 0.0, %v248
      %v250 = vpop.f32.mrf.mxu0
      %v251 = vadd.f32 0.0, %v250
      %252 = vmatmul.bf16.gmra.mxu0 %v228
      %v253 = vpop.f32.mrf.mxu0
      %v254 = vadd.f32 0.0, %v253
      %v255 = vpop.f32.mrf.mxu0
      %v256 = vadd.f32 0.0, %v255
      %257 = vmatmul.bf16.gmra.mxu0 %v231
      %v258 = vpop.f32.mrf.mxu0
      %v259 = vadd.f32 0.0, %v258
      %v260 = vpop.f32.mrf.mxu0
      %v261 = vadd.f32 0.0, %v260
      %262 = vmatmul.bf16.gmra.mxu0 %v234
      %v263 = vpop.f32.mrf.mxu0
      %v264 = vadd.f32 0.0, %v263
      %v265 = vpop.f32.mrf.mxu0
      %v266 = vadd.f32 0.0, %v265
      %267 = vmatmul.bf16.gmra.mxu0 %v237
      %v268 = vpop.f32.mrf.mxu0
      %v269 = vadd.f32 0.0, %v268
      %v270 = vpop.f32.mrf.mxu0
      %v271 = vadd.f32 0.0, %v270
      %272 = vdwg.mxu0
      %v277 = vunpack.c.l.b16 %v187
      %v278 = vunpack.c.l.b16 %v188
      %v279 = vunpack.c.l.b16 %v189
      %v280 = vunpack.c.l.b16 %v190
      %v281 = vpack.c.b16 %v278, %v277
      %v282 = vpack.c.b16 %v280, %v279
      %v286 = vsel %vm223, %v182, 0
      %v289 = vsel %vm223, %v183, 0
      %v292 = vsel %vm223, %v184, 0
      %v295 = vsel %vm223, %v185, 0
      %v298 = vsel %vm223, %v186, 0
      %300 = vmatpush.bf16.msra.mxu0 0
      %301 = vmatpush.bf16.msra.mxu0 0
      %302 = vmatpush.bf16.msra.mxu0 0
      %303 = vmatpush.bf16.msra.mxu0 0
      %304 = vmatpush.bf16.msra.mxu0 0
      %305 = vmatpush.bf16.msra.mxu0 0
      %306 = vmatpush.bf16.msra.mxu0 %v282
      %307 = vmatpush.bf16.msra.mxu0 %v281
      %308 = vmatmul.bf16.gmra.mxu0 %v286
      %v309 = vpop.f32.mrf.mxu0
      %v310 = vadd.f32 %v249, %v309
      %v311 = vpop.f32.mrf.mxu0
      %v312 = vadd.f32 %v251, %v311
      %313 = vmatmul.bf16.gmra.mxu0 %v289
      %v314 = vpop.f32.mrf.mxu0
      %v315 = vadd.f32 %v254, %v314
      %v316 = vpop.f32.mrf.mxu0
      %v317 = vadd.f32 %v256, %v316
      %318 = vmatmul.bf16.gmra.mxu0 %v292
      %v319 = vpop.f32.mrf.mxu0
      %v320 = vadd.f32 %v259, %v319
      %v321 = vpop.f32.mrf.mxu0
      %v322 = vadd.f32 %v261, %v321
      %323 = vmatmul.bf16.gmra.mxu0 %v295
      %v324 = vpop.f32.mrf.mxu0
      %v325 = vadd.f32 %v264, %v324
      %v326 = vpop.f32.mrf.mxu0
      %v327 = vadd.f32 %v266, %v326
      %328 = vmatmul.bf16.gmra.mxu0 %v298
      %v329 = vpop.f32.mrf.mxu0
      %v330 = vadd.f32 %v269, %v329
      %v331 = vpop.f32.mrf.mxu0
      %v332 = vadd.f32 %v271, %v331
      %333 = vdwg.mxu0
      %v334 = vld [vmem:[%s165 + $0x2] sm:$0xff]
      %v335 = vld [vmem:[%s165 + $0xa] sm:$0xff]
      %v336 = vld [vmem:[%s165 + $0x12] sm:$0xff]
      %v337 = vld [vmem:[%s165 + $0x1a] sm:$0xff]
      %v338 = vld [vmem:[%s165 + $0x22] sm:$0xff]
      %v339 = vld [vmem:[%s165 + $0x2a] sm:$0xff]
      %v340 = vld [vmem:[%s165 + $0x32] sm:$0xff]
      %v341 = vld [vmem:[%s165 + $0x3a] sm:$0xff]
      %v342 = vld [vmem:[%s165 + $0x42] sm:$0xff]
      %v343 = vld [vmem:[%s165 + $0x4a] sm:$0xff]
      %v344 = vpack.c.bf16 %v335, %v334
      %v345 = vpack.c.bf16 %v337, %v336
      %v346 = vpack.c.bf16 %v339, %v338
      %v347 = vpack.c.bf16 %v341, %v340
      %v348 = vpack.c.bf16 %v343, %v342
      %s349 = scalar_lea.vmem %s1, 32
      %v350 = vld [vmem:[%s349] sm:$0xf]
      %v351 = vld [vmem:[%s349 + $0x4] sm:$0xf]
      %v352 = vld [vmem:[%s349 + $0x8] sm:$0xf]
      %v353 = vld [vmem:[%s349 + $0xc] sm:$0xf]
      %v358 = vunpack.c.l.b16 %v350
      %v359 = vunpack.c.l.b16 %v351
      %v360 = vunpack.c.l.b16 %v352
      %v361 = vunpack.c.l.b16 %v353
      %v362 = vpack.c.b16 %v359, %v358
      %v363 = vpack.c.b16 %v361, %v360
      %v367 = vsel %vm223, %v344, 0
      %v370 = vsel %vm223, %v345, 0
      %v373 = vsel %vm223, %v346, 0
      %v376 = vsel %vm223, %v347, 0
      %v379 = vsel %vm223, %v348, 0
      %381 = vmatpush.bf16.msra.mxu0 0
      %382 = vmatpush.bf16.msra.mxu0 0
      %383 = vmatpush.bf16.msra.mxu0 0
      %384 = vmatpush.bf16.msra.mxu0 0
      %385 = vmatpush.bf16.msra.mxu0 0
      %386 = vmatpush.bf16.msra.mxu0 0
      %387 = vmatpush.bf16.msra.mxu0 %v363
      %388 = vmatpush.bf16.msra.mxu0 %v362
      %389 = vmatmul.bf16.gmra.mxu0 %v367
      %v390 = vpop.f32.mrf.mxu0
      %v391 = vadd.f32 0.0, %v390
      %v392 = vpop.f32.mrf.mxu0
      %v393 = vadd.f32 0.0, %v392
      %394 = vmatmul.bf16.gmra.mxu0 %v370
      %v395 = vpop.f32.mrf.mxu0
      %v396 = vadd.f32 0.0, %v395
      %v397 = vpop.f32.mrf.mxu0
      %v398 = vadd.f32 0.0, %v397
      %399 = vmatmul.bf16.gmra.mxu0 %v373
      %v400 = vpop.f32.mrf.mxu0
      %v401 = vadd.f32 0.0, %v400
      %v402 = vpop.f32.mrf.mxu0
      %v403 = vadd.f32 0.0, %v402
      %404 = vmatmul.bf16.gmra.mxu0 %v376
      %v405 = vpop.f32.mrf.mxu0
      %v406 = vadd.f32 0.0, %v405
      %v407 = vpop.f32.mrf.mxu0
      %v408 = vadd.f32 0.0, %v407
      %409 = vmatmul.bf16.gmra.mxu0 %v379
      %v410 = vpop.f32.mrf.mxu0
      %v411 = vadd.f32 0.0, %v410
      %v412 = vpop.f32.mrf.mxu0
      %v413 = vadd.f32 0.0, %v412
      %414 = vdwg.mxu0
      %v415 = vadd.f32 %v310, %v391
      %v416 = vadd.f32 %v312, %v393
      %v417 = vadd.f32 %v315, %v396
      %v418 = vadd.f32 %v317, %v398
      %v419 = vadd.f32 %v320, %v401
      %v420 = vadd.f32 %v322, %v403
      %v421 = vadd.f32 %v325, %v406
      %v422 = vadd.f32 %v327, %v408
      %v423 = vadd.f32 %v330, %v411
      %v424 = vadd.f32 %v332, %v413
      %v425 = vld [vmem:[%s165 + $0xa] sm:$0xff]
      %v426 = vld [vmem:[%s165 + $0x12] sm:$0xff]
      %v427 = vld [vmem:[%s165 + $0x1a] sm:$0xff]
      %v428 = vld [vmem:[%s165 + $0x22] sm:$0xff]
      %v429 = vld [vmem:[%s165 + $0x2a] sm:$0xff]
      %v430 = vld [vmem:[%s165 + $0x32] sm:$0xff]
      %v431 = vld [vmem:[%s165 + $0x3a] sm:$0xff]
      %v432 = vld [vmem:[%s165 + $0x42] sm:$0xff]
      %v433 = vld [vmem:[%s165 + $0x4a] sm:$0xff]
      %v434 = vld [vmem:[%s165 + $0x52] sm:$0xff]
      %v435 = vpack.c.bf16 %v426, %v425
      %v436 = vpack.c.bf16 %v428, %v427
      %v437 = vpack.c.bf16 %v430, %v429
      %v438 = vpack.c.bf16 %v432, %v431
      %v439 = vpack.c.bf16 %v434, %v433
      %s440 = scalar_lea.vmem %s1, 48
      %v441 = vld [vmem:[%s440] sm:$0xf]
      %v442 = vld [vmem:[%s440 + $0x4] sm:$0xf]
      %v443 = vld [vmem:[%s440 + $0x8] sm:$0xf]
      %v444 = vld [vmem:[%s440 + $0xc] sm:$0xf]
      %v449 = vunpack.c.l.b16 %v441
      %v450 = vunpack.c.l.b16 %v442
      %v451 = vunpack.c.l.b16 %v443
      %v452 = vunpack.c.l.b16 %v444
      %v453 = vpack.c.b16 %v450, %v449
      %v454 = vpack.c.b16 %v452, %v451
      %v458 = vsel %vm223, %v435, 0
      %v461 = vsel %vm223, %v436, 0
      %v464 = vsel %vm223, %v437, 0
      %v467 = vsel %vm223, %v438, 0
      %v470 = vsel %vm223, %v439, 0
      %472 = vmatpush.bf16.msra.mxu0 0
      %473 = vmatpush.bf16.msra.mxu0 0
      %474 = vmatpush.bf16.msra.mxu0 0
      %475 = vmatpush.bf16.msra.mxu0 0
      %476 = vmatpush.bf16.msra.mxu0 0
      %477 = vmatpush.bf16.msra.mxu0 0
      %478 = vmatpush.bf16.msra.mxu0 %v454
      %479 = vmatpush.bf16.msra.mxu0 %v453
      %480 = vmatmul.bf16.gmra.mxu0 %v458
      %v481 = vpop.f32.mrf.mxu0
      %v482 = vadd.f32 0.0, %v481
      %v483 = vpop.f32.mrf.mxu0
      %v484 = vadd.f32 0.0, %v483
      %485 = vmatmul.bf16.gmra.mxu0 %v461
      %v486 = vpop.f32.mrf.mxu0
      %v487 = vadd.f32 0.0, %v486
      %v488 = vpop.f32.mrf.mxu0
      %v489 = vadd.f32 0.0, %v488
      %490 = vmatmul.bf16.gmra.mxu0 %v464
      %v491 = vpop.f32.mrf.mxu0
      %v492 = vadd.f32 0.0, %v491
      %v493 = vpop.f32.mrf.mxu0
      %v494 = vadd.f32 0.0, %v493
      %495 = vmatmul.bf16.gmra.mxu0 %v467
      %v496 = vpop.f32.mrf.mxu0
      %v497 = vadd.f32 0.0, %v496
      %v498 = vpop.f32.mrf.mxu0
      %v499 = vadd.f32 0.0, %v498
      %500 = vmatmul.bf16.gmra.mxu0 %v470
      %v501 = vpop.f32.mrf.mxu0
      %v502 = vadd.f32 0.0, %v501
      %v503 = vpop.f32.mrf.mxu0
      %v504 = vadd.f32 0.0, %v503
      %505 = vdwg.mxu0
      %v506 = vadd.f32 %v415, %v482
      %v507 = vadd.f32 %v416, %v484
      %v508 = vadd.f32 %v417, %v487
      %v509 = vadd.f32 %v418, %v489
      %v510 = vadd.f32 %v419, %v492
      %v511 = vadd.f32 %v420, %v494
      %v512 = vadd.f32 %v421, %v497
      %v513 = vadd.f32 %v422, %v499
      %v514 = vadd.f32 %v423, %v502
      %v515 = vadd.f32 %v424, %v504
      %v516 = vld [vmem:[%s165 + $0xb] sm:$0xff]
      %v517 = vld [vmem:[%s165 + $0x13] sm:$0xff]
      %v518 = vld [vmem:[%s165 + $0x1b] sm:$0xff]
      %v519 = vld [vmem:[%s165 + $0x23] sm:$0xff]
      %v520 = vld [vmem:[%s165 + $0x2b] sm:$0xff]
      %v521 = vld [vmem:[%s165 + $0x33] sm:$0xff]
      %v522 = vld [vmem:[%s165 + $0x3b] sm:$0xff]
      %v523 = vld [vmem:[%s165 + $0x43] sm:$0xff]
      %v524 = vld [vmem:[%s165 + $0x4b] sm:$0xff]
      %v525 = vld [vmem:[%s165 + $0x53] sm:$0xff]
      %v526 = vpack.c.bf16 %v517, %v516
      %v527 = vpack.c.bf16 %v519, %v518
      %v528 = vpack.c.bf16 %v521, %v520
      %v529 = vpack.c.bf16 %v523, %v522
      %v530 = vpack.c.bf16 %v525, %v524
      %s531 = scalar_lea.vmem %s1, 64
      %v532 = vld [vmem:[%s531] sm:$0xf]
      %v533 = vld [vmem:[%s531 + $0x4] sm:$0xf]
      %v534 = vld [vmem:[%s531 + $0x8] sm:$0xf]
      %v535 = vld [vmem:[%s531 + $0xc] sm:$0xf]
      %v540 = vunpack.c.l.b16 %v532
      %v541 = vunpack.c.l.b16 %v533
      %v542 = vunpack.c.l.b16 %v534
      %v543 = vunpack.c.l.b16 %v535
      %v544 = vpack.c.b16 %v541, %v540
      %v545 = vpack.c.b16 %v543, %v542
      %v549 = vsel %vm223, %v526, 0
      %v552 = vsel %vm223, %v527, 0
      %v555 = vsel %vm223, %v528, 0
      %v558 = vsel %vm223, %v529, 0
      %v561 = vsel %vm223, %v530, 0
      %563 = vmatpush.bf16.msra.mxu0 0
      %564 = vmatpush.bf16.msra.mxu0 0
      %565 = vmatpush.bf16.msra.mxu0 0
      %566 = vmatpush.bf16.msra.mxu0 0
      %567 = vmatpush.bf16.msra.mxu0 0
      %568 = vmatpush.bf16.msra.mxu0 0
      %569 = vmatpush.bf16.msra.mxu0 %v545
      %570 = vmatpush.bf16.msra.mxu0 %v544
      %571 = vmatmul.bf16.gmra.mxu0 %v549
      %v572 = vpop.f32.mrf.mxu0
      %v573 = vadd.f32 0.0, %v572
      %v574 = vpop.f32.mrf.mxu0
      %v575 = vadd.f32 0.0, %v574
      %576 = vmatmul.bf16.gmra.mxu0 %v552
      %v577 = vpop.f32.mrf.mxu0
      %v578 = vadd.f32 0.0, %v577
      %v579 = vpop.f32.mrf.mxu0
      %v580 = vadd.f32 0.0, %v579
      %581 = vmatmul.bf16.gmra.mxu0 %v555
      %v582 = vpop.f32.mrf.mxu0
      %v583 = vadd.f32 0.0, %v582
      %v584 = vpop.f32.mrf.mxu0
      %v585 = vadd.f32 0.0, %v584
      %586 = vmatmul.bf16.gmra.mxu0 %v558
      %v587 = vpop.f32.mrf.mxu0
      %v588 = vadd.f32 0.0, %v587
      %v589 = vpop.f32.mrf.mxu0
      %v590 = vadd.f32 0.0, %v589
      %591 = vmatmul.bf16.gmra.mxu0 %v561
      %v592 = vpop.f32.mrf.mxu0
      %v593 = vadd.f32 0.0, %v592
      %v594 = vpop.f32.mrf.mxu0
      %v595 = vadd.f32 0.0, %v594
      %596 = vdwg.mxu0
      %v597 = vadd.f32 %v506, %v573
      %v598 = vadd.f32 %v507, %v575
      %v599 = vadd.f32 %v508, %v578
      %v600 = vadd.f32 %v509, %v580
      %v601 = vadd.f32 %v510, %v583
      %v602 = vadd.f32 %v511, %v585
      %v603 = vadd.f32 %v512, %v588
      %v604 = vadd.f32 %v513, %v590
      %v605 = vadd.f32 %v514, %v593
      %v606 = vadd.f32 %v515, %v595
      %v607 = vld [vmem:[%s165 + $0xc] sm:$0xff]
      %v608 = vld [vmem:[%s165 + $0x14] sm:$0xff]
      %v609 = vld [vmem:[%s165 + $0x1c] sm:$0xff]
      %v610 = vld [vmem:[%s165 + $0x24] sm:$0xff]
      %v611 = vld [vmem:[%s165 + $0x2c] sm:$0xff]
      %v612 = vld [vmem:[%s165 + $0x34] sm:$0xff]
      %v613 = vld [vmem:[%s165 + $0x3c] sm:$0xff]
      %v614 = vld [vmem:[%s165 + $0x44] sm:$0xff]
      %v615 = vld [vmem:[%s165 + $0x4c] sm:$0xff]
      %v616 = vld [vmem:[%s165 + $0x54] sm:$0xff]
      %v617 = vpack.c.bf16 %v608, %v607
      %v618 = vpack.c.bf16 %v610, %v609
      %v619 = vpack.c.bf16 %v612, %v611
      %v620 = vpack.c.bf16 %v614, %v613
      %v621 = vpack.c.bf16 %v616, %v615
      %s622 = scalar_lea.vmem %s1, 80
      %v623 = vld [vmem:[%s622] sm:$0xf]
      %v624 = vld [vmem:[%s622 + $0x4] sm:$0xf]
      %v625 = vld [vmem:[%s622 + $0x8] sm:$0xf]
      %v626 = vld [vmem:[%s622 + $0xc] sm:$0xf]
      %v631 = vunpack.c.l.b16 %v623
      %v632 = vunpack.c.l.b16 %v624
      %v633 = vunpack.c.l.b16 %v625
      %v634 = vunpack.c.l.b16 %v626
      %v635 = vpack.c.b16 %v632, %v631
      %v636 = vpack.c.b16 %v634, %v633
      %v640 = vsel %vm223, %v617, 0
      %v643 = vsel %vm223, %v618, 0
      %v646 = vsel %vm223, %v619, 0
      %v649 = vsel %vm223, %v620, 0
      %v652 = vsel %vm223, %v621, 0
      %654 = vmatpush.bf16.msra.mxu0 0
      %655 = vmatpush.bf16.msra.mxu0 0
      %656 = vmatpush.bf16.msra.mxu0 0
      %657 = vmatpush.bf16.msra.mxu0 0
      %658 = vmatpush.bf16.msra.mxu0 0
      %659 = vmatpush.bf16.msra.mxu0 0
      %660 = vmatpush.bf16.msra.mxu0 %v636
      %661 = vmatpush.bf16.msra.mxu0 %v635
      %662 = vmatmul.bf16.gmra.mxu0 %v640
      %v663 = vpop.f32.mrf.mxu0
      %v664 = vadd.f32 0.0, %v663
      %v665 = vpop.f32.mrf.mxu0
      %v666 = vadd.f32 0.0, %v665
      %667 = vmatmul.bf16.gmra.mxu0 %v643
      %v668 = vpop.f32.mrf.mxu0
      %v669 = vadd.f32 0.0, %v668
      %v670 = vpop.f32.mrf.mxu0
      %v671 = vadd.f32 0.0, %v670
      %672 = vmatmul.bf16.gmra.mxu0 %v646
      %v673 = vpop.f32.mrf.mxu0
      %v674 = vadd.f32 0.0, %v673
      %v675 = vpop.f32.mrf.mxu0
      %v676 = vadd.f32 0.0, %v675
      %677 = vmatmul.bf16.gmra.mxu0 %v649
      %v678 = vpop.f32.mrf.mxu0
      %v679 = vadd.f32 0.0, %v678
      %v680 = vpop.f32.mrf.mxu0
      %v681 = vadd.f32 0.0, %v680
      %682 = vmatmul.bf16.gmra.mxu0 %v652
      %v683 = vpop.f32.mrf.mxu0
      %v684 = vadd.f32 0.0, %v683
      %v685 = vpop.f32.mrf.mxu0
      %v686 = vadd.f32 0.0, %v685
      %687 = vdwg.mxu0
      %v688 = vadd.f32 %v597, %v664
      %v689 = vadd.f32 %v598, %v666
      %v690 = vadd.f32 %v599, %v669
      %v691 = vadd.f32 %v600, %v671
      %v692 = vadd.f32 %v601, %v674
      %v693 = vadd.f32 %v602, %v676
      %v694 = vadd.f32 %v603, %v679
      %v695 = vadd.f32 %v604, %v681
      %v696 = vadd.f32 %v605, %v684
      %v697 = vadd.f32 %v606, %v686
      %v698 = vld [vmem:[%s165 + $0x14] sm:$0xff]
      %v699 = vld [vmem:[%s165 + $0x1c] sm:$0xff]
      %v700 = vld [vmem:[%s165 + $0x24] sm:$0xff]
      %v701 = vld [vmem:[%s165 + $0x2c] sm:$0xff]
      %v702 = vld [vmem:[%s165 + $0x34] sm:$0xff]
      %v703 = vld [vmem:[%s165 + $0x3c] sm:$0xff]
      %v704 = vld [vmem:[%s165 + $0x44] sm:$0xff]
      %v705 = vld [vmem:[%s165 + $0x4c] sm:$0xff]
      %v706 = vld [vmem:[%s165 + $0x54] sm:$0xff]
      %v707 = vld [vmem:[%s165 + $0x5c] sm:$0xff]
      %v708 = vpack.c.bf16 %v699, %v698
      %v709 = vpack.c.bf16 %v701, %v700
      %v710 = vpack.c.bf16 %v703, %v702
      %v711 = vpack.c.bf16 %v705, %v704
      %v712 = vpack.c.bf16 %v707, %v706
      %s713 = scalar_lea.vmem %s1, 96
      %v714 = vld [vmem:[%s713] sm:$0xf]
      %v715 = vld [vmem:[%s713 + $0x4] sm:$0xf]
      %v716 = vld [vmem:[%s713 + $0x8] sm:$0xf]
      %v717 = vld [vmem:[%s713 + $0xc] sm:$0xf]
      %v722 = vunpack.c.l.b16 %v714
      %v723 = vunpack.c.l.b16 %v715
      %v724 = vunpack.c.l.b16 %v716
      %v725 = vunpack.c.l.b16 %v717
      %v726 = vpack.c.b16 %v723, %v722
      %v727 = vpack.c.b16 %v725, %v724
      %v731 = vsel %vm223, %v708, 0
      %v734 = vsel %vm223, %v709, 0
      %v737 = vsel %vm223, %v710, 0
      %v740 = vsel %vm223, %v711, 0
      %v743 = vsel %vm223, %v712, 0
      %745 = vmatpush.bf16.msra.mxu0 0
      %746 = vmatpush.bf16.msra.mxu0 0
      %747 = vmatpush.bf16.msra.mxu0 0
      %748 = vmatpush.bf16.msra.mxu0 0
      %749 = vmatpush.bf16.msra.mxu0 0
      %750 = vmatpush.bf16.msra.mxu0 0
      %751 = vmatpush.bf16.msra.mxu0 %v727
      %752 = vmatpush.bf16.msra.mxu0 %v726
      %753 = vmatmul.bf16.gmra.mxu0 %v731
      %v754 = vpop.f32.mrf.mxu0
      %v755 = vadd.f32 0.0, %v754
      %v756 = vpop.f32.mrf.mxu0
      %v757 = vadd.f32 0.0, %v756
      %758 = vmatmul.bf16.gmra.mxu0 %v734
      %v759 = vpop.f32.mrf.mxu0
      %v760 = vadd.f32 0.0, %v759
      %v761 = vpop.f32.mrf.mxu0
      %v762 = vadd.f32 0.0, %v761
      %763 = vmatmul.bf16.gmra.mxu0 %v737
      %v764 = vpop.f32.mrf.mxu0
      %v765 = vadd.f32 0.0, %v764
      %v766 = vpop.f32.mrf.mxu0
      %v767 = vadd.f32 0.0, %v766
      %768 = vmatmul.bf16.gmra.mxu0 %v740
      %v769 = vpop.f32.mrf.mxu0
      %v770 = vadd.f32 0.0, %v769
      %v771 = vpop.f32.mrf.mxu0
      %v772 = vadd.f32 0.0, %v771
      %773 = vmatmul.bf16.gmra.mxu0 %v743
      %v774 = vpop.f32.mrf.mxu0
      %v775 = vadd.f32 0.0, %v774
      %v776 = vpop.f32.mrf.mxu0
      %v777 = vadd.f32 0.0, %v776
      %778 = vdwg.mxu0
      %v779 = vadd.f32 %v688, %v755
      %v780 = vadd.f32 %v689, %v757
      %v781 = vadd.f32 %v690, %v760
      %v782 = vadd.f32 %v691, %v762
      %v783 = vadd.f32 %v692, %v765
      %v784 = vadd.f32 %v693, %v767
      %v785 = vadd.f32 %v694, %v770
      %v786 = vadd.f32 %v695, %v772
      %v787 = vadd.f32 %v696, %v775
      %v788 = vadd.f32 %v697, %v777
      %v789 = vld [vmem:[%s165 + $0x15] sm:$0xff]
      %v790 = vld [vmem:[%s165 + $0x1d] sm:$0xff]
      %v791 = vld [vmem:[%s165 + $0x25] sm:$0xff]
      %v792 = vld [vmem:[%s165 + $0x2d] sm:$0xff]
      %v793 = vld [vmem:[%s165 + $0x35] sm:$0xff]
      %v794 = vld [vmem:[%s165 + $0x3d] sm:$0xff]
      %v795 = vld [vmem:[%s165 + $0x45] sm:$0xff]
      %v796 = vld [vmem:[%s165 + $0x4d] sm:$0xff]
      %v797 = vld [vmem:[%s165 + $0x55] sm:$0xff]
      %v798 = vld [vmem:[%s165 + $0x5d] sm:$0xff]
      %v799 = vpack.c.bf16 %v790, %v789
      %v800 = vpack.c.bf16 %v792, %v791
      %v801 = vpack.c.bf16 %v794, %v793
      %v802 = vpack.c.bf16 %v796, %v795
      %v803 = vpack.c.bf16 %v798, %v797
      %s804 = scalar_lea.vmem %s1, 112
      %v805 = vld [vmem:[%s804] sm:$0xf]
      %v806 = vld [vmem:[%s804 + $0x4] sm:$0xf]
      %v807 = vld [vmem:[%s804 + $0x8] sm:$0xf]
      %v808 = vld [vmem:[%s804 + $0xc] sm:$0xf]
      %v813 = vunpack.c.l.b16 %v805
      %v814 = vunpack.c.l.b16 %v806
      %v815 = vunpack.c.l.b16 %v807
      %v816 = vunpack.c.l.b16 %v808
      %v817 = vpack.c.b16 %v814, %v813
      %v818 = vpack.c.b16 %v816, %v815
      %v822 = vsel %vm223, %v799, 0
      %v825 = vsel %vm223, %v800, 0
      %v828 = vsel %vm223, %v801, 0
      %v831 = vsel %vm223, %v802, 0
      %v834 = vsel %vm223, %v803, 0
      %836 = vmatpush.bf16.msra.mxu0 0
      %837 = vmatpush.bf16.msra.mxu0 0
      %838 = vmatpush.bf16.msra.mxu0 0
      %839 = vmatpush.bf16.msra.mxu0 0
      %840 = vmatpush.bf16.msra.mxu0 0
      %841 = vmatpush.bf16.msra.mxu0 0
      %842 = vmatpush.bf16.msra.mxu0 %v818
      %843 = vmatpush.bf16.msra.mxu0 %v817
      %844 = vmatmul.bf16.gmra.mxu0 %v822
      %v845 = vpop.f32.mrf.mxu0
      %v846 = vadd.f32 0.0, %v845
      %v847 = vpop.f32.mrf.mxu0
      %v848 = vadd.f32 0.0, %v847
      %849 = vmatmul.bf16.gmra.mxu0 %v825
      %v850 = vpop.f32.mrf.mxu0
      %v851 = vadd.f32 0.0, %v850
      %v852 = vpop.f32.mrf.mxu0
      %v853 = vadd.f32 0.0, %v852
      %854 = vmatmul.bf16.gmra.mxu0 %v828
      %v855 = vpop.f32.mrf.mxu0
      %v856 = vadd.f32 0.0, %v855
      %v857 = vpop.f32.mrf.mxu0
      %v858 = vadd.f32 0.0, %v857
      %859 = vmatmul.bf16.gmra.mxu0 %v831
      %v860 = vpop.f32.mrf.mxu0
      %v861 = vadd.f32 0.0, %v860
      %v862 = vpop.f32.mrf.mxu0
      %v863 = vadd.f32 0.0, %v862
      %864 = vmatmul.bf16.gmra.mxu0 %v834
      %v865 = vpop.f32.mrf.mxu0
      %v866 = vadd.f32 0.0, %v865
      %v867 = vpop.f32.mrf.mxu0
      %v868 = vadd.f32 0.0, %v867
      %869 = vdwg.mxu0
      %v870 = vadd.f32 %v779, %v846
      %v871 = vadd.f32 %v780, %v848
      %v872 = vadd.f32 %v781, %v851
      %v873 = vadd.f32 %v782, %v853
      %v874 = vadd.f32 %v783, %v856
      %v875 = vadd.f32 %v784, %v858
      %v876 = vadd.f32 %v785, %v861
      %v877 = vadd.f32 %v786, %v863
      %v878 = vadd.f32 %v787, %v866
      %v879 = vadd.f32 %v788, %v868
      %v880 = vld [vmem:[%s165 + $0x16] sm:$0xff]
      %v881 = vld [vmem:[%s165 + $0x1e] sm:$0xff]
      %v882 = vld [vmem:[%s165 + $0x26] sm:$0xff]
      %v883 = vld [vmem:[%s165 + $0x2e] sm:$0xff]
      %v884 = vld [vmem:[%s165 + $0x36] sm:$0xff]
      %v885 = vld [vmem:[%s165 + $0x3e] sm:$0xff]
      %v886 = vld [vmem:[%s165 + $0x46] sm:$0xff]
      %v887 = vld [vmem:[%s165 + $0x4e] sm:$0xff]
      %v888 = vld [vmem:[%s165 + $0x56] sm:$0xff]
      %v889 = vld [vmem:[%s165 + $0x5e] sm:$0xff]
      %v890 = vpack.c.bf16 %v881, %v880
      %v891 = vpack.c.bf16 %v883, %v882
      %v892 = vpack.c.bf16 %v885, %v884
      %v893 = vpack.c.bf16 %v887, %v886
      %v894 = vpack.c.bf16 %v889, %v888
      %s895 = scalar_lea.vmem %s1, 128
      %v896 = vld [vmem:[%s895] sm:$0xf]
      %v897 = vld [vmem:[%s895 + $0x4] sm:$0xf]
      %v898 = vld [vmem:[%s895 + $0x8] sm:$0xf]
      %v899 = vld [vmem:[%s895 + $0xc] sm:$0xf]
      %v904 = vunpack.c.l.b16 %v896
      %v905 = vunpack.c.l.b16 %v897
      %v906 = vunpack.c.l.b16 %v898
      %v907 = vunpack.c.l.b16 %v899
      %v908 = vpack.c.b16 %v905, %v904
      %v909 = vpack.c.b16 %v907, %v906
      %v913 = vsel %vm223, %v890, 0
      %v916 = vsel %vm223, %v891, 0
      %v919 = vsel %vm223, %v892, 0
      %v922 = vsel %vm223, %v893, 0
      %v925 = vsel %vm223, %v894, 0
      %927 = vmatpush.bf16.msra.mxu0 0
      %928 = vmatpush.bf16.msra.mxu0 0
      %929 = vmatpush.bf16.msra.mxu0 0
      %930 = vmatpush.bf16.msra.mxu0 0
      %931 = vmatpush.bf16.msra.mxu0 0
      %932 = vmatpush.bf16.msra.mxu0 0
      %933 = vmatpush.bf16.msra.mxu0 %v909
      %934 = vmatpush.bf16.msra.mxu0 %v908
      %935 = vmatmul.bf16.gmra.mxu0 %v913
      %v936 = vpop.f32.mrf.mxu0
      %v937 = vadd.f32 0.0, %v936
      %v938 = vpop.f32.mrf.mxu0
      %v939 = vadd.f32 0.0, %v938
      %940 = vmatmul.bf16.gmra.mxu0 %v916
      %v941 = vpop.f32.mrf.mxu0
      %v942 = vadd.f32 0.0, %v941
      %v943 = vpop.f32.mrf.mxu0
      %v944 = vadd.f32 0.0, %v943
      %945 = vmatmul.bf16.gmra.mxu0 %v919
      %v946 = vpop.f32.mrf.mxu0
      %v947 = vadd.f32 0.0, %v946
      %v948 = vpop.f32.mrf.mxu0
      %v949 = vadd.f32 0.0, %v948
      %950 = vmatmul.bf16.gmra.mxu0 %v922
      %v951 = vpop.f32.mrf.mxu0
      %v952 = vadd.f32 0.0, %v951
      %v953 = vpop.f32.mrf.mxu0
      %v954 = vadd.f32 0.0, %v953
      %955 = vmatmul.bf16.gmra.mxu0 %v925
      %v956 = vpop.f32.mrf.mxu0
      %v957 = vadd.f32 0.0, %v956
      %v958 = vpop.f32.mrf.mxu0
      %v959 = vadd.f32 0.0, %v958
      %960 = vdwg.mxu0
      %v961 = vadd.f32 %v870, %v937
      %v962 = vadd.f32 %v871, %v939
      %v963 = vadd.f32 %v872, %v942
      %v964 = vadd.f32 %v873, %v944
      %v965 = vadd.f32 %v874, %v947
      %v966 = vadd.f32 %v875, %v949
      %v967 = vadd.f32 %v876, %v952
      %v968 = vadd.f32 %v877, %v954
      %v969 = vadd.f32 %v878, %v957
      %v970 = vadd.f32 %v879, %v959
      %v971 = vld [vmem:[%s2] sm:$0x1]
      %v973 = vperm.slane %v971, 0
      %v975 = vadd.f32 %v961, %v973
      %v976 = vadd.f32 %v962, %v973
      %v977 = vadd.f32 %v963, %v973
      %v978 = vadd.f32 %v964, %v973
      %v979 = vadd.f32 %v965, %v973
      %v980 = vadd.f32 %v966, %v973
      %v981 = vadd.f32 %v967, %v973
      %v982 = vadd.f32 %v968, %v973
      %v983 = vadd.f32 %v969, %v973
      %v984 = vadd.f32 %v970, %v973
      %985 = vst.msk [vmem:[%s170] sm:$0xff] %vm223, %v975
      %s986 = scalar_lea.vmem %s170, 8
      %vm987 = vcmask 261122
      %988 = vst.msk [vmem:[%s986 - $0x2] sm:$0xfc] %vm987, %v976
      %vm989 = vcmask 254976
      %990 = vst.msk [vmem:[%s986 + $0x6] sm:$0x3] %vm989, %v977
      %s991 = scalar_lea.vmem %s170, 16
      %vm992 = vcmask 261124
      %993 = vst.msk [vmem:[%s991 - $0x4] sm:$0xf0] %vm992, %v977
      %vm994 = vcmask 257024
      %995 = vst.msk [vmem:[%s991 + $0x4] sm:$0xf] %vm994, %v978
      %s996 = scalar_lea.vmem %s170, 24
      %vm997 = vcmask 261126
      %998 = vst.msk [vmem:[%s996 - $0x6] sm:$0xc0] %vm997, %v978
      %vm999 = vcmask 259072
      %1000 = vst.msk [vmem:[%s996 + $0x2] sm:$0x3f] %vm999, %v979
      %s1001 = scalar_lea.vmem %s170, 32
      %1002 = vst.msk [vmem:[%s1001] sm:$0xff] %vm223, %v980
      %s1003 = scalar_lea.vmem %s170, 40
      %1004 = vst.msk [vmem:[%s1003 - $0x2] sm:$0xfc] %vm987, %v981
      %1005 = vst.msk [vmem:[%s1003 + $0x6] sm:$0x3] %vm989, %v982
      %s1006 = scalar_lea.vmem %s170, 48
      %1007 = vst.msk [vmem:[%s1006 - $0x4] sm:$0xf0] %vm992, %v982
      %1008 = vst.msk [vmem:[%s1006 + $0x4] sm:$0xf] %vm994, %v983
      %s1009 = scalar_lea.vmem %s170, 56
      %1010 = vst.msk [vmem:[%s1009 - $0x6] sm:$0xc0] %vm997, %v983
      %1011 = vst.msk [vmem:[%s1009 + $0x2] sm:$0x3f] %vm999, %v984
      %p1012 = scmp.lt.s32.totalorder %s14, 1
      %s1013 = scalar_select %p1012, %s14, 1
      %s1014 = smul.addr %s1013, 8
      %s1015 = smul.addr %s1014, 8
      %s1016 = scalar_lea.vmem %s3, %s1015
      // Predicated region
      $region33: #{vqvae_forward.13} parent=31 // pred_check
        %p1017 = pneg %p100
      $region34: #{vqvae_forward.13} parent=31 // pred_check_branch
        %1019 = sbr.rel (%p1017) target = $region36
      $region35: #{vqvae_forward.13} parent=31 // pred_region
        _
      $region36: #{vqvae_forward.13} parent=31 // pred_fallthru
        _
    $region32: #{vqvae_forward.13} parent=5 // pred_fallthru
      _
    %p1020 = scmp.le.s32.totalorder 2, %s9
    // Predicated region
    $region37: #{vqvae_forward.13} parent=5 // pred_check
      %p1021 = pneg %p1020
    $region38: #{vqvae_forward.13} parent=5 // pred_check_branch
      %1023 = sbr.rel (%p1021) target = $region40
    $region39: #{vqvae_forward.13} parent=5 // pred_region
      %s1024 = ssub.s32 %s9, 2
      // Predicated region
      $region41: #{vqvae_forward.13} parent=39 // pred_check
        %p1025 = pneg %p106
      $region42: #{vqvae_forward.13} parent=39 // pred_check_branch
        %1027 = sbr.rel (%p1025) target = $region44
      $region43: #{vqvae_forward.13} parent=39 // pred_region
        %p1028 = scmp.lt.s32.totalorder %s15, 1
        %s1029 = scalar_select %p1028, %s15, 1
        %s1030 = smul.addr %s1029, 8
        %s1031 = smul.addr %s1030, 8
        %s1032 = scalar_lea.vmem %s3, %s1031
      $region44: #{vqvae_forward.13} parent=39 // pred_fallthru
        _
    $region40: #{vqvae_forward.13} parent=5 // pred_fallthru
      _
  $region6: #{vqvae_forward.13} parent=0 // loop_footer
    %s13 = sadd.s32 1, %s9
  $region7: #{vqvae_forward.13} parent=0 // loop_footer_branch
    %8 = sbr.rel target = $region3
  $region8: #{vqvae_forward.13} parent=0 // loop_exit
    _

// kernel: vqvae_forward.15
$region0: #{vqvae_forward.15}
  #allocation0 [shape = 'u32[]', space=smem, size = 0x4, offset = 0x4, fixed_abs, tag = 'smem constant byte address 0x4 - core index']
  #allocation1 [shape = 'u32[72,128]{1,0:T(1,128)}', space=vmem, size = 0x9000, scoped, tag = 'internal scratch']
  %s0 = inlined_call_operand.vmem [shape: f32[2,26,128], index: 0, kind: input, shape index: {}]
  %s1 = inlined_call_operand.vmem [shape: bf16[4,128,32], index: 1, kind: input, shape index: {}]
  %s2 = inlined_call_operand.vmem [shape: f32[1,32], index: 2, kind: input, shape index: {}]
  %s3 = inlined_call_operand.vmem [shape: f32[2,4,4,32], index: 3, kind: output, shape index: {}]
  %s4 = sld [smem:[#allocation0]]
  $region45: #{vqvae_forward.15} parent=0
    _
  %s6 = ssub.s32 1, %s4
  %s7 = scalar_select 0, %s6, %s4
  loop: start=0, step=1, limit=4
  $region2: #{vqvae_forward.15} parent=0 // loop_pre_header
    _
  $region3: #{vqvae_forward.15} parent=0 // loop_header
    %s9 = sphi 0, %s13
    %p10 = scmp.ge.s32.totalorder %s9, 4
    %s19 = sphi 0, %s21
    %s22 = sphi 0, %s19
    %s23 = sphi 0, %s22
    %s39 = sphi 0, %s23
    %s43 = sphi 0, %s43
    %s45 = sphi 0, %s43
    %s46 = sphi 0, %s45
    %s60 = sphi 0, %s46
    %s64 = sphi 0, %s64
    %s66 = sphi 0, %s64
    %s67 = sphi 0, %s66
    %s81 = sphi 0, %s67
    %s87 = sphi 0, %s89
    %s90 = sphi 0, %s87
    %s91 = sphi 0, %s90
    %s107 = sphi 0, %s91
  $region4: #{vqvae_forward.15} parent=0 // loop_header_branch
    %12 = sbr.rel (%p10) target = $region8
  $region5: #{vqvae_forward.15} parent=0 // loop_body
    %s14 = ssub.s32 %s9, 1
    %s15 = ssub.s32 %s9, 2
    %s16 = sadd.s32 %s9, 1
    %s17 = ssub.s32 %s9, %s16
    %p18 = scmp.eq.s32.totalorder %s17, 0
    %s20 = sadd.s32 %s19, 1
    %s21 = scalar_select %p18, %s19, %s20
    %p24 = pneg %p18
    %p25 = scmp.eq.s32.totalorder %s9, 1
    %p26 = por %p24, %p25
    %p27 = scmp.ne.s32.totalorder %s19, %s22
    %p28 = scmp.eq.s32.totalorder %s9, 0
    %p29 = por %p27, %p28
    %p30 = scmp.ne.s32.totalorder %s19, %s22
    %p31 = scmp.eq.s32.totalorder %s14, 1
    %p32 = por %p30, %p31
    %p33 = scmp.ne.s32.totalorder %s22, %s23
    %p34 = scmp.eq.s32.totalorder %s14, 0
    %p35 = por %p33, %p34
    %p36 = scmp.ne.s32.totalorder %s22, %s23
    %p37 = scmp.eq.s32.totalorder %s15, 1
    %p38 = por %p36, %p37
    %p40 = scmp.ne.s32.totalorder %s23, %s39
    %p41 = scmp.eq.s32.totalorder %s15, 0
    %p42 = por %p40, %p41
    %s44 = sadd.s32 %s43, 1
    %p47 = scmp.eq.s32.totalorder %s9, 1
    %p48 = scmp.ne.s32.totalorder %s43, %s45
    %p49 = scmp.eq.s32.totalorder %s9, 0
    %p50 = por %p48, %p49
    %p51 = scmp.ne.s32.totalorder %s43, %s45
    %p52 = scmp.eq.s32.totalorder %s14, 1
    %p53 = por %p51, %p52
    %p54 = scmp.ne.s32.totalorder %s45, %s46
    %p55 = scmp.eq.s32.totalorder %s14, 0
    %p56 = por %p54, %p55
    %p57 = scmp.ne.s32.totalorder %s45, %s46
    %p58 = scmp.eq.s32.totalorder %s15, 1
    %p59 = por %p57, %p58
    %p61 = scmp.ne.s32.totalorder %s46, %s60
    %p62 = scmp.eq.s32.totalorder %s15, 0
    %p63 = por %p61, %p62
    %s65 = sadd.s32 %s64, 1
    %p68 = scmp.eq.s32.totalorder %s9, 1
    %p69 = scmp.ne.s32.totalorder %s64, %s66
    %p70 = scmp.eq.s32.totalorder %s9, 0
    %p71 = por %p69, %p70
    %p72 = scmp.ne.s32.totalorder %s64, %s66
    %p73 = scmp.eq.s32.totalorder %s14, 1
    %p74 = por %p72, %p73
    %p75 = scmp.ne.s32.totalorder %s66, %s67
    %p76 = scmp.eq.s32.totalorder %s14, 0
    %p77 = por %p75, %p76
    %p78 = scmp.ne.s32.totalorder %s66, %s67
    %p79 = scmp.eq.s32.totalorder %s15, 1
    %p80 = por %p78, %p79
    %p82 = scmp.ne.s32.totalorder %s67, %s81
    %p83 = scmp.eq.s32.totalorder %s15, 0
    %p84 = por %p82, %p83
    %s85 = ssub.s32 %s9, %s16
    %p86 = scmp.eq.s32.totalorder %s85, 0
    %s88 = sadd.s32 %s87, 1
    %s89 = scalar_select %p86, %s87, %s88
    %p92 = pneg %p86
    %p93 = scmp.eq.s32.totalorder %s9, 1
    %p94 = por %p92, %p93
    %p95 = scmp.ne.s32.totalorder %s87, %s90
    %p96 = scmp.eq.s32.totalorder %s9, 0
    %p97 = por %p95, %p96
    %p98 = scmp.ne.s32.totalorder %s87, %s90
    %p99 = scmp.eq.s32.totalorder %s14, 1
    %p100 = por %p98, %p99
    %p101 = scmp.ne.s32.totalorder %s90, %s91
    %p102 = scmp.eq.s32.totalorder %s14, 0
    %p103 = por %p101, %p102
    %p104 = scmp.ne.s32.totalorder %s90, %s91
    %p105 = scmp.eq.s32.totalorder %s15, 1
    %p106 = por %p104, %p105
    %p108 = scmp.ne.s32.totalorder %s91, %s107
    %p109 = scmp.eq.s32.totalorder %s15, 0
    %p110 = por %p108, %p109
    %p111 = scmp.le.s32.totalorder 1, %s9
    %p112 = scmp.lt.s32.totalorder %s9, 3
    %p113 = pnand %p111, %p112
    %p114 = pneg %p113
    // Predicated region
    $region9: #{vqvae_forward.15} parent=5 // pred_check
      _
    $region10: #{vqvae_forward.15} parent=5 // pred_check_branch
      %116 = sbr.rel (%p113) target = $region12
    $region11: #{vqvae_forward.15} parent=5 // pred_region
      %s117 = ssub.s32 %s9, 1
      // Predicated region
      $region13: #{vqvae_forward.15} parent=11 // pred_check
        %p118 = pneg %p56
      $region14: #{vqvae_forward.15} parent=11 // pred_check_branch
        %120 = sbr.rel (%p118) target = $region16
      $region15: #{vqvae_forward.15} parent=11 // pred_region
        _
      $region16: #{vqvae_forward.15} parent=11 // pred_fallthru
        _
      // Predicated region
      $region17: #{vqvae_forward.15} parent=11 // pred_check
        %p121 = pneg %p77
      $region18: #{vqvae_forward.15} parent=11 // pred_check_branch
        %123 = sbr.rel (%p121) target = $region20
      $region19: #{vqvae_forward.15} parent=11 // pred_region
        _
      $region20: #{vqvae_forward.15} parent=11 // pred_fallthru
        _
    $region12: #{vqvae_forward.15} parent=5 // pred_fallthru
      _
    %p124 = scmp.lt.s32.totalorder %s9, 2
    // Predicated region
    $region21: #{vqvae_forward.15} parent=5 // pred_check
      %p125 = pneg %p124
    $region22: #{vqvae_forward.15} parent=5 // pred_check_branch
      %127 = sbr.rel (%p125) target = $region24
    $region23: #{vqvae_forward.15} parent=5 // pred_region
      // Predicated region
      $region25: #{vqvae_forward.15} parent=23 // pred_check
        %p128 = pneg %p29
      $region26: #{vqvae_forward.15} parent=23 // pred_check_branch
        %130 = sbr.rel (%p128) target = $region28
      $region27: #{vqvae_forward.15} parent=23 // pred_region
        %p131 = scmp.lt.s32.totalorder %s9, 1
        %s132 = scalar_select %p131, %s9, 1
        %s133 = smul.addr %s132, 4
        %s134 = smul.addr %s133, 8
        %s135 = scalar_lea.vmem %s0, %s134
      $region28: #{vqvae_forward.15} parent=23 // pred_fallthru
        _
    $region24: #{vqvae_forward.15} parent=5 // pred_fallthru
      _
    %p136 = scmp.le.s32.totalorder 1, %s9
    %p137 = scmp.lt.s32.totalorder %s9, 3
    %p138 = pnand %p136, %p137
    %p139 = pneg %p138
    // Predicated region
    $region29: #{vqvae_forward.15} parent=5 // pred_check
      _
    $region30: #{vqvae_forward.15} parent=5 // pred_check_branch
      %141 = sbr.rel (%p138) target = $region32
    $region31: #{vqvae_forward.15} parent=5 // pred_region
      %s142 = ssub.s32 %s9, 1
      %p143 = scmp.lt.s32.totalorder %s14, 1
      %s144 = scalar_select %p143, %s14, 1
      %s145 = smul.addr %s144, 4
      %s146 = smul.addr %s145, 8
      %s147 = scalar_lea.vmem %s0, %s146
      %p148 = pneg %p35
      %p149 = pneg %p32
      %p150 = pneg %p56
      %p151 = pneg %p53
      %p152 = pneg %p77
      %p153 = pneg %p74
      %p154 = pneg %p103
      %p155 = pneg %p100
      %p156 = scmp.lt.s32.totalorder %s14, 1
      %s157 = scalar_select %p156, %s14, 1
      %s158 = smul.addr %s157, 4
      %s159 = smul.addr %s158, 4
      %s160 = scalar_lea.vmem %s3, %s159
      %p161 = scmp.lt.s32.totalorder %s14, 1
      %s162 = scalar_select %p161, %s14, 1
      %s163 = smul.addr %s162, 4
      %s164 = smul.addr %s163, 8
      %s165 = scalar_lea.vmem %s0, %s164
      %p166 = scmp.lt.s32.totalorder %s14, 1
      %s167 = scalar_select %p166, %s14, 1
      %s168 = smul.addr %s167, 4
      %s169 = smul.addr %s168, 4
      %s170 = scalar_lea.vmem %s3, %s169
      %v171 = vld [vmem:[%s165] sm:$0xff]
      %v172 = vld [vmem:[%s165 + $0x8] sm:$0xff]
      %v173 = vld [vmem:[%s165 + $0x10] sm:$0xf]
      %v174 = vpack.c.bf16 %v172, %v171
      %v175 = vpack.c.bf16 %v173, %v173
      %v176 = vld [vmem:[%s1] sm:$0xf]
      %v177 = vld [vmem:[%s1 + $0x4] sm:$0xf]
      %v178 = vld [vmem:[%s1 + $0x8] sm:$0xf]
      %v179 = vld [vmem:[%s1 + $0xc] sm:$0xf]
      %v180 = vld [vmem:[%s1 + $0x10] sm:$0xf]
      %v181 = vld [vmem:[%s1 + $0x14] sm:$0xf]
      %v182 = vld [vmem:[%s1 + $0x18] sm:$0xf]
      %v183 = vld [vmem:[%s1 + $0x1c] sm:$0xf]
      %v184 = vld [vmem:[%s1 + $0x20] sm:$0xf]
      %v185 = vld [vmem:[%s1 + $0x24] sm:$0xf]
      %v186 = vld [vmem:[%s1 + $0x28] sm:$0xf]
      %v187 = vld [vmem:[%s1 + $0x2c] sm:$0xf]
      %v188 = vld [vmem:[%s1 + $0x30] sm:$0xf]
      %v189 = vld [vmem:[%s1 + $0x34] sm:$0xf]
      %v190 = vld [vmem:[%s1 + $0x38] sm:$0xf]
      %v191 = vld [vmem:[%s1 + $0x3c] sm:$0xf]
      %v192 = vld [vmem:[%s165 + $0x1] sm:$0xff]
      %v193 = vld [vmem:[%s165 + $0x9] sm:$0xff]
      %v194 = vld [vmem:[%s165 + $0x11] sm:$0xf]
      %v195 = vpack.c.bf16 %v193, %v192
      %v196 = vpack.c.bf16 %v194, %v194
      %s197 = scalar_lea.vmem %s1, 64
      %v198 = vld [vmem:[%s197] sm:$0xf]
      %v199 = vld [vmem:[%s197 + $0x4] sm:$0xf]
      %v200 = vld [vmem:[%s197 + $0x8] sm:$0xf]
      %v201 = vld [vmem:[%s197 + $0xc] sm:$0xf]
      %v202 = vld [vmem:[%s197 + $0x10] sm:$0xf]
      %v203 = vld [vmem:[%s197 + $0x14] sm:$0xf]
      %v204 = vld [vmem:[%s197 + $0x18] sm:$0xf]
      %v205 = vld [vmem:[%s197 + $0x1c] sm:$0xf]
      %v206 = vld [vmem:[%s197 + $0x20] sm:$0xf]
      %v207 = vld [vmem:[%s197 + $0x24] sm:$0xf]
      %v208 = vld [vmem:[%s197 + $0x28] sm:$0xf]
      %v209 = vld [vmem:[%s197 + $0x2c] sm:$0xf]
      %v210 = vld [vmem:[%s197 + $0x30] sm:$0xf]
      %v211 = vld [vmem:[%s197 + $0x34] sm:$0xf]
      %v212 = vld [vmem:[%s197 + $0x38] sm:$0xf]
      %v213 = vld [vmem:[%s197 + $0x3c] sm:$0xf]
      %v230 = vunpack.c.l.b16 %v198
      %v231 = vunpack.c.l.b16 %v199
      %v232 = vunpack.c.l.b16 %v200
      %v233 = vunpack.c.l.b16 %v201
      %v234 = vunpack.c.l.b16 %v202
      %v235 = vunpack.c.l.b16 %v203
      %v236 = vunpack.c.l.b16 %v204
      %v237 = vunpack.c.l.b16 %v205
      %v238 = vunpack.c.l.b16 %v206
      %v239 = vunpack.c.l.b16 %v207
      %v240 = vunpack.c.l.b16 %v208
      %v241 = vunpack.c.l.b16 %v209
      %v242 = vunpack.c.l.b16 %v210
      %v243 = vunpack.c.l.b16 %v211
      %v244 = vunpack.c.l.b16 %v212
      %v245 = vunpack.c.l.b16 %v213
      %v246 = vpack.c.b16 %v231, %v230
      %v247 = vpack.c.b16 %v233, %v232
      %v248 = vpack.c.b16 %v235, %v234
      %v249 = vpack.c.b16 %v237, %v236
      %v250 = vpack.c.b16 %v239, %v238
      %v251 = vpack.c.b16 %v241, %v240
      %v252 = vpack.c.b16 %v243, %v242
      %v253 = vpack.c.b16 %v245, %v244
      %262 = vmatpush.bf16.msra.mxu0 %v253
      %263 = vmatpush.bf16.msra.mxu0 %v252
      %264 = vmatpush.bf16.msra.mxu0 %v251
      %265 = vmatpush.bf16.msra.mxu0 %v250
      %266 = vmatpush.bf16.msra.mxu0 %v249
      %267 = vmatpush.bf16.msra.mxu0 %v248
      %268 = vmatpush.bf16.msra.mxu0 %v247
      %269 = vmatpush.bf16.msra.mxu0 %v246
      %270 = vmatmul.bf16.gmra.mxu0 %v195
      %v271 = vpop.f32.mrf.mxu0
      %v272 = vadd.f32 0.0, %v271
      %v273 = vpop.f32.mrf.mxu0
      %v274 = vadd.f32 0.0, %v273
      %275 = vmatmul.bf16.gmra.mxu0 %v196
      %v276 = vpop.f32.mrf.mxu0
      %v277 = vadd.f32 0.0, %v276
      %v278 = vpop.f32.mrf.mxu0
      %279 = vdwg.mxu0
      %v296 = vunpack.c.l.b16 %v176
      %v297 = vunpack.c.l.b16 %v177
      %v298 = vunpack.c.l.b16 %v178
      %v299 = vunpack.c.l.b16 %v179
      %v300 = vunpack.c.l.b16 %v180
      %v301 = vunpack.c.l.b16 %v181
      %v302 = vunpack.c.l.b16 %v182
      %v303 = vunpack.c.l.b16 %v183
      %v304 = vunpack.c.l.b16 %v184
      %v305 = vunpack.c.l.b16 %v185
      %v306 = vunpack.c.l.b16 %v186
      %v307 = vunpack.c.l.b16 %v187
      %v308 = vunpack.c.l.b16 %v188
      %v309 = vunpack.c.l.b16 %v189
      %v310 = vunpack.c.l.b16 %v190
      %v311 = vunpack.c.l.b16 %v191
      %v312 = vpack.c.b16 %v297, %v296
      %v313 = vpack.c.b16 %v299, %v298
      %v314 = vpack.c.b16 %v301, %v300
      %v315 = vpack.c.b16 %v303, %v302
      %v316 = vpack.c.b16 %v305, %v304
      %v317 = vpack.c.b16 %v307, %v306
      %v318 = vpack.c.b16 %v309, %v308
      %v319 = vpack.c.b16 %v311, %v310
      %328 = vmatpush.bf16.msra.mxu0 %v319
      %329 = vmatpush.bf16.msra.mxu0 %v318
      %330 = vmatpush.bf16.msra.mxu0 %v317
      %331 = vmatpush.bf16.msra.mxu0 %v316
      %332 = vmatpush.bf16.msra.mxu0 %v315
      %333 = vmatpush.bf16.msra.mxu0 %v314
      %334 = vmatpush.bf16.msra.mxu0 %v313
      %335 = vmatpush.bf16.msra.mxu0 %v312
      %336 = vmatmul.bf16.gmra.mxu0 %v174
      %v337 = vpop.f32.mrf.mxu0
      %v338 = vadd.f32 %v272, %v337
      %v339 = vpop.f32.mrf.mxu0
      %v340 = vadd.f32 %v274, %v339
      %341 = vmatmul.bf16.gmra.mxu0 %v175
      %v342 = vpop.f32.mrf.mxu0
      %v343 = vadd.f32 %v277, %v342
      %v344 = vpop.f32.mrf.mxu0
      %345 = vdwg.mxu0
      %v346 = vld [vmem:[%s165 + $0x5] sm:$0xff]
      %v347 = vld [vmem:[%s165 + $0xd] sm:$0xff]
      %v348 = vld [vmem:[%s165 + $0x15] sm:$0xf]
      %v349 = vpack.c.bf16 %v347, %v346
      %v350 = vpack.c.bf16 %v348, %v348
      %s351 = scalar_lea.vmem %s1, 128
      %v352 = vld [vmem:[%s351] sm:$0xf]
      %v353 = vld [vmem:[%s351 + $0x4] sm:$0xf]
      %v354 = vld [vmem:[%s351 + $0x8] sm:$0xf]
      %v355 = vld [vmem:[%s351 + $0xc] sm:$0xf]
      %v356 = vld [vmem:[%s351 + $0x10] sm:$0xf]
      %v357 = vld [vmem:[%s351 + $0x14] sm:$0xf]
      %v358 = vld [vmem:[%s351 + $0x18] sm:$0xf]
      %v359 = vld [vmem:[%s351 + $0x1c] sm:$0xf]
      %v360 = vld [vmem:[%s351 + $0x20] sm:$0xf]
      %v361 = vld [vmem:[%s351 + $0x24] sm:$0xf]
      %v362 = vld [vmem:[%s351 + $0x28] sm:$0xf]
      %v363 = vld [vmem:[%s351 + $0x2c] sm:$0xf]
      %v364 = vld [vmem:[%s351 + $0x30] sm:$0xf]
      %v365 = vld [vmem:[%s351 + $0x34] sm:$0xf]
      %v366 = vld [vmem:[%s351 + $0x38] sm:$0xf]
      %v367 = vld [vmem:[%s351 + $0x3c] sm:$0xf]
      %v384 = vunpack.c.l.b16 %v352
      %v385 = vunpack.c.l.b16 %v353
      %v386 = vunpack.c.l.b16 %v354
      %v387 = vunpack.c.l.b16 %v355
      %v388 = vunpack.c.l.b16 %v356
      %v389 = vunpack.c.l.b16 %v357
      %v390 = vunpack.c.l.b16 %v358
      %v391 = vunpack.c.l.b16 %v359
      %v392 = vunpack.c.l.b16 %v360
      %v393 = vunpack.c.l.b16 %v361
      %v394 = vunpack.c.l.b16 %v362
      %v395 = vunpack.c.l.b16 %v363
      %v396 = vunpack.c.l.b16 %v364
      %v397 = vunpack.c.l.b16 %v365
      %v398 = vunpack.c.l.b16 %v366
      %v399 = vunpack.c.l.b16 %v367
      %v400 = vpack.c.b16 %v385, %v384
      %v401 = vpack.c.b16 %v387, %v386
      %v402 = vpack.c.b16 %v389, %v388
      %v403 = vpack.c.b16 %v391, %v390
      %v404 = vpack.c.b16 %v393, %v392
      %v405 = vpack.c.b16 %v395, %v394
      %v406 = vpack.c.b16 %v397, %v396
      %v407 = vpack.c.b16 %v399, %v398
      %416 = vmatpush.bf16.msra.mxu0 %v407
      %417 = vmatpush.bf16.msra.mxu0 %v406
      %418 = vmatpush.bf16.msra.mxu0 %v405
      %419 = vmatpush.bf16.msra.mxu0 %v404
      %420 = vmatpush.bf16.msra.mxu0 %v403
      %421 = vmatpush.bf16.msra.mxu0 %v402
      %422 = vmatpush.bf16.msra.mxu0 %v401
      %423 = vmatpush.bf16.msra.mxu0 %v400
      %424 = vmatmul.bf16.gmra.mxu0 %v349
      %v425 = vpop.f32.mrf.mxu0
      %v426 = vadd.f32 0.0, %v425
      %v427 = vpop.f32.mrf.mxu0
      %v428 = vadd.f32 0.0, %v427
      %429 = vmatmul.bf16.gmra.mxu0 %v350
      %v430 = vpop.f32.mrf.mxu0
      %v431 = vadd.f32 0.0, %v430
      %v432 = vpop.f32.mrf.mxu0
      %433 = vdwg.mxu0
      %v434 = vadd.f32 %v338, %v426
      %v435 = vadd.f32 %v340, %v428
      %v436 = vadd.f32 %v343, %v431
      %v437 = vld [vmem:[%s165 + $0x6] sm:$0xff]
      %v438 = vld [vmem:[%s165 + $0xe] sm:$0xff]
      %v439 = vld [vmem:[%s165 + $0x16] sm:$0xf]
      %v440 = vpack.c.bf16 %v438, %v437
      %v441 = vpack.c.bf16 %v439, %v439
      %s442 = scalar_lea.vmem %s1, 192
      %v443 = vld [vmem:[%s442] sm:$0xf]
      %v444 = vld [vmem:[%s442 + $0x4] sm:$0xf]
      %v445 = vld [vmem:[%s442 + $0x8] sm:$0xf]
      %v446 = vld [vmem:[%s442 + $0xc] sm:$0xf]
      %v447 = vld [vmem:[%s442 + $0x10] sm:$0xf]
      %v448 = vld [vmem:[%s442 + $0x14] sm:$0xf]
      %v449 = vld [vmem:[%s442 + $0x18] sm:$0xf]
      %v450 = vld [vmem:[%s442 + $0x1c] sm:$0xf]
      %v451 = vld [vmem:[%s442 + $0x20] sm:$0xf]
      %v452 = vld [vmem:[%s442 + $0x24] sm:$0xf]
      %v453 = vld [vmem:[%s442 + $0x28] sm:$0xf]
      %v454 = vld [vmem:[%s442 + $0x2c] sm:$0xf]
      %v455 = vld [vmem:[%s442 + $0x30] sm:$0xf]
      %v456 = vld [vmem:[%s442 + $0x34] sm:$0xf]
      %v457 = vld [vmem:[%s442 + $0x38] sm:$0xf]
      %v458 = vld [vmem:[%s442 + $0x3c] sm:$0xf]
      %v475 = vunpack.c.l.b16 %v443
      %v476 = vunpack.c.l.b16 %v444
      %v477 = vunpack.c.l.b16 %v445
      %v478 = vunpack.c.l.b16 %v446
      %v479 = vunpack.c.l.b16 %v447
      %v480 = vunpack.c.l.b16 %v448
      %v481 = vunpack.c.l.b16 %v449
      %v482 = vunpack.c.l.b16 %v450
      %v483 = vunpack.c.l.b16 %v451
      %v484 = vunpack.c.l.b16 %v452
      %v485 = vunpack.c.l.b16 %v453
      %v486 = vunpack.c.l.b16 %v454
      %v487 = vunpack.c.l.b16 %v455
      %v488 = vunpack.c.l.b16 %v456
      %v489 = vunpack.c.l.b16 %v457
      %v490 = vunpack.c.l.b16 %v458
      %v491 = vpack.c.b16 %v476, %v475
      %v492 = vpack.c.b16 %v478, %v477
      %v493 = vpack.c.b16 %v480, %v479
      %v494 = vpack.c.b16 %v482, %v481
      %v495 = vpack.c.b16 %v484, %v483
      %v496 = vpack.c.b16 %v486, %v485
      %v497 = vpack.c.b16 %v488, %v487
      %v498 = vpack.c.b16 %v490, %v489
      %507 = vmatpush.bf16.msra.mxu0 %v498
      %508 = vmatpush.bf16.msra.mxu0 %v497
      %509 = vmatpush.bf16.msra.mxu0 %v496
      %510 = vmatpush.bf16.msra.mxu0 %v495
      %511 = vmatpush.bf16.msra.mxu0 %v494
      %512 = vmatpush.bf16.msra.mxu0 %v493
      %513 = vmatpush.bf16.msra.mxu0 %v492
      %514 = vmatpush.bf16.msra.mxu0 %v491
      %515 = vmatmul.bf16.gmra.mxu0 %v440
      %v516 = vpop.f32.mrf.mxu0
      %v517 = vadd.f32 0.0, %v516
      %v518 = vpop.f32.mrf.mxu0
      %v519 = vadd.f32 0.0, %v518
      %520 = vmatmul.bf16.gmra.mxu0 %v441
      %v521 = vpop.f32.mrf.mxu0
      %v522 = vadd.f32 0.0, %v521
      %v523 = vpop.f32.mrf.mxu0
      %524 = vdwg.mxu0
      %v525 = vadd.f32 %v434, %v517
      %v526 = vadd.f32 %v435, %v519
      %v527 = vadd.f32 %v436, %v522
      %v528 = vld [vmem:[%s2] sm:$0x1]
      %v530 = vperm.slane %v528, 0
      %v532 = vadd.f32 %v525, %v530
      %v533 = vadd.f32 %v526, %v530
      %v534 = vadd.f32 %v527, %v530
      %v535 = vmax.f32 %v532, 0.0
      %v536 = vmax.f32 %v533, 0.0
      %v537 = vmax.f32 %v534, 0.0
      %vm538 = vcmask 257024
      %539 = vst.msk [vmem:[%s170] sm:$0xf] %vm538, %v535
      %s540 = scalar_lea.vmem %s170, 4
      %vm541 = vcmask 261125
      %542 = vst.msk [vmem:[%s540 - $0x5] sm:$0xe0] %vm541, %v535
      %vm543 = vcmask 253952
      %544 = vst.msk [vmem:[%s540 + $0x3] sm:$0x1] %vm543, %v536
      %s545 = scalar_lea.vmem %s170, 8
      %vm546 = vcmask 259074
      %547 = vst.msk [vmem:[%s545 - $0x2] sm:$0x3c] %vm546, %v536
      %s548 = scalar_lea.vmem %s170, 12
      %vm549 = vcmask 261127
      %550 = vst.msk [vmem:[%s548 - $0x7] sm:$0x80] %vm549, %v536
      %vm551 = vcmask 256000
      %552 = vst.msk [vmem:[%s548 + $0x1] sm:$0x7] %vm551, %v537
      %p553 = scmp.lt.s32.totalorder %s14, 1
      %s554 = scalar_select %p553, %s14, 1
      %s555 = smul.addr %s554, 4
      %s556 = smul.addr %s555, 4
      %s557 = scalar_lea.vmem %s3, %s556
      // Predicated region
      $region33: #{vqvae_forward.15} parent=31 // pred_check
        %p558 = pneg %p100
      $region34: #{vqvae_forward.15} parent=31 // pred_check_branch
        %560 = sbr.rel (%p558) target = $region36
      $region35: #{vqvae_forward.15} parent=31 // pred_region
        _
      $region36: #{vqvae_forward.15} parent=31 // pred_fallthru
        _
    $region32: #{vqvae_forward.15} parent=5 // pred_fallthru
      _
    %p561 = scmp.le.s32.totalorder 2, %s9
    // Predicated region
    $region37: #{vqvae_forward.15} parent=5 // pred_check
      %p562 = pneg %p561
    $region38: #{vqvae_forward.15} parent=5 // pred_check_branch
      %564 = sbr.rel (%p562) target = $region40
    $region39: #{vqvae_forward.15} parent=5 // pred_region
      %s565 = ssub.s32 %s9, 2
      // Predicated region
      $region41: #{vqvae_forward.15} parent=39 // pred_check
        %p566 = pneg %p106
      $region42: #{vqvae_forward.15} parent=39 // pred_check_branch
        %568 = sbr.rel (%p566) target = $region44
      $region43: #{vqvae_forward.15} parent=39 // pred_region
        %p569 = scmp.lt.s32.totalorder %s15, 1
        %s570 = scalar_select %p569, %s15, 1
        %s571 = smul.addr %s570, 4
        %s572 = smul.addr %s571, 4
        %s573 = scalar_lea.vmem %s3, %s572
      $region44: #{vqvae_forward.15} parent=39 // pred_fallthru
        _
    $region40: #{vqvae_forward.15} parent=5 // pred_fallthru
      _
  $region6: #{vqvae_forward.15} parent=0 // loop_footer
    %s13 = sadd.s32 1, %s9
  $region7: #{vqvae_forward.15} parent=0 // loop_footer_branch
    %8 = sbr.rel target = $region3
  $region8: #{vqvae_forward.15} parent=0 // loop_exit
    _

// kernel: vqvae_forward.16
$region0: #{vqvae_forward.16}
  #allocation0 [shape = 'u32[]', space=smem, size = 0x4, offset = 0x4, fixed_abs, tag = 'smem constant byte address 0x4 - core index']
  #allocation1 [shape = 'u32[72,128]{1,0:T(1,128)}', space=vmem, size = 0x9000, scoped, tag = 'internal scratch']
  %s0 = inlined_call_operand.vmem [shape: f32[2,38,32], index: 0, kind: input, shape index: {}]
  %s1 = inlined_call_operand.vmem [shape: bf16[9,32,32], index: 1, kind: input, shape index: {}]
  %s2 = inlined_call_operand.vmem [shape: f32[1,32], index: 2, kind: input, shape index: {}]
  %s3 = inlined_call_operand.vmem [shape: f32[2,4,4,32], index: 3, kind: output, shape index: {}]
  %s4 = sld [smem:[#allocation0]]
  $region45: #{vqvae_forward.16} parent=0
    _
  %s6 = ssub.s32 1, %s4
  %s7 = scalar_select 0, %s6, %s4
  loop: start=0, step=1, limit=4
  $region2: #{vqvae_forward.16} parent=0 // loop_pre_header
    _
  $region3: #{vqvae_forward.16} parent=0 // loop_header
    %s9 = sphi 0, %s13
    %p10 = scmp.ge.s32.totalorder %s9, 4
    %s19 = sphi 0, %s21
    %s22 = sphi 0, %s19
    %s23 = sphi 0, %s22
    %s39 = sphi 0, %s23
    %s43 = sphi 0, %s43
    %s45 = sphi 0, %s43
    %s46 = sphi 0, %s45
    %s60 = sphi 0, %s46
    %s64 = sphi 0, %s64
    %s66 = sphi 0, %s64
    %s67 = sphi 0, %s66
    %s81 = sphi 0, %s67
    %s87 = sphi 0, %s89
    %s90 = sphi 0, %s87
    %s91 = sphi 0, %s90
    %s107 = sphi 0, %s91
  $region4: #{vqvae_forward.16} parent=0 // loop_header_branch
    %12 = sbr.rel (%p10) target = $region8
  $region5: #{vqvae_forward.16} parent=0 // loop_body
    %s14 = ssub.s32 %s9, 1
    %s15 = ssub.s32 %s9, 2
    %s16 = sadd.s32 %s9, 1
    %s17 = ssub.s32 %s9, %s16
    %p18 = scmp.eq.s32.totalorder %s17, 0
    %s20 = sadd.s32 %s19, 1
    %s21 = scalar_select %p18, %s19, %s20
    %p24 = pneg %p18
    %p25 = scmp.eq.s32.totalorder %s9, 1
    %p26 = por %p24, %p25
    %p27 = scmp.ne.s32.totalorder %s19, %s22
    %p28 = scmp.eq.s32.totalorder %s9, 0
    %p29 = por %p27, %p28
    %p30 = scmp.ne.s32.totalorder %s19, %s22
    %p31 = scmp.eq.s32.totalorder %s14, 1
    %p32 = por %p30, %p31
    %p33 = scmp.ne.s32.totalorder %s22, %s23
    %p34 = scmp.eq.s32.totalorder %s14, 0
    %p35 = por %p33, %p34
    %p36 = scmp.ne.s32.totalorder %s22, %s23
    %p37 = scmp.eq.s32.totalorder %s15, 1
    %p38 = por %p36, %p37
    %p40 = scmp.ne.s32.totalorder %s23, %s39
    %p41 = scmp.eq.s32.totalorder %s15, 0
    %p42 = por %p40, %p41
    %s44 = sadd.s32 %s43, 1
    %p47 = scmp.eq.s32.totalorder %s9, 1
    %p48 = scmp.ne.s32.totalorder %s43, %s45
    %p49 = scmp.eq.s32.totalorder %s9, 0
    %p50 = por %p48, %p49
    %p51 = scmp.ne.s32.totalorder %s43, %s45
    %p52 = scmp.eq.s32.totalorder %s14, 1
    %p53 = por %p51, %p52
    %p54 = scmp.ne.s32.totalorder %s45, %s46
    %p55 = scmp.eq.s32.totalorder %s14, 0
    %p56 = por %p54, %p55
    %p57 = scmp.ne.s32.totalorder %s45, %s46
    %p58 = scmp.eq.s32.totalorder %s15, 1
    %p59 = por %p57, %p58
    %p61 = scmp.ne.s32.totalorder %s46, %s60
    %p62 = scmp.eq.s32.totalorder %s15, 0
    %p63 = por %p61, %p62
    %s65 = sadd.s32 %s64, 1
    %p68 = scmp.eq.s32.totalorder %s9, 1
    %p69 = scmp.ne.s32.totalorder %s64, %s66
    %p70 = scmp.eq.s32.totalorder %s9, 0
    %p71 = por %p69, %p70
    %p72 = scmp.ne.s32.totalorder %s64, %s66
    %p73 = scmp.eq.s32.totalorder %s14, 1
    %p74 = por %p72, %p73
    %p75 = scmp.ne.s32.totalorder %s66, %s67
    %p76 = scmp.eq.s32.totalorder %s14, 0
    %p77 = por %p75, %p76
    %p78 = scmp.ne.s32.totalorder %s66, %s67
    %p79 = scmp.eq.s32.totalorder %s15, 1
    %p80 = por %p78, %p79
    %p82 = scmp.ne.s32.totalorder %s67, %s81
    %p83 = scmp.eq.s32.totalorder %s15, 0
    %p84 = por %p82, %p83
    %s85 = ssub.s32 %s9, %s16
    %p86 = scmp.eq.s32.totalorder %s85, 0
    %s88 = sadd.s32 %s87, 1
    %s89 = scalar_select %p86, %s87, %s88
    %p92 = pneg %p86
    %p93 = scmp.eq.s32.totalorder %s9, 1
    %p94 = por %p92, %p93
    %p95 = scmp.ne.s32.totalorder %s87, %s90
    %p96 = scmp.eq.s32.totalorder %s9, 0
    %p97 = por %p95, %p96
    %p98 = scmp.ne.s32.totalorder %s87, %s90
    %p99 = scmp.eq.s32.totalorder %s14, 1
    %p100 = por %p98, %p99
    %p101 = scmp.ne.s32.totalorder %s90, %s91
    %p102 = scmp.eq.s32.totalorder %s14, 0
    %p103 = por %p101, %p102
    %p104 = scmp.ne.s32.totalorder %s90, %s91
    %p105 = scmp.eq.s32.totalorder %s15, 1
    %p106 = por %p104, %p105
    %p108 = scmp.ne.s32.totalorder %s91, %s107
    %p109 = scmp.eq.s32.totalorder %s15, 0
    %p110 = por %p108, %p109
    %p111 = scmp.le.s32.totalorder 1, %s9
    %p112 = scmp.lt.s32.totalorder %s9, 3
    %p113 = pnand %p111, %p112
    %p114 = pneg %p113
    // Predicated region
    $region9: #{vqvae_forward.16} parent=5 // pred_check
      _
    $region10: #{vqvae_forward.16} parent=5 // pred_check_branch
      %116 = sbr.rel (%p113) target = $region12
    $region11: #{vqvae_forward.16} parent=5 // pred_region
      %s117 = ssub.s32 %s9, 1
      // Predicated region
      $region13: #{vqvae_forward.16} parent=11 // pred_check
        %p118 = pneg %p56
      $region14: #{vqvae_forward.16} parent=11 // pred_check_branch
        %120 = sbr.rel (%p118) target = $region16
      $region15: #{vqvae_forward.16} parent=11 // pred_region
        _
      $region16: #{vqvae_forward.16} parent=11 // pred_fallthru
        _
      // Predicated region
      $region17: #{vqvae_forward.16} parent=11 // pred_check
        %p121 = pneg %p77
      $region18: #{vqvae_forward.16} parent=11 // pred_check_branch
        %123 = sbr.rel (%p121) target = $region20
      $region19: #{vqvae_forward.16} parent=11 // pred_region
        _
      $region20: #{vqvae_forward.16} parent=11 // pred_fallthru
        _
    $region12: #{vqvae_forward.16} parent=5 // pred_fallthru
      _
    %p124 = scmp.lt.s32.totalorder %s9, 2
    // Predicated region
    $region21: #{vqvae_forward.16} parent=5 // pred_check
      %p125 = pneg %p124
    $region22: #{vqvae_forward.16} parent=5 // pred_check_branch
      %127 = sbr.rel (%p125) target = $region24
    $region23: #{vqvae_forward.16} parent=5 // pred_region
      // Predicated region
      $region25: #{vqvae_forward.16} parent=23 // pred_check
        %p128 = pneg %p29
      $region26: #{vqvae_forward.16} parent=23 // pred_check_branch
        %130 = sbr.rel (%p128) target = $region28
      $region27: #{vqvae_forward.16} parent=23 // pred_region
        %p131 = scmp.lt.s32.totalorder %s9, 1
        %s132 = scalar_select %p131, %s9, 1
        %s133 = smul.addr %s132, 5
        %s134 = smul.addr %s133, 8
        %s135 = scalar_lea.vmem %s0, %s134
      $region28: #{vqvae_forward.16} parent=23 // pred_fallthru
        _
    $region24: #{vqvae_forward.16} parent=5 // pred_fallthru
      _
    %p136 = scmp.le.s32.totalorder 1, %s9
    %p137 = scmp.lt.s32.totalorder %s9, 3
    %p138 = pnand %p136, %p137
    %p139 = pneg %p138
    // Predicated region
    $region29: #{vqvae_forward.16} parent=5 // pred_check
      _
    $region30: #{vqvae_forward.16} parent=5 // pred_check_branch
      %141 = sbr.rel (%p138) target = $region32
    $region31: #{vqvae_forward.16} parent=5 // pred_region
      %s142 = ssub.s32 %s9, 1
      %p143 = scmp.lt.s32.totalorder %s14, 1
      %s144 = scalar_select %p143, %s14, 1
      %s145 = smul.addr %s144, 5
      %s146 = smul.addr %s145, 8
      %s147 = scalar_lea.vmem %s0, %s146
      %p148 = pneg %p35
      %p149 = pneg %p32
      %p150 = pneg %p56
      %p151 = pneg %p53
      %p152 = pneg %p77
      %p153 = pneg %p74
      %p154 = pneg %p103
      %p155 = pneg %p100
      %p156 = scmp.lt.s32.totalorder %s14, 1
      %s157 = scalar_select %p156, %s14, 1
      %s158 = smul.addr %s157, 4
      %s159 = smul.addr %s158, 4
      %s160 = scalar_lea.vmem %s3, %s159
      %p161 = scmp.lt.s32.totalorder %s14, 1
      %s162 = scalar_select %p161, %s14, 1
      %s163 = smul.addr %s162, 5
      %s164 = smul.addr %s163, 8
      %s165 = scalar_lea.vmem %s0, %s164
      %p166 = scmp.lt.s32.totalorder %s14, 1
      %s167 = scalar_select %p166, %s14, 1
      %s168 = smul.addr %s167, 4
      %s169 = smul.addr %s168, 4
      %s170 = scalar_lea.vmem %s3, %s169
      %v172 = vld [vmem:[%s165] sm:$0xff]
      %v173 = vld [vmem:[%s165 + $0x8] sm:$0xff]
      %v174 = vld [vmem:[%s165 + $0x10] sm:$0xff]
      %v175 = vpack.c.bf16 %v173, %v172
      %v176 = vpack.c.bf16 %v174, %v174
      %v177 = vld [vmem:[%s1] sm:$0xf]
      %v178 = vld [vmem:[%s1 + $0x4] sm:$0xf]
      %v179 = vld [vmem:[%s1 + $0x8] sm:$0xf]
      %v180 = vld [vmem:[%s1 + $0xc] sm:$0xf]
      %v181 = vld [vmem:[%s165 + $0x1] sm:$0xff]
      %v182 = vld [vmem:[%s165 + $0x9] sm:$0xff]
      %v183 = vld [vmem:[%s165 + $0x11] sm:$0xff]
      %v184 = vpack.c.bf16 %v182, %v181
      %v185 = vpack.c.bf16 %v183, %v183
      %s186 = scalar_lea.vmem %s1, 16
      %v187 = vld [vmem:[%s186] sm:$0xf]
      %v188 = vld [vmem:[%s186 + $0x4] sm:$0xf]
      %v189 = vld [vmem:[%s186 + $0x8] sm:$0xf]
      %v190 = vld [vmem:[%s186 + $0xc] sm:$0xf]
      %v195 = vunpack.c.l.b16 %v187
      %v196 = vunpack.c.l.b16 %v188
      %v197 = vunpack.c.l.b16 %v189
      %v198 = vunpack.c.l.b16 %v190
      %v199 = vpack.c.b16 %v196, %v195
      %v200 = vpack.c.b16 %v198, %v197
      %vm203 = vcmask 261120
      %v205 = vsel %vm203, %v184, 0
      %v208 = vsel %vm203, %v185, 0
      %210 = vmatpush.bf16.msra.mxu0 0
      %211 = vmatpush.bf16.msra.mxu0 0
      %212 = vmatpush.bf16.msra.mxu0 0
      %213 = vmatpush.bf16.msra.mxu0 0
      %214 = vmatpush.bf16.msra.mxu0 0
      %215 = vmatpush.bf16.msra.mxu0 0
      %216 = vmatpush.bf16.msra.mxu0 %v200
      %217 = vmatpush.bf16.msra.mxu0 %v199
      %218 = vmatmul.bf16.gmra.mxu0 %v205
      %v219 = vpop.f32.mrf.mxu0
      %v220 = vadd.f32 0.0, %v219
      %v221 = vpop.f32.mrf.mxu0
      %v222 = vadd.f32 0.0, %v221
      %223 = vmatmul.bf16.gmra.mxu0 %v208
      %v224 = vpop.f32.mrf.mxu0
      %v225 = vadd.f32 0.0, %v224
      %v226 = vpop.f32.mrf.mxu0
      %227 = vdwg.mxu0
      %v232 = vunpack.c.l.b16 %v177
      %v233 = vunpack.c.l.b16 %v178
      %v234 = vunpack.c.l.b16 %v179
      %v235 = vunpack.c.l.b16 %v180
      %v236 = vpack.c.b16 %v233, %v232
      %v237 = vpack.c.b16 %v235, %v234
      %v241 = vsel %vm203, %v175, 0
      %v244 = vsel %vm203, %v176, 0
      %246 = vmatpush.bf16.msra.mxu0 0
      %247 = vmatpush.bf16.msra.mxu0 0
      %248 = vmatpush.bf16.msra.mxu0 0
      %249 = vmatpush.bf16.msra.mxu0 0
      %250 = vmatpush.bf16.msra.mxu0 0
      %251 = vmatpush.bf16.msra.mxu0 0
      %252 = vmatpush.bf16.msra.mxu0 %v237
      %253 = vmatpush.bf16.msra.mxu0 %v236
      %254 = vmatmul.bf16.gmra.mxu0 %v241
      %v255 = vpop.f32.mrf.mxu0
      %v256 = vadd.f32 %v220, %v255
      %v257 = vpop.f32.mrf.mxu0
      %v258 = vadd.f32 %v222, %v257
      %259 = vmatmul.bf16.gmra.mxu0 %v244
      %v260 = vpop.f32.mrf.mxu0
      %v261 = vadd.f32 %v225, %v260
      %v262 = vpop.f32.mrf.mxu0
      %263 = vdwg.mxu0
      %v264 = vld [vmem:[%s165 + $0x2] sm:$0xff]
      %v265 = vld [vmem:[%s165 + $0xa] sm:$0xff]
      %v266 = vld [vmem:[%s165 + $0x12] sm:$0xff]
      %v267 = vpack.c.bf16 %v265, %v264
      %v268 = vpack.c.bf16 %v266, %v266
      %s269 = scalar_lea.vmem %s1, 32
      %v270 = vld [vmem:[%s269] sm:$0xf]
      %v271 = vld [vmem:[%s269 + $0x4] sm:$0xf]
      %v272 = vld [vmem:[%s269 + $0x8] sm:$0xf]
      %v273 = vld [vmem:[%s269 + $0xc] sm:$0xf]
      %v278 = vunpack.c.l.b16 %v270
      %v279 = vunpack.c.l.b16 %v271
      %v280 = vunpack.c.l.b16 %v272
      %v281 = vunpack.c.l.b16 %v273
      %v282 = vpack.c.b16 %v279, %v278
      %v283 = vpack.c.b16 %v281, %v280
      %v287 = vsel %vm203, %v267, 0
      %v290 = vsel %vm203, %v268, 0
      %292 = vmatpush.bf16.msra.mxu0 0
      %293 = vmatpush.bf16.msra.mxu0 0
      %294 = vmatpush.bf16.msra.mxu0 0
      %295 = vmatpush.bf16.msra.mxu0 0
      %296 = vmatpush.bf16.msra.mxu0 0
      %297 = vmatpush.bf16.msra.mxu0 0
      %298 = vmatpush.bf16.msra.mxu0 %v283
      %299 = vmatpush.bf16.msra.mxu0 %v282
      %300 = vmatmul.bf16.gmra.mxu0 %v287
      %v301 = vpop.f32.mrf.mxu0
      %v302 = vadd.f32 0.0, %v301
      %v303 = vpop.f32.mrf.mxu0
      %v304 = vadd.f32 0.0, %v303
      %305 = vmatmul.bf16.gmra.mxu0 %v290
      %v306 = vpop.f32.mrf.mxu0
      %v307 = vadd.f32 0.0, %v306
      %v308 = vpop.f32.mrf.mxu0
      %309 = vdwg.mxu0
      %v310 = vadd.f32 %v256, %v302
      %v311 = vadd.f32 %v258, %v304
      %v312 = vadd.f32 %v261, %v307
      %v313 = vld [vmem:[%s165 + $0x6] sm:$0xff]
      %v314 = vld [vmem:[%s165 + $0xe] sm:$0xff]
      %v315 = vld [vmem:[%s165 + $0x16] sm:$0xff]
      %v316 = vpack.c.bf16 %v314, %v313
      %v317 = vpack.c.bf16 %v315, %v315
      %s318 = scalar_lea.vmem %s1, 48
      %v319 = vld [vmem:[%s318] sm:$0xf]
      %v320 = vld [vmem:[%s318 + $0x4] sm:$0xf]
      %v321 = vld [vmem:[%s318 + $0x8] sm:$0xf]
      %v322 = vld [vmem:[%s318 + $0xc] sm:$0xf]
      %v327 = vunpack.c.l.b16 %v319
      %v328 = vunpack.c.l.b16 %v320
      %v329 = vunpack.c.l.b16 %v321
      %v330 = vunpack.c.l.b16 %v322
      %v331 = vpack.c.b16 %v328, %v327
      %v332 = vpack.c.b16 %v330, %v329
      %v336 = vsel %vm203, %v316, 0
      %v339 = vsel %vm203, %v317, 0
      %341 = vmatpush.bf16.msra.mxu0 0
      %342 = vmatpush.bf16.msra.mxu0 0
      %343 = vmatpush.bf16.msra.mxu0 0
      %344 = vmatpush.bf16.msra.mxu0 0
      %345 = vmatpush.bf16.msra.mxu0 0
      %346 = vmatpush.bf16.msra.mxu0 0
      %347 = vmatpush.bf16.msra.mxu0 %v332
      %348 = vmatpush.bf16.msra.mxu0 %v331
      %349 = vmatmul.bf16.gmra.mxu0 %v336
      %v350 = vpop.f32.mrf.mxu0
      %v351 = vadd.f32 0.0, %v350
      %v352 = vpop.f32.mrf.mxu0
      %v353 = vadd.f32 0.0, %v352
      %354 = vmatmul.bf16.gmra.mxu0 %v339
      %v355 = vpop.f32.mrf.mxu0
      %v356 = vadd.f32 0.0, %v355
      %v357 = vpop.f32.mrf.mxu0
      %358 = vdwg.mxu0
      %v359 = vadd.f32 %v310, %v351
      %v360 = vadd.f32 %v311, %v353
      %v361 = vadd.f32 %v312, %v356
      %v362 = vld [vmem:[%s165 + $0x7] sm:$0xff]
      %v363 = vld [vmem:[%s165 + $0xf] sm:$0xff]
      %v364 = vld [vmem:[%s165 + $0x17] sm:$0xff]
      %v365 = vpack.c.bf16 %v363, %v362
      %v366 = vpack.c.bf16 %v364, %v364
      %s367 = scalar_lea.vmem %s1, 64
      %v368 = vld [vmem:[%s367] sm:$0xf]
      %v369 = vld [vmem:[%s367 + $0x4] sm:$0xf]
      %v370 = vld [vmem:[%s367 + $0x8] sm:$0xf]
      %v371 = vld [vmem:[%s367 + $0xc] sm:$0xf]
      %v376 = vunpack.c.l.b16 %v368
      %v377 = vunpack.c.l.b16 %v369
      %v378 = vunpack.c.l.b16 %v370
      %v379 = vunpack.c.l.b16 %v371
      %v380 = vpack.c.b16 %v377, %v376
      %v381 = vpack.c.b16 %v379, %v378
      %v385 = vsel %vm203, %v365, 0
      %v388 = vsel %vm203, %v366, 0
      %390 = vmatpush.bf16.msra.mxu0 0
      %391 = vmatpush.bf16.msra.mxu0 0
      %392 = vmatpush.bf16.msra.mxu0 0
      %393 = vmatpush.bf16.msra.mxu0 0
      %394 = vmatpush.bf16.msra.mxu0 0
      %395 = vmatpush.bf16.msra.mxu0 0
      %396 = vmatpush.bf16.msra.mxu0 %v381
      %397 = vmatpush.bf16.msra.mxu0 %v380
      %398 = vmatmul.bf16.gmra.mxu0 %v385
      %v399 = vpop.f32.mrf.mxu0
      %v400 = vadd.f32 0.0, %v399
      %v401 = vpop.f32.mrf.mxu0
      %v402 = vadd.f32 0.0, %v401
      %403 = vmatmul.bf16.gmra.mxu0 %v388
      %v404 = vpop.f32.mrf.mxu0
      %v405 = vadd.f32 0.0, %v404
      %v406 = vpop.f32.mrf.mxu0
      %407 = vdwg.mxu0
      %v408 = vadd.f32 %v359, %v400
      %v409 = vadd.f32 %v360, %v402
      %v410 = vadd.f32 %v361, %v405
      %v411 = vld [vmem:[%s165 + $0x8] sm:$0xff]
      %v412 = vld [vmem:[%s165 + $0x10] sm:$0xff]
      %v413 = vld [vmem:[%s165 + $0x18] sm:$0xff]
      %v414 = vpack.c.bf16 %v412, %v411
      %v415 = vpack.c.bf16 %v413, %v413
      %s416 = scalar_lea.vmem %s1, 80
      %v417 = vld [vmem:[%s416] sm:$0xf]
      %v418 = vld [vmem:[%s416 + $0x4] sm:$0xf]
      %v419 = vld [vmem:[%s416 + $0x8] sm:$0xf]
      %v420 = vld [vmem:[%s416 + $0xc] sm:$0xf]
      %v425 = vunpack.c.l.b16 %v417
      %v426 = vunpack.c.l.b16 %v418
      %v427 = vunpack.c.l.b16 %v419
      %v428 = vunpack.c.l.b16 %v420
      %v429 = vpack.c.b16 %v426, %v425
      %v430 = vpack.c.b16 %v428, %v427
      %v434 = vsel %vm203, %v414, 0
      %v437 = vsel %vm203, %v415, 0
      %439 = vmatpush.bf16.msra.mxu0 0
      %440 = vmatpush.bf16.msra.mxu0 0
      %441 = vmatpush.bf16.msra.mxu0 0
      %442 = vmatpush.bf16.msra.mxu0 0
      %443 = vmatpush.bf16.msra.mxu0 0
      %444 = vmatpush.bf16.msra.mxu0 0
      %445 = vmatpush.bf16.msra.mxu0 %v430
      %446 = vmatpush.bf16.msra.mxu0 %v429
      %447 = vmatmul.bf16.gmra.mxu0 %v434
      %v448 = vpop.f32.mrf.mxu0
      %v449 = vadd.f32 0.0, %v448
      %v450 = vpop.f32.mrf.mxu0
      %v451 = vadd.f32 0.0, %v450
      %452 = vmatmul.bf16.gmra.mxu0 %v437
      %v453 = vpop.f32.mrf.mxu0
      %v454 = vadd.f32 0.0, %v453
      %v455 = vpop.f32.mrf.mxu0
      %456 = vdwg.mxu0
      %v457 = vadd.f32 %v408, %v449
      %v458 = vadd.f32 %v409, %v451
      %v459 = vadd.f32 %v410, %v454
      %v460 = vld [vmem:[%s165 + $0xc] sm:$0xff]
      %v461 = vld [vmem:[%s165 + $0x14] sm:$0xff]
      %v462 = vld [vmem:[%s165 + $0x1c] sm:$0xff]
      %v463 = vpack.c.bf16 %v461, %v460
      %v464 = vpack.c.bf16 %v462, %v462
      %s465 = scalar_lea.vmem %s1, 96
      %v466 = vld [vmem:[%s465] sm:$0xf]
      %v467 = vld [vmem:[%s465 + $0x4] sm:$0xf]
      %v468 = vld [vmem:[%s465 + $0x8] sm:$0xf]
      %v469 = vld [vmem:[%s465 + $0xc] sm:$0xf]
      %v474 = vunpack.c.l.b16 %v466
      %v475 = vunpack.c.l.b16 %v467
      %v476 = vunpack.c.l.b16 %v468
      %v477 = vunpack.c.l.b16 %v469
      %v478 = vpack.c.b16 %v475, %v474
      %v479 = vpack.c.b16 %v477, %v476
      %v483 = vsel %vm203, %v463, 0
      %v486 = vsel %vm203, %v464, 0
      %488 = vmatpush.bf16.msra.mxu0 0
      %489 = vmatpush.bf16.msra.mxu0 0
      %490 = vmatpush.bf16.msra.mxu0 0
      %491 = vmatpush.bf16.msra.mxu0 0
      %492 = vmatpush.bf16.msra.mxu0 0
      %493 = vmatpush.bf16.msra.mxu0 0
      %494 = vmatpush.bf16.msra.mxu0 %v479
      %495 = vmatpush.bf16.msra.mxu0 %v478
      %496 = vmatmul.bf16.gmra.mxu0 %v483
      %v497 = vpop.f32.mrf.mxu0
      %v498 = vadd.f32 0.0, %v497
      %v499 = vpop.f32.mrf.mxu0
      %v500 = vadd.f32 0.0, %v499
      %501 = vmatmul.bf16.gmra.mxu0 %v486
      %v502 = vpop.f32.mrf.mxu0
      %v503 = vadd.f32 0.0, %v502
      %v504 = vpop.f32.mrf.mxu0
      %505 = vdwg.mxu0
      %v506 = vadd.f32 %v457, %v498
      %v507 = vadd.f32 %v458, %v500
      %v508 = vadd.f32 %v459, %v503
      %v509 = vld [vmem:[%s165 + $0xd] sm:$0xff]
      %v510 = vld [vmem:[%s165 + $0x15] sm:$0xff]
      %v511 = vld [vmem:[%s165 + $0x1d] sm:$0xff]
      %v512 = vpack.c.bf16 %v510, %v509
      %v513 = vpack.c.bf16 %v511, %v511
      %s514 = scalar_lea.vmem %s1, 112
      %v515 = vld [vmem:[%s514] sm:$0xf]
      %v516 = vld [vmem:[%s514 + $0x4] sm:$0xf]
      %v517 = vld [vmem:[%s514 + $0x8] sm:$0xf]
      %v518 = vld [vmem:[%s514 + $0xc] sm:$0xf]
      %v523 = vunpack.c.l.b16 %v515
      %v524 = vunpack.c.l.b16 %v516
      %v525 = vunpack.c.l.b16 %v517
      %v526 = vunpack.c.l.b16 %v518
      %v527 = vpack.c.b16 %v524, %v523
      %v528 = vpack.c.b16 %v526, %v525
      %v532 = vsel %vm203, %v512, 0
      %v535 = vsel %vm203, %v513, 0
      %537 = vmatpush.bf16.msra.mxu0 0
      %538 = vmatpush.bf16.msra.mxu0 0
      %539 = vmatpush.bf16.msra.mxu0 0
      %540 = vmatpush.bf16.msra.mxu0 0
      %541 = vmatpush.bf16.msra.mxu0 0
      %542 = vmatpush.bf16.msra.mxu0 0
      %543 = vmatpush.bf16.msra.mxu0 %v528
      %544 = vmatpush.bf16.msra.mxu0 %v527
      %545 = vmatmul.bf16.gmra.mxu0 %v532
      %v546 = vpop.f32.mrf.mxu0
      %v547 = vadd.f32 0.0, %v546
      %v548 = vpop.f32.mrf.mxu0
      %v549 = vadd.f32 0.0, %v548
      %550 = vmatmul.bf16.gmra.mxu0 %v535
      %v551 = vpop.f32.mrf.mxu0
      %v552 = vadd.f32 0.0, %v551
      %v553 = vpop.f32.mrf.mxu0
      %554 = vdwg.mxu0
      %v555 = vadd.f32 %v506, %v547
      %v556 = vadd.f32 %v507, %v549
      %v557 = vadd.f32 %v508, %v552
      %v558 = vld [vmem:[%s165 + $0xe] sm:$0xff]
      %v559 = vld [vmem:[%s165 + $0x16] sm:$0xff]
      %v560 = vld [vmem:[%s165 + $0x1e] sm:$0xff]
      %v561 = vpack.c.bf16 %v559, %v558
      %v562 = vpack.c.bf16 %v560, %v560
      %s563 = scalar_lea.vmem %s1, 128
      %v564 = vld [vmem:[%s563] sm:$0xf]
      %v565 = vld [vmem:[%s563 + $0x4] sm:$0xf]
      %v566 = vld [vmem:[%s563 + $0x8] sm:$0xf]
      %v567 = vld [vmem:[%s563 + $0xc] sm:$0xf]
      %v572 = vunpack.c.l.b16 %v564
      %v573 = vunpack.c.l.b16 %v565
      %v574 = vunpack.c.l.b16 %v566
      %v575 = vunpack.c.l.b16 %v567
      %v576 = vpack.c.b16 %v573, %v572
      %v577 = vpack.c.b16 %v575, %v574
      %v581 = vsel %vm203, %v561, 0
      %v584 = vsel %vm203, %v562, 0
      %586 = vmatpush.bf16.msra.mxu0 0
      %587 = vmatpush.bf16.msra.mxu0 0
      %588 = vmatpush.bf16.msra.mxu0 0
      %589 = vmatpush.bf16.msra.mxu0 0
      %590 = vmatpush.bf16.msra.mxu0 0
      %591 = vmatpush.bf16.msra.mxu0 0
      %592 = vmatpush.bf16.msra.mxu0 %v577
      %593 = vmatpush.bf16.msra.mxu0 %v576
      %594 = vmatmul.bf16.gmra.mxu0 %v581
      %v595 = vpop.f32.mrf.mxu0
      %v596 = vadd.f32 0.0, %v595
      %v597 = vpop.f32.mrf.mxu0
      %v598 = vadd.f32 0.0, %v597
      %599 = vmatmul.bf16.gmra.mxu0 %v584
      %v600 = vpop.f32.mrf.mxu0
      %v601 = vadd.f32 0.0, %v600
      %v602 = vpop.f32.mrf.mxu0
      %603 = vdwg.mxu0
      %v604 = vadd.f32 %v555, %v596
      %v605 = vadd.f32 %v556, %v598
      %v606 = vadd.f32 %v557, %v601
      %v607 = vld [vmem:[%s2] sm:$0x1]
      %v609 = vperm.slane %v607, 0
      %v611 = vadd.f32 %v604, %v609
      %v612 = vadd.f32 %v605, %v609
      %v613 = vadd.f32 %v606, %v609
      %vm614 = vcmask 257024
      %615 = vst.msk [vmem:[%s170] sm:$0xf] %vm614, %v611
      %s616 = scalar_lea.vmem %s170, 4
      %vm617 = vcmask 261126
      %618 = vst.msk [vmem:[%s616 - $0x6] sm:$0xc0] %vm617, %v611
      %vm619 = vcmask 254976
      %620 = vst.msk [vmem:[%s616 + $0x2] sm:$0x3] %vm619, %v612
      %s621 = scalar_lea.vmem %s170, 8
      %vm622 = vcmask 261124
      %623 = vst.msk [vmem:[%s621 - $0x4] sm:$0xf0] %vm622, %v612
      %s624 = scalar_lea.vmem %s170, 12
      %vm625 = vcmask 259074
      %626 = vst.msk [vmem:[%s624 - $0x2] sm:$0x3c] %vm625, %v613
      %p627 = scmp.lt.s32.totalorder %s14, 1
      %s628 = scalar_select %p627, %s14, 1
      %s629 = smul.addr %s628, 4
      %s630 = smul.addr %s629, 4
      %s631 = scalar_lea.vmem %s3, %s630
      // Predicated region
      $region33: #{vqvae_forward.16} parent=31 // pred_check
        %p632 = pneg %p100
      $region34: #{vqvae_forward.16} parent=31 // pred_check_branch
        %634 = sbr.rel (%p632) target = $region36
      $region35: #{vqvae_forward.16} parent=31 // pred_region
        _
      $region36: #{vqvae_forward.16} parent=31 // pred_fallthru
        _
    $region32: #{vqvae_forward.16} parent=5 // pred_fallthru
      _
    %p635 = scmp.le.s32.totalorder 2, %s9
    // Predicated region
    $region37: #{vqvae_forward.16} parent=5 // pred_check
      %p636 = pneg %p635
    $region38: #{vqvae_forward.16} parent=5 // pred_check_branch
      %638 = sbr.rel (%p636) target = $region40
    $region39: #{vqvae_forward.16} parent=5 // pred_region
      %s639 = ssub.s32 %s9, 2
      // Predicated region
      $region41: #{vqvae_forward.16} parent=39 // pred_check
        %p640 = pneg %p106
      $region42: #{vqvae_forward.16} parent=39 // pred_check_branch
        %642 = sbr.rel (%p640) target = $region44
      $region43: #{vqvae_forward.16} parent=39 // pred_region
        %p643 = scmp.lt.s32.totalorder %s15, 1
        %s644 = scalar_select %p643, %s15, 1
        %s645 = smul.addr %s644, 4
        %s646 = smul.addr %s645, 4
        %s647 = scalar_lea.vmem %s3, %s646
      $region44: #{vqvae_forward.16} parent=39 // pred_fallthru
        _
    $region40: #{vqvae_forward.16} parent=5 // pred_fallthru
      _
  $region6: #{vqvae_forward.16} parent=0 // loop_footer
    %s13 = sadd.s32 1, %s9
  $region7: #{vqvae_forward.16} parent=0 // loop_footer_branch
    %8 = sbr.rel target = $region3
  $region8: #{vqvae_forward.16} parent=0 // loop_exit
    _

// kernel: vqvae_forward.17
$region0: #{vqvae_forward.17}
  #allocation0 [shape = 'u32[]', space=smem, size = 0x4, offset = 0x4, fixed_abs, tag = 'smem constant byte address 0x4 - core index']
  #allocation1 [shape = 'u32[72,128]{1,0:T(1,128)}', space=vmem, size = 0x9000, scoped, tag = 'internal scratch']
  %s0 = inlined_call_operand.vmem [shape: f32[32,32], index: 0, kind: input, shape index: {}]
  %s1 = inlined_call_operand.vmem [shape: f32[128,32], index: 1, kind: input, shape index: {}]
  %s2 = inlined_call_operand.vmem [shape: f32[32,32], index: 2, kind: output, shape index: {0}]
  %s3 = inlined_call_operand.hbm [shape: f32[1,1], index: 3, kind: output, shape index: {1}]
  %4 = xla_tuple %s2, %s3
  %s5 = sld [smem:[#allocation0]]
  $region26: #{vqvae_forward.17} parent=0
    _
  %s7 = ssub.s32 1, %s5
  %s8 = scalar_select 0, %s7, %s5
  $region1: #{vqvae_forward.17} parent=0
    #allocation2 [shape = 'u8[512]{0}', space=smem, size = 0x200, scoped, tag = 'output window, operand 1, single buffered']
    #allocation3 [shape = 's32[1]{0}', space=sflag, size = 0x4, scoped, tag = 'scoped memory for vqvae_forward.17']
    %9 = vsyncpa [#allocation3], 0
    // Predicated region
    $region2: #{vqvae_forward.17} parent=1 // pred_check
      _
    $region3: #{vqvae_forward.17} parent=1 // pred_check_branch
      %11 = sbr.rel (0) target = $region5
    $region4: #{vqvae_forward.17} parent=1 // pred_region
      _
    $region5: #{vqvae_forward.17} parent=1 // pred_fallthru
      _
    // Predicated region
    $region6: #{vqvae_forward.17} parent=1 // pred_check
      _
    $region7: #{vqvae_forward.17} parent=1 // pred_check_branch
      %13 = sbr.rel (0) target = $region9
    $region8: #{vqvae_forward.17} parent=1 // pred_region
      _
    $region9: #{vqvae_forward.17} parent=1 // pred_fallthru
      _
    %v14 = vld [vmem:[%s0] sm:$0xff]
    %v15 = vld [vmem:[%s0 + $0x8] sm:$0xff]
    %v16 = vld [vmem:[%s0 + $0x10] sm:$0xff]
    %v17 = vld [vmem:[%s0 + $0x18] sm:$0xff]
    %v18 = vld [vmem:[%s1] sm:$0xff]
    %v19 = vld [vmem:[%s1 + $0x8] sm:$0xff]
    %v20 = vld [vmem:[%s1 + $0x10] sm:$0xff]
    %v21 = vld [vmem:[%s1 + $0x18] sm:$0xff]
    %v22 = vld [vmem:[%s1 + $0x20] sm:$0xff]
    %v23 = vld [vmem:[%s1 + $0x28] sm:$0xff]
    %v24 = vld [vmem:[%s1 + $0x30] sm:$0xff]
    %v25 = vld [vmem:[%s1 + $0x38] sm:$0xff]
    %v26 = vld [vmem:[%s1 + $0x40] sm:$0xff]
    %v27 = vld [vmem:[%s1 + $0x48] sm:$0xff]
    %v28 = vld [vmem:[%s1 + $0x50] sm:$0xff]
    %v29 = vld [vmem:[%s1 + $0x58] sm:$0xff]
    %v30 = vld [vmem:[%s1 + $0x60] sm:$0xff]
    %v31 = vld [vmem:[%s1 + $0x68] sm:$0xff]
    %v32 = vld [vmem:[%s1 + $0x70] sm:$0xff]
    %v33 = vld [vmem:[%s1 + $0x78] sm:$0xff]
    %v34 = vmul.f32 %v14, %v14
    %v35 = vmul.f32 %v15, %v15
    %v36 = vmul.f32 %v16, %v16
    %v37 = vmul.f32 %v17, %v17
    %vm38 = vcmask 261120
    %v39 = vsel %vm38, %v34, 0.0
    %40 = vadd.xlane.f32.xlu0 %v39
    %v41 = vpop.xlane.xlu0 %40
    %v42 = vsel %vm38, %v35, 0.0
    %43 = vadd.xlane.f32.xlu0 %v42
    %v44 = vpop.xlane.xlu0 %43
    %v45 = vsel %vm38, %v36, 0.0
    %46 = vadd.xlane.f32.xlu0 %v45
    %v47 = vpop.xlane.xlu0 %46
    %v48 = vsel %vm38, %v37, 0.0
    %49 = vadd.xlane.f32.xlu0 %v48
    %v50 = vpop.xlane.xlu0 %49
    %v51 = vmul.f32 %v18, %v18
    %v52 = vmul.f32 %v19, %v19
    %v53 = vmul.f32 %v20, %v20
    %v54 = vmul.f32 %v21, %v21
    %v55 = vmul.f32 %v22, %v22
    %v56 = vmul.f32 %v23, %v23
    %v57 = vmul.f32 %v24, %v24
    %v58 = vmul.f32 %v25, %v25
    %v59 = vmul.f32 %v26, %v26
    %v60 = vmul.f32 %v27, %v27
    %v61 = vmul.f32 %v28, %v28
    %v62 = vmul.f32 %v29, %v29
    %v63 = vmul.f32 %v30, %v30
    %v64 = vmul.f32 %v31, %v31
    %v65 = vmul.f32 %v32, %v32
    %v66 = vmul.f32 %v33, %v33
    %v67 = vsel %vm38, %v51, 0.0
    %68 = vadd.xlane.f32.xlu0 %v67
    %v69 = vpop.xlane.xlu0 %68
    %v70 = vsel %vm38, %v52, 0.0
    %71 = vadd.xlane.f32.xlu0 %v70
    %v72 = vpop.xlane.xlu0 %71
    %v73 = vsel %vm38, %v53, 0.0
    %74 = vadd.xlane.f32.xlu0 %v73
    %v75 = vpop.xlane.xlu0 %74
    %v76 = vsel %vm38, %v54, 0.0
    %77 = vadd.xlane.f32.xlu0 %v76
    %v78 = vpop.xlane.xlu0 %77
    %v79 = vsel %vm38, %v55, 0.0
    %80 = vadd.xlane.f32.xlu0 %v79
    %v81 = vpop.xlane.xlu0 %80
    %v82 = vsel %vm38, %v56, 0.0
    %83 = vadd.xlane.f32.xlu0 %v82
    %v84 = vpop.xlane.xlu0 %83
    %v85 = vsel %vm38, %v57, 0.0
    %86 = vadd.xlane.f32.xlu0 %v85
    %v87 = vpop.xlane.xlu0 %86
    %v88 = vsel %vm38, %v58, 0.0
    %89 = vadd.xlane.f32.xlu0 %v88
    %v90 = vpop.xlane.xlu0 %89
    %v91 = vsel %vm38, %v59, 0.0
    %92 = vadd.xlane.f32.xlu0 %v91
    %v93 = vpop.xlane.xlu0 %92
    %v94 = vsel %vm38, %v60, 0.0
    %95 = vadd.xlane.f32.xlu0 %v94
    %v96 = vpop.xlane.xlu0 %95
    %v97 = vsel %vm38, %v61, 0.0
    %98 = vadd.xlane.f32.xlu0 %v97
    %v99 = vpop.xlane.xlu0 %98
    %v100 = vsel %vm38, %v62, 0.0
    %101 = vadd.xlane.f32.xlu0 %v100
    %v102 = vpop.xlane.xlu0 %101
    %v103 = vsel %vm38, %v63, 0.0
    %104 = vadd.xlane.f32.xlu0 %v103
    %v105 = vpop.xlane.xlu0 %104
    %v106 = vsel %vm38, %v64, 0.0
    %107 = vadd.xlane.f32.xlu0 %v106
    %v108 = vpop.xlane.xlu0 %107
    %v109 = vsel %vm38, %v65, 0.0
    %110 = vadd.xlane.f32.xlu0 %v109
    %v111 = vpop.xlane.xlu0 %110
    %v112 = vsel %vm38, %v66, 0.0
    %113 = vadd.xlane.f32.xlu0 %v112
    %v114 = vpop.xlane.xlu0 %113
    %v116 = vsel %vm38, %v14, 0
    %v119 = vsel %vm38, %v15, 0
    %v122 = vsel %vm38, %v16, 0
    %v125 = vsel %vm38, %v17, 0
    %v128 = vsel %vm38, %v18, 0
    %v131 = vsel %vm38, %v19, 0
    %v134 = vsel %vm38, %v20, 0
    %v137 = vsel %vm38, %v21, 0
    %v140 = vsel %vm38, %v22, 0
    %v143 = vsel %vm38, %v23, 0
    %v146 = vsel %vm38, %v24, 0
    %v149 = vsel %vm38, %v25, 0
    %v152 = vsel %vm38, %v26, 0
    %v155 = vsel %vm38, %v27, 0
    %v158 = vsel %vm38, %v28, 0
    %v161 = vsel %vm38, %v29, 0
    %v164 = vsel %vm38, %v30, 0
    %v167 = vsel %vm38, %v31, 0
    %v170 = vsel %vm38, %v32, 0
    %v173 = vsel %vm38, %v33, 0
    %175 = vmatpush.xpose.msra.mxu0 %v173
    %176 = vmatpush.xpose.msra.mxu0 %v170
    %177 = vmatpush.xpose.msra.mxu0 %v167
    %178 = vmatpush.xpose.msra.mxu0 %v164
    %179 = vmatpush.xpose.msra.mxu0 %v161
    %180 = vmatpush.xpose.msra.mxu0 %v158
    %181 = vmatpush.xpose.msra.mxu0 %v155
    %182 = vmatpush.xpose.msra.mxu0 %v152
    %183 = vmatpush.xpose.msra.mxu0 %v149
    %184 = vmatpush.xpose.msra.mxu0 %v146
    %185 = vmatpush.xpose.msra.mxu0 %v143
    %186 = vmatpush.xpose.msra.mxu0 %v140
    %187 = vmatpush.xpose.msra.mxu0 %v137
    %188 = vmatpush.xpose.msra.mxu0 %v134
    %189 = vmatpush.xpose.msra.mxu0 %v131
    %190 = vmatpush.xpose.msra.mxu0 %v128
    %191 = vmatmul.f32.gmra.mxu0 %v116
    %v192 = vpop.f32.mrf.mxu0
    %v193 = vadd.f32 0.0, %v192
    %194 = vmatmul.f32.gmra.mxu0 %v119
    %v195 = vpop.f32.mrf.mxu0
    %v196 = vadd.f32 0.0, %v195
    %197 = vmatmul.f32.gmra.mxu0 %v122
    %v198 = vpop.f32.mrf.mxu0
    %v199 = vadd.f32 0.0, %v198
    %200 = vmatmul.f32.gmra.mxu0 %v125
    %v201 = vpop.f32.mrf.mxu0
    %v202 = vadd.f32 0.0, %v201
    %203 = vdwg.mxu0
    %v204 = vmul.f32 %v193, 2.0
    %v205 = vmul.f32 %v196, 2.0
    %v206 = vmul.f32 %v199, 2.0
    %v207 = vmul.f32 %v202, 2.0
    %v208 = vsub.f32 %v41, %v204
    %v209 = vsub.f32 %v44, %v205
    %v210 = vsub.f32 %v47, %v206
    %v211 = vsub.f32 %v50, %v207
    %v228 = vlaneseq
    %v229 = vand.u32 %v228, 127
    %v230 = vperm.slane %v69, %v229
    %v231 = vadd.s32 %v229, 4294967288
    %v232 = vperm.slane %v72, %v231
    %vm233 = vcmask 130112
    %v234 = vsel %vm233, %v232, %v230
    %v235 = vadd.s32 %v229, 4294967280
    %v236 = vperm.slane %v75, %v235
    %vm237 = vcmask 195712
    %v238 = vsel %vm237, %v236, %v234
    %v239 = vadd.s32 %v229, 4294967272
    %v240 = vperm.slane %v78, %v239
    %vm241 = vcmask 261312
    %v242 = vsel %vm241, %v240, %v238
    %v243 = vadd.s32 %v229, 4294967264
    %v244 = vperm.slane %v81, %v243
    %vm245 = vcmask 326912
    %v246 = vsel %vm245, %v244, %v242
    %v247 = vadd.s32 %v229, 4294967256
    %v248 = vperm.slane %v84, %v247
    %vm249 = vcmask 392512
    %v250 = vsel %vm249, %v248, %v246
    %v251 = vadd.s32 %v229, 4294967248
    %v252 = vperm.slane %v87, %v251
    %vm253 = vcmask 458112
    %v254 = vsel %vm253, %v252, %v250
    %v255 = vadd.s32 %v229, 4294967240
    %v256 = vperm.slane %v90, %v255
    %vm257 = vcmask 523712
    %v258 = vsel %vm257, %v256, %v254
    %v259 = vadd.s32 %v229, 4294967232
    %v260 = vperm.slane %v93, %v259
    %vm261 = vcmask 589312
    %v262 = vsel %vm261, %v260, %v258
    %v263 = vadd.s32 %v229, 4294967224
    %v264 = vperm.slane %v96, %v263
    %vm265 = vcmask 654912
    %v266 = vsel %vm265, %v264, %v262
    %v267 = vadd.s32 %v229, 4294967216
    %v268 = vperm.slane %v99, %v267
    %vm269 = vcmask 720512
    %v270 = vsel %vm269, %v268, %v266
    %v271 = vadd.s32 %v229, 4294967208
    %v272 = vperm.slane %v102, %v271
    %vm273 = vcmask 786112
    %v274 = vsel %vm273, %v272, %v270
    %v275 = vadd.s32 %v229, 4294967200
    %v276 = vperm.slane %v105, %v275
    %vm277 = vcmask 851712
    %v278 = vsel %vm277, %v276, %v274
    %v279 = vadd.s32 %v229, 4294967192
    %v280 = vperm.slane %v108, %v279
    %vm281 = vcmask 917312
    %v282 = vsel %vm281, %v280, %v278
    %v283 = vadd.s32 %v229, 4294967184
    %v284 = vperm.slane %v111, %v283
    %vm285 = vcmask 982912
    %v286 = vsel %vm285, %v284, %v282
    %v287 = vadd.s32 %v229, 4294967176
    %v288 = vperm.slane %v114, %v287
    %vm289 = vcmask 1048512
    %v290 = vsel %vm289, %v288, %v286
    %vm291 = vcmask 1042434
    %v292 = vsel %vm291, %v290, %v290
    %vm293 = vcmask 1043459
    %v294 = vsel %vm293, %v290, %v292
    %vm295 = vcmask 1044484
    %v296 = vsel %vm295, %v290, %v294
    %vm297 = vcmask 1045509
    %v298 = vsel %vm297, %v290, %v296
    %vm299 = vcmask 1046534
    %v300 = vsel %vm299, %v290, %v298
    %vm301 = vcmask 1047559
    %v302 = vsel %vm301, %v290, %v300
    %v304 = vadd.f32 %v208, %v302
    %v305 = vadd.f32 %v209, %v302
    %v306 = vadd.f32 %v210, %v302
    %v307 = vadd.f32 %v211, %v302
    %vm308 = vcmp.lt.s32.totalorder %v229, 64
    %v309 = vsel %vm308, %v304, inf
    %v310 = vsel %vm308, %v305, inf
    %v311 = vsel %vm308, %v306, inf
    %v312 = vsel %vm308, %v307, inf
    %313 = vmin.xlane.f32.xlu0 %v309
    %v314 = vpop.xlane.xlu0 %313
    %315 = vmin.xlane.f32.xlu0 %v310
    %v316 = vpop.xlane.xlu0 %315
    %317 = vmin.xlane.f32.xlu0 %v311
    %v318 = vpop.xlane.xlu0 %317
    %319 = vmin.xlane.f32.xlu0 %v312
    %v320 = vpop.xlane.xlu0 %319
    %vm321 = vcmp.eq.f32.partialorder %v309, %v314
    %vm322 = vcmp.eq.f32.partialorder %v310, %v316
    %vm323 = vcmp.eq.f32.partialorder %v311, %v318
    %vm324 = vcmp.eq.f32.partialorder %v312, %v320
    %v325 = vsel %vm321, %v229, 128
    %v326 = vsel %vm322, %v229, 128
    %v327 = vsel %vm323, %v229, 128
    %v328 = vsel %vm324, %v229, 128
    %v329 = vand.u32 %v325, 65535
    %v330 = vshra.s32 %v325, 16
    %v331 = vcvt.s32.f32 %v329
    %v332 = vcvt.s32.f32 %v330
    %333 = vmin.xlane.f32.xlu0 %v332
    %v334 = vpop.xlane.xlu0 %333
    %vm335 = vcmp.eq.f32.partialorder %v332, %v334
    %v336 = vsel %vm335, %v331, inf
    %337 = vmin.xlane.f32.xlu0 %v336
    %v338 = vpop.xlane.xlu0 %337
    %v339 = vcvt.f32.s32 %v338
    %v340 = vcvt.f32.s32 %v334
    %v341 = vshll.u32 %v340, 16
    %v342 = vadd.s32 %v341, %v339
    %v343 = vand.u32 %v326, 65535
    %v344 = vshra.s32 %v326, 16
    %v345 = vcvt.s32.f32 %v343
    %v346 = vcvt.s32.f32 %v344
    %347 = vmin.xlane.f32.xlu0 %v346
    %v348 = vpop.xlane.xlu0 %347
    %vm349 = vcmp.eq.f32.partialorder %v346, %v348
    %v350 = vsel %vm349, %v345, inf
    %351 = vmin.xlane.f32.xlu0 %v350
    %v352 = vpop.xlane.xlu0 %351
    %v353 = vcvt.f32.s32 %v352
    %v354 = vcvt.f32.s32 %v348
    %v355 = vshll.u32 %v354, 16
    %v356 = vadd.s32 %v355, %v353
    %v357 = vand.u32 %v327, 65535
    %v358 = vshra.s32 %v327, 16
    %v359 = vcvt.s32.f32 %v357
    %v360 = vcvt.s32.f32 %v358
    %361 = vmin.xlane.f32.xlu0 %v360
    %v362 = vpop.xlane.xlu0 %361
    %vm363 = vcmp.eq.f32.partialorder %v360, %v362
    %v364 = vsel %vm363, %v359, inf
    %365 = vmin.xlane.f32.xlu0 %v364
    %v366 = vpop.xlane.xlu0 %365
    %v367 = vcvt.f32.s32 %v366
    %v368 = vcvt.f32.s32 %v362
    %v369 = vshll.u32 %v368, 16
    %v370 = vadd.s32 %v369, %v367
    %v371 = vand.u32 %v328, 65535
    %v372 = vshra.s32 %v328, 16
    %v373 = vcvt.s32.f32 %v371
    %v374 = vcvt.s32.f32 %v372
    %375 = vmin.xlane.f32.xlu0 %v374
    %v376 = vpop.xlane.xlu0 %375
    %vm377 = vcmp.eq.f32.partialorder %v374, %v376
    %v378 = vsel %vm377, %v373, inf
    %379 = vmin.xlane.f32.xlu0 %v378
    %v380 = vpop.xlane.xlu0 %379
    %v381 = vcvt.f32.s32 %v380
    %v382 = vcvt.f32.s32 %v376
    %v383 = vshll.u32 %v382, 16
    %v384 = vadd.s32 %v383, %v381
    %vm385 = vcmp.eq.s32.totalorder %v229, %v342
    %vm386 = vcmp.eq.s32.totalorder %v229, %v356
    %vm387 = vcmp.eq.s32.totalorder %v229, %v370
    %vm388 = vcmp.eq.s32.totalorder %v229, %v384
    %v389 = vsel %vm385, 1, 0
    %v390 = vsel %vm386, 1, 0
    %v391 = vsel %vm387, 1, 0
    %v392 = vsel %vm388, 1, 0
    %v393 = vcvt.s32.f32 %v389
    %v394 = vcvt.s32.f32 %v390
    %v395 = vcvt.s32.f32 %v391
    %v396 = vcvt.s32.f32 %v392
    %397 = vmatpush.msra.mxu0 %v33
    %398 = vmatpush.msra.mxu0 %v32
    %399 = vmatpush.msra.mxu0 %v31
    %400 = vmatpush.msra.mxu0 %v30
    %401 = vmatpush.msra.mxu0 %v29
    %402 = vmatpush.msra.mxu0 %v28
    %403 = vmatpush.msra.mxu0 %v27
    %404 = vmatpush.msra.mxu0 %v26
    %405 = vmatpush.msra.mxu0 %v25
    %406 = vmatpush.msra.mxu0 %v24
    %407 = vmatpush.msra.mxu0 %v23
    %408 = vmatpush.msra.mxu0 %v22
    %409 = vmatpush.msra.mxu0 %v21
    %410 = vmatpush.msra.mxu0 %v20
    %411 = vmatpush.msra.mxu0 %v19
    %412 = vmatpush.msra.mxu0 %v18
    %413 = vmatmul.f32.gmra.mxu0 %v393
    %v414 = vpop.f32.mrf.mxu0
    %v415 = vadd.f32 0.0, %v414
    %416 = vmatmul.f32.gmra.mxu0 %v394
    %v417 = vpop.f32.mrf.mxu0
    %v418 = vadd.f32 0.0, %v417
    %419 = vmatmul.f32.gmra.mxu0 %v395
    %v420 = vpop.f32.mrf.mxu0
    %v421 = vadd.f32 0.0, %v420
    %422 = vmatmul.f32.gmra.mxu0 %v396
    %v423 = vpop.f32.mrf.mxu0
    %v424 = vadd.f32 0.0, %v423
    %425 = vdwg.mxu0
    %426 = vst.msk [vmem:[%s2] sm:$0xff] %vm38, %v415
    %427 = vst.msk [vmem:[%s2 + $0x8] sm:$0xff] %vm38, %v418
    %428 = vst.msk [vmem:[%s2 + $0x10] sm:$0xff] %vm38, %v421
    %429 = vst.msk [vmem:[%s2 + $0x18] sm:$0xff] %vm38, %v424
    %v430 = vsub.f32 %v14, %v415
    %v431 = vsub.f32 %v15, %v418
    %v432 = vsub.f32 %v16, %v421
    %v433 = vsub.f32 %v17, %v424
    %v434 = vmul.f32 %v430, %v430
    %v435 = vmul.f32 %v431, %v431
    %v436 = vmul.f32 %v432, %v432
    %v437 = vmul.f32 %v433, %v433
    %v438 = vsel %vm38, %v434, 0.0
    %v439 = vsel %vm38, %v435, 0.0
    %v440 = vadd.f32 %v438, %v439
    %v441 = vsel %vm38, %v436, 0.0
    %v442 = vadd.f32 %v440, %v441
    %v443 = vsel %vm38, %v437, 0.0
    %v444 = vadd.f32 %v442, %v443
    %445 = vadd.xlane.f32.xlu0 %v444
    %v446 = vpop.xlane.xlu0 %445
    %v447 = vrot.slane %v446, 4
    %v448 = vadd.f32 %v446, %v447
    %v449 = vrot.slane %v448, 2
    %v450 = vadd.f32 %v448, %v449
    %v451 = vrot.slane %v450, 1
    %v452 = vadd.f32 %v450, %v451
    %s453 = vtos %v452
    %s454 = scalar_lea.smem [#allocation2], 0
    %455 = sst [smem:[%s454]] %s453
    // Predicated region
    $region10: #{vqvae_forward.17} parent=1 // pred_check
      _
    $region11: #{vqvae_forward.17} parent=1 // pred_check_branch
      %457 = sbr.rel (0) target = $region13
    $region12: #{vqvae_forward.17} parent=1 // pred_region
      _
    $region13: #{vqvae_forward.17} parent=1 // pred_fallthru
      _
    // Predicated region
    $region14: #{vqvae_forward.17} parent=1 // pred_check
      _
    $region15: #{vqvae_forward.17} parent=1 // pred_check_branch
      %459 = sbr.rel (0) target = $region17
    $region16: #{vqvae_forward.17} parent=1 // pred_region
      %461 = vsyncadd [#allocation3], 0
      %s463 = sshll.u32 %s3, 4
      %s464 = int_to_ptr.hbm [resolvable:$true] %s463
      %466 = dma.smem_to_hbm [#allocation2], 16, %s464, [#allocation3]
    $region17: #{vqvae_forward.17} parent=1 // pred_fallthru
      _
    // Predicated region
    $region18: #{vqvae_forward.17} parent=1 // pred_check
      _
    $region19: #{vqvae_forward.17} parent=1 // pred_check_branch
      %468 = sbr.rel (0) target = $region21
    $region20: #{vqvae_forward.17} parent=1 // pred_region
      _
    $region21: #{vqvae_forward.17} parent=1 // pred_fallthru
      _
    // Predicated region
    $region22: #{vqvae_forward.17} parent=1 // pred_check
      _
    $region23: #{vqvae_forward.17} parent=1 // pred_check_branch
      %470 = sbr.rel (0) target = $region25
    $region24: #{vqvae_forward.17} parent=1 // pred_region
      %472 = dma.done [#allocation3], 16
    $region25: #{vqvae_forward.17} parent=1 // pred_fallthru
      _
    %473 = sfence
    %474 = vsyncpa [#allocation3], 1

// kernel: vqvae_forward.20
$region0: #{vqvae_forward.20}
  #allocation0 [shape = 'u32[]', space=smem, size = 0x4, offset = 0x4, fixed_abs, tag = 'smem constant byte address 0x4 - core index']
  #allocation1 [shape = 'u32[72,128]{1,0:T(1,128)}', space=vmem, size = 0x9000, scoped, tag = 'internal scratch']
  %s0 = inlined_call_operand.vmem [shape: f32[32,128], index: 0, kind: input, shape index: {}]
  %s1 = inlined_call_operand.vmem [shape: f32[32,128], index: 1, kind: input, shape index: {}]
  %s2 = inlined_call_operand.hbm [shape: f32[1,1], index: 2, kind: output, shape index: {}]
  %s3 = sld [smem:[#allocation0]]
  $region18: #{vqvae_forward.20} parent=0
    _
  %s5 = ssub.s32 1, %s3
  %s6 = scalar_select 0, %s5, %s3
  $region1: #{vqvae_forward.20} parent=0
    #allocation2 [shape = 'u8[512]{0}', space=smem, size = 0x200, scoped, tag = 'output window, operand 0, single buffered']
    #allocation3 [shape = 's32[1]{0}', space=sflag, size = 0x4, scoped, tag = 'scoped memory for vqvae_forward.20']
    %7 = vsyncpa [#allocation3], 0
    // Predicated region
    $region2: #{vqvae_forward.20} parent=1 // pred_check
      _
    $region3: #{vqvae_forward.20} parent=1 // pred_check_branch
      %9 = sbr.rel (0) target = $region5
    $region4: #{vqvae_forward.20} parent=1 // pred_region
      _
    $region5: #{vqvae_forward.20} parent=1 // pred_fallthru
      _
    // Predicated region
    $region6: #{vqvae_forward.20} parent=1 // pred_check
      _
    $region7: #{vqvae_forward.20} parent=1 // pred_check_branch
      %11 = sbr.rel (0) target = $region9
    $region8: #{vqvae_forward.20} parent=1 // pred_region
      _
    $region9: #{vqvae_forward.20} parent=1 // pred_fallthru
      _
    %v12 = vld [vmem:[%s0] sm:$0xff]
    %v13 = vld [vmem:[%s0 + $0x8] sm:$0xff]
    %v14 = vld [vmem:[%s0 + $0x10] sm:$0xff]
    %v15 = vld [vmem:[%s0 + $0x18] sm:$0xff]
    %v16 = vld [vmem:[%s1] sm:$0xff]
    %v17 = vld [vmem:[%s1 + $0x8] sm:$0xff]
    %v18 = vld [vmem:[%s1 + $0x10] sm:$0xff]
    %v19 = vld [vmem:[%s1 + $0x18] sm:$0xff]
    %v20 = vsub.f32 %v12, %v16
    %v21 = vsub.f32 %v13, %v17
    %v22 = vsub.f32 %v14, %v18
    %v23 = vsub.f32 %v15, %v19
    %v24 = vmul.f32 %v20, %v20
    %v25 = vmul.f32 %v21, %v21
    %v26 = vmul.f32 %v22, %v22
    %v27 = vmul.f32 %v23, %v23
    %v28 = vadd.f32 %v24, %v25
    %v29 = vadd.f32 %v28, %v26
    %v30 = vadd.f32 %v29, %v27
    %31 = vadd.xlane.f32.xlu0 %v30
    %v32 = vpop.xlane.xlu0 %31
    %v33 = vrot.slane %v32, 4
    %v34 = vadd.f32 %v32, %v33
    %v35 = vrot.slane %v34, 2
    %v36 = vadd.f32 %v34, %v35
    %v37 = vrot.slane %v36, 1
    %v38 = vadd.f32 %v36, %v37
    %s39 = vtos %v38
    %s40 = scalar_lea.smem [#allocation2], 0
    %41 = sst [smem:[%s40]] %s39
    // Predicated region
    $region10: #{vqvae_forward.20} parent=1 // pred_check
      _
    $region11: #{vqvae_forward.20} parent=1 // pred_check_branch
      %43 = sbr.rel (0) target = $region13
    $region12: #{vqvae_forward.20} parent=1 // pred_region
      %45 = vsyncadd [#allocation3], 0
      %s47 = sshll.u32 %s2, 4
      %s48 = int_to_ptr.hbm [resolvable:$true] %s47
      %50 = dma.smem_to_hbm [#allocation2], 16, %s48, [#allocation3]
    $region13: #{vqvae_forward.20} parent=1 // pred_fallthru
      _
    // Predicated region
    $region14: #{vqvae_forward.20} parent=1 // pred_check
      _
    $region15: #{vqvae_forward.20} parent=1 // pred_check_branch
      %52 = sbr.rel (0) target = $region17
    $region16: #{vqvae_forward.20} parent=1 // pred_region
      %54 = dma.done [#allocation3], 16
    $region17: #{vqvae_forward.20} parent=1 // pred_fallthru
      _
    %55 = sfence
    %56 = vsyncpa [#allocation3], 1

// kernel: vqvae_forward.14
$region0: #{vqvae_forward.14}
  #allocation0 [shape = 'u32[]', space=smem, size = 0x4, offset = 0x4, fixed_abs, tag = 'smem constant byte address 0x4 - core index']
  #allocation1 [shape = 'u32[72,128]{1,0:T(1,128)}', space=vmem, size = 0x9000, scoped, tag = 'internal scratch']
  %s0 = inlined_call_operand.vmem [shape: f32[128,32], index: 0, kind: input, shape index: {}]
  %s1 = inlined_call_operand.vmem [shape: f32[128,32], index: 1, kind: input, shape index: {}]
  %s2 = inlined_call_operand.vmem [shape: f32[128,32], index: 2, kind: output, shape index: {0}]
  %s3 = inlined_call_operand.hbm [shape: f32[1,1], index: 3, kind: output, shape index: {1}]
  %4 = xla_tuple %s2, %s3
  %s5 = sld [smem:[#allocation0]]
  $region26: #{vqvae_forward.14} parent=0
    _
  %s7 = ssub.s32 1, %s5
  %s8 = scalar_select 0, %s7, %s5
  $region1: #{vqvae_forward.14} parent=0
    #allocation2 [shape = 'u8[512]{0}', space=smem, size = 0x200, scoped, tag = 'output window, operand 1, single buffered']
    #allocation3 [shape = 's32[1]{0}', space=sflag, size = 0x4, scoped, tag = 'scoped memory for vqvae_forward.14']
    %9 = vsyncpa [#allocation3], 0
    // Predicated region
    $region2: #{vqvae_forward.14} parent=1 // pred_check
      _
    $region3: #{vqvae_forward.14} parent=1 // pred_check_branch
      %11 = sbr.rel (0) target = $region5
    $region4: #{vqvae_forward.14} parent=1 // pred_region
      _
    $region5: #{vqvae_forward.14} parent=1 // pred_fallthru
      _
    // Predicated region
    $region6: #{vqvae_forward.14} parent=1 // pred_check
      _
    $region7: #{vqvae_forward.14} parent=1 // pred_check_branch
      %13 = sbr.rel (0) target = $region9
    $region8: #{vqvae_forward.14} parent=1 // pred_region
      _
    $region9: #{vqvae_forward.14} parent=1 // pred_fallthru
      _
    %v14 = vld [vmem:[%s0] sm:$0xff]
    %v15 = vld [vmem:[%s0 + $0x8] sm:$0xff]
    %v16 = vld [vmem:[%s0 + $0x10] sm:$0xff]
    %v17 = vld [vmem:[%s0 + $0x18] sm:$0xff]
    %v18 = vld [vmem:[%s0 + $0x20] sm:$0xff]
    %v19 = vld [vmem:[%s0 + $0x28] sm:$0xff]
    %v20 = vld [vmem:[%s0 + $0x30] sm:$0xff]
    %v21 = vld [vmem:[%s0 + $0x38] sm:$0xff]
    %v22 = vld [vmem:[%s0 + $0x40] sm:$0xff]
    %v23 = vld [vmem:[%s0 + $0x48] sm:$0xff]
    %v24 = vld [vmem:[%s0 + $0x50] sm:$0xff]
    %v25 = vld [vmem:[%s0 + $0x58] sm:$0xff]
    %v26 = vld [vmem:[%s0 + $0x60] sm:$0xff]
    %v27 = vld [vmem:[%s0 + $0x68] sm:$0xff]
    %v28 = vld [vmem:[%s0 + $0x70] sm:$0xff]
    %v29 = vld [vmem:[%s0 + $0x78] sm:$0xff]
    %v30 = vld [vmem:[%s1] sm:$0xff]
    %v31 = vld [vmem:[%s1 + $0x8] sm:$0xff]
    %v32 = vld [vmem:[%s1 + $0x10] sm:$0xff]
    %v33 = vld [vmem:[%s1 + $0x18] sm:$0xff]
    %v34 = vld [vmem:[%s1 + $0x20] sm:$0xff]
    %v35 = vld [vmem:[%s1 + $0x28] sm:$0xff]
    %v36 = vld [vmem:[%s1 + $0x30] sm:$0xff]
    %v37 = vld [vmem:[%s1 + $0x38] sm:$0xff]
    %v38 = vld [vmem:[%s1 + $0x40] sm:$0xff]
    %v39 = vld [vmem:[%s1 + $0x48] sm:$0xff]
    %v40 = vld [vmem:[%s1 + $0x50] sm:$0xff]
    %v41 = vld [vmem:[%s1 + $0x58] sm:$0xff]
    %v42 = vld [vmem:[%s1 + $0x60] sm:$0xff]
    %v43 = vld [vmem:[%s1 + $0x68] sm:$0xff]
    %v44 = vld [vmem:[%s1 + $0x70] sm:$0xff]
    %v45 = vld [vmem:[%s1 + $0x78] sm:$0xff]
    %v46 = vmul.f32 %v14, %v14
    %v47 = vmul.f32 %v15, %v15
    %v48 = vmul.f32 %v16, %v16
    %v49 = vmul.f32 %v17, %v17
    %v50 = vmul.f32 %v18, %v18
    %v51 = vmul.f32 %v19, %v19
    %v52 = vmul.f32 %v20, %v20
    %v53 = vmul.f32 %v21, %v21
    %v54 = vmul.f32 %v22, %v22
    %v55 = vmul.f32 %v23, %v23
    %v56 = vmul.f32 %v24, %v24
    %v57 = vmul.f32 %v25, %v25
    %v58 = vmul.f32 %v26, %v26
    %v59 = vmul.f32 %v27, %v27
    %v60 = vmul.f32 %v28, %v28
    %v61 = vmul.f32 %v29, %v29
    %vm62 = vcmask 261120
    %v63 = vsel %vm62, %v46, 0.0
    %64 = vadd.xlane.f32.xlu0 %v63
    %v65 = vpop.xlane.xlu0 %64
    %v66 = vsel %vm62, %v47, 0.0
    %67 = vadd.xlane.f32.xlu0 %v66
    %v68 = vpop.xlane.xlu0 %67
    %v69 = vsel %vm62, %v48, 0.0
    %70 = vadd.xlane.f32.xlu0 %v69
    %v71 = vpop.xlane.xlu0 %70
    %v72 = vsel %vm62, %v49, 0.0
    %73 = vadd.xlane.f32.xlu0 %v72
    %v74 = vpop.xlane.xlu0 %73
    %v75 = vsel %vm62, %v50, 0.0
    %76 = vadd.xlane.f32.xlu0 %v75
    %v77 = vpop.xlane.xlu0 %76
    %v78 = vsel %vm62, %v51, 0.0
    %79 = vadd.xlane.f32.xlu0 %v78
    %v80 = vpop.xlane.xlu0 %79
    %v81 = vsel %vm62, %v52, 0.0
    %82 = vadd.xlane.f32.xlu0 %v81
    %v83 = vpop.xlane.xlu0 %82
    %v84 = vsel %vm62, %v53, 0.0
    %85 = vadd.xlane.f32.xlu0 %v84
    %v86 = vpop.xlane.xlu0 %85
    %v87 = vsel %vm62, %v54, 0.0
    %88 = vadd.xlane.f32.xlu0 %v87
    %v89 = vpop.xlane.xlu0 %88
    %v90 = vsel %vm62, %v55, 0.0
    %91 = vadd.xlane.f32.xlu0 %v90
    %v92 = vpop.xlane.xlu0 %91
    %v93 = vsel %vm62, %v56, 0.0
    %94 = vadd.xlane.f32.xlu0 %v93
    %v95 = vpop.xlane.xlu0 %94
    %v96 = vsel %vm62, %v57, 0.0
    %97 = vadd.xlane.f32.xlu0 %v96
    %v98 = vpop.xlane.xlu0 %97
    %v99 = vsel %vm62, %v58, 0.0
    %100 = vadd.xlane.f32.xlu0 %v99
    %v101 = vpop.xlane.xlu0 %100
    %v102 = vsel %vm62, %v59, 0.0
    %103 = vadd.xlane.f32.xlu0 %v102
    %v104 = vpop.xlane.xlu0 %103
    %v105 = vsel %vm62, %v60, 0.0
    %106 = vadd.xlane.f32.xlu0 %v105
    %v107 = vpop.xlane.xlu0 %106
    %v108 = vsel %vm62, %v61, 0.0
    %109 = vadd.xlane.f32.xlu0 %v108
    %v110 = vpop.xlane.xlu0 %109
    %v111 = vmul.f32 %v30, %v30
    %v112 = vmul.f32 %v31, %v31
    %v113 = vmul.f32 %v32, %v32
    %v114 = vmul.f32 %v33, %v33
    %v115 = vmul.f32 %v34, %v34
    %v116 = vmul.f32 %v35, %v35
    %v117 = vmul.f32 %v36, %v36
    %v118 = vmul.f32 %v37, %v37
    %v119 = vmul.f32 %v38, %v38
    %v120 = vmul.f32 %v39, %v39
    %v121 = vmul.f32 %v40, %v40
    %v122 = vmul.f32 %v41, %v41
    %v123 = vmul.f32 %v42, %v42
    %v124 = vmul.f32 %v43, %v43
    %v125 = vmul.f32 %v44, %v44
    %v126 = vmul.f32 %v45, %v45
    %v127 = vsel %vm62, %v111, 0.0
    %128 = vadd.xlane.f32.xlu0 %v127
    %v129 = vpop.xlane.xlu0 %128
    %v130 = vsel %vm62, %v112, 0.0
    %131 = vadd.xlane.f32.xlu0 %v130
    %v132 = vpop.xlane.xlu0 %131
    %v133 = vsel %vm62, %v113, 0.0
    %134 = vadd.xlane.f32.xlu0 %v133
    %v135 = vpop.xlane.xlu0 %134
    %v136 = vsel %vm62, %v114, 0.0
    %137 = vadd.xlane.f32.xlu0 %v136
    %v138 = vpop.xlane.xlu0 %137
    %v139 = vsel %vm62, %v115, 0.0
    %140 = vadd.xlane.f32.xlu0 %v139
    %v141 = vpop.xlane.xlu0 %140
    %v142 = vsel %vm62, %v116, 0.0
    %143 = vadd.xlane.f32.xlu0 %v142
    %v144 = vpop.xlane.xlu0 %143
    %v145 = vsel %vm62, %v117, 0.0
    %146 = vadd.xlane.f32.xlu0 %v145
    %v147 = vpop.xlane.xlu0 %146
    %v148 = vsel %vm62, %v118, 0.0
    %149 = vadd.xlane.f32.xlu0 %v148
    %v150 = vpop.xlane.xlu0 %149
    %v151 = vsel %vm62, %v119, 0.0
    %152 = vadd.xlane.f32.xlu0 %v151
    %v153 = vpop.xlane.xlu0 %152
    %v154 = vsel %vm62, %v120, 0.0
    %155 = vadd.xlane.f32.xlu0 %v154
    %v156 = vpop.xlane.xlu0 %155
    %v157 = vsel %vm62, %v121, 0.0
    %158 = vadd.xlane.f32.xlu0 %v157
    %v159 = vpop.xlane.xlu0 %158
    %v160 = vsel %vm62, %v122, 0.0
    %161 = vadd.xlane.f32.xlu0 %v160
    %v162 = vpop.xlane.xlu0 %161
    %v163 = vsel %vm62, %v123, 0.0
    %164 = vadd.xlane.f32.xlu0 %v163
    %v165 = vpop.xlane.xlu0 %164
    %v166 = vsel %vm62, %v124, 0.0
    %167 = vadd.xlane.f32.xlu0 %v166
    %v168 = vpop.xlane.xlu0 %167
    %v169 = vsel %vm62, %v125, 0.0
    %170 = vadd.xlane.f32.xlu0 %v169
    %v171 = vpop.xlane.xlu0 %170
    %v172 = vsel %vm62, %v126, 0.0
    %173 = vadd.xlane.f32.xlu0 %v172
    %v174 = vpop.xlane.xlu0 %173
    %v176 = vsel %vm62, %v14, 0
    %v179 = vsel %vm62, %v15, 0
    %v182 = vsel %vm62, %v16, 0
    %v185 = vsel %vm62, %v17, 0
    %v188 = vsel %vm62, %v18, 0
    %v191 = vsel %vm62, %v19, 0
    %v194 = vsel %vm62, %v20, 0
    %v197 = vsel %vm62, %v21, 0
    %v200 = vsel %vm62, %v22, 0
    %v203 = vsel %vm62, %v23, 0
    %v206 = vsel %vm62, %v24, 0
    %v209 = vsel %vm62, %v25, 0
    %v212 = vsel %vm62, %v26, 0
    %v215 = vsel %vm62, %v27, 0
    %v218 = vsel %vm62, %v28, 0
    %v221 = vsel %vm62, %v29, 0
    %v224 = vsel %vm62, %v30, 0
    %v227 = vsel %vm62, %v31, 0
    %v230 = vsel %vm62, %v32, 0
    %v233 = vsel %vm62, %v33, 0
    %v236 = vsel %vm62, %v34, 0
    %v239 = vsel %vm62, %v35, 0
    %v242 = vsel %vm62, %v36, 0
    %v245 = vsel %vm62, %v37, 0
    %v248 = vsel %vm62, %v38, 0
    %v251 = vsel %vm62, %v39, 0
    %v254 = vsel %vm62, %v40, 0
    %v257 = vsel %vm62, %v41, 0
    %v260 = vsel %vm62, %v42, 0
    %v263 = vsel %vm62, %v43, 0
    %v266 = vsel %vm62, %v44, 0
    %v269 = vsel %vm62, %v45, 0
    %271 = vmatpush.xpose.msra.mxu0 %v269
    %272 = vmatpush.xpose.msra.mxu0 %v266
    %273 = vmatpush.xpose.msra.mxu0 %v263
    %274 = vmatpush.xpose.msra.mxu0 %v260
    %275 = vmatpush.xpose.msra.mxu0 %v257
    %276 = vmatpush.xpose.msra.mxu0 %v254
    %277 = vmatpush.xpose.msra.mxu0 %v251
    %278 = vmatpush.xpose.msra.mxu0 %v248
    %279 = vmatpush.xpose.msra.mxu0 %v245
    %280 = vmatpush.xpose.msra.mxu0 %v242
    %281 = vmatpush.xpose.msra.mxu0 %v239
    %282 = vmatpush.xpose.msra.mxu0 %v236
    %283 = vmatpush.xpose.msra.mxu0 %v233
    %284 = vmatpush.xpose.msra.mxu0 %v230
    %285 = vmatpush.xpose.msra.mxu0 %v227
    %286 = vmatpush.xpose.msra.mxu0 %v224
    %287 = vmatmul.f32.gmra.mxu0 %v176
    %v288 = vpop.f32.mrf.mxu0
    %v289 = vadd.f32 0.0, %v288
    %290 = vmatmul.f32.gmra.mxu0 %v179
    %v291 = vpop.f32.mrf.mxu0
    %v292 = vadd.f32 0.0, %v291
    %293 = vmatmul.f32.gmra.mxu0 %v182
    %v294 = vpop.f32.mrf.mxu0
    %v295 = vadd.f32 0.0, %v294
    %296 = vmatmul.f32.gmra.mxu0 %v185
    %v297 = vpop.f32.mrf.mxu0
    %v298 = vadd.f32 0.0, %v297
    %299 = vmatmul.f32.gmra.mxu0 %v188
    %v300 = vpop.f32.mrf.mxu0
    %v301 = vadd.f32 0.0, %v300
    %302 = vmatmul.f32.gmra.mxu0 %v191
    %v303 = vpop.f32.mrf.mxu0
    %v304 = vadd.f32 0.0, %v303
    %305 = vmatmul.f32.gmra.mxu0 %v194
    %v306 = vpop.f32.mrf.mxu0
    %v307 = vadd.f32 0.0, %v306
    %308 = vmatmul.f32.gmra.mxu0 %v197
    %v309 = vpop.f32.mrf.mxu0
    %v310 = vadd.f32 0.0, %v309
    %311 = vmatmul.f32.gmra.mxu0 %v200
    %v312 = vpop.f32.mrf.mxu0
    %v313 = vadd.f32 0.0, %v312
    %314 = vmatmul.f32.gmra.mxu0 %v203
    %v315 = vpop.f32.mrf.mxu0
    %v316 = vadd.f32 0.0, %v315
    %317 = vmatmul.f32.gmra.mxu0 %v206
    %v318 = vpop.f32.mrf.mxu0
    %v319 = vadd.f32 0.0, %v318
    %320 = vmatmul.f32.gmra.mxu0 %v209
    %v321 = vpop.f32.mrf.mxu0
    %v322 = vadd.f32 0.0, %v321
    %323 = vmatmul.f32.gmra.mxu0 %v212
    %v324 = vpop.f32.mrf.mxu0
    %v325 = vadd.f32 0.0, %v324
    %326 = vmatmul.f32.gmra.mxu0 %v215
    %v327 = vpop.f32.mrf.mxu0
    %v328 = vadd.f32 0.0, %v327
    %329 = vmatmul.f32.gmra.mxu0 %v218
    %v330 = vpop.f32.mrf.mxu0
    %v331 = vadd.f32 0.0, %v330
    %332 = vmatmul.f32.gmra.mxu0 %v221
    %v333 = vpop.f32.mrf.mxu0
    %v334 = vadd.f32 0.0, %v333
    %335 = vdwg.mxu0
    %v336 = vmul.f32 %v289, 2.0
    %v337 = vmul.f32 %v292, 2.0
    %v338 = vmul.f32 %v295, 2.0
    %v339 = vmul.f32 %v298, 2.0
    %v340 = vmul.f32 %v301, 2.0
    %v341 = vmul.f32 %v304, 2.0
    %v342 = vmul.f32 %v307, 2.0
    %v343 = vmul.f32 %v310, 2.0
    %v344 = vmul.f32 %v313, 2.0
    %v345 = vmul.f32 %v316, 2.0
    %v346 = vmul.f32 %v319, 2.0
    %v347 = vmul.f32 %v322, 2.0
    %v348 = vmul.f32 %v325, 2.0
    %v349 = vmul.f32 %v328, 2.0
    %v350 = vmul.f32 %v331, 2.0
    %v351 = vmul.f32 %v334, 2.0
    %v352 = vsub.f32 %v65, %v336
    %v353 = vsub.f32 %v68, %v337
    %v354 = vsub.f32 %v71, %v338
    %v355 = vsub.f32 %v74, %v339
    %v356 = vsub.f32 %v77, %v340
    %v357 = vsub.f32 %v80, %v341
    %v358 = vsub.f32 %v83, %v342
    %v359 = vsub.f32 %v86, %v343
    %v360 = vsub.f32 %v89, %v344
    %v361 = vsub.f32 %v92, %v345
    %v362 = vsub.f32 %v95, %v346
    %v363 = vsub.f32 %v98, %v347
    %v364 = vsub.f32 %v101, %v348
    %v365 = vsub.f32 %v104, %v349
    %v366 = vsub.f32 %v107, %v350
    %v367 = vsub.f32 %v110, %v351
    %v384 = vlaneseq
    %v385 = vand.u32 %v384, 127
    %v386 = vperm.slane %v129, %v385
    %v387 = vadd.s32 %v385, 4294967288
    %v388 = vperm.slane %v132, %v387
    %vm389 = vcmask 130112
    %v390 = vsel %vm389, %v388, %v386
    %v391 = vadd.s32 %v385, 4294967280
    %v392 = vperm.slane %v135, %v391
    %vm393 = vcmask 195712
    %v394 = vsel %vm393, %v392, %v390
    %v395 = vadd.s32 %v385, 4294967272
    %v396 = vperm.slane %v138, %v395
    %vm397 = vcmask 261312
    %v398 = vsel %vm397, %v396, %v394
    %v399 = vadd.s32 %v385, 4294967264
    %v400 = vperm.slane %v141, %v399
    %vm401 = vcmask 326912
    %v402 = vsel %vm401, %v400, %v398
    %v403 = vadd.s32 %v385, 4294967256
    %v404 = vperm.slane %v144, %v403
    %vm405 = vcmask 392512
    %v406 = vsel %vm405, %v404, %v402
    %v407 = vadd.s32 %v385, 4294967248
    %v408 = vperm.slane %v147, %v407
    %vm409 = vcmask 458112
    %v410 = vsel %vm409, %v408, %v406
    %v411 = vadd.s32 %v385, 4294967240
    %v412 = vperm.slane %v150, %v411
    %vm413 = vcmask 523712
    %v414 = vsel %vm413, %v412, %v410
    %v415 = vadd.s32 %v385, 4294967232
    %v416 = vperm.slane %v153, %v415
    %vm417 = vcmask 589312
    %v418 = vsel %vm417, %v416, %v414
    %v419 = vadd.s32 %v385, 4294967224
    %v420 = vperm.slane %v156, %v419
    %vm421 = vcmask 654912
    %v422 = vsel %vm421, %v420, %v418
    %v423 = vadd.s32 %v385, 4294967216
    %v424 = vperm.slane %v159, %v423
    %vm425 = vcmask 720512
    %v426 = vsel %vm425, %v424, %v422
    %v427 = vadd.s32 %v385, 4294967208
    %v428 = vperm.slane %v162, %v427
    %vm429 = vcmask 786112
    %v430 = vsel %vm429, %v428, %v426
    %v431 = vadd.s32 %v385, 4294967200
    %v432 = vperm.slane %v165, %v431
    %vm433 = vcmask 851712
    %v434 = vsel %vm433, %v432, %v430
    %v435 = vadd.s32 %v385, 4294967192
    %v436 = vperm.slane %v168, %v435
    %vm437 = vcmask 917312
    %v438 = vsel %vm437, %v436, %v434
    %v439 = vadd.s32 %v385, 4294967184
    %v440 = vperm.slane %v171, %v439
    %vm441 = vcmask 982912
    %v442 = vsel %vm441, %v440, %v438
    %v443 = vadd.s32 %v385, 4294967176
    %v444 = vperm.slane %v174, %v443
    %vm445 = vcmask 1048512
    %v446 = vsel %vm445, %v444, %v442
    %vm447 = vcmask 1042434
    %v448 = vsel %vm447, %v446, %v446
    %vm449 = vcmask 1043459
    %v450 = vsel %vm449, %v446, %v448
    %vm451 = vcmask 1044484
    %v452 = vsel %vm451, %v446, %v450
    %vm453 = vcmask 1045509
    %v454 = vsel %vm453, %v446, %v452
    %vm455 = vcmask 1046534
    %v456 = vsel %vm455, %v446, %v454
    %vm457 = vcmask 1047559
    %v458 = vsel %vm457, %v446, %v456
    %v460 = vadd.f32 %v352, %v458
    %v461 = vadd.f32 %v353, %v458
    %v462 = vadd.f32 %v354, %v458
    %v463 = vadd.f32 %v355, %v458
    %v464 = vadd.f32 %v356, %v458
    %v465 = vadd.f32 %v357, %v458
    %v466 = vadd.f32 %v358, %v458
    %v467 = vadd.f32 %v359, %v458
    %v468 = vadd.f32 %v360, %v458
    %v469 = vadd.f32 %v361, %v458
    %v470 = vadd.f32 %v362, %v458
    %v471 = vadd.f32 %v363, %v458
    %v472 = vadd.f32 %v364, %v458
    %v473 = vadd.f32 %v365, %v458
    %v474 = vadd.f32 %v366, %v458
    %v475 = vadd.f32 %v367, %v458
    %vm476 = vcmp.lt.s32.totalorder %v385, 64
    %v477 = vsel %vm476, %v460, inf
    %v478 = vsel %vm476, %v461, inf
    %v479 = vsel %vm476, %v462, inf
    %v480 = vsel %vm476, %v463, inf
    %v481 = vsel %vm476, %v464, inf
    %v482 = vsel %vm476, %v465, inf
    %v483 = vsel %vm476, %v466, inf
    %v484 = vsel %vm476, %v467, inf
    %v485 = vsel %vm476, %v468, inf
    %v486 = vsel %vm476, %v469, inf
    %v487 = vsel %vm476, %v470, inf
    %v488 = vsel %vm476, %v471, inf
    %v489 = vsel %vm476, %v472, inf
    %v490 = vsel %vm476, %v473, inf
    %v491 = vsel %vm476, %v474, inf
    %v492 = vsel %vm476, %v475, inf
    %493 = vmin.xlane.f32.xlu0 %v477
    %v494 = vpop.xlane.xlu0 %493
    %495 = vmin.xlane.f32.xlu0 %v478
    %v496 = vpop.xlane.xlu0 %495
    %497 = vmin.xlane.f32.xlu0 %v479
    %v498 = vpop.xlane.xlu0 %497
    %499 = vmin.xlane.f32.xlu0 %v480
    %v500 = vpop.xlane.xlu0 %499
    %501 = vmin.xlane.f32.xlu0 %v481
    %v502 = vpop.xlane.xlu0 %501
    %503 = vmin.xlane.f32.xlu0 %v482
    %v504 = vpop.xlane.xlu0 %503
    %505 = vmin.xlane.f32.xlu0 %v483
    %v506 = vpop.xlane.xlu0 %505
    %507 = vmin.xlane.f32.xlu0 %v484
    %v508 = vpop.xlane.xlu0 %507
    %509 = vmin.xlane.f32.xlu0 %v485
    %v510 = vpop.xlane.xlu0 %509
    %511 = vmin.xlane.f32.xlu0 %v486
    %v512 = vpop.xlane.xlu0 %511
    %513 = vmin.xlane.f32.xlu0 %v487
    %v514 = vpop.xlane.xlu0 %513
    %515 = vmin.xlane.f32.xlu0 %v488
    %v516 = vpop.xlane.xlu0 %515
    %517 = vmin.xlane.f32.xlu0 %v489
    %v518 = vpop.xlane.xlu0 %517
    %519 = vmin.xlane.f32.xlu0 %v490
    %v520 = vpop.xlane.xlu0 %519
    %521 = vmin.xlane.f32.xlu0 %v491
    %v522 = vpop.xlane.xlu0 %521
    %523 = vmin.xlane.f32.xlu0 %v492
    %v524 = vpop.xlane.xlu0 %523
    %vm525 = vcmp.eq.f32.partialorder %v477, %v494
    %vm526 = vcmp.eq.f32.partialorder %v478, %v496
    %vm527 = vcmp.eq.f32.partialorder %v479, %v498
    %vm528 = vcmp.eq.f32.partialorder %v480, %v500
    %vm529 = vcmp.eq.f32.partialorder %v481, %v502
    %vm530 = vcmp.eq.f32.partialorder %v482, %v504
    %vm531 = vcmp.eq.f32.partialorder %v483, %v506
    %vm532 = vcmp.eq.f32.partialorder %v484, %v508
    %vm533 = vcmp.eq.f32.partialorder %v485, %v510
    %vm534 = vcmp.eq.f32.partialorder %v486, %v512
    %vm535 = vcmp.eq.f32.partialorder %v487, %v514
    %vm536 = vcmp.eq.f32.partialorder %v488, %v516
    %vm537 = vcmp.eq.f32.partialorder %v489, %v518
    %vm538 = vcmp.eq.f32.partialorder %v490, %v520
    %vm539 = vcmp.eq.f32.partialorder %v491, %v522
    %vm540 = vcmp.eq.f32.partialorder %v492, %v524
    %v541 = vsel %vm525, %v385, 128
    %v542 = vsel %vm526, %v385, 128
    %v543 = vsel %vm527, %v385, 128
    %v544 = vsel %vm528, %v385, 128
    %v545 = vsel %vm529, %v385, 128
    %v546 = vsel %vm530, %v385, 128
    %v547 = vsel %vm531, %v385, 128
    %v548 = vsel %vm532, %v385, 128
    %v549 = vsel %vm533, %v385, 128
    %v550 = vsel %vm534, %v385, 128
    %v551 = vsel %vm535, %v385, 128
    %v552 = vsel %vm536, %v385, 128
    %v553 = vsel %vm537, %v385, 128
    %v554 = vsel %vm538, %v385, 128
    %v555 = vsel %vm539, %v385, 128
    %v556 = vsel %vm540, %v385, 128
    %v557 = vand.u32 %v541, 65535
    %v558 = vshra.s32 %v541, 16
    %v559 = vcvt.s32.f32 %v557
    %v560 = vcvt.s32.f32 %v558
    %561 = vmin.xlane.f32.xlu0 %v560
    %v562 = vpop.xlane.xlu0 %561
    %vm563 = vcmp.eq.f32.partialorder %v560, %v562
    %v564 = vsel %vm563, %v559, inf
    %565 = vmin.xlane.f32.xlu0 %v564
    %v566 = vpop.xlane.xlu0 %565
    %v567 = vcvt.f32.s32 %v566
    %v568 = vcvt.f32.s32 %v562
    %v569 = vshll.u32 %v568, 16
    %v570 = vadd.s32 %v569, %v567
    %v571 = vand.u32 %v542, 65535
    %v572 = vshra.s32 %v542, 16
    %v573 = vcvt.s32.f32 %v571
    %v574 = vcvt.s32.f32 %v572
    %575 = vmin.xlane.f32.xlu0 %v574
    %v576 = vpop.xlane.xlu0 %575
    %vm577 = vcmp.eq.f32.partialorder %v574, %v576
    %v578 = vsel %vm577, %v573, inf
    %579 = vmin.xlane.f32.xlu0 %v578
    %v580 = vpop.xlane.xlu0 %579
    %v581 = vcvt.f32.s32 %v580
    %v582 = vcvt.f32.s32 %v576
    %v583 = vshll.u32 %v582, 16
    %v584 = vadd.s32 %v583, %v581
    %v585 = vand.u32 %v543, 65535
    %v586 = vshra.s32 %v543, 16
    %v587 = vcvt.s32.f32 %v585
    %v588 = vcvt.s32.f32 %v586
    %589 = vmin.xlane.f32.xlu0 %v588
    %v590 = vpop.xlane.xlu0 %589
    %vm591 = vcmp.eq.f32.partialorder %v588, %v590
    %v592 = vsel %vm591, %v587, inf
    %593 = vmin.xlane.f32.xlu0 %v592
    %v594 = vpop.xlane.xlu0 %593
    %v595 = vcvt.f32.s32 %v594
    %v596 = vcvt.f32.s32 %v590
    %v597 = vshll.u32 %v596, 16
    %v598 = vadd.s32 %v597, %v595
    %v599 = vand.u32 %v544, 65535
    %v600 = vshra.s32 %v544, 16
    %v601 = vcvt.s32.f32 %v599
    %v602 = vcvt.s32.f32 %v600
    %603 = vmin.xlane.f32.xlu0 %v602
    %v604 = vpop.xlane.xlu0 %603
    %vm605 = vcmp.eq.f32.partialorder %v602, %v604
    %v606 = vsel %vm605, %v601, inf
    %607 = vmin.xlane.f32.xlu0 %v606
    %v608 = vpop.xlane.xlu0 %607
    %v609 = vcvt.f32.s32 %v608
    %v610 = vcvt.f32.s32 %v604
    %v611 = vshll.u32 %v610, 16
    %v612 = vadd.s32 %v611, %v609
    %v613 = vand.u32 %v545, 65535
    %v614 = vshra.s32 %v545, 16
    %v615 = vcvt.s32.f32 %v613
    %v616 = vcvt.s32.f32 %v614
    %617 = vmin.xlane.f32.xlu0 %v616
    %v618 = vpop.xlane.xlu0 %617
    %vm619 = vcmp.eq.f32.partialorder %v616, %v618
    %v620 = vsel %vm619, %v615, inf
    %621 = vmin.xlane.f32.xlu0 %v620
    %v622 = vpop.xlane.xlu0 %621
    %v623 = vcvt.f32.s32 %v622
    %v624 = vcvt.f32.s32 %v618
    %v625 = vshll.u32 %v624, 16
    %v626 = vadd.s32 %v625, %v623
    %v627 = vand.u32 %v546, 65535
    %v628 = vshra.s32 %v546, 16
    %v629 = vcvt.s32.f32 %v627
    %v630 = vcvt.s32.f32 %v628
    %631 = vmin.xlane.f32.xlu0 %v630
    %v632 = vpop.xlane.xlu0 %631
    %vm633 = vcmp.eq.f32.partialorder %v630, %v632
    %v634 = vsel %vm633, %v629, inf
    %635 = vmin.xlane.f32.xlu0 %v634
    %v636 = vpop.xlane.xlu0 %635
    %v637 = vcvt.f32.s32 %v636
    %v638 = vcvt.f32.s32 %v632
    %v639 = vshll.u32 %v638, 16
    %v640 = vadd.s32 %v639, %v637
    %v641 = vand.u32 %v547, 65535
    %v642 = vshra.s32 %v547, 16
    %v643 = vcvt.s32.f32 %v641
    %v644 = vcvt.s32.f32 %v642
    %645 = vmin.xlane.f32.xlu0 %v644
    %v646 = vpop.xlane.xlu0 %645
    %vm647 = vcmp.eq.f32.partialorder %v644, %v646
    %v648 = vsel %vm647, %v643, inf
    %649 = vmin.xlane.f32.xlu0 %v648
    %v650 = vpop.xlane.xlu0 %649
    %v651 = vcvt.f32.s32 %v650
    %v652 = vcvt.f32.s32 %v646
    %v653 = vshll.u32 %v652, 16
    %v654 = vadd.s32 %v653, %v651
    %v655 = vand.u32 %v548, 65535
    %v656 = vshra.s32 %v548, 16
    %v657 = vcvt.s32.f32 %v655
    %v658 = vcvt.s32.f32 %v656
    %659 = vmin.xlane.f32.xlu0 %v658
    %v660 = vpop.xlane.xlu0 %659
    %vm661 = vcmp.eq.f32.partialorder %v658, %v660
    %v662 = vsel %vm661, %v657, inf
    %663 = vmin.xlane.f32.xlu0 %v662
    %v664 = vpop.xlane.xlu0 %663
    %v665 = vcvt.f32.s32 %v664
    %v666 = vcvt.f32.s32 %v660
    %v667 = vshll.u32 %v666, 16
    %v668 = vadd.s32 %v667, %v665
    %v669 = vand.u32 %v549, 65535
    %v670 = vshra.s32 %v549, 16
    %v671 = vcvt.s32.f32 %v669
    %v672 = vcvt.s32.f32 %v670
    %673 = vmin.xlane.f32.xlu0 %v672
    %v674 = vpop.xlane.xlu0 %673
    %vm675 = vcmp.eq.f32.partialorder %v672, %v674
    %v676 = vsel %vm675, %v671, inf
    %677 = vmin.xlane.f32.xlu0 %v676
    %v678 = vpop.xlane.xlu0 %677
    %v679 = vcvt.f32.s32 %v678
    %v680 = vcvt.f32.s32 %v674
    %v681 = vshll.u32 %v680, 16
    %v682 = vadd.s32 %v681, %v679
    %v683 = vand.u32 %v550, 65535
    %v684 = vshra.s32 %v550, 16
    %v685 = vcvt.s32.f32 %v683
    %v686 = vcvt.s32.f32 %v684
    %687 = vmin.xlane.f32.xlu0 %v686
    %v688 = vpop.xlane.xlu0 %687
    %vm689 = vcmp.eq.f32.partialorder %v686, %v688
    %v690 = vsel %vm689, %v685, inf
    %691 = vmin.xlane.f32.xlu0 %v690
    %v692 = vpop.xlane.xlu0 %691
    %v693 = vcvt.f32.s32 %v692
    %v694 = vcvt.f32.s32 %v688
    %v695 = vshll.u32 %v694, 16
    %v696 = vadd.s32 %v695, %v693
    %v697 = vand.u32 %v551, 65535
    %v698 = vshra.s32 %v551, 16
    %v699 = vcvt.s32.f32 %v697
    %v700 = vcvt.s32.f32 %v698
    %701 = vmin.xlane.f32.xlu0 %v700
    %v702 = vpop.xlane.xlu0 %701
    %vm703 = vcmp.eq.f32.partialorder %v700, %v702
    %v704 = vsel %vm703, %v699, inf
    %705 = vmin.xlane.f32.xlu0 %v704
    %v706 = vpop.xlane.xlu0 %705
    %v707 = vcvt.f32.s32 %v706
    %v708 = vcvt.f32.s32 %v702
    %v709 = vshll.u32 %v708, 16
    %v710 = vadd.s32 %v709, %v707
    %v711 = vand.u32 %v552, 65535
    %v712 = vshra.s32 %v552, 16
    %v713 = vcvt.s32.f32 %v711
    %v714 = vcvt.s32.f32 %v712
    %715 = vmin.xlane.f32.xlu0 %v714
    %v716 = vpop.xlane.xlu0 %715
    %vm717 = vcmp.eq.f32.partialorder %v714, %v716
    %v718 = vsel %vm717, %v713, inf
    %719 = vmin.xlane.f32.xlu0 %v718
    %v720 = vpop.xlane.xlu0 %719
    %v721 = vcvt.f32.s32 %v720
    %v722 = vcvt.f32.s32 %v716
    %v723 = vshll.u32 %v722, 16
    %v724 = vadd.s32 %v723, %v721
    %v725 = vand.u32 %v553, 65535
    %v726 = vshra.s32 %v553, 16
    %v727 = vcvt.s32.f32 %v725
    %v728 = vcvt.s32.f32 %v726
    %729 = vmin.xlane.f32.xlu0 %v728
    %v730 = vpop.xlane.xlu0 %729
    %vm731 = vcmp.eq.f32.partialorder %v728, %v730
    %v732 = vsel %vm731, %v727, inf
    %733 = vmin.xlane.f32.xlu0 %v732
    %v734 = vpop.xlane.xlu0 %733
    %v735 = vcvt.f32.s32 %v734
    %v736 = vcvt.f32.s32 %v730
    %v737 = vshll.u32 %v736, 16
    %v738 = vadd.s32 %v737, %v735
    %v739 = vand.u32 %v554, 65535
    %v740 = vshra.s32 %v554, 16
    %v741 = vcvt.s32.f32 %v739
    %v742 = vcvt.s32.f32 %v740
    %743 = vmin.xlane.f32.xlu0 %v742
    %v744 = vpop.xlane.xlu0 %743
    %vm745 = vcmp.eq.f32.partialorder %v742, %v744
    %v746 = vsel %vm745, %v741, inf
    %747 = vmin.xlane.f32.xlu0 %v746
    %v748 = vpop.xlane.xlu0 %747
    %v749 = vcvt.f32.s32 %v748
    %v750 = vcvt.f32.s32 %v744
    %v751 = vshll.u32 %v750, 16
    %v752 = vadd.s32 %v751, %v749
    %v753 = vand.u32 %v555, 65535
    %v754 = vshra.s32 %v555, 16
    %v755 = vcvt.s32.f32 %v753
    %v756 = vcvt.s32.f32 %v754
    %757 = vmin.xlane.f32.xlu0 %v756
    %v758 = vpop.xlane.xlu0 %757
    %vm759 = vcmp.eq.f32.partialorder %v756, %v758
    %v760 = vsel %vm759, %v755, inf
    %761 = vmin.xlane.f32.xlu0 %v760
    %v762 = vpop.xlane.xlu0 %761
    %v763 = vcvt.f32.s32 %v762
    %v764 = vcvt.f32.s32 %v758
    %v765 = vshll.u32 %v764, 16
    %v766 = vadd.s32 %v765, %v763
    %v767 = vand.u32 %v556, 65535
    %v768 = vshra.s32 %v556, 16
    %v769 = vcvt.s32.f32 %v767
    %v770 = vcvt.s32.f32 %v768
    %771 = vmin.xlane.f32.xlu0 %v770
    %v772 = vpop.xlane.xlu0 %771
    %vm773 = vcmp.eq.f32.partialorder %v770, %v772
    %v774 = vsel %vm773, %v769, inf
    %775 = vmin.xlane.f32.xlu0 %v774
    %v776 = vpop.xlane.xlu0 %775
    %v777 = vcvt.f32.s32 %v776
    %v778 = vcvt.f32.s32 %v772
    %v779 = vshll.u32 %v778, 16
    %v780 = vadd.s32 %v779, %v777
    %vm781 = vcmp.eq.s32.totalorder %v385, %v570
    %vm782 = vcmp.eq.s32.totalorder %v385, %v584
    %vm783 = vcmp.eq.s32.totalorder %v385, %v598
    %vm784 = vcmp.eq.s32.totalorder %v385, %v612
    %vm785 = vcmp.eq.s32.totalorder %v385, %v626
    %vm786 = vcmp.eq.s32.totalorder %v385, %v640
    %vm787 = vcmp.eq.s32.totalorder %v385, %v654
    %vm788 = vcmp.eq.s32.totalorder %v385, %v668
    %vm789 = vcmp.eq.s32.totalorder %v385, %v682
    %vm790 = vcmp.eq.s32.totalorder %v385, %v696
    %vm791 = vcmp.eq.s32.totalorder %v385, %v710
    %vm792 = vcmp.eq.s32.totalorder %v385, %v724
    %vm793 = vcmp.eq.s32.totalorder %v385, %v738
    %vm794 = vcmp.eq.s32.totalorder %v385, %v752
    %vm795 = vcmp.eq.s32.totalorder %v385, %v766
    %vm796 = vcmp.eq.s32.totalorder %v385, %v780
    %v797 = vsel %vm781, 1, 0
    %v798 = vsel %vm782, 1, 0
    %v799 = vsel %vm783, 1, 0
    %v800 = vsel %vm784, 1, 0
    %v801 = vsel %vm785, 1, 0
    %v802 = vsel %vm786, 1, 0
    %v803 = vsel %vm787, 1, 0
    %v804 = vsel %vm788, 1, 0
    %v805 = vsel %vm789, 1, 0
    %v806 = vsel %vm790, 1, 0
    %v807 = vsel %vm791, 1, 0
    %v808 = vsel %vm792, 1, 0
    %v809 = vsel %vm793, 1, 0
    %v810 = vsel %vm794, 1, 0
    %v811 = vsel %vm795, 1, 0
    %v812 = vsel %vm796, 1, 0
    %v813 = vcvt.s32.f32 %v797
    %v814 = vcvt.s32.f32 %v798
    %v815 = vcvt.s32.f32 %v799
    %v816 = vcvt.s32.f32 %v800
    %v817 = vcvt.s32.f32 %v801
    %v818 = vcvt.s32.f32 %v802
    %v819 = vcvt.s32.f32 %v803
    %v820 = vcvt.s32.f32 %v804
    %v821 = vcvt.s32.f32 %v805
    %v822 = vcvt.s32.f32 %v806
    %v823 = vcvt.s32.f32 %v807
    %v824 = vcvt.s32.f32 %v808
    %v825 = vcvt.s32.f32 %v809
    %v826 = vcvt.s32.f32 %v810
    %v827 = vcvt.s32.f32 %v811
    %v828 = vcvt.s32.f32 %v812
    %829 = vmatpush.msra.mxu0 %v45
    %830 = vmatpush.msra.mxu0 %v44
    %831 = vmatpush.msra.mxu0 %v43
    %832 = vmatpush.msra.mxu0 %v42
    %833 = vmatpush.msra.mxu0 %v41
    %834 = vmatpush.msra.mxu0 %v40
    %835 = vmatpush.msra.mxu0 %v39
    %836 = vmatpush.msra.mxu0 %v38
    %837 = vmatpush.msra.mxu0 %v37
    %838 = vmatpush.msra.mxu0 %v36
    %839 = vmatpush.msra.mxu0 %v35
    %840 = vmatpush.msra.mxu0 %v34
    %841 = vmatpush.msra.mxu0 %v33
    %842 = vmatpush.msra.mxu0 %v32
    %843 = vmatpush.msra.mxu0 %v31
    %844 = vmatpush.msra.mxu0 %v30
    %845 = vmatmul.f32.gmra.mxu0 %v813
    %v846 = vpop.f32.mrf.mxu0
    %v847 = vadd.f32 0.0, %v846
    %848 = vmatmul.f32.gmra.mxu0 %v814
    %v849 = vpop.f32.mrf.mxu0
    %v850 = vadd.f32 0.0, %v849
    %851 = vmatmul.f32.gmra.mxu0 %v815
    %v852 = vpop.f32.mrf.mxu0
    %v853 = vadd.f32 0.0, %v852
    %854 = vmatmul.f32.gmra.mxu0 %v816
    %v855 = vpop.f32.mrf.mxu0
    %v856 = vadd.f32 0.0, %v855
    %857 = vmatmul.f32.gmra.mxu0 %v817
    %v858 = vpop.f32.mrf.mxu0
    %v859 = vadd.f32 0.0, %v858
    %860 = vmatmul.f32.gmra.mxu0 %v818
    %v861 = vpop.f32.mrf.mxu0
    %v862 = vadd.f32 0.0, %v861
    %863 = vmatmul.f32.gmra.mxu0 %v819
    %v864 = vpop.f32.mrf.mxu0
    %v865 = vadd.f32 0.0, %v864
    %866 = vmatmul.f32.gmra.mxu0 %v820
    %v867 = vpop.f32.mrf.mxu0
    %v868 = vadd.f32 0.0, %v867
    %869 = vmatmul.f32.gmra.mxu0 %v821
    %v870 = vpop.f32.mrf.mxu0
    %v871 = vadd.f32 0.0, %v870
    %872 = vmatmul.f32.gmra.mxu0 %v822
    %v873 = vpop.f32.mrf.mxu0
    %v874 = vadd.f32 0.0, %v873
    %875 = vmatmul.f32.gmra.mxu0 %v823
    %v876 = vpop.f32.mrf.mxu0
    %v877 = vadd.f32 0.0, %v876
    %878 = vmatmul.f32.gmra.mxu0 %v824
    %v879 = vpop.f32.mrf.mxu0
    %v880 = vadd.f32 0.0, %v879
    %881 = vmatmul.f32.gmra.mxu0 %v825
    %v882 = vpop.f32.mrf.mxu0
    %v883 = vadd.f32 0.0, %v882
    %884 = vmatmul.f32.gmra.mxu0 %v826
    %v885 = vpop.f32.mrf.mxu0
    %v886 = vadd.f32 0.0, %v885
    %887 = vmatmul.f32.gmra.mxu0 %v827
    %v888 = vpop.f32.mrf.mxu0
    %v889 = vadd.f32 0.0, %v888
    %890 = vmatmul.f32.gmra.mxu0 %v828
    %v891 = vpop.f32.mrf.mxu0
    %v892 = vadd.f32 0.0, %v891
    %893 = vdwg.mxu0
    %894 = vst.msk [vmem:[%s2] sm:$0xff] %vm62, %v847
    %895 = vst.msk [vmem:[%s2 + $0x8] sm:$0xff] %vm62, %v850
    %896 = vst.msk [vmem:[%s2 + $0x10] sm:$0xff] %vm62, %v853
    %897 = vst.msk [vmem:[%s2 + $0x18] sm:$0xff] %vm62, %v856
    %898 = vst.msk [vmem:[%s2 + $0x20] sm:$0xff] %vm62, %v859
    %899 = vst.msk [vmem:[%s2 + $0x28] sm:$0xff] %vm62, %v862
    %900 = vst.msk [vmem:[%s2 + $0x30] sm:$0xff] %vm62, %v865
    %901 = vst.msk [vmem:[%s2 + $0x38] sm:$0xff] %vm62, %v868
    %902 = vst.msk [vmem:[%s2 + $0x40] sm:$0xff] %vm62, %v871
    %903 = vst.msk [vmem:[%s2 + $0x48] sm:$0xff] %vm62, %v874
    %904 = vst.msk [vmem:[%s2 + $0x50] sm:$0xff] %vm62, %v877
    %905 = vst.msk [vmem:[%s2 + $0x58] sm:$0xff] %vm62, %v880
    %906 = vst.msk [vmem:[%s2 + $0x60] sm:$0xff] %vm62, %v883
    %907 = vst.msk [vmem:[%s2 + $0x68] sm:$0xff] %vm62, %v886
    %908 = vst.msk [vmem:[%s2 + $0x70] sm:$0xff] %vm62, %v889
    %909 = vst.msk [vmem:[%s2 + $0x78] sm:$0xff] %vm62, %v892
    %v910 = vsub.f32 %v14, %v847
    %v911 = vsub.f32 %v15, %v850
    %v912 = vsub.f32 %v16, %v853
    %v913 = vsub.f32 %v17, %v856
    %v914 = vsub.f32 %v18, %v859
    %v915 = vsub.f32 %v19, %v862
    %v916 = vsub.f32 %v20, %v865
    %v917 = vsub.f32 %v21, %v868
    %v918 = vsub.f32 %v22, %v871
    %v919 = vsub.f32 %v23, %v874
    %v920 = vsub.f32 %v24, %v877
    %v921 = vsub.f32 %v25, %v880
    %v922 = vsub.f32 %v26, %v883
    %v923 = vsub.f32 %v27, %v886
    %v924 = vsub.f32 %v28, %v889
    %v925 = vsub.f32 %v29, %v892
    %v926 = vmul.f32 %v910, %v910
    %v927 = vmul.f32 %v911, %v911
    %v928 = vmul.f32 %v912, %v912
    %v929 = vmul.f32 %v913, %v913
    %v930 = vmul.f32 %v914, %v914
    %v931 = vmul.f32 %v915, %v915
    %v932 = vmul.f32 %v916, %v916
    %v933 = vmul.f32 %v917, %v917
    %v934 = vmul.f32 %v918, %v918
    %v935 = vmul.f32 %v919, %v919
    %v936 = vmul.f32 %v920, %v920
    %v937 = vmul.f32 %v921, %v921
    %v938 = vmul.f32 %v922, %v922
    %v939 = vmul.f32 %v923, %v923
    %v940 = vmul.f32 %v924, %v924
    %v941 = vmul.f32 %v925, %v925
    %v942 = vsel %vm62, %v926, 0.0
    %v943 = vsel %vm62, %v927, 0.0
    %v944 = vadd.f32 %v942, %v943
    %v945 = vsel %vm62, %v928, 0.0
    %v946 = vadd.f32 %v944, %v945
    %v947 = vsel %vm62, %v929, 0.0
    %v948 = vadd.f32 %v946, %v947
    %v949 = vsel %vm62, %v930, 0.0
    %v950 = vadd.f32 %v948, %v949
    %v951 = vsel %vm62, %v931, 0.0
    %v952 = vadd.f32 %v950, %v951
    %v953 = vsel %vm62, %v932, 0.0
    %v954 = vadd.f32 %v952, %v953
    %v955 = vsel %vm62, %v933, 0.0
    %v956 = vadd.f32 %v954, %v955
    %v957 = vsel %vm62, %v934, 0.0
    %v958 = vadd.f32 %v956, %v957
    %v959 = vsel %vm62, %v935, 0.0
    %v960 = vadd.f32 %v958, %v959
    %v961 = vsel %vm62, %v936, 0.0
    %v962 = vadd.f32 %v960, %v961
    %v963 = vsel %vm62, %v937, 0.0
    %v964 = vadd.f32 %v962, %v963
    %v965 = vsel %vm62, %v938, 0.0
    %v966 = vadd.f32 %v964, %v965
    %v967 = vsel %vm62, %v939, 0.0
    %v968 = vadd.f32 %v966, %v967
    %v969 = vsel %vm62, %v940, 0.0
    %v970 = vadd.f32 %v968, %v969
    %v971 = vsel %vm62, %v941, 0.0
    %v972 = vadd.f32 %v970, %v971
    %973 = vadd.xlane.f32.xlu0 %v972
    %v974 = vpop.xlane.xlu0 %973
    %v975 = vrot.slane %v974, 4
    %v976 = vadd.f32 %v974, %v975
    %v977 = vrot.slane %v976, 2
    %v978 = vadd.f32 %v976, %v977
    %v979 = vrot.slane %v978, 1
    %v980 = vadd.f32 %v978, %v979
    %s981 = vtos %v980
    %s982 = scalar_lea.smem [#allocation2], 0
    %983 = sst [smem:[%s982]] %s981
    // Predicated region
    $region10: #{vqvae_forward.14} parent=1 // pred_check
      _
    $region11: #{vqvae_forward.14} parent=1 // pred_check_branch
      %985 = sbr.rel (0) target = $region13
    $region12: #{vqvae_forward.14} parent=1 // pred_region
      _
    $region13: #{vqvae_forward.14} parent=1 // pred_fallthru
      _
    // Predicated region
    $region14: #{vqvae_forward.14} parent=1 // pred_check
      _
    $region15: #{vqvae_forward.14} parent=1 // pred_check_branch
      %987 = sbr.rel (0) target = $region17
    $region16: #{vqvae_forward.14} parent=1 // pred_region
      %989 = vsyncadd [#allocation3], 0
      %s991 = sshll.u32 %s3, 4
      %s992 = int_to_ptr.hbm [resolvable:$true] %s991
      %994 = dma.smem_to_hbm [#allocation2], 16, %s992, [#allocation3]
    $region17: #{vqvae_forward.14} parent=1 // pred_fallthru
      _
    // Predicated region
    $region18: #{vqvae_forward.14} parent=1 // pred_check
      _
    $region19: #{vqvae_forward.14} parent=1 // pred_check_branch
      %996 = sbr.rel (0) target = $region21
    $region20: #{vqvae_forward.14} parent=1 // pred_region
      _
    $region21: #{vqvae_forward.14} parent=1 // pred_fallthru
      _
    // Predicated region
    $region22: #{vqvae_forward.14} parent=1 // pred_check
      _
    $region23: #{vqvae_forward.14} parent=1 // pred_check_branch
      %998 = sbr.rel (0) target = $region25
    $region24: #{vqvae_forward.14} parent=1 // pred_region
      %1000 = dma.done [#allocation3], 16
    $region25: #{vqvae_forward.14} parent=1 // pred_fallthru
      _
    %1001 = sfence
    %1002 = vsyncpa [#allocation3], 1

// kernel: vqvae_forward.18
$region0: #{vqvae_forward.18}
  #allocation0 [shape = 'u32[]', space=smem, size = 0x4, offset = 0x4, fixed_abs, tag = 'smem constant byte address 0x4 - core index']
  #allocation1 [shape = 'u32[72,128]{1,0:T(1,128)}', space=vmem, size = 0x9000, scoped, tag = 'internal scratch']
  %s0 = inlined_call_operand.vmem [shape: f32[2,102,32], index: 0, kind: input, shape index: {}]
  %s1 = inlined_call_operand.vmem [shape: bf16[9,32,32], index: 1, kind: input, shape index: {}]
  %s2 = inlined_call_operand.vmem [shape: f32[1,32], index: 2, kind: input, shape index: {}]
  %s3 = inlined_call_operand.vmem [shape: f32[2,8,8,32], index: 3, kind: output, shape index: {}]
  %s4 = sld [smem:[#allocation0]]
  $region45: #{vqvae_forward.18} parent=0
    _
  %s6 = ssub.s32 1, %s4
  %s7 = scalar_select 0, %s6, %s4
  loop: start=0, step=1, limit=4
  $region2: #{vqvae_forward.18} parent=0 // loop_pre_header
    _
  $region3: #{vqvae_forward.18} parent=0 // loop_header
    %s9 = sphi 0, %s13
    %p10 = scmp.ge.s32.totalorder %s9, 4
    %s19 = sphi 0, %s21
    %s22 = sphi 0, %s19
    %s23 = sphi 0, %s22
    %s39 = sphi 0, %s23
    %s43 = sphi 0, %s43
    %s45 = sphi 0, %s43
    %s46 = sphi 0, %s45
    %s60 = sphi 0, %s46
    %s64 = sphi 0, %s64
    %s66 = sphi 0, %s64
    %s67 = sphi 0, %s66
    %s81 = sphi 0, %s67
    %s87 = sphi 0, %s89
    %s90 = sphi 0, %s87
    %s91 = sphi 0, %s90
    %s107 = sphi 0, %s91
  $region4: #{vqvae_forward.18} parent=0 // loop_header_branch
    %12 = sbr.rel (%p10) target = $region8
  $region5: #{vqvae_forward.18} parent=0 // loop_body
    %s14 = ssub.s32 %s9, 1
    %s15 = ssub.s32 %s9, 2
    %s16 = sadd.s32 %s9, 1
    %s17 = ssub.s32 %s9, %s16
    %p18 = scmp.eq.s32.totalorder %s17, 0
    %s20 = sadd.s32 %s19, 1
    %s21 = scalar_select %p18, %s19, %s20
    %p24 = pneg %p18
    %p25 = scmp.eq.s32.totalorder %s9, 1
    %p26 = por %p24, %p25
    %p27 = scmp.ne.s32.totalorder %s19, %s22
    %p28 = scmp.eq.s32.totalorder %s9, 0
    %p29 = por %p27, %p28
    %p30 = scmp.ne.s32.totalorder %s19, %s22
    %p31 = scmp.eq.s32.totalorder %s14, 1
    %p32 = por %p30, %p31
    %p33 = scmp.ne.s32.totalorder %s22, %s23
    %p34 = scmp.eq.s32.totalorder %s14, 0
    %p35 = por %p33, %p34
    %p36 = scmp.ne.s32.totalorder %s22, %s23
    %p37 = scmp.eq.s32.totalorder %s15, 1
    %p38 = por %p36, %p37
    %p40 = scmp.ne.s32.totalorder %s23, %s39
    %p41 = scmp.eq.s32.totalorder %s15, 0
    %p42 = por %p40, %p41
    %s44 = sadd.s32 %s43, 1
    %p47 = scmp.eq.s32.totalorder %s9, 1
    %p48 = scmp.ne.s32.totalorder %s43, %s45
    %p49 = scmp.eq.s32.totalorder %s9, 0
    %p50 = por %p48, %p49
    %p51 = scmp.ne.s32.totalorder %s43, %s45
    %p52 = scmp.eq.s32.totalorder %s14, 1
    %p53 = por %p51, %p52
    %p54 = scmp.ne.s32.totalorder %s45, %s46
    %p55 = scmp.eq.s32.totalorder %s14, 0
    %p56 = por %p54, %p55
    %p57 = scmp.ne.s32.totalorder %s45, %s46
    %p58 = scmp.eq.s32.totalorder %s15, 1
    %p59 = por %p57, %p58
    %p61 = scmp.ne.s32.totalorder %s46, %s60
    %p62 = scmp.eq.s32.totalorder %s15, 0
    %p63 = por %p61, %p62
    %s65 = sadd.s32 %s64, 1
    %p68 = scmp.eq.s32.totalorder %s9, 1
    %p69 = scmp.ne.s32.totalorder %s64, %s66
    %p70 = scmp.eq.s32.totalorder %s9, 0
    %p71 = por %p69, %p70
    %p72 = scmp.ne.s32.totalorder %s64, %s66
    %p73 = scmp.eq.s32.totalorder %s14, 1
    %p74 = por %p72, %p73
    %p75 = scmp.ne.s32.totalorder %s66, %s67
    %p76 = scmp.eq.s32.totalorder %s14, 0
    %p77 = por %p75, %p76
    %p78 = scmp.ne.s32.totalorder %s66, %s67
    %p79 = scmp.eq.s32.totalorder %s15, 1
    %p80 = por %p78, %p79
    %p82 = scmp.ne.s32.totalorder %s67, %s81
    %p83 = scmp.eq.s32.totalorder %s15, 0
    %p84 = por %p82, %p83
    %s85 = ssub.s32 %s9, %s16
    %p86 = scmp.eq.s32.totalorder %s85, 0
    %s88 = sadd.s32 %s87, 1
    %s89 = scalar_select %p86, %s87, %s88
    %p92 = pneg %p86
    %p93 = scmp.eq.s32.totalorder %s9, 1
    %p94 = por %p92, %p93
    %p95 = scmp.ne.s32.totalorder %s87, %s90
    %p96 = scmp.eq.s32.totalorder %s9, 0
    %p97 = por %p95, %p96
    %p98 = scmp.ne.s32.totalorder %s87, %s90
    %p99 = scmp.eq.s32.totalorder %s14, 1
    %p100 = por %p98, %p99
    %p101 = scmp.ne.s32.totalorder %s90, %s91
    %p102 = scmp.eq.s32.totalorder %s14, 0
    %p103 = por %p101, %p102
    %p104 = scmp.ne.s32.totalorder %s90, %s91
    %p105 = scmp.eq.s32.totalorder %s15, 1
    %p106 = por %p104, %p105
    %p108 = scmp.ne.s32.totalorder %s91, %s107
    %p109 = scmp.eq.s32.totalorder %s15, 0
    %p110 = por %p108, %p109
    %p111 = scmp.le.s32.totalorder 1, %s9
    %p112 = scmp.lt.s32.totalorder %s9, 3
    %p113 = pnand %p111, %p112
    %p114 = pneg %p113
    // Predicated region
    $region9: #{vqvae_forward.18} parent=5 // pred_check
      _
    $region10: #{vqvae_forward.18} parent=5 // pred_check_branch
      %116 = sbr.rel (%p113) target = $region12
    $region11: #{vqvae_forward.18} parent=5 // pred_region
      %s117 = ssub.s32 %s9, 1
      // Predicated region
      $region13: #{vqvae_forward.18} parent=11 // pred_check
        %p118 = pneg %p56
      $region14: #{vqvae_forward.18} parent=11 // pred_check_branch
        %120 = sbr.rel (%p118) target = $region16
      $region15: #{vqvae_forward.18} parent=11 // pred_region
        _
      $region16: #{vqvae_forward.18} parent=11 // pred_fallthru
        _
      // Predicated region
      $region17: #{vqvae_forward.18} parent=11 // pred_check
        %p121 = pneg %p77
      $region18: #{vqvae_forward.18} parent=11 // pred_check_branch
        %123 = sbr.rel (%p121) target = $region20
      $region19: #{vqvae_forward.18} parent=11 // pred_region
        _
      $region20: #{vqvae_forward.18} parent=11 // pred_fallthru
        _
    $region12: #{vqvae_forward.18} parent=5 // pred_fallthru
      _
    %p124 = scmp.lt.s32.totalorder %s9, 2
    // Predicated region
    $region21: #{vqvae_forward.18} parent=5 // pred_check
      %p125 = pneg %p124
    $region22: #{vqvae_forward.18} parent=5 // pred_check_branch
      %127 = sbr.rel (%p125) target = $region24
    $region23: #{vqvae_forward.18} parent=5 // pred_region
      // Predicated region
      $region25: #{vqvae_forward.18} parent=23 // pred_check
        %p128 = pneg %p29
      $region26: #{vqvae_forward.18} parent=23 // pred_check_branch
        %130 = sbr.rel (%p128) target = $region28
      $region27: #{vqvae_forward.18} parent=23 // pred_region
        %p131 = scmp.lt.s32.totalorder %s9, 1
        %s132 = scalar_select %p131, %s9, 1
        %s133 = smul.addr %s132, 13
        %s134 = smul.addr %s133, 8
        %s135 = scalar_lea.vmem %s0, %s134
      $region28: #{vqvae_forward.18} parent=23 // pred_fallthru
        _
    $region24: #{vqvae_forward.18} parent=5 // pred_fallthru
      _
    %p136 = scmp.le.s32.totalorder 1, %s9
    %p137 = scmp.lt.s32.totalorder %s9, 3
    %p138 = pnand %p136, %p137
    %p139 = pneg %p138
    // Predicated region
    $region29: #{vqvae_forward.18} parent=5 // pred_check
      _
    $region30: #{vqvae_forward.18} parent=5 // pred_check_branch
      %141 = sbr.rel (%p138) target = $region32
    $region31: #{vqvae_forward.18} parent=5 // pred_region
      %s142 = ssub.s32 %s9, 1
      %p143 = scmp.lt.s32.totalorder %s14, 1
      %s144 = scalar_select %p143, %s14, 1
      %s145 = smul.addr %s144, 13
      %s146 = smul.addr %s145, 8
      %s147 = scalar_lea.vmem %s0, %s146
      %p148 = pneg %p35
      %p149 = pneg %p32
      %p150 = pneg %p56
      %p151 = pneg %p53
      %p152 = pneg %p77
      %p153 = pneg %p74
      %p154 = pneg %p103
      %p155 = pneg %p100
      %p156 = scmp.lt.s32.totalorder %s14, 1
      %s157 = scalar_select %p156, %s14, 1
      %s158 = smul.addr %s157, 8
      %s159 = smul.addr %s158, 8
      %s160 = scalar_lea.vmem %s3, %s159
      %p161 = scmp.lt.s32.totalorder %s14, 1
      %s162 = scalar_select %p161, %s14, 1
      %s163 = smul.addr %s162, 13
      %s164 = smul.addr %s163, 8
      %s165 = scalar_lea.vmem %s0, %s164
      %p166 = scmp.lt.s32.totalorder %s14, 1
      %s167 = scalar_select %p166, %s14, 1
      %s168 = smul.addr %s167, 8
      %s169 = smul.addr %s168, 8
      %s170 = scalar_lea.vmem %s3, %s169
      %v172 = vld [vmem:[%s165] sm:$0xff]
      %v173 = vld [vmem:[%s165 + $0x8] sm:$0xff]
      %v174 = vld [vmem:[%s165 + $0x10] sm:$0xff]
      %v175 = vld [vmem:[%s165 + $0x18] sm:$0xff]
      %v176 = vld [vmem:[%s165 + $0x20] sm:$0xff]
      %v177 = vld [vmem:[%s165 + $0x28] sm:$0xff]
      %v178 = vld [vmem:[%s165 + $0x30] sm:$0xff]
      %v179 = vld [vmem:[%s165 + $0x38] sm:$0xff]
      %v180 = vld [vmem:[%s165 + $0x40] sm:$0xff]
      %v181 = vld [vmem:[%s165 + $0x48] sm:$0xff]
      %v182 = vpack.c.bf16 %v173, %v172
      %v183 = vpack.c.bf16 %v175, %v174
      %v184 = vpack.c.bf16 %v177, %v176
      %v185 = vpack.c.bf16 %v179, %v178
      %v186 = vpack.c.bf16 %v181, %v180
      %v187 = vld [vmem:[%s1] sm:$0xf]
      %v188 = vld [vmem:[%s1 + $0x4] sm:$0xf]
      %v189 = vld [vmem:[%s1 + $0x8] sm:$0xf]
      %v190 = vld [vmem:[%s1 + $0xc] sm:$0xf]
      %v191 = vld [vmem:[%s165 + $0x1] sm:$0xff]
      %v192 = vld [vmem:[%s165 + $0x9] sm:$0xff]
      %v193 = vld [vmem:[%s165 + $0x11] sm:$0xff]
      %v194 = vld [vmem:[%s165 + $0x19] sm:$0xff]
      %v195 = vld [vmem:[%s165 + $0x21] sm:$0xff]
      %v196 = vld [vmem:[%s165 + $0x29] sm:$0xff]
      %v197 = vld [vmem:[%s165 + $0x31] sm:$0xff]
      %v198 = vld [vmem:[%s165 + $0x39] sm:$0xff]
      %v199 = vld [vmem:[%s165 + $0x41] sm:$0xff]
      %v200 = vld [vmem:[%s165 + $0x49] sm:$0xff]
      %v201 = vpack.c.bf16 %v192, %v191
      %v202 = vpack.c.bf16 %v194, %v193
      %v203 = vpack.c.bf16 %v196, %v195
      %v204 = vpack.c.bf16 %v198, %v197
      %v205 = vpack.c.bf16 %v200, %v199
      %s206 = scalar_lea.vmem %s1, 16
      %v207 = vld [vmem:[%s206] sm:$0xf]
      %v208 = vld [vmem:[%s206 + $0x4] sm:$0xf]
      %v209 = vld [vmem:[%s206 + $0x8] sm:$0xf]
      %v210 = vld [vmem:[%s206 + $0xc] sm:$0xf]
      %v215 = vunpack.c.l.b16 %v207
      %v216 = vunpack.c.l.b16 %v208
      %v217 = vunpack.c.l.b16 %v209
      %v218 = vunpack.c.l.b16 %v210
      %v219 = vpack.c.b16 %v216, %v215
      %v220 = vpack.c.b16 %v218, %v217
      %vm223 = vcmask 261120
      %v225 = vsel %vm223, %v201, 0
      %v228 = vsel %vm223, %v202, 0
      %v231 = vsel %vm223, %v203, 0
      %v234 = vsel %vm223, %v204, 0
      %v237 = vsel %vm223, %v205, 0
      %239 = vmatpush.bf16.msra.mxu0 0
      %240 = vmatpush.bf16.msra.mxu0 0
      %241 = vmatpush.bf16.msra.mxu0 0
      %242 = vmatpush.bf16.msra.mxu0 0
      %243 = vmatpush.bf16.msra.mxu0 0
      %244 = vmatpush.bf16.msra.mxu0 0
      %245 = vmatpush.bf16.msra.mxu0 %v220
      %246 = vmatpush.bf16.msra.mxu0 %v219
      %247 = vmatmul.bf16.gmra.mxu0 %v225
      %v248 = vpop.f32.mrf.mxu0
      %v249 = vadd.f32 0.0, %v248
      %v250 = vpop.f32.mrf.mxu0
      %v251 = vadd.f32 0.0, %v250
      %252 = vmatmul.bf16.gmra.mxu0 %v228
      %v253 = vpop.f32.mrf.mxu0
      %v254 = vadd.f32 0.0, %v253
      %v255 = vpop.f32.mrf.mxu0
      %v256 = vadd.f32 0.0, %v255
      %257 = vmatmul.bf16.gmra.mxu0 %v231
      %v258 = vpop.f32.mrf.mxu0
      %v259 = vadd.f32 0.0, %v258
      %v260 = vpop.f32.mrf.mxu0
      %v261 = vadd.f32 0.0, %v260
      %262 = vmatmul.bf16.gmra.mxu0 %v234
      %v263 = vpop.f32.mrf.mxu0
      %v264 = vadd.f32 0.0, %v263
      %v265 = vpop.f32.mrf.mxu0
      %v266 = vadd.f32 0.0, %v265
      %267 = vmatmul.bf16.gmra.mxu0 %v237
      %v268 = vpop.f32.mrf.mxu0
      %v269 = vadd.f32 0.0, %v268
      %v270 = vpop.f32.mrf.mxu0
      %v271 = vadd.f32 0.0, %v270
      %272 = vdwg.mxu0
      %v277 = vunpack.c.l.b16 %v187
      %v278 = vunpack.c.l.b16 %v188
      %v279 = vunpack.c.l.b16 %v189
      %v280 = vunpack.c.l.b16 %v190
      %v281 = vpack.c.b16 %v278, %v277
      %v282 = vpack.c.b16 %v280, %v279
      %v286 = vsel %vm223, %v182, 0
      %v289 = vsel %vm223, %v183, 0
      %v292 = vsel %vm223, %v184, 0
      %v295 = vsel %vm223, %v185, 0
      %v298 = vsel %vm223, %v186, 0
      %300 = vmatpush.bf16.msra.mxu0 0
      %301 = vmatpush.bf16.msra.mxu0 0
      %302 = vmatpush.bf16.msra.mxu0 0
      %303 = vmatpush.bf16.msra.mxu0 0
      %304 = vmatpush.bf16.msra.mxu0 0
      %305 = vmatpush.bf16.msra.mxu0 0
      %306 = vmatpush.bf16.msra.mxu0 %v282
      %307 = vmatpush.bf16.msra.mxu0 %v281
      %308 = vmatmul.bf16.gmra.mxu0 %v286
      %v309 = vpop.f32.mrf.mxu0
      %v310 = vadd.f32 %v249, %v309
      %v311 = vpop.f32.mrf.mxu0
      %v312 = vadd.f32 %v251, %v311
      %313 = vmatmul.bf16.gmra.mxu0 %v289
      %v314 = vpop.f32.mrf.mxu0
      %v315 = vadd.f32 %v254, %v314
      %v316 = vpop.f32.mrf.mxu0
      %v317 = vadd.f32 %v256, %v316
      %318 = vmatmul.bf16.gmra.mxu0 %v292
      %v319 = vpop.f32.mrf.mxu0
      %v320 = vadd.f32 %v259, %v319
      %v321 = vpop.f32.mrf.mxu0
      %v322 = vadd.f32 %v261, %v321
      %323 = vmatmul.bf16.gmra.mxu0 %v295
      %v324 = vpop.f32.mrf.mxu0
      %v325 = vadd.f32 %v264, %v324
      %v326 = vpop.f32.mrf.mxu0
      %v327 = vadd.f32 %v266, %v326
      %328 = vmatmul.bf16.gmra.mxu0 %v298
      %v329 = vpop.f32.mrf.mxu0
      %v330 = vadd.f32 %v269, %v329
      %v331 = vpop.f32.mrf.mxu0
      %v332 = vadd.f32 %v271, %v331
      %333 = vdwg.mxu0
      %v334 = vld [vmem:[%s165 + $0x2] sm:$0xff]
      %v335 = vld [vmem:[%s165 + $0xa] sm:$0xff]
      %v336 = vld [vmem:[%s165 + $0x12] sm:$0xff]
      %v337 = vld [vmem:[%s165 + $0x1a] sm:$0xff]
      %v338 = vld [vmem:[%s165 + $0x22] sm:$0xff]
      %v339 = vld [vmem:[%s165 + $0x2a] sm:$0xff]
      %v340 = vld [vmem:[%s165 + $0x32] sm:$0xff]
      %v341 = vld [vmem:[%s165 + $0x3a] sm:$0xff]
      %v342 = vld [vmem:[%s165 + $0x42] sm:$0xff]
      %v343 = vld [vmem:[%s165 + $0x4a] sm:$0xff]
      %v344 = vpack.c.bf16 %v335, %v334
      %v345 = vpack.c.bf16 %v337, %v336
      %v346 = vpack.c.bf16 %v339, %v338
      %v347 = vpack.c.bf16 %v341, %v340
      %v348 = vpack.c.bf16 %v343, %v342
      %s349 = scalar_lea.vmem %s1, 32
      %v350 = vld [vmem:[%s349] sm:$0xf]
      %v351 = vld [vmem:[%s349 + $0x4] sm:$0xf]
      %v352 = vld [vmem:[%s349 + $0x8] sm:$0xf]
      %v353 = vld [vmem:[%s349 + $0xc] sm:$0xf]
      %v358 = vunpack.c.l.b16 %v350
      %v359 = vunpack.c.l.b16 %v351
      %v360 = vunpack.c.l.b16 %v352
      %v361 = vunpack.c.l.b16 %v353
      %v362 = vpack.c.b16 %v359, %v358
      %v363 = vpack.c.b16 %v361, %v360
      %v367 = vsel %vm223, %v344, 0
      %v370 = vsel %vm223, %v345, 0
      %v373 = vsel %vm223, %v346, 0
      %v376 = vsel %vm223, %v347, 0
      %v379 = vsel %vm223, %v348, 0
      %381 = vmatpush.bf16.msra.mxu0 0
      %382 = vmatpush.bf16.msra.mxu0 0
      %383 = vmatpush.bf16.msra.mxu0 0
      %384 = vmatpush.bf16.msra.mxu0 0
      %385 = vmatpush.bf16.msra.mxu0 0
      %386 = vmatpush.bf16.msra.mxu0 0
      %387 = vmatpush.bf16.msra.mxu0 %v363
      %388 = vmatpush.bf16.msra.mxu0 %v362
      %389 = vmatmul.bf16.gmra.mxu0 %v367
      %v390 = vpop.f32.mrf.mxu0
      %v391 = vadd.f32 0.0, %v390
      %v392 = vpop.f32.mrf.mxu0
      %v393 = vadd.f32 0.0, %v392
      %394 = vmatmul.bf16.gmra.mxu0 %v370
      %v395 = vpop.f32.mrf.mxu0
      %v396 = vadd.f32 0.0, %v395
      %v397 = vpop.f32.mrf.mxu0
      %v398 = vadd.f32 0.0, %v397
      %399 = vmatmul.bf16.gmra.mxu0 %v373
      %v400 = vpop.f32.mrf.mxu0
      %v401 = vadd.f32 0.0, %v400
      %v402 = vpop.f32.mrf.mxu0
      %v403 = vadd.f32 0.0, %v402
      %404 = vmatmul.bf16.gmra.mxu0 %v376
      %v405 = vpop.f32.mrf.mxu0
      %v406 = vadd.f32 0.0, %v405
      %v407 = vpop.f32.mrf.mxu0
      %v408 = vadd.f32 0.0, %v407
      %409 = vmatmul.bf16.gmra.mxu0 %v379
      %v410 = vpop.f32.mrf.mxu0
      %v411 = vadd.f32 0.0, %v410
      %v412 = vpop.f32.mrf.mxu0
      %v413 = vadd.f32 0.0, %v412
      %414 = vdwg.mxu0
      %v415 = vadd.f32 %v310, %v391
      %v416 = vadd.f32 %v312, %v393
      %v417 = vadd.f32 %v315, %v396
      %v418 = vadd.f32 %v317, %v398
      %v419 = vadd.f32 %v320, %v401
      %v420 = vadd.f32 %v322, %v403
      %v421 = vadd.f32 %v325, %v406
      %v422 = vadd.f32 %v327, %v408
      %v423 = vadd.f32 %v330, %v411
      %v424 = vadd.f32 %v332, %v413
      %v425 = vld [vmem:[%s165 + $0xa] sm:$0xff]
      %v426 = vld [vmem:[%s165 + $0x12] sm:$0xff]
      %v427 = vld [vmem:[%s165 + $0x1a] sm:$0xff]
      %v428 = vld [vmem:[%s165 + $0x22] sm:$0xff]
      %v429 = vld [vmem:[%s165 + $0x2a] sm:$0xff]
      %v430 = vld [vmem:[%s165 + $0x32] sm:$0xff]
      %v431 = vld [vmem:[%s165 + $0x3a] sm:$0xff]
      %v432 = vld [vmem:[%s165 + $0x42] sm:$0xff]
      %v433 = vld [vmem:[%s165 + $0x4a] sm:$0xff]
      %v434 = vld [vmem:[%s165 + $0x52] sm:$0xff]
      %v435 = vpack.c.bf16 %v426, %v425
      %v436 = vpack.c.bf16 %v428, %v427
      %v437 = vpack.c.bf16 %v430, %v429
      %v438 = vpack.c.bf16 %v432, %v431
      %v439 = vpack.c.bf16 %v434, %v433
      %s440 = scalar_lea.vmem %s1, 48
      %v441 = vld [vmem:[%s440] sm:$0xf]
      %v442 = vld [vmem:[%s440 + $0x4] sm:$0xf]
      %v443 = vld [vmem:[%s440 + $0x8] sm:$0xf]
      %v444 = vld [vmem:[%s440 + $0xc] sm:$0xf]
      %v449 = vunpack.c.l.b16 %v441
      %v450 = vunpack.c.l.b16 %v442
      %v451 = vunpack.c.l.b16 %v443
      %v452 = vunpack.c.l.b16 %v444
      %v453 = vpack.c.b16 %v450, %v449
      %v454 = vpack.c.b16 %v452, %v451
      %v458 = vsel %vm223, %v435, 0
      %v461 = vsel %vm223, %v436, 0
      %v464 = vsel %vm223, %v437, 0
      %v467 = vsel %vm223, %v438, 0
      %v470 = vsel %vm223, %v439, 0
      %472 = vmatpush.bf16.msra.mxu0 0
      %473 = vmatpush.bf16.msra.mxu0 0
      %474 = vmatpush.bf16.msra.mxu0 0
      %475 = vmatpush.bf16.msra.mxu0 0
      %476 = vmatpush.bf16.msra.mxu0 0
      %477 = vmatpush.bf16.msra.mxu0 0
      %478 = vmatpush.bf16.msra.mxu0 %v454
      %479 = vmatpush.bf16.msra.mxu0 %v453
      %480 = vmatmul.bf16.gmra.mxu0 %v458
      %v481 = vpop.f32.mrf.mxu0
      %v482 = vadd.f32 0.0, %v481
      %v483 = vpop.f32.mrf.mxu0
      %v484 = vadd.f32 0.0, %v483
      %485 = vmatmul.bf16.gmra.mxu0 %v461
      %v486 = vpop.f32.mrf.mxu0
      %v487 = vadd.f32 0.0, %v486
      %v488 = vpop.f32.mrf.mxu0
      %v489 = vadd.f32 0.0, %v488
      %490 = vmatmul.bf16.gmra.mxu0 %v464
      %v491 = vpop.f32.mrf.mxu0
      %v492 = vadd.f32 0.0, %v491
      %v493 = vpop.f32.mrf.mxu0
      %v494 = vadd.f32 0.0, %v493
      %495 = vmatmul.bf16.gmra.mxu0 %v467
      %v496 = vpop.f32.mrf.mxu0
      %v497 = vadd.f32 0.0, %v496
      %v498 = vpop.f32.mrf.mxu0
      %v499 = vadd.f32 0.0, %v498
      %500 = vmatmul.bf16.gmra.mxu0 %v470
      %v501 = vpop.f32.mrf.mxu0
      %v502 = vadd.f32 0.0, %v501
      %v503 = vpop.f32.mrf.mxu0
      %v504 = vadd.f32 0.0, %v503
      %505 = vdwg.mxu0
      %v506 = vadd.f32 %v415, %v482
      %v507 = vadd.f32 %v416, %v484
      %v508 = vadd.f32 %v417, %v487
      %v509 = vadd.f32 %v418, %v489
      %v510 = vadd.f32 %v419, %v492
      %v511 = vadd.f32 %v420, %v494
      %v512 = vadd.f32 %v421, %v497
      %v513 = vadd.f32 %v422, %v499
      %v514 = vadd.f32 %v423, %v502
      %v515 = vadd.f32 %v424, %v504
      %v516 = vld [vmem:[%s165 + $0xb] sm:$0xff]
      %v517 = vld [vmem:[%s165 + $0x13] sm:$0xff]
      %v518 = vld [vmem:[%s165 + $0x1b] sm:$0xff]
      %v519 = vld [vmem:[%s165 + $0x23] sm:$0xff]
      %v520 = vld [vmem:[%s165 + $0x2b] sm:$0xff]
      %v521 = vld [vmem:[%s165 + $0x33] sm:$0xff]
      %v522 = vld [vmem:[%s165 + $0x3b] sm:$0xff]
      %v523 = vld [vmem:[%s165 + $0x43] sm:$0xff]
      %v524 = vld [vmem:[%s165 + $0x4b] sm:$0xff]
      %v525 = vld [vmem:[%s165 + $0x53] sm:$0xff]
      %v526 = vpack.c.bf16 %v517, %v516
      %v527 = vpack.c.bf16 %v519, %v518
      %v528 = vpack.c.bf16 %v521, %v520
      %v529 = vpack.c.bf16 %v523, %v522
      %v530 = vpack.c.bf16 %v525, %v524
      %s531 = scalar_lea.vmem %s1, 64
      %v532 = vld [vmem:[%s531] sm:$0xf]
      %v533 = vld [vmem:[%s531 + $0x4] sm:$0xf]
      %v534 = vld [vmem:[%s531 + $0x8] sm:$0xf]
      %v535 = vld [vmem:[%s531 + $0xc] sm:$0xf]
      %v540 = vunpack.c.l.b16 %v532
      %v541 = vunpack.c.l.b16 %v533
      %v542 = vunpack.c.l.b16 %v534
      %v543 = vunpack.c.l.b16 %v535
      %v544 = vpack.c.b16 %v541, %v540
      %v545 = vpack.c.b16 %v543, %v542
      %v549 = vsel %vm223, %v526, 0
      %v552 = vsel %vm223, %v527, 0
      %v555 = vsel %vm223, %v528, 0
      %v558 = vsel %vm223, %v529, 0
      %v561 = vsel %vm223, %v530, 0
      %563 = vmatpush.bf16.msra.mxu0 0
      %564 = vmatpush.bf16.msra.mxu0 0
      %565 = vmatpush.bf16.msra.mxu0 0
      %566 = vmatpush.bf16.msra.mxu0 0
      %567 = vmatpush.bf16.msra.mxu0 0
      %568 = vmatpush.bf16.msra.mxu0 0
      %569 = vmatpush.bf16.msra.mxu0 %v545
      %570 = vmatpush.bf16.msra.mxu0 %v544
      %571 = vmatmul.bf16.gmra.mxu0 %v549
      %v572 = vpop.f32.mrf.mxu0
      %v573 = vadd.f32 0.0, %v572
      %v574 = vpop.f32.mrf.mxu0
      %v575 = vadd.f32 0.0, %v574
      %576 = vmatmul.bf16.gmra.mxu0 %v552
      %v577 = vpop.f32.mrf.mxu0
      %v578 = vadd.f32 0.0, %v577
      %v579 = vpop.f32.mrf.mxu0
      %v580 = vadd.f32 0.0, %v579
      %581 = vmatmul.bf16.gmra.mxu0 %v555
      %v582 = vpop.f32.mrf.mxu0
      %v583 = vadd.f32 0.0, %v582
      %v584 = vpop.f32.mrf.mxu0
      %v585 = vadd.f32 0.0, %v584
      %586 = vmatmul.bf16.gmra.mxu0 %v558
      %v587 = vpop.f32.mrf.mxu0
      %v588 = vadd.f32 0.0, %v587
      %v589 = vpop.f32.mrf.mxu0
      %v590 = vadd.f32 0.0, %v589
      %591 = vmatmul.bf16.gmra.mxu0 %v561
      %v592 = vpop.f32.mrf.mxu0
      %v593 = vadd.f32 0.0, %v592
      %v594 = vpop.f32.mrf.mxu0
      %v595 = vadd.f32 0.0, %v594
      %596 = vdwg.mxu0
      %v597 = vadd.f32 %v506, %v573
      %v598 = vadd.f32 %v507, %v575
      %v599 = vadd.f32 %v508, %v578
      %v600 = vadd.f32 %v509, %v580
      %v601 = vadd.f32 %v510, %v583
      %v602 = vadd.f32 %v511, %v585
      %v603 = vadd.f32 %v512, %v588
      %v604 = vadd.f32 %v513, %v590
      %v605 = vadd.f32 %v514, %v593
      %v606 = vadd.f32 %v515, %v595
      %v607 = vld [vmem:[%s165 + $0xc] sm:$0xff]
      %v608 = vld [vmem:[%s165 + $0x14] sm:$0xff]
      %v609 = vld [vmem:[%s165 + $0x1c] sm:$0xff]
      %v610 = vld [vmem:[%s165 + $0x24] sm:$0xff]
      %v611 = vld [vmem:[%s165 + $0x2c] sm:$0xff]
      %v612 = vld [vmem:[%s165 + $0x34] sm:$0xff]
      %v613 = vld [vmem:[%s165 + $0x3c] sm:$0xff]
      %v614 = vld [vmem:[%s165 + $0x44] sm:$0xff]
      %v615 = vld [vmem:[%s165 + $0x4c] sm:$0xff]
      %v616 = vld [vmem:[%s165 + $0x54] sm:$0xff]
      %v617 = vpack.c.bf16 %v608, %v607
      %v618 = vpack.c.bf16 %v610, %v609
      %v619 = vpack.c.bf16 %v612, %v611
      %v620 = vpack.c.bf16 %v614, %v613
      %v621 = vpack.c.bf16 %v616, %v615
      %s622 = scalar_lea.vmem %s1, 80
      %v623 = vld [vmem:[%s622] sm:$0xf]
      %v624 = vld [vmem:[%s622 + $0x4] sm:$0xf]
      %v625 = vld [vmem:[%s622 + $0x8] sm:$0xf]
      %v626 = vld [vmem:[%s622 + $0xc] sm:$0xf]
      %v631 = vunpack.c.l.b16 %v623
      %v632 = vunpack.c.l.b16 %v624
      %v633 = vunpack.c.l.b16 %v625
      %v634 = vunpack.c.l.b16 %v626
      %v635 = vpack.c.b16 %v632, %v631
      %v636 = vpack.c.b16 %v634, %v633
      %v640 = vsel %vm223, %v617, 0
      %v643 = vsel %vm223, %v618, 0
      %v646 = vsel %vm223, %v619, 0
      %v649 = vsel %vm223, %v620, 0
      %v652 = vsel %vm223, %v621, 0
      %654 = vmatpush.bf16.msra.mxu0 0
      %655 = vmatpush.bf16.msra.mxu0 0
      %656 = vmatpush.bf16.msra.mxu0 0
      %657 = vmatpush.bf16.msra.mxu0 0
      %658 = vmatpush.bf16.msra.mxu0 0
      %659 = vmatpush.bf16.msra.mxu0 0
      %660 = vmatpush.bf16.msra.mxu0 %v636
      %661 = vmatpush.bf16.msra.mxu0 %v635
      %662 = vmatmul.bf16.gmra.mxu0 %v640
      %v663 = vpop.f32.mrf.mxu0
      %v664 = vadd.f32 0.0, %v663
      %v665 = vpop.f32.mrf.mxu0
      %v666 = vadd.f32 0.0, %v665
      %667 = vmatmul.bf16.gmra.mxu0 %v643
      %v668 = vpop.f32.mrf.mxu0
      %v669 = vadd.f32 0.0, %v668
      %v670 = vpop.f32.mrf.mxu0
      %v671 = vadd.f32 0.0, %v670
      %672 = vmatmul.bf16.gmra.mxu0 %v646
      %v673 = vpop.f32.mrf.mxu0
      %v674 = vadd.f32 0.0, %v673
      %v675 = vpop.f32.mrf.mxu0
      %v676 = vadd.f32 0.0, %v675
      %677 = vmatmul.bf16.gmra.mxu0 %v649
      %v678 = vpop.f32.mrf.mxu0
      %v679 = vadd.f32 0.0, %v678
      %v680 = vpop.f32.mrf.mxu0
      %v681 = vadd.f32 0.0, %v680
      %682 = vmatmul.bf16.gmra.mxu0 %v652
      %v683 = vpop.f32.mrf.mxu0
      %v684 = vadd.f32 0.0, %v683
      %v685 = vpop.f32.mrf.mxu0
      %v686 = vadd.f32 0.0, %v685
      %687 = vdwg.mxu0
      %v688 = vadd.f32 %v597, %v664
      %v689 = vadd.f32 %v598, %v666
      %v690 = vadd.f32 %v599, %v669
      %v691 = vadd.f32 %v600, %v671
      %v692 = vadd.f32 %v601, %v674
      %v693 = vadd.f32 %v602, %v676
      %v694 = vadd.f32 %v603, %v679
      %v695 = vadd.f32 %v604, %v681
      %v696 = vadd.f32 %v605, %v684
      %v697 = vadd.f32 %v606, %v686
      %v698 = vld [vmem:[%s165 + $0x14] sm:$0xff]
      %v699 = vld [vmem:[%s165 + $0x1c] sm:$0xff]
      %v700 = vld [vmem:[%s165 + $0x24] sm:$0xff]
      %v701 = vld [vmem:[%s165 + $0x2c] sm:$0xff]
      %v702 = vld [vmem:[%s165 + $0x34] sm:$0xff]
      %v703 = vld [vmem:[%s165 + $0x3c] sm:$0xff]
      %v704 = vld [vmem:[%s165 + $0x44] sm:$0xff]
      %v705 = vld [vmem:[%s165 + $0x4c] sm:$0xff]
      %v706 = vld [vmem:[%s165 + $0x54] sm:$0xff]
      %v707 = vld [vmem:[%s165 + $0x5c] sm:$0xff]
      %v708 = vpack.c.bf16 %v699, %v698
      %v709 = vpack.c.bf16 %v701, %v700
      %v710 = vpack.c.bf16 %v703, %v702
      %v711 = vpack.c.bf16 %v705, %v704
      %v712 = vpack.c.bf16 %v707, %v706
      %s713 = scalar_lea.vmem %s1, 96
      %v714 = vld [vmem:[%s713] sm:$0xf]
      %v715 = vld [vmem:[%s713 + $0x4] sm:$0xf]
      %v716 = vld [vmem:[%s713 + $0x8] sm:$0xf]
      %v717 = vld [vmem:[%s713 + $0xc] sm:$0xf]
      %v722 = vunpack.c.l.b16 %v714
      %v723 = vunpack.c.l.b16 %v715
      %v724 = vunpack.c.l.b16 %v716
      %v725 = vunpack.c.l.b16 %v717
      %v726 = vpack.c.b16 %v723, %v722
      %v727 = vpack.c.b16 %v725, %v724
      %v731 = vsel %vm223, %v708, 0
      %v734 = vsel %vm223, %v709, 0
      %v737 = vsel %vm223, %v710, 0
      %v740 = vsel %vm223, %v711, 0
      %v743 = vsel %vm223, %v712, 0
      %745 = vmatpush.bf16.msra.mxu0 0
      %746 = vmatpush.bf16.msra.mxu0 0
      %747 = vmatpush.bf16.msra.mxu0 0
      %748 = vmatpush.bf16.msra.mxu0 0
      %749 = vmatpush.bf16.msra.mxu0 0
      %750 = vmatpush.bf16.msra.mxu0 0
      %751 = vmatpush.bf16.msra.mxu0 %v727
      %752 = vmatpush.bf16.msra.mxu0 %v726
      %753 = vmatmul.bf16.gmra.mxu0 %v731
      %v754 = vpop.f32.mrf.mxu0
      %v755 = vadd.f32 0.0, %v754
      %v756 = vpop.f32.mrf.mxu0
      %v757 = vadd.f32 0.0, %v756
      %758 = vmatmul.bf16.gmra.mxu0 %v734
      %v759 = vpop.f32.mrf.mxu0
      %v760 = vadd.f32 0.0, %v759
      %v761 = vpop.f32.mrf.mxu0
      %v762 = vadd.f32 0.0, %v761
      %763 = vmatmul.bf16.gmra.mxu0 %v737
      %v764 = vpop.f32.mrf.mxu0
      %v765 = vadd.f32 0.0, %v764
      %v766 = vpop.f32.mrf.mxu0
      %v767 = vadd.f32 0.0, %v766
      %768 = vmatmul.bf16.gmra.mxu0 %v740
      %v769 = vpop.f32.mrf.mxu0
      %v770 = vadd.f32 0.0, %v769
      %v771 = vpop.f32.mrf.mxu0
      %v772 = vadd.f32 0.0, %v771
      %773 = vmatmul.bf16.gmra.mxu0 %v743
      %v774 = vpop.f32.mrf.mxu0
      %v775 = vadd.f32 0.0, %v774
      %v776 = vpop.f32.mrf.mxu0
      %v777 = vadd.f32 0.0, %v776
      %778 = vdwg.mxu0
      %v779 = vadd.f32 %v688, %v755
      %v780 = vadd.f32 %v689, %v757
      %v781 = vadd.f32 %v690, %v760
      %v782 = vadd.f32 %v691, %v762
      %v783 = vadd.f32 %v692, %v765
      %v784 = vadd.f32 %v693, %v767
      %v785 = vadd.f32 %v694, %v770
      %v786 = vadd.f32 %v695, %v772
      %v787 = vadd.f32 %v696, %v775
      %v788 = vadd.f32 %v697, %v777
      %v789 = vld [vmem:[%s165 + $0x15] sm:$0xff]
      %v790 = vld [vmem:[%s165 + $0x1d] sm:$0xff]
      %v791 = vld [vmem:[%s165 + $0x25] sm:$0xff]
      %v792 = vld [vmem:[%s165 + $0x2d] sm:$0xff]
      %v793 = vld [vmem:[%s165 + $0x35] sm:$0xff]
      %v794 = vld [vmem:[%s165 + $0x3d] sm:$0xff]
      %v795 = vld [vmem:[%s165 + $0x45] sm:$0xff]
      %v796 = vld [vmem:[%s165 + $0x4d] sm:$0xff]
      %v797 = vld [vmem:[%s165 + $0x55] sm:$0xff]
      %v798 = vld [vmem:[%s165 + $0x5d] sm:$0xff]
      %v799 = vpack.c.bf16 %v790, %v789
      %v800 = vpack.c.bf16 %v792, %v791
      %v801 = vpack.c.bf16 %v794, %v793
      %v802 = vpack.c.bf16 %v796, %v795
      %v803 = vpack.c.bf16 %v798, %v797
      %s804 = scalar_lea.vmem %s1, 112
      %v805 = vld [vmem:[%s804] sm:$0xf]
      %v806 = vld [vmem:[%s804 + $0x4] sm:$0xf]
      %v807 = vld [vmem:[%s804 + $0x8] sm:$0xf]
      %v808 = vld [vmem:[%s804 + $0xc] sm:$0xf]
      %v813 = vunpack.c.l.b16 %v805
      %v814 = vunpack.c.l.b16 %v806
      %v815 = vunpack.c.l.b16 %v807
      %v816 = vunpack.c.l.b16 %v808
      %v817 = vpack.c.b16 %v814, %v813
      %v818 = vpack.c.b16 %v816, %v815
      %v822 = vsel %vm223, %v799, 0
      %v825 = vsel %vm223, %v800, 0
      %v828 = vsel %vm223, %v801, 0
      %v831 = vsel %vm223, %v802, 0
      %v834 = vsel %vm223, %v803, 0
      %836 = vmatpush.bf16.msra.mxu0 0
      %837 = vmatpush.bf16.msra.mxu0 0
      %838 = vmatpush.bf16.msra.mxu0 0
      %839 = vmatpush.bf16.msra.mxu0 0
      %840 = vmatpush.bf16.msra.mxu0 0
      %841 = vmatpush.bf16.msra.mxu0 0
      %842 = vmatpush.bf16.msra.mxu0 %v818
      %843 = vmatpush.bf16.msra.mxu0 %v817
      %844 = vmatmul.bf16.gmra.mxu0 %v822
      %v845 = vpop.f32.mrf.mxu0
      %v846 = vadd.f32 0.0, %v845
      %v847 = vpop.f32.mrf.mxu0
      %v848 = vadd.f32 0.0, %v847
      %849 = vmatmul.bf16.gmra.mxu0 %v825
      %v850 = vpop.f32.mrf.mxu0
      %v851 = vadd.f32 0.0, %v850
      %v852 = vpop.f32.mrf.mxu0
      %v853 = vadd.f32 0.0, %v852
      %854 = vmatmul.bf16.gmra.mxu0 %v828
      %v855 = vpop.f32.mrf.mxu0
      %v856 = vadd.f32 0.0, %v855
      %v857 = vpop.f32.mrf.mxu0
      %v858 = vadd.f32 0.0, %v857
      %859 = vmatmul.bf16.gmra.mxu0 %v831
      %v860 = vpop.f32.mrf.mxu0
      %v861 = vadd.f32 0.0, %v860
      %v862 = vpop.f32.mrf.mxu0
      %v863 = vadd.f32 0.0, %v862
      %864 = vmatmul.bf16.gmra.mxu0 %v834
      %v865 = vpop.f32.mrf.mxu0
      %v866 = vadd.f32 0.0, %v865
      %v867 = vpop.f32.mrf.mxu0
      %v868 = vadd.f32 0.0, %v867
      %869 = vdwg.mxu0
      %v870 = vadd.f32 %v779, %v846
      %v871 = vadd.f32 %v780, %v848
      %v872 = vadd.f32 %v781, %v851
      %v873 = vadd.f32 %v782, %v853
      %v874 = vadd.f32 %v783, %v856
      %v875 = vadd.f32 %v784, %v858
      %v876 = vadd.f32 %v785, %v861
      %v877 = vadd.f32 %v786, %v863
      %v878 = vadd.f32 %v787, %v866
      %v879 = vadd.f32 %v788, %v868
      %v880 = vld [vmem:[%s165 + $0x16] sm:$0xff]
      %v881 = vld [vmem:[%s165 + $0x1e] sm:$0xff]
      %v882 = vld [vmem:[%s165 + $0x26] sm:$0xff]
      %v883 = vld [vmem:[%s165 + $0x2e] sm:$0xff]
      %v884 = vld [vmem:[%s165 + $0x36] sm:$0xff]
      %v885 = vld [vmem:[%s165 + $0x3e] sm:$0xff]
      %v886 = vld [vmem:[%s165 + $0x46] sm:$0xff]
      %v887 = vld [vmem:[%s165 + $0x4e] sm:$0xff]
      %v888 = vld [vmem:[%s165 + $0x56] sm:$0xff]
      %v889 = vld [vmem:[%s165 + $0x5e] sm:$0xff]
      %v890 = vpack.c.bf16 %v881, %v880
      %v891 = vpack.c.bf16 %v883, %v882
      %v892 = vpack.c.bf16 %v885, %v884
      %v893 = vpack.c.bf16 %v887, %v886
      %v894 = vpack.c.bf16 %v889, %v888
      %s895 = scalar_lea.vmem %s1, 128
      %v896 = vld [vmem:[%s895] sm:$0xf]
      %v897 = vld [vmem:[%s895 + $0x4] sm:$0xf]
      %v898 = vld [vmem:[%s895 + $0x8] sm:$0xf]
      %v899 = vld [vmem:[%s895 + $0xc] sm:$0xf]
      %v904 = vunpack.c.l.b16 %v896
      %v905 = vunpack.c.l.b16 %v897
      %v906 = vunpack.c.l.b16 %v898
      %v907 = vunpack.c.l.b16 %v899
      %v908 = vpack.c.b16 %v905, %v904
      %v909 = vpack.c.b16 %v907, %v906
      %v913 = vsel %vm223, %v890, 0
      %v916 = vsel %vm223, %v891, 0
      %v919 = vsel %vm223, %v892, 0
      %v922 = vsel %vm223, %v893, 0
      %v925 = vsel %vm223, %v894, 0
      %927 = vmatpush.bf16.msra.mxu0 0
      %928 = vmatpush.bf16.msra.mxu0 0
      %929 = vmatpush.bf16.msra.mxu0 0
      %930 = vmatpush.bf16.msra.mxu0 0
      %931 = vmatpush.bf16.msra.mxu0 0
      %932 = vmatpush.bf16.msra.mxu0 0
      %933 = vmatpush.bf16.msra.mxu0 %v909
      %934 = vmatpush.bf16.msra.mxu0 %v908
      %935 = vmatmul.bf16.gmra.mxu0 %v913
      %v936 = vpop.f32.mrf.mxu0
      %v937 = vadd.f32 0.0, %v936
      %v938 = vpop.f32.mrf.mxu0
      %v939 = vadd.f32 0.0, %v938
      %940 = vmatmul.bf16.gmra.mxu0 %v916
      %v941 = vpop.f32.mrf.mxu0
      %v942 = vadd.f32 0.0, %v941
      %v943 = vpop.f32.mrf.mxu0
      %v944 = vadd.f32 0.0, %v943
      %945 = vmatmul.bf16.gmra.mxu0 %v919
      %v946 = vpop.f32.mrf.mxu0
      %v947 = vadd.f32 0.0, %v946
      %v948 = vpop.f32.mrf.mxu0
      %v949 = vadd.f32 0.0, %v948
      %950 = vmatmul.bf16.gmra.mxu0 %v922
      %v951 = vpop.f32.mrf.mxu0
      %v952 = vadd.f32 0.0, %v951
      %v953 = vpop.f32.mrf.mxu0
      %v954 = vadd.f32 0.0, %v953
      %955 = vmatmul.bf16.gmra.mxu0 %v925
      %v956 = vpop.f32.mrf.mxu0
      %v957 = vadd.f32 0.0, %v956
      %v958 = vpop.f32.mrf.mxu0
      %v959 = vadd.f32 0.0, %v958
      %960 = vdwg.mxu0
      %v961 = vadd.f32 %v870, %v937
      %v962 = vadd.f32 %v871, %v939
      %v963 = vadd.f32 %v872, %v942
      %v964 = vadd.f32 %v873, %v944
      %v965 = vadd.f32 %v874, %v947
      %v966 = vadd.f32 %v875, %v949
      %v967 = vadd.f32 %v876, %v952
      %v968 = vadd.f32 %v877, %v954
      %v969 = vadd.f32 %v878, %v957
      %v970 = vadd.f32 %v879, %v959
      %v971 = vld [vmem:[%s2] sm:$0x1]
      %v973 = vperm.slane %v971, 0
      %v975 = vadd.f32 %v961, %v973
      %v976 = vadd.f32 %v962, %v973
      %v977 = vadd.f32 %v963, %v973
      %v978 = vadd.f32 %v964, %v973
      %v979 = vadd.f32 %v965, %v973
      %v980 = vadd.f32 %v966, %v973
      %v981 = vadd.f32 %v967, %v973
      %v982 = vadd.f32 %v968, %v973
      %v983 = vadd.f32 %v969, %v973
      %v984 = vadd.f32 %v970, %v973
      %v985 = vmax.f32 %v975, 0.0
      %v986 = vmax.f32 %v976, 0.0
      %v987 = vmax.f32 %v977, 0.0
      %v988 = vmax.f32 %v978, 0.0
      %v989 = vmax.f32 %v979, 0.0
      %v990 = vmax.f32 %v980, 0.0
      %v991 = vmax.f32 %v981, 0.0
      %v992 = vmax.f32 %v982, 0.0
      %v993 = vmax.f32 %v983, 0.0
      %v994 = vmax.f32 %v984, 0.0
      %995 = vst.msk [vmem:[%s170] sm:$0xff] %vm223, %v985
      %s996 = scalar_lea.vmem %s170, 8
      %vm997 = vcmask 261122
      %998 = vst.msk [vmem:[%s996 - $0x2] sm:$0xfc] %vm997, %v986
      %vm999 = vcmask 254976
      %1000 = vst.msk [vmem:[%s996 + $0x6] sm:$0x3] %vm999, %v987
      %s1001 = scalar_lea.vmem %s170, 16
      %vm1002 = vcmask 261124
      %1003 = vst.msk [vmem:[%s1001 - $0x4] sm:$0xf0] %vm1002, %v987
      %vm1004 = vcmask 257024
      %1005 = vst.msk [vmem:[%s1001 + $0x4] sm:$0xf] %vm1004, %v988
      %s1006 = scalar_lea.vmem %s170, 24
      %vm1007 = vcmask 261126
      %1008 = vst.msk [vmem:[%s1006 - $0x6] sm:$0xc0] %vm1007, %v988
      %vm1009 = vcmask 259072
      %1010 = vst.msk [vmem:[%s1006 + $0x2] sm:$0x3f] %vm1009, %v989
      %s1011 = scalar_lea.vmem %s170, 32
      %1012 = vst.msk [vmem:[%s1011] sm:$0xff] %vm223, %v990
      %s1013 = scalar_lea.vmem %s170, 40
      %1014 = vst.msk [vmem:[%s1013 - $0x2] sm:$0xfc] %vm997, %v991
      %1015 = vst.msk [vmem:[%s1013 + $0x6] sm:$0x3] %vm999, %v992
      %s1016 = scalar_lea.vmem %s170, 48
      %1017 = vst.msk [vmem:[%s1016 - $0x4] sm:$0xf0] %vm1002, %v992
      %1018 = vst.msk [vmem:[%s1016 + $0x4] sm:$0xf] %vm1004, %v993
      %s1019 = scalar_lea.vmem %s170, 56
      %1020 = vst.msk [vmem:[%s1019 - $0x6] sm:$0xc0] %vm1007, %v993
      %1021 = vst.msk [vmem:[%s1019 + $0x2] sm:$0x3f] %vm1009, %v994
      %p1022 = scmp.lt.s32.totalorder %s14, 1
      %s1023 = scalar_select %p1022, %s14, 1
      %s1024 = smul.addr %s1023, 8
      %s1025 = smul.addr %s1024, 8
      %s1026 = scalar_lea.vmem %s3, %s1025
      // Predicated region
      $region33: #{vqvae_forward.18} parent=31 // pred_check
        %p1027 = pneg %p100
      $region34: #{vqvae_forward.18} parent=31 // pred_check_branch
        %1029 = sbr.rel (%p1027) target = $region36
      $region35: #{vqvae_forward.18} parent=31 // pred_region
        _
      $region36: #{vqvae_forward.18} parent=31 // pred_fallthru
        _
    $region32: #{vqvae_forward.18} parent=5 // pred_fallthru
      _
    %p1030 = scmp.le.s32.totalorder 2, %s9
    // Predicated region
    $region37: #{vqvae_forward.18} parent=5 // pred_check
      %p1031 = pneg %p1030
    $region38: #{vqvae_forward.18} parent=5 // pred_check_branch
      %1033 = sbr.rel (%p1031) target = $region40
    $region39: #{vqvae_forward.18} parent=5 // pred_region
      %s1034 = ssub.s32 %s9, 2
      // Predicated region
      $region41: #{vqvae_forward.18} parent=39 // pred_check
        %p1035 = pneg %p106
      $region42: #{vqvae_forward.18} parent=39 // pred_check_branch
        %1037 = sbr.rel (%p1035) target = $region44
      $region43: #{vqvae_forward.18} parent=39 // pred_region
        %p1038 = scmp.lt.s32.totalorder %s15, 1
        %s1039 = scalar_select %p1038, %s15, 1
        %s1040 = smul.addr %s1039, 8
        %s1041 = smul.addr %s1040, 8
        %s1042 = scalar_lea.vmem %s3, %s1041
      $region44: #{vqvae_forward.18} parent=39 // pred_fallthru
        _
    $region40: #{vqvae_forward.18} parent=5 // pred_fallthru
      _
  $region6: #{vqvae_forward.18} parent=0 // loop_footer
    %s13 = sadd.s32 1, %s9
  $region7: #{vqvae_forward.18} parent=0 // loop_footer_branch
    %8 = sbr.rel target = $region3
  $region8: #{vqvae_forward.18} parent=0 // loop_exit
    _

// kernel: vqvae_forward.21
$region0: #{vqvae_forward.21}
  #allocation0 [shape = 'u32[]', space=smem, size = 0x4, offset = 0x4, fixed_abs, tag = 'smem constant byte address 0x4 - core index']
  #allocation1 [shape = 'u32[72,128]{1,0:T(1,128)}', space=vmem, size = 0x9000, scoped, tag = 'internal scratch']
  %s0 = inlined_call_operand.vmem [shape: f32[2,102,64], index: 0, kind: input, shape index: {}]
  %s1 = inlined_call_operand.vmem [shape: bf16[9,64,32], index: 1, kind: input, shape index: {}]
  %s2 = inlined_call_operand.vmem [shape: f32[1,32], index: 2, kind: input, shape index: {}]
  %s3 = inlined_call_operand.vmem [shape: f32[2,8,8,32], index: 3, kind: output, shape index: {}]
  %s4 = sld [smem:[#allocation0]]
  $region45: #{vqvae_forward.21} parent=0
    _
  %s6 = ssub.s32 1, %s4
  %s7 = scalar_select 0, %s6, %s4
  loop: start=0, step=1, limit=4
  $region2: #{vqvae_forward.21} parent=0 // loop_pre_header
    _
  $region3: #{vqvae_forward.21} parent=0 // loop_header
    %s9 = sphi 0, %s13
    %p10 = scmp.ge.s32.totalorder %s9, 4
    %s19 = sphi 0, %s21
    %s22 = sphi 0, %s19
    %s23 = sphi 0, %s22
    %s39 = sphi 0, %s23
    %s43 = sphi 0, %s43
    %s45 = sphi 0, %s43
    %s46 = sphi 0, %s45
    %s60 = sphi 0, %s46
    %s64 = sphi 0, %s64
    %s66 = sphi 0, %s64
    %s67 = sphi 0, %s66
    %s81 = sphi 0, %s67
    %s87 = sphi 0, %s89
    %s90 = sphi 0, %s87
    %s91 = sphi 0, %s90
    %s107 = sphi 0, %s91
  $region4: #{vqvae_forward.21} parent=0 // loop_header_branch
    %12 = sbr.rel (%p10) target = $region8
  $region5: #{vqvae_forward.21} parent=0 // loop_body
    %s14 = ssub.s32 %s9, 1
    %s15 = ssub.s32 %s9, 2
    %s16 = sadd.s32 %s9, 1
    %s17 = ssub.s32 %s9, %s16
    %p18 = scmp.eq.s32.totalorder %s17, 0
    %s20 = sadd.s32 %s19, 1
    %s21 = scalar_select %p18, %s19, %s20
    %p24 = pneg %p18
    %p25 = scmp.eq.s32.totalorder %s9, 1
    %p26 = por %p24, %p25
    %p27 = scmp.ne.s32.totalorder %s19, %s22
    %p28 = scmp.eq.s32.totalorder %s9, 0
    %p29 = por %p27, %p28
    %p30 = scmp.ne.s32.totalorder %s19, %s22
    %p31 = scmp.eq.s32.totalorder %s14, 1
    %p32 = por %p30, %p31
    %p33 = scmp.ne.s32.totalorder %s22, %s23
    %p34 = scmp.eq.s32.totalorder %s14, 0
    %p35 = por %p33, %p34
    %p36 = scmp.ne.s32.totalorder %s22, %s23
    %p37 = scmp.eq.s32.totalorder %s15, 1
    %p38 = por %p36, %p37
    %p40 = scmp.ne.s32.totalorder %s23, %s39
    %p41 = scmp.eq.s32.totalorder %s15, 0
    %p42 = por %p40, %p41
    %s44 = sadd.s32 %s43, 1
    %p47 = scmp.eq.s32.totalorder %s9, 1
    %p48 = scmp.ne.s32.totalorder %s43, %s45
    %p49 = scmp.eq.s32.totalorder %s9, 0
    %p50 = por %p48, %p49
    %p51 = scmp.ne.s32.totalorder %s43, %s45
    %p52 = scmp.eq.s32.totalorder %s14, 1
    %p53 = por %p51, %p52
    %p54 = scmp.ne.s32.totalorder %s45, %s46
    %p55 = scmp.eq.s32.totalorder %s14, 0
    %p56 = por %p54, %p55
    %p57 = scmp.ne.s32.totalorder %s45, %s46
    %p58 = scmp.eq.s32.totalorder %s15, 1
    %p59 = por %p57, %p58
    %p61 = scmp.ne.s32.totalorder %s46, %s60
    %p62 = scmp.eq.s32.totalorder %s15, 0
    %p63 = por %p61, %p62
    %s65 = sadd.s32 %s64, 1
    %p68 = scmp.eq.s32.totalorder %s9, 1
    %p69 = scmp.ne.s32.totalorder %s64, %s66
    %p70 = scmp.eq.s32.totalorder %s9, 0
    %p71 = por %p69, %p70
    %p72 = scmp.ne.s32.totalorder %s64, %s66
    %p73 = scmp.eq.s32.totalorder %s14, 1
    %p74 = por %p72, %p73
    %p75 = scmp.ne.s32.totalorder %s66, %s67
    %p76 = scmp.eq.s32.totalorder %s14, 0
    %p77 = por %p75, %p76
    %p78 = scmp.ne.s32.totalorder %s66, %s67
    %p79 = scmp.eq.s32.totalorder %s15, 1
    %p80 = por %p78, %p79
    %p82 = scmp.ne.s32.totalorder %s67, %s81
    %p83 = scmp.eq.s32.totalorder %s15, 0
    %p84 = por %p82, %p83
    %s85 = ssub.s32 %s9, %s16
    %p86 = scmp.eq.s32.totalorder %s85, 0
    %s88 = sadd.s32 %s87, 1
    %s89 = scalar_select %p86, %s87, %s88
    %p92 = pneg %p86
    %p93 = scmp.eq.s32.totalorder %s9, 1
    %p94 = por %p92, %p93
    %p95 = scmp.ne.s32.totalorder %s87, %s90
    %p96 = scmp.eq.s32.totalorder %s9, 0
    %p97 = por %p95, %p96
    %p98 = scmp.ne.s32.totalorder %s87, %s90
    %p99 = scmp.eq.s32.totalorder %s14, 1
    %p100 = por %p98, %p99
    %p101 = scmp.ne.s32.totalorder %s90, %s91
    %p102 = scmp.eq.s32.totalorder %s14, 0
    %p103 = por %p101, %p102
    %p104 = scmp.ne.s32.totalorder %s90, %s91
    %p105 = scmp.eq.s32.totalorder %s15, 1
    %p106 = por %p104, %p105
    %p108 = scmp.ne.s32.totalorder %s91, %s107
    %p109 = scmp.eq.s32.totalorder %s15, 0
    %p110 = por %p108, %p109
    %p111 = scmp.le.s32.totalorder 1, %s9
    %p112 = scmp.lt.s32.totalorder %s9, 3
    %p113 = pnand %p111, %p112
    %p114 = pneg %p113
    // Predicated region
    $region9: #{vqvae_forward.21} parent=5 // pred_check
      _
    $region10: #{vqvae_forward.21} parent=5 // pred_check_branch
      %116 = sbr.rel (%p113) target = $region12
    $region11: #{vqvae_forward.21} parent=5 // pred_region
      %s117 = ssub.s32 %s9, 1
      // Predicated region
      $region13: #{vqvae_forward.21} parent=11 // pred_check
        %p118 = pneg %p56
      $region14: #{vqvae_forward.21} parent=11 // pred_check_branch
        %120 = sbr.rel (%p118) target = $region16
      $region15: #{vqvae_forward.21} parent=11 // pred_region
        _
      $region16: #{vqvae_forward.21} parent=11 // pred_fallthru
        _
      // Predicated region
      $region17: #{vqvae_forward.21} parent=11 // pred_check
        %p121 = pneg %p77
      $region18: #{vqvae_forward.21} parent=11 // pred_check_branch
        %123 = sbr.rel (%p121) target = $region20
      $region19: #{vqvae_forward.21} parent=11 // pred_region
        _
      $region20: #{vqvae_forward.21} parent=11 // pred_fallthru
        _
    $region12: #{vqvae_forward.21} parent=5 // pred_fallthru
      _
    %p124 = scmp.lt.s32.totalorder %s9, 2
    // Predicated region
    $region21: #{vqvae_forward.21} parent=5 // pred_check
      %p125 = pneg %p124
    $region22: #{vqvae_forward.21} parent=5 // pred_check_branch
      %127 = sbr.rel (%p125) target = $region24
    $region23: #{vqvae_forward.21} parent=5 // pred_region
      // Predicated region
      $region25: #{vqvae_forward.21} parent=23 // pred_check
        %p128 = pneg %p29
      $region26: #{vqvae_forward.21} parent=23 // pred_check_branch
        %130 = sbr.rel (%p128) target = $region28
      $region27: #{vqvae_forward.21} parent=23 // pred_region
        %p131 = scmp.lt.s32.totalorder %s9, 1
        %s132 = scalar_select %p131, %s9, 1
        %s133 = smul.addr %s132, 13
        %s134 = smul.addr %s133, 8
        %s135 = scalar_lea.vmem %s0, %s134
      $region28: #{vqvae_forward.21} parent=23 // pred_fallthru
        _
    $region24: #{vqvae_forward.21} parent=5 // pred_fallthru
      _
    %p136 = scmp.le.s32.totalorder 1, %s9
    %p137 = scmp.lt.s32.totalorder %s9, 3
    %p138 = pnand %p136, %p137
    %p139 = pneg %p138
    // Predicated region
    $region29: #{vqvae_forward.21} parent=5 // pred_check
      _
    $region30: #{vqvae_forward.21} parent=5 // pred_check_branch
      %141 = sbr.rel (%p138) target = $region32
    $region31: #{vqvae_forward.21} parent=5 // pred_region
      %s142 = ssub.s32 %s9, 1
      %p143 = scmp.lt.s32.totalorder %s14, 1
      %s144 = scalar_select %p143, %s14, 1
      %s145 = smul.addr %s144, 13
      %s146 = smul.addr %s145, 8
      %s147 = scalar_lea.vmem %s0, %s146
      %p148 = pneg %p35
      %p149 = pneg %p32
      %p150 = pneg %p56
      %p151 = pneg %p53
      %p152 = pneg %p77
      %p153 = pneg %p74
      %p154 = pneg %p103
      %p155 = pneg %p100
      %p156 = scmp.lt.s32.totalorder %s14, 1
      %s157 = scalar_select %p156, %s14, 1
      %s158 = smul.addr %s157, 8
      %s159 = smul.addr %s158, 8
      %s160 = scalar_lea.vmem %s3, %s159
      %p161 = scmp.lt.s32.totalorder %s14, 1
      %s162 = scalar_select %p161, %s14, 1
      %s163 = smul.addr %s162, 13
      %s164 = smul.addr %s163, 8
      %s165 = scalar_lea.vmem %s0, %s164
      %p166 = scmp.lt.s32.totalorder %s14, 1
      %s167 = scalar_select %p166, %s14, 1
      %s168 = smul.addr %s167, 8
      %s169 = smul.addr %s168, 8
      %s170 = scalar_lea.vmem %s3, %s169
      %v172 = vld [vmem:[%s165] sm:$0xff]
      %v173 = vld [vmem:[%s165 + $0x8] sm:$0xff]
      %v174 = vld [vmem:[%s165 + $0x10] sm:$0xff]
      %v175 = vld [vmem:[%s165 + $0x18] sm:$0xff]
      %v176 = vld [vmem:[%s165 + $0x20] sm:$0xff]
      %v177 = vld [vmem:[%s165 + $0x28] sm:$0xff]
      %v178 = vld [vmem:[%s165 + $0x30] sm:$0xff]
      %v179 = vld [vmem:[%s165 + $0x38] sm:$0xff]
      %v180 = vld [vmem:[%s165 + $0x40] sm:$0xff]
      %v181 = vld [vmem:[%s165 + $0x48] sm:$0xff]
      %v182 = vpack.c.bf16 %v173, %v172
      %v183 = vpack.c.bf16 %v175, %v174
      %v184 = vpack.c.bf16 %v177, %v176
      %v185 = vpack.c.bf16 %v179, %v178
      %v186 = vpack.c.bf16 %v181, %v180
      %v187 = vld [vmem:[%s1] sm:$0xf]
      %v188 = vld [vmem:[%s1 + $0x4] sm:$0xf]
      %v189 = vld [vmem:[%s1 + $0x8] sm:$0xf]
      %v190 = vld [vmem:[%s1 + $0xc] sm:$0xf]
      %v191 = vld [vmem:[%s1 + $0x10] sm:$0xf]
      %v192 = vld [vmem:[%s1 + $0x14] sm:$0xf]
      %v193 = vld [vmem:[%s1 + $0x18] sm:$0xf]
      %v194 = vld [vmem:[%s1 + $0x1c] sm:$0xf]
      %v195 = vld [vmem:[%s165 + $0x1] sm:$0xff]
      %v196 = vld [vmem:[%s165 + $0x9] sm:$0xff]
      %v197 = vld [vmem:[%s165 + $0x11] sm:$0xff]
      %v198 = vld [vmem:[%s165 + $0x19] sm:$0xff]
      %v199 = vld [vmem:[%s165 + $0x21] sm:$0xff]
      %v200 = vld [vmem:[%s165 + $0x29] sm:$0xff]
      %v201 = vld [vmem:[%s165 + $0x31] sm:$0xff]
      %v202 = vld [vmem:[%s165 + $0x39] sm:$0xff]
      %v203 = vld [vmem:[%s165 + $0x41] sm:$0xff]
      %v204 = vld [vmem:[%s165 + $0x49] sm:$0xff]
      %v205 = vpack.c.bf16 %v196, %v195
      %v206 = vpack.c.bf16 %v198, %v197
      %v207 = vpack.c.bf16 %v200, %v199
      %v208 = vpack.c.bf16 %v202, %v201
      %v209 = vpack.c.bf16 %v204, %v203
      %s210 = scalar_lea.vmem %s1, 32
      %v211 = vld [vmem:[%s210] sm:$0xf]
      %v212 = vld [vmem:[%s210 + $0x4] sm:$0xf]
      %v213 = vld [vmem:[%s210 + $0x8] sm:$0xf]
      %v214 = vld [vmem:[%s210 + $0xc] sm:$0xf]
      %v215 = vld [vmem:[%s210 + $0x10] sm:$0xf]
      %v216 = vld [vmem:[%s210 + $0x14] sm:$0xf]
      %v217 = vld [vmem:[%s210 + $0x18] sm:$0xf]
      %v218 = vld [vmem:[%s210 + $0x1c] sm:$0xf]
      %v227 = vunpack.c.l.b16 %v211
      %v228 = vunpack.c.l.b16 %v212
      %v229 = vunpack.c.l.b16 %v213
      %v230 = vunpack.c.l.b16 %v214
      %v231 = vunpack.c.l.b16 %v215
      %v232 = vunpack.c.l.b16 %v216
      %v233 = vunpack.c.l.b16 %v217
      %v234 = vunpack.c.l.b16 %v218
      %v235 = vpack.c.b16 %v228, %v227
      %v236 = vpack.c.b16 %v230, %v229
      %v237 = vpack.c.b16 %v232, %v231
      %v238 = vpack.c.b16 %v234, %v233
      %vm243 = vcmask 523264
      %v245 = vsel %vm243, %v205, 0
      %v248 = vsel %vm243, %v206, 0
      %v251 = vsel %vm243, %v207, 0
      %v254 = vsel %vm243, %v208, 0
      %v257 = vsel %vm243, %v209, 0
      %259 = vmatpush.bf16.msra.mxu0 0
      %260 = vmatpush.bf16.msra.mxu0 0
      %261 = vmatpush.bf16.msra.mxu0 0
      %262 = vmatpush.bf16.msra.mxu0 0
      %263 = vmatpush.bf16.msra.mxu0 %v238
      %264 = vmatpush.bf16.msra.mxu0 %v237
      %265 = vmatpush.bf16.msra.mxu0 %v236
      %266 = vmatpush.bf16.msra.mxu0 %v235
      %267 = vmatmul.bf16.gmra.mxu0 %v245
      %v268 = vpop.f32.mrf.mxu0
      %v269 = vadd.f32 0.0, %v268
      %v270 = vpop.f32.mrf.mxu0
      %v271 = vadd.f32 0.0, %v270
      %272 = vmatmul.bf16.gmra.mxu0 %v248
      %v273 = vpop.f32.mrf.mxu0
      %v274 = vadd.f32 0.0, %v273
      %v275 = vpop.f32.mrf.mxu0
      %v276 = vadd.f32 0.0, %v275
      %277 = vmatmul.bf16.gmra.mxu0 %v251
      %v278 = vpop.f32.mrf.mxu0
      %v279 = vadd.f32 0.0, %v278
      %v280 = vpop.f32.mrf.mxu0
      %v281 = vadd.f32 0.0, %v280
      %282 = vmatmul.bf16.gmra.mxu0 %v254
      %v283 = vpop.f32.mrf.mxu0
      %v284 = vadd.f32 0.0, %v283
      %v285 = vpop.f32.mrf.mxu0
      %v286 = vadd.f32 0.0, %v285
      %287 = vmatmul.bf16.gmra.mxu0 %v257
      %v288 = vpop.f32.mrf.mxu0
      %v289 = vadd.f32 0.0, %v288
      %v290 = vpop.f32.mrf.mxu0
      %v291 = vadd.f32 0.0, %v290
      %292 = vdwg.mxu0
      %v301 = vunpack.c.l.b16 %v187
      %v302 = vunpack.c.l.b16 %v188
      %v303 = vunpack.c.l.b16 %v189
      %v304 = vunpack.c.l.b16 %v190
      %v305 = vunpack.c.l.b16 %v191
      %v306 = vunpack.c.l.b16 %v192
      %v307 = vunpack.c.l.b16 %v193
      %v308 = vunpack.c.l.b16 %v194
      %v309 = vpack.c.b16 %v302, %v301
      %v310 = vpack.c.b16 %v304, %v303
      %v311 = vpack.c.b16 %v306, %v305
      %v312 = vpack.c.b16 %v308, %v307
      %v318 = vsel %vm243, %v182, 0
      %v321 = vsel %vm243, %v183, 0
      %v324 = vsel %vm243, %v184, 0
      %v327 = vsel %vm243, %v185, 0
      %v330 = vsel %vm243, %v186, 0
      %332 = vmatpush.bf16.msra.mxu0 0
      %333 = vmatpush.bf16.msra.mxu0 0
      %334 = vmatpush.bf16.msra.mxu0 0
      %335 = vmatpush.bf16.msra.mxu0 0
      %336 = vmatpush.bf16.msra.mxu0 %v312
      %337 = vmatpush.bf16.msra.mxu0 %v311
      %338 = vmatpush.bf16.msra.mxu0 %v310
      %339 = vmatpush.bf16.msra.mxu0 %v309
      %340 = vmatmul.bf16.gmra.mxu0 %v318
      %v341 = vpop.f32.mrf.mxu0
      %v342 = vadd.f32 %v269, %v341
      %v343 = vpop.f32.mrf.mxu0
      %v344 = vadd.f32 %v271, %v343
      %345 = vmatmul.bf16.gmra.mxu0 %v321
      %v346 = vpop.f32.mrf.mxu0
      %v347 = vadd.f32 %v274, %v346
      %v348 = vpop.f32.mrf.mxu0
      %v349 = vadd.f32 %v276, %v348
      %350 = vmatmul.bf16.gmra.mxu0 %v324
      %v351 = vpop.f32.mrf.mxu0
      %v352 = vadd.f32 %v279, %v351
      %v353 = vpop.f32.mrf.mxu0
      %v354 = vadd.f32 %v281, %v353
      %355 = vmatmul.bf16.gmra.mxu0 %v327
      %v356 = vpop.f32.mrf.mxu0
      %v357 = vadd.f32 %v284, %v356
      %v358 = vpop.f32.mrf.mxu0
      %v359 = vadd.f32 %v286, %v358
      %360 = vmatmul.bf16.gmra.mxu0 %v330
      %v361 = vpop.f32.mrf.mxu0
      %v362 = vadd.f32 %v289, %v361
      %v363 = vpop.f32.mrf.mxu0
      %v364 = vadd.f32 %v291, %v363
      %365 = vdwg.mxu0
      %v366 = vld [vmem:[%s165 + $0x2] sm:$0xff]
      %v367 = vld [vmem:[%s165 + $0xa] sm:$0xff]
      %v368 = vld [vmem:[%s165 + $0x12] sm:$0xff]
      %v369 = vld [vmem:[%s165 + $0x1a] sm:$0xff]
      %v370 = vld [vmem:[%s165 + $0x22] sm:$0xff]
      %v371 = vld [vmem:[%s165 + $0x2a] sm:$0xff]
      %v372 = vld [vmem:[%s165 + $0x32] sm:$0xff]
      %v373 = vld [vmem:[%s165 + $0x3a] sm:$0xff]
      %v374 = vld [vmem:[%s165 + $0x42] sm:$0xff]
      %v375 = vld [vmem:[%s165 + $0x4a] sm:$0xff]
      %v376 = vpack.c.bf16 %v367, %v366
      %v377 = vpack.c.bf16 %v369, %v368
      %v378 = vpack.c.bf16 %v371, %v370
      %v379 = vpack.c.bf16 %v373, %v372
      %v380 = vpack.c.bf16 %v375, %v374
      %s381 = scalar_lea.vmem %s1, 64
      %v382 = vld [vmem:[%s381] sm:$0xf]
      %v383 = vld [vmem:[%s381 + $0x4] sm:$0xf]
      %v384 = vld [vmem:[%s381 + $0x8] sm:$0xf]
      %v385 = vld [vmem:[%s381 + $0xc] sm:$0xf]
      %v386 = vld [vmem:[%s381 + $0x10] sm:$0xf]
      %v387 = vld [vmem:[%s381 + $0x14] sm:$0xf]
      %v388 = vld [vmem:[%s381 + $0x18] sm:$0xf]
      %v389 = vld [vmem:[%s381 + $0x1c] sm:$0xf]
      %v398 = vunpack.c.l.b16 %v382
      %v399 = vunpack.c.l.b16 %v383
      %v400 = vunpack.c.l.b16 %v384
      %v401 = vunpack.c.l.b16 %v385
      %v402 = vunpack.c.l.b16 %v386
      %v403 = vunpack.c.l.b16 %v387
      %v404 = vunpack.c.l.b16 %v388
      %v405 = vunpack.c.l.b16 %v389
      %v406 = vpack.c.b16 %v399, %v398
      %v407 = vpack.c.b16 %v401, %v400
      %v408 = vpack.c.b16 %v403, %v402
      %v409 = vpack.c.b16 %v405, %v404
      %v415 = vsel %vm243, %v376, 0
      %v418 = vsel %vm243, %v377, 0
      %v421 = vsel %vm243, %v378, 0
      %v424 = vsel %vm243, %v379, 0
      %v427 = vsel %vm243, %v380, 0
      %429 = vmatpush.bf16.msra.mxu0 0
      %430 = vmatpush.bf16.msra.mxu0 0
      %431 = vmatpush.bf16.msra.mxu0 0
      %432 = vmatpush.bf16.msra.mxu0 0
      %433 = vmatpush.bf16.msra.mxu0 %v409
      %434 = vmatpush.bf16.msra.mxu0 %v408
      %435 = vmatpush.bf16.msra.mxu0 %v407
      %436 = vmatpush.bf16.msra.mxu0 %v406
      %437 = vmatmul.bf16.gmra.mxu0 %v415
      %v438 = vpop.f32.mrf.mxu0
      %v439 = vadd.f32 0.0, %v438
      %v440 = vpop.f32.mrf.mxu0
      %v441 = vadd.f32 0.0, %v440
      %442 = vmatmul.bf16.gmra.mxu0 %v418
      %v443 = vpop.f32.mrf.mxu0
      %v444 = vadd.f32 0.0, %v443
      %v445 = vpop.f32.mrf.mxu0
      %v446 = vadd.f32 0.0, %v445
      %447 = vmatmul.bf16.gmra.mxu0 %v421
      %v448 = vpop.f32.mrf.mxu0
      %v449 = vadd.f32 0.0, %v448
      %v450 = vpop.f32.mrf.mxu0
      %v451 = vadd.f32 0.0, %v450
      %452 = vmatmul.bf16.gmra.mxu0 %v424
      %v453 = vpop.f32.mrf.mxu0
      %v454 = vadd.f32 0.0, %v453
      %v455 = vpop.f32.mrf.mxu0
      %v456 = vadd.f32 0.0, %v455
      %457 = vmatmul.bf16.gmra.mxu0 %v427
      %v458 = vpop.f32.mrf.mxu0
      %v459 = vadd.f32 0.0, %v458
      %v460 = vpop.f32.mrf.mxu0
      %v461 = vadd.f32 0.0, %v460
      %462 = vdwg.mxu0
      %v463 = vadd.f32 %v342, %v439
      %v464 = vadd.f32 %v344, %v441
      %v465 = vadd.f32 %v347, %v444
      %v466 = vadd.f32 %v349, %v446
      %v467 = vadd.f32 %v352, %v449
      %v468 = vadd.f32 %v354, %v451
      %v469 = vadd.f32 %v357, %v454
      %v470 = vadd.f32 %v359, %v456
      %v471 = vadd.f32 %v362, %v459
      %v472 = vadd.f32 %v364, %v461
      %v473 = vld [vmem:[%s165 + $0xa] sm:$0xff]
      %v474 = vld [vmem:[%s165 + $0x12] sm:$0xff]
      %v475 = vld [vmem:[%s165 + $0x1a] sm:$0xff]
      %v476 = vld [vmem:[%s165 + $0x22] sm:$0xff]
      %v477 = vld [vmem:[%s165 + $0x2a] sm:$0xff]
      %v478 = vld [vmem:[%s165 + $0x32] sm:$0xff]
      %v479 = vld [vmem:[%s165 + $0x3a] sm:$0xff]
      %v480 = vld [vmem:[%s165 + $0x42] sm:$0xff]
      %v481 = vld [vmem:[%s165 + $0x4a] sm:$0xff]
      %v482 = vld [vmem:[%s165 + $0x52] sm:$0xff]
      %v483 = vpack.c.bf16 %v474, %v473
      %v484 = vpack.c.bf16 %v476, %v475
      %v485 = vpack.c.bf16 %v478, %v477
      %v486 = vpack.c.bf16 %v480, %v479
      %v487 = vpack.c.bf16 %v482, %v481
      %s488 = scalar_lea.vmem %s1, 96
      %v489 = vld [vmem:[%s488] sm:$0xf]
      %v490 = vld [vmem:[%s488 + $0x4] sm:$0xf]
      %v491 = vld [vmem:[%s488 + $0x8] sm:$0xf]
      %v492 = vld [vmem:[%s488 + $0xc] sm:$0xf]
      %v493 = vld [vmem:[%s488 + $0x10] sm:$0xf]
      %v494 = vld [vmem:[%s488 + $0x14] sm:$0xf]
      %v495 = vld [vmem:[%s488 + $0x18] sm:$0xf]
      %v496 = vld [vmem:[%s488 + $0x1c] sm:$0xf]
      %v505 = vunpack.c.l.b16 %v489
      %v506 = vunpack.c.l.b16 %v490
      %v507 = vunpack.c.l.b16 %v491
      %v508 = vunpack.c.l.b16 %v492
      %v509 = vunpack.c.l.b16 %v493
      %v510 = vunpack.c.l.b16 %v494
      %v511 = vunpack.c.l.b16 %v495
      %v512 = vunpack.c.l.b16 %v496
      %v513 = vpack.c.b16 %v506, %v505
      %v514 = vpack.c.b16 %v508, %v507
      %v515 = vpack.c.b16 %v510, %v509
      %v516 = vpack.c.b16 %v512, %v511
      %v522 = vsel %vm243, %v483, 0
      %v525 = vsel %vm243, %v484, 0
      %v528 = vsel %vm243, %v485, 0
      %v531 = vsel %vm243, %v486, 0
      %v534 = vsel %vm243, %v487, 0
      %536 = vmatpush.bf16.msra.mxu0 0
      %537 = vmatpush.bf16.msra.mxu0 0
      %538 = vmatpush.bf16.msra.mxu0 0
      %539 = vmatpush.bf16.msra.mxu0 0
      %540 = vmatpush.bf16.msra.mxu0 %v516
      %541 = vmatpush.bf16.msra.mxu0 %v515
      %542 = vmatpush.bf16.msra.mxu0 %v514
      %543 = vmatpush.bf16.msra.mxu0 %v513
      %544 = vmatmul.bf16.gmra.mxu0 %v522
      %v545 = vpop.f32.mrf.mxu0
      %v546 = vadd.f32 0.0, %v545
      %v547 = vpop.f32.mrf.mxu0
      %v548 = vadd.f32 0.0, %v547
      %549 = vmatmul.bf16.gmra.mxu0 %v525
      %v550 = vpop.f32.mrf.mxu0
      %v551 = vadd.f32 0.0, %v550
      %v552 = vpop.f32.mrf.mxu0
      %v553 = vadd.f32 0.0, %v552
      %554 = vmatmul.bf16.gmra.mxu0 %v528
      %v555 = vpop.f32.mrf.mxu0
      %v556 = vadd.f32 0.0, %v555
      %v557 = vpop.f32.mrf.mxu0
      %v558 = vadd.f32 0.0, %v557
      %559 = vmatmul.bf16.gmra.mxu0 %v531
      %v560 = vpop.f32.mrf.mxu0
      %v561 = vadd.f32 0.0, %v560
      %v562 = vpop.f32.mrf.mxu0
      %v563 = vadd.f32 0.0, %v562
      %564 = vmatmul.bf16.gmra.mxu0 %v534
      %v565 = vpop.f32.mrf.mxu0
      %v566 = vadd.f32 0.0, %v565
      %v567 = vpop.f32.mrf.mxu0
      %v568 = vadd.f32 0.0, %v567
      %569 = vdwg.mxu0
      %v570 = vadd.f32 %v463, %v546
      %v571 = vadd.f32 %v464, %v548
      %v572 = vadd.f32 %v465, %v551
      %v573 = vadd.f32 %v466, %v553
      %v574 = vadd.f32 %v467, %v556
      %v575 = vadd.f32 %v468, %v558
      %v576 = vadd.f32 %v469, %v561
      %v577 = vadd.f32 %v470, %v563
      %v578 = vadd.f32 %v471, %v566
      %v579 = vadd.f32 %v472, %v568
      %v580 = vld [vmem:[%s165 + $0xb] sm:$0xff]
      %v581 = vld [vmem:[%s165 + $0x13] sm:$0xff]
      %v582 = vld [vmem:[%s165 + $0x1b] sm:$0xff]
      %v583 = vld [vmem:[%s165 + $0x23] sm:$0xff]
      %v584 = vld [vmem:[%s165 + $0x2b] sm:$0xff]
      %v585 = vld [vmem:[%s165 + $0x33] sm:$0xff]
      %v586 = vld [vmem:[%s165 + $0x3b] sm:$0xff]
      %v587 = vld [vmem:[%s165 + $0x43] sm:$0xff]
      %v588 = vld [vmem:[%s165 + $0x4b] sm:$0xff]
      %v589 = vld [vmem:[%s165 + $0x53] sm:$0xff]
      %v590 = vpack.c.bf16 %v581, %v580
      %v591 = vpack.c.bf16 %v583, %v582
      %v592 = vpack.c.bf16 %v585, %v584
      %v593 = vpack.c.bf16 %v587, %v586
      %v594 = vpack.c.bf16 %v589, %v588
      %s595 = scalar_lea.vmem %s1, 128
      %v596 = vld [vmem:[%s595] sm:$0xf]
      %v597 = vld [vmem:[%s595 + $0x4] sm:$0xf]
      %v598 = vld [vmem:[%s595 + $0x8] sm:$0xf]
      %v599 = vld [vmem:[%s595 + $0xc] sm:$0xf]
      %v600 = vld [vmem:[%s595 + $0x10] sm:$0xf]
      %v601 = vld [vmem:[%s595 + $0x14] sm:$0xf]
      %v602 = vld [vmem:[%s595 + $0x18] sm:$0xf]
      %v603 = vld [vmem:[%s595 + $0x1c] sm:$0xf]
      %v612 = vunpack.c.l.b16 %v596
      %v613 = vunpack.c.l.b16 %v597
      %v614 = vunpack.c.l.b16 %v598
      %v615 = vunpack.c.l.b16 %v599
      %v616 = vunpack.c.l.b16 %v600
      %v617 = vunpack.c.l.b16 %v601
      %v618 = vunpack.c.l.b16 %v602
      %v619 = vunpack.c.l.b16 %v603
      %v620 = vpack.c.b16 %v613, %v612
      %v621 = vpack.c.b16 %v615, %v614
      %v622 = vpack.c.b16 %v617, %v616
      %v623 = vpack.c.b16 %v619, %v618
      %v629 = vsel %vm243, %v590, 0
      %v632 = vsel %vm243, %v591, 0
      %v635 = vsel %vm243, %v592, 0
      %v638 = vsel %vm243, %v593, 0
      %v641 = vsel %vm243, %v594, 0
      %643 = vmatpush.bf16.msra.mxu0 0
      %644 = vmatpush.bf16.msra.mxu0 0
      %645 = vmatpush.bf16.msra.mxu0 0
      %646 = vmatpush.bf16.msra.mxu0 0
      %647 = vmatpush.bf16.msra.mxu0 %v623
      %648 = vmatpush.bf16.msra.mxu0 %v622
      %649 = vmatpush.bf16.msra.mxu0 %v621
      %650 = vmatpush.bf16.msra.mxu0 %v620
      %651 = vmatmul.bf16.gmra.mxu0 %v629
      %v652 = vpop.f32.mrf.mxu0
      %v653 = vadd.f32 0.0, %v652
      %v654 = vpop.f32.mrf.mxu0
      %v655 = vadd.f32 0.0, %v654
      %656 = vmatmul.bf16.gmra.mxu0 %v632
      %v657 = vpop.f32.mrf.mxu0
      %v658 = vadd.f32 0.0, %v657
      %v659 = vpop.f32.mrf.mxu0
      %v660 = vadd.f32 0.0, %v659
      %661 = vmatmul.bf16.gmra.mxu0 %v635
      %v662 = vpop.f32.mrf.mxu0
      %v663 = vadd.f32 0.0, %v662
      %v664 = vpop.f32.mrf.mxu0
      %v665 = vadd.f32 0.0, %v664
      %666 = vmatmul.bf16.gmra.mxu0 %v638
      %v667 = vpop.f32.mrf.mxu0
      %v668 = vadd.f32 0.0, %v667
      %v669 = vpop.f32.mrf.mxu0
      %v670 = vadd.f32 0.0, %v669
      %671 = vmatmul.bf16.gmra.mxu0 %v641
      %v672 = vpop.f32.mrf.mxu0
      %v673 = vadd.f32 0.0, %v672
      %v674 = vpop.f32.mrf.mxu0
      %v675 = vadd.f32 0.0, %v674
      %676 = vdwg.mxu0
      %v677 = vadd.f32 %v570, %v653
      %v678 = vadd.f32 %v571, %v655
      %v679 = vadd.f32 %v572, %v658
      %v680 = vadd.f32 %v573, %v660
      %v681 = vadd.f32 %v574, %v663
      %v682 = vadd.f32 %v575, %v665
      %v683 = vadd.f32 %v576, %v668
      %v684 = vadd.f32 %v577, %v670
      %v685 = vadd.f32 %v578, %v673
      %v686 = vadd.f32 %v579, %v675
      %v687 = vld [vmem:[%s165 + $0xc] sm:$0xff]
      %v688 = vld [vmem:[%s165 + $0x14] sm:$0xff]
      %v689 = vld [vmem:[%s165 + $0x1c] sm:$0xff]
      %v690 = vld [vmem:[%s165 + $0x24] sm:$0xff]
      %v691 = vld [vmem:[%s165 + $0x2c] sm:$0xff]
      %v692 = vld [vmem:[%s165 + $0x34] sm:$0xff]
      %v693 = vld [vmem:[%s165 + $0x3c] sm:$0xff]
      %v694 = vld [vmem:[%s165 + $0x44] sm:$0xff]
      %v695 = vld [vmem:[%s165 + $0x4c] sm:$0xff]
      %v696 = vld [vmem:[%s165 + $0x54] sm:$0xff]
      %v697 = vpack.c.bf16 %v688, %v687
      %v698 = vpack.c.bf16 %v690, %v689
      %v699 = vpack.c.bf16 %v692, %v691
      %v700 = vpack.c.bf16 %v694, %v693
      %v701 = vpack.c.bf16 %v696, %v695
      %s702 = scalar_lea.vmem %s1, 160
      %v703 = vld [vmem:[%s702] sm:$0xf]
      %v704 = vld [vmem:[%s702 + $0x4] sm:$0xf]
      %v705 = vld [vmem:[%s702 + $0x8] sm:$0xf]
      %v706 = vld [vmem:[%s702 + $0xc] sm:$0xf]
      %v707 = vld [vmem:[%s702 + $0x10] sm:$0xf]
      %v708 = vld [vmem:[%s702 + $0x14] sm:$0xf]
      %v709 = vld [vmem:[%s702 + $0x18] sm:$0xf]
      %v710 = vld [vmem:[%s702 + $0x1c] sm:$0xf]
      %v719 = vunpack.c.l.b16 %v703
      %v720 = vunpack.c.l.b16 %v704
      %v721 = vunpack.c.l.b16 %v705
      %v722 = vunpack.c.l.b16 %v706
      %v723 = vunpack.c.l.b16 %v707
      %v724 = vunpack.c.l.b16 %v708
      %v725 = vunpack.c.l.b16 %v709
      %v726 = vunpack.c.l.b16 %v710
      %v727 = vpack.c.b16 %v720, %v719
      %v728 = vpack.c.b16 %v722, %v721
      %v729 = vpack.c.b16 %v724, %v723
      %v730 = vpack.c.b16 %v726, %v725
      %v736 = vsel %vm243, %v697, 0
      %v739 = vsel %vm243, %v698, 0
      %v742 = vsel %vm243, %v699, 0
      %v745 = vsel %vm243, %v700, 0
      %v748 = vsel %vm243, %v701, 0
      %750 = vmatpush.bf16.msra.mxu0 0
      %751 = vmatpush.bf16.msra.mxu0 0
      %752 = vmatpush.bf16.msra.mxu0 0
      %753 = vmatpush.bf16.msra.mxu0 0
      %754 = vmatpush.bf16.msra.mxu0 %v730
      %755 = vmatpush.bf16.msra.mxu0 %v729
      %756 = vmatpush.bf16.msra.mxu0 %v728
      %757 = vmatpush.bf16.msra.mxu0 %v727
      %758 = vmatmul.bf16.gmra.mxu0 %v736
      %v759 = vpop.f32.mrf.mxu0
      %v760 = vadd.f32 0.0, %v759
      %v761 = vpop.f32.mrf.mxu0
      %v762 = vadd.f32 0.0, %v761
      %763 = vmatmul.bf16.gmra.mxu0 %v739
      %v764 = vpop.f32.mrf.mxu0
      %v765 = vadd.f32 0.0, %v764
      %v766 = vpop.f32.mrf.mxu0
      %v767 = vadd.f32 0.0, %v766
      %768 = vmatmul.bf16.gmra.mxu0 %v742
      %v769 = vpop.f32.mrf.mxu0
      %v770 = vadd.f32 0.0, %v769
      %v771 = vpop.f32.mrf.mxu0
      %v772 = vadd.f32 0.0, %v771
      %773 = vmatmul.bf16.gmra.mxu0 %v745
      %v774 = vpop.f32.mrf.mxu0
      %v775 = vadd.f32 0.0, %v774
      %v776 = vpop.f32.mrf.mxu0
      %v777 = vadd.f32 0.0, %v776
      %778 = vmatmul.bf16.gmra.mxu0 %v748
      %v779 = vpop.f32.mrf.mxu0
      %v780 = vadd.f32 0.0, %v779
      %v781 = vpop.f32.mrf.mxu0
      %v782 = vadd.f32 0.0, %v781
      %783 = vdwg.mxu0
      %v784 = vadd.f32 %v677, %v760
      %v785 = vadd.f32 %v678, %v762
      %v786 = vadd.f32 %v679, %v765
      %v787 = vadd.f32 %v680, %v767
      %v788 = vadd.f32 %v681, %v770
      %v789 = vadd.f32 %v682, %v772
      %v790 = vadd.f32 %v683, %v775
      %v791 = vadd.f32 %v684, %v777
      %v792 = vadd.f32 %v685, %v780
      %v793 = vadd.f32 %v686, %v782
      %v794 = vld [vmem:[%s165 + $0x14] sm:$0xff]
      %v795 = vld [vmem:[%s165 + $0x1c] sm:$0xff]
      %v796 = vld [vmem:[%s165 + $0x24] sm:$0xff]
      %v797 = vld [vmem:[%s165 + $0x2c] sm:$0xff]
      %v798 = vld [vmem:[%s165 + $0x34] sm:$0xff]
      %v799 = vld [vmem:[%s165 + $0x3c] sm:$0xff]
      %v800 = vld [vmem:[%s165 + $0x44] sm:$0xff]
      %v801 = vld [vmem:[%s165 + $0x4c] sm:$0xff]
      %v802 = vld [vmem:[%s165 + $0x54] sm:$0xff]
      %v803 = vld [vmem:[%s165 + $0x5c] sm:$0xff]
      %v804 = vpack.c.bf16 %v795, %v794
      %v805 = vpack.c.bf16 %v797, %v796
      %v806 = vpack.c.bf16 %v799, %v798
      %v807 = vpack.c.bf16 %v801, %v800
      %v808 = vpack.c.bf16 %v803, %v802
      %s809 = scalar_lea.vmem %s1, 192
      %v810 = vld [vmem:[%s809] sm:$0xf]
      %v811 = vld [vmem:[%s809 + $0x4] sm:$0xf]
      %v812 = vld [vmem:[%s809 + $0x8] sm:$0xf]
      %v813 = vld [vmem:[%s809 + $0xc] sm:$0xf]
      %v814 = vld [vmem:[%s809 + $0x10] sm:$0xf]
      %v815 = vld [vmem:[%s809 + $0x14] sm:$0xf]
      %v816 = vld [vmem:[%s809 + $0x18] sm:$0xf]
      %v817 = vld [vmem:[%s809 + $0x1c] sm:$0xf]
      %v826 = vunpack.c.l.b16 %v810
      %v827 = vunpack.c.l.b16 %v811
      %v828 = vunpack.c.l.b16 %v812
      %v829 = vunpack.c.l.b16 %v813
      %v830 = vunpack.c.l.b16 %v814
      %v831 = vunpack.c.l.b16 %v815
      %v832 = vunpack.c.l.b16 %v816
      %v833 = vunpack.c.l.b16 %v817
      %v834 = vpack.c.b16 %v827, %v826
      %v835 = vpack.c.b16 %v829, %v828
      %v836 = vpack.c.b16 %v831, %v830
      %v837 = vpack.c.b16 %v833, %v832
      %v843 = vsel %vm243, %v804, 0
      %v846 = vsel %vm243, %v805, 0
      %v849 = vsel %vm243, %v806, 0
      %v852 = vsel %vm243, %v807, 0
      %v855 = vsel %vm243, %v808, 0
      %857 = vmatpush.bf16.msra.mxu0 0
      %858 = vmatpush.bf16.msra.mxu0 0
      %859 = vmatpush.bf16.msra.mxu0 0
      %860 = vmatpush.bf16.msra.mxu0 0
      %861 = vmatpush.bf16.msra.mxu0 %v837
      %862 = vmatpush.bf16.msra.mxu0 %v836
      %863 = vmatpush.bf16.msra.mxu0 %v835
      %864 = vmatpush.bf16.msra.mxu0 %v834
      %865 = vmatmul.bf16.gmra.mxu0 %v843
      %v866 = vpop.f32.mrf.mxu0
      %v867 = vadd.f32 0.0, %v866
      %v868 = vpop.f32.mrf.mxu0
      %v869 = vadd.f32 0.0, %v868
      %870 = vmatmul.bf16.gmra.mxu0 %v846
      %v871 = vpop.f32.mrf.mxu0
      %v872 = vadd.f32 0.0, %v871
      %v873 = vpop.f32.mrf.mxu0
      %v874 = vadd.f32 0.0, %v873
      %875 = vmatmul.bf16.gmra.mxu0 %v849
      %v876 = vpop.f32.mrf.mxu0
      %v877 = vadd.f32 0.0, %v876
      %v878 = vpop.f32.mrf.mxu0
      %v879 = vadd.f32 0.0, %v878
      %880 = vmatmul.bf16.gmra.mxu0 %v852
      %v881 = vpop.f32.mrf.mxu0
      %v882 = vadd.f32 0.0, %v881
      %v883 = vpop.f32.mrf.mxu0
      %v884 = vadd.f32 0.0, %v883
      %885 = vmatmul.bf16.gmra.mxu0 %v855
      %v886 = vpop.f32.mrf.mxu0
      %v887 = vadd.f32 0.0, %v886
      %v888 = vpop.f32.mrf.mxu0
      %v889 = vadd.f32 0.0, %v888
      %890 = vdwg.mxu0
      %v891 = vadd.f32 %v784, %v867
      %v892 = vadd.f32 %v785, %v869
      %v893 = vadd.f32 %v786, %v872
      %v894 = vadd.f32 %v787, %v874
      %v895 = vadd.f32 %v788, %v877
      %v896 = vadd.f32 %v789, %v879
      %v897 = vadd.f32 %v790, %v882
      %v898 = vadd.f32 %v791, %v884
      %v899 = vadd.f32 %v792, %v887
      %v900 = vadd.f32 %v793, %v889
      %v901 = vld [vmem:[%s165 + $0x15] sm:$0xff]
      %v902 = vld [vmem:[%s165 + $0x1d] sm:$0xff]
      %v903 = vld [vmem:[%s165 + $0x25] sm:$0xff]
      %v904 = vld [vmem:[%s165 + $0x2d] sm:$0xff]
      %v905 = vld [vmem:[%s165 + $0x35] sm:$0xff]
      %v906 = vld [vmem:[%s165 + $0x3d] sm:$0xff]
      %v907 = vld [vmem:[%s165 + $0x45] sm:$0xff]
      %v908 = vld [vmem:[%s165 + $0x4d] sm:$0xff]
      %v909 = vld [vmem:[%s165 + $0x55] sm:$0xff]
      %v910 = vld [vmem:[%s165 + $0x5d] sm:$0xff]
      %v911 = vpack.c.bf16 %v902, %v901
      %v912 = vpack.c.bf16 %v904, %v903
      %v913 = vpack.c.bf16 %v906, %v905
      %v914 = vpack.c.bf16 %v908, %v907
      %v915 = vpack.c.bf16 %v910, %v909
      %s916 = scalar_lea.vmem %s1, 224
      %v917 = vld [vmem:[%s916] sm:$0xf]
      %v918 = vld [vmem:[%s916 + $0x4] sm:$0xf]
      %v919 = vld [vmem:[%s916 + $0x8] sm:$0xf]
      %v920 = vld [vmem:[%s916 + $0xc] sm:$0xf]
      %v921 = vld [vmem:[%s916 + $0x10] sm:$0xf]
      %v922 = vld [vmem:[%s916 + $0x14] sm:$0xf]
      %v923 = vld [vmem:[%s916 + $0x18] sm:$0xf]
      %v924 = vld [vmem:[%s916 + $0x1c] sm:$0xf]
      %v933 = vunpack.c.l.b16 %v917
      %v934 = vunpack.c.l.b16 %v918
      %v935 = vunpack.c.l.b16 %v919
      %v936 = vunpack.c.l.b16 %v920
      %v937 = vunpack.c.l.b16 %v921
      %v938 = vunpack.c.l.b16 %v922
      %v939 = vunpack.c.l.b16 %v923
      %v940 = vunpack.c.l.b16 %v924
      %v941 = vpack.c.b16 %v934, %v933
      %v942 = vpack.c.b16 %v936, %v935
      %v943 = vpack.c.b16 %v938, %v937
      %v944 = vpack.c.b16 %v940, %v939
      %v950 = vsel %vm243, %v911, 0
      %v953 = vsel %vm243, %v912, 0
      %v956 = vsel %vm243, %v913, 0
      %v959 = vsel %vm243, %v914, 0
      %v962 = vsel %vm243, %v915, 0
      %964 = vmatpush.bf16.msra.mxu0 0
      %965 = vmatpush.bf16.msra.mxu0 0
      %966 = vmatpush.bf16.msra.mxu0 0
      %967 = vmatpush.bf16.msra.mxu0 0
      %968 = vmatpush.bf16.msra.mxu0 %v944
      %969 = vmatpush.bf16.msra.mxu0 %v943
      %970 = vmatpush.bf16.msra.mxu0 %v942
      %971 = vmatpush.bf16.msra.mxu0 %v941
      %972 = vmatmul.bf16.gmra.mxu0 %v950
      %v973 = vpop.f32.mrf.mxu0
      %v974 = vadd.f32 0.0, %v973
      %v975 = vpop.f32.mrf.mxu0
      %v976 = vadd.f32 0.0, %v975
      %977 = vmatmul.bf16.gmra.mxu0 %v953
      %v978 = vpop.f32.mrf.mxu0
      %v979 = vadd.f32 0.0, %v978
      %v980 = vpop.f32.mrf.mxu0
      %v981 = vadd.f32 0.0, %v980
      %982 = vmatmul.bf16.gmra.mxu0 %v956
      %v983 = vpop.f32.mrf.mxu0
      %v984 = vadd.f32 0.0, %v983
      %v985 = vpop.f32.mrf.mxu0
      %v986 = vadd.f32 0.0, %v985
      %987 = vmatmul.bf16.gmra.mxu0 %v959
      %v988 = vpop.f32.mrf.mxu0
      %v989 = vadd.f32 0.0, %v988
      %v990 = vpop.f32.mrf.mxu0
      %v991 = vadd.f32 0.0, %v990
      %992 = vmatmul.bf16.gmra.mxu0 %v962
      %v993 = vpop.f32.mrf.mxu0
      %v994 = vadd.f32 0.0, %v993
      %v995 = vpop.f32.mrf.mxu0
      %v996 = vadd.f32 0.0, %v995
      %997 = vdwg.mxu0
      %v998 = vadd.f32 %v891, %v974
      %v999 = vadd.f32 %v892, %v976
      %v1000 = vadd.f32 %v893, %v979
      %v1001 = vadd.f32 %v894, %v981
      %v1002 = vadd.f32 %v895, %v984
      %v1003 = vadd.f32 %v896, %v986
      %v1004 = vadd.f32 %v897, %v989
      %v1005 = vadd.f32 %v898, %v991
      %v1006 = vadd.f32 %v899, %v994
      %v1007 = vadd.f32 %v900, %v996
      %v1008 = vld [vmem:[%s165 + $0x16] sm:$0xff]
      %v1009 = vld [vmem:[%s165 + $0x1e] sm:$0xff]
      %v1010 = vld [vmem:[%s165 + $0x26] sm:$0xff]
      %v1011 = vld [vmem:[%s165 + $0x2e] sm:$0xff]
      %v1012 = vld [vmem:[%s165 + $0x36] sm:$0xff]
      %v1013 = vld [vmem:[%s165 + $0x3e] sm:$0xff]
      %v1014 = vld [vmem:[%s165 + $0x46] sm:$0xff]
      %v1015 = vld [vmem:[%s165 + $0x4e] sm:$0xff]
      %v1016 = vld [vmem:[%s165 + $0x56] sm:$0xff]
      %v1017 = vld [vmem:[%s165 + $0x5e] sm:$0xff]
      %v1018 = vpack.c.bf16 %v1009, %v1008
      %v1019 = vpack.c.bf16 %v1011, %v1010
      %v1020 = vpack.c.bf16 %v1013, %v1012
      %v1021 = vpack.c.bf16 %v1015, %v1014
      %v1022 = vpack.c.bf16 %v1017, %v1016
      %s1023 = scalar_lea.vmem %s1, 256
      %v1024 = vld [vmem:[%s1023] sm:$0xf]
      %v1025 = vld [vmem:[%s1023 + $0x4] sm:$0xf]
      %v1026 = vld [vmem:[%s1023 + $0x8] sm:$0xf]
      %v1027 = vld [vmem:[%s1023 + $0xc] sm:$0xf]
      %v1028 = vld [vmem:[%s1023 + $0x10] sm:$0xf]
      %v1029 = vld [vmem:[%s1023 + $0x14] sm:$0xf]
      %v1030 = vld [vmem:[%s1023 + $0x18] sm:$0xf]
      %v1031 = vld [vmem:[%s1023 + $0x1c] sm:$0xf]
      %v1040 = vunpack.c.l.b16 %v1024
      %v1041 = vunpack.c.l.b16 %v1025
      %v1042 = vunpack.c.l.b16 %v1026
      %v1043 = vunpack.c.l.b16 %v1027
      %v1044 = vunpack.c.l.b16 %v1028
      %v1045 = vunpack.c.l.b16 %v1029
      %v1046 = vunpack.c.l.b16 %v1030
      %v1047 = vunpack.c.l.b16 %v1031
      %v1048 = vpack.c.b16 %v1041, %v1040
      %v1049 = vpack.c.b16 %v1043, %v1042
      %v1050 = vpack.c.b16 %v1045, %v1044
      %v1051 = vpack.c.b16 %v1047, %v1046
      %v1057 = vsel %vm243, %v1018, 0
      %v1060 = vsel %vm243, %v1019, 0
      %v1063 = vsel %vm243, %v1020, 0
      %v1066 = vsel %vm243, %v1021, 0
      %v1069 = vsel %vm243, %v1022, 0
      %1071 = vmatpush.bf16.msra.mxu0 0
      %1072 = vmatpush.bf16.msra.mxu0 0
      %1073 = vmatpush.bf16.msra.mxu0 0
      %1074 = vmatpush.bf16.msra.mxu0 0
      %1075 = vmatpush.bf16.msra.mxu0 %v1051
      %1076 = vmatpush.bf16.msra.mxu0 %v1050
      %1077 = vmatpush.bf16.msra.mxu0 %v1049
      %1078 = vmatpush.bf16.msra.mxu0 %v1048
      %1079 = vmatmul.bf16.gmra.mxu0 %v1057
      %v1080 = vpop.f32.mrf.mxu0
      %v1081 = vadd.f32 0.0, %v1080
      %v1082 = vpop.f32.mrf.mxu0
      %v1083 = vadd.f32 0.0, %v1082
      %1084 = vmatmul.bf16.gmra.mxu0 %v1060
      %v1085 = vpop.f32.mrf.mxu0
      %v1086 = vadd.f32 0.0, %v1085
      %v1087 = vpop.f32.mrf.mxu0
      %v1088 = vadd.f32 0.0, %v1087
      %1089 = vmatmul.bf16.gmra.mxu0 %v1063
      %v1090 = vpop.f32.mrf.mxu0
      %v1091 = vadd.f32 0.0, %v1090
      %v1092 = vpop.f32.mrf.mxu0
      %v1093 = vadd.f32 0.0, %v1092
      %1094 = vmatmul.bf16.gmra.mxu0 %v1066
      %v1095 = vpop.f32.mrf.mxu0
      %v1096 = vadd.f32 0.0, %v1095
      %v1097 = vpop.f32.mrf.mxu0
      %v1098 = vadd.f32 0.0, %v1097
      %1099 = vmatmul.bf16.gmra.mxu0 %v1069
      %v1100 = vpop.f32.mrf.mxu0
      %v1101 = vadd.f32 0.0, %v1100
      %v1102 = vpop.f32.mrf.mxu0
      %v1103 = vadd.f32 0.0, %v1102
      %1104 = vdwg.mxu0
      %v1105 = vadd.f32 %v998, %v1081
      %v1106 = vadd.f32 %v999, %v1083
      %v1107 = vadd.f32 %v1000, %v1086
      %v1108 = vadd.f32 %v1001, %v1088
      %v1109 = vadd.f32 %v1002, %v1091
      %v1110 = vadd.f32 %v1003, %v1093
      %v1111 = vadd.f32 %v1004, %v1096
      %v1112 = vadd.f32 %v1005, %v1098
      %v1113 = vadd.f32 %v1006, %v1101
      %v1114 = vadd.f32 %v1007, %v1103
      %v1115 = vld [vmem:[%s2] sm:$0x1]
      %v1117 = vperm.slane %v1115, 0
      %v1119 = vadd.f32 %v1105, %v1117
      %v1120 = vadd.f32 %v1106, %v1117
      %v1121 = vadd.f32 %v1107, %v1117
      %v1122 = vadd.f32 %v1108, %v1117
      %v1123 = vadd.f32 %v1109, %v1117
      %v1124 = vadd.f32 %v1110, %v1117
      %v1125 = vadd.f32 %v1111, %v1117
      %v1126 = vadd.f32 %v1112, %v1117
      %v1127 = vadd.f32 %v1113, %v1117
      %v1128 = vadd.f32 %v1114, %v1117
      %v1129 = vmax.f32 %v1119, 0.0
      %v1130 = vmax.f32 %v1120, 0.0
      %v1131 = vmax.f32 %v1121, 0.0
      %v1132 = vmax.f32 %v1122, 0.0
      %v1133 = vmax.f32 %v1123, 0.0
      %v1134 = vmax.f32 %v1124, 0.0
      %v1135 = vmax.f32 %v1125, 0.0
      %v1136 = vmax.f32 %v1126, 0.0
      %v1137 = vmax.f32 %v1127, 0.0
      %v1138 = vmax.f32 %v1128, 0.0
      %vm1139 = vcmask 261120
      %1140 = vst.msk [vmem:[%s170] sm:$0xff] %vm1139, %v1129
      %s1141 = scalar_lea.vmem %s170, 8
      %vm1142 = vcmask 261122
      %1143 = vst.msk [vmem:[%s1141 - $0x2] sm:$0xfc] %vm1142, %v1130
      %vm1144 = vcmask 254976
      %1145 = vst.msk [vmem:[%s1141 + $0x6] sm:$0x3] %vm1144, %v1131
      %s1146 = scalar_lea.vmem %s170, 16
      %vm1147 = vcmask 261124
      %1148 = vst.msk [vmem:[%s1146 - $0x4] sm:$0xf0] %vm1147, %v1131
      %vm1149 = vcmask 257024
      %1150 = vst.msk [vmem:[%s1146 + $0x4] sm:$0xf] %vm1149, %v1132
      %s1151 = scalar_lea.vmem %s170, 24
      %vm1152 = vcmask 261126
      %1153 = vst.msk [vmem:[%s1151 - $0x6] sm:$0xc0] %vm1152, %v1132
      %vm1154 = vcmask 259072
      %1155 = vst.msk [vmem:[%s1151 + $0x2] sm:$0x3f] %vm1154, %v1133
      %s1156 = scalar_lea.vmem %s170, 32
      %1157 = vst.msk [vmem:[%s1156] sm:$0xff] %vm1139, %v1134
      %s1158 = scalar_lea.vmem %s170, 40
      %1159 = vst.msk [vmem:[%s1158 - $0x2] sm:$0xfc] %vm1142, %v1135
      %1160 = vst.msk [vmem:[%s1158 + $0x6] sm:$0x3] %vm1144, %v1136
      %s1161 = scalar_lea.vmem %s170, 48
      %1162 = vst.msk [vmem:[%s1161 - $0x4] sm:$0xf0] %vm1147, %v1136
      %1163 = vst.msk [vmem:[%s1161 + $0x4] sm:$0xf] %vm1149, %v1137
      %s1164 = scalar_lea.vmem %s170, 56
      %1165 = vst.msk [vmem:[%s1164 - $0x6] sm:$0xc0] %vm1152, %v1137
      %1166 = vst.msk [vmem:[%s1164 + $0x2] sm:$0x3f] %vm1154, %v1138
      %p1167 = scmp.lt.s32.totalorder %s14, 1
      %s1168 = scalar_select %p1167, %s14, 1
      %s1169 = smul.addr %s1168, 8
      %s1170 = smul.addr %s1169, 8
      %s1171 = scalar_lea.vmem %s3, %s1170
      // Predicated region
      $region33: #{vqvae_forward.21} parent=31 // pred_check
        %p1172 = pneg %p100
      $region34: #{vqvae_forward.21} parent=31 // pred_check_branch
        %1174 = sbr.rel (%p1172) target = $region36
      $region35: #{vqvae_forward.21} parent=31 // pred_region
        _
      $region36: #{vqvae_forward.21} parent=31 // pred_fallthru
        _
    $region32: #{vqvae_forward.21} parent=5 // pred_fallthru
      _
    %p1175 = scmp.le.s32.totalorder 2, %s9
    // Predicated region
    $region37: #{vqvae_forward.21} parent=5 // pred_check
      %p1176 = pneg %p1175
    $region38: #{vqvae_forward.21} parent=5 // pred_check_branch
      %1178 = sbr.rel (%p1176) target = $region40
    $region39: #{vqvae_forward.21} parent=5 // pred_region
      %s1179 = ssub.s32 %s9, 2
      // Predicated region
      $region41: #{vqvae_forward.21} parent=39 // pred_check
        %p1180 = pneg %p106
      $region42: #{vqvae_forward.21} parent=39 // pred_check_branch
        %1182 = sbr.rel (%p1180) target = $region44
      $region43: #{vqvae_forward.21} parent=39 // pred_region
        %p1183 = scmp.lt.s32.totalorder %s15, 1
        %s1184 = scalar_select %p1183, %s15, 1
        %s1185 = smul.addr %s1184, 8
        %s1186 = smul.addr %s1185, 8
        %s1187 = scalar_lea.vmem %s3, %s1186
      $region44: #{vqvae_forward.21} parent=39 // pred_fallthru
        _
    $region40: #{vqvae_forward.21} parent=5 // pred_fallthru
      _
  $region6: #{vqvae_forward.21} parent=0 // loop_footer
    %s13 = sadd.s32 1, %s9
  $region7: #{vqvae_forward.21} parent=0 // loop_footer_branch
    %8 = sbr.rel target = $region3
  $region8: #{vqvae_forward.21} parent=0 // loop_exit
    _

// kernel: vqvae_forward.23
$region0: #{vqvae_forward.23}
  #allocation0 [shape = 'u32[]', space=smem, size = 0x4, offset = 0x4, fixed_abs, tag = 'smem constant byte address 0x4 - core index']
  #allocation1 [shape = 'u32[72,128]{1,0:T(1,128)}', space=vmem, size = 0x9000, scoped, tag = 'internal scratch']
  %s0 = inlined_call_operand.vmem [shape: f32[16,128], index: 0, kind: input, shape index: {}]
  %s1 = inlined_call_operand.vmem [shape: f32[16,128], index: 1, kind: input, shape index: {}]
  %s2 = inlined_call_operand.hbm [shape: f32[1,1], index: 2, kind: output, shape index: {}]
  %s3 = sld [smem:[#allocation0]]
  $region18: #{vqvae_forward.23} parent=0
    _
  %s5 = ssub.s32 1, %s3
  %s6 = scalar_select 0, %s5, %s3
  $region1: #{vqvae_forward.23} parent=0
    #allocation2 [shape = 'u8[512]{0}', space=smem, size = 0x200, scoped, tag = 'output window, operand 0, single buffered']
    #allocation3 [shape = 's32[1]{0}', space=sflag, size = 0x4, scoped, tag = 'scoped memory for vqvae_forward.23']
    %7 = vsyncpa [#allocation3], 0
    // Predicated region
    $region2: #{vqvae_forward.23} parent=1 // pred_check
      _
    $region3: #{vqvae_forward.23} parent=1 // pred_check_branch
      %9 = sbr.rel (0) target = $region5
    $region4: #{vqvae_forward.23} parent=1 // pred_region
      _
    $region5: #{vqvae_forward.23} parent=1 // pred_fallthru
      _
    // Predicated region
    $region6: #{vqvae_forward.23} parent=1 // pred_check
      _
    $region7: #{vqvae_forward.23} parent=1 // pred_check_branch
      %11 = sbr.rel (0) target = $region9
    $region8: #{vqvae_forward.23} parent=1 // pred_region
      _
    $region9: #{vqvae_forward.23} parent=1 // pred_fallthru
      _
    %v12 = vld [vmem:[%s0] sm:$0xff]
    %v13 = vld [vmem:[%s0 + $0x8] sm:$0xff]
    %v14 = vld [vmem:[%s1] sm:$0xff]
    %v15 = vld [vmem:[%s1 + $0x8] sm:$0xff]
    %v16 = vsub.f32 %v12, %v14
    %v17 = vsub.f32 %v13, %v15
    %v18 = vmul.f32 %v16, %v16
    %v19 = vmul.f32 %v17, %v17
    %v20 = vadd.f32 %v18, %v19
    %21 = vadd.xlane.f32.xlu0 %v20
    %v22 = vpop.xlane.xlu0 %21
    %v23 = vrot.slane %v22, 4
    %v24 = vadd.f32 %v22, %v23
    %v25 = vrot.slane %v24, 2
    %v26 = vadd.f32 %v24, %v25
    %v27 = vrot.slane %v26, 1
    %v28 = vadd.f32 %v26, %v27
    %s29 = vtos %v28
    %s30 = scalar_lea.smem [#allocation2], 0
    %31 = sst [smem:[%s30]] %s29
    // Predicated region
    $region10: #{vqvae_forward.23} parent=1 // pred_check
      _
    $region11: #{vqvae_forward.23} parent=1 // pred_check_branch
      %33 = sbr.rel (0) target = $region13
    $region12: #{vqvae_forward.23} parent=1 // pred_region
      %35 = vsyncadd [#allocation3], 0
      %s37 = sshll.u32 %s2, 4
      %s38 = int_to_ptr.hbm [resolvable:$true] %s37
      %40 = dma.smem_to_hbm [#allocation2], 16, %s38, [#allocation3]
    $region13: #{vqvae_forward.23} parent=1 // pred_fallthru
      _
    // Predicated region
    $region14: #{vqvae_forward.23} parent=1 // pred_check
      _
    $region15: #{vqvae_forward.23} parent=1 // pred_check_branch
      %42 = sbr.rel (0) target = $region17
    $region16: #{vqvae_forward.23} parent=1 // pred_region
      %44 = dma.done [#allocation3], 16
    $region17: #{vqvae_forward.23} parent=1 // pred_fallthru
      _
    %45 = sfence
    %46 = vsyncpa [#allocation3], 1

// kernel: vqvae_forward.22
$region0: #{vqvae_forward.22}
  #allocation0 [shape = 'u32[]', space=smem, size = 0x4, offset = 0x4, fixed_abs, tag = 'smem constant byte address 0x4 - core index']
  #allocation1 [shape = 'u32[72,128]{1,0:T(1,128)}', space=vmem, size = 0x9000, scoped, tag = 'internal scratch']
  %s0 = inlined_call_operand.vmem [shape: f32[2,326,32], index: 0, kind: input, shape index: {}]
  %s1 = inlined_call_operand.vmem [shape: bf16[9,32,4], index: 1, kind: input, shape index: {}]
  %s2 = inlined_call_operand.vmem [shape: f32[1,4], index: 2, kind: input, shape index: {}]
  %s3 = inlined_call_operand.vmem [shape: f32[2,16,16,4], index: 3, kind: output, shape index: {}]
  %s4 = sld [smem:[#allocation0]]
  $region45: #{vqvae_forward.22} parent=0
    _
  %s6 = ssub.s32 1, %s4
  %s7 = scalar_select 0, %s6, %s4
  loop: start=0, step=1, limit=4
  $region2: #{vqvae_forward.22} parent=0 // loop_pre_header
    _
  $region3: #{vqvae_forward.22} parent=0 // loop_header
    %s9 = sphi 0, %s13
    %p10 = scmp.ge.s32.totalorder %s9, 4
    %s19 = sphi 0, %s21
    %s22 = sphi 0, %s19
    %s23 = sphi 0, %s22
    %s39 = sphi 0, %s23
    %s43 = sphi 0, %s43
    %s45 = sphi 0, %s43
    %s46 = sphi 0, %s45
    %s60 = sphi 0, %s46
    %s64 = sphi 0, %s64
    %s66 = sphi 0, %s64
    %s67 = sphi 0, %s66
    %s81 = sphi 0, %s67
    %s87 = sphi 0, %s89
    %s90 = sphi 0, %s87
    %s91 = sphi 0, %s90
    %s107 = sphi 0, %s91
  $region4: #{vqvae_forward.22} parent=0 // loop_header_branch
    %12 = sbr.rel (%p10) target = $region8
  $region5: #{vqvae_forward.22} parent=0 // loop_body
    %s14 = ssub.s32 %s9, 1
    %s15 = ssub.s32 %s9, 2
    %s16 = sadd.s32 %s9, 1
    %s17 = ssub.s32 %s9, %s16
    %p18 = scmp.eq.s32.totalorder %s17, 0
    %s20 = sadd.s32 %s19, 1
    %s21 = scalar_select %p18, %s19, %s20
    %p24 = pneg %p18
    %p25 = scmp.eq.s32.totalorder %s9, 1
    %p26 = por %p24, %p25
    %p27 = scmp.ne.s32.totalorder %s19, %s22
    %p28 = scmp.eq.s32.totalorder %s9, 0
    %p29 = por %p27, %p28
    %p30 = scmp.ne.s32.totalorder %s19, %s22
    %p31 = scmp.eq.s32.totalorder %s14, 1
    %p32 = por %p30, %p31
    %p33 = scmp.ne.s32.totalorder %s22, %s23
    %p34 = scmp.eq.s32.totalorder %s14, 0
    %p35 = por %p33, %p34
    %p36 = scmp.ne.s32.totalorder %s22, %s23
    %p37 = scmp.eq.s32.totalorder %s15, 1
    %p38 = por %p36, %p37
    %p40 = scmp.ne.s32.totalorder %s23, %s39
    %p41 = scmp.eq.s32.totalorder %s15, 0
    %p42 = por %p40, %p41
    %s44 = sadd.s32 %s43, 1
    %p47 = scmp.eq.s32.totalorder %s9, 1
    %p48 = scmp.ne.s32.totalorder %s43, %s45
    %p49 = scmp.eq.s32.totalorder %s9, 0
    %p50 = por %p48, %p49
    %p51 = scmp.ne.s32.totalorder %s43, %s45
    %p52 = scmp.eq.s32.totalorder %s14, 1
    %p53 = por %p51, %p52
    %p54 = scmp.ne.s32.totalorder %s45, %s46
    %p55 = scmp.eq.s32.totalorder %s14, 0
    %p56 = por %p54, %p55
    %p57 = scmp.ne.s32.totalorder %s45, %s46
    %p58 = scmp.eq.s32.totalorder %s15, 1
    %p59 = por %p57, %p58
    %p61 = scmp.ne.s32.totalorder %s46, %s60
    %p62 = scmp.eq.s32.totalorder %s15, 0
    %p63 = por %p61, %p62
    %s65 = sadd.s32 %s64, 1
    %p68 = scmp.eq.s32.totalorder %s9, 1
    %p69 = scmp.ne.s32.totalorder %s64, %s66
    %p70 = scmp.eq.s32.totalorder %s9, 0
    %p71 = por %p69, %p70
    %p72 = scmp.ne.s32.totalorder %s64, %s66
    %p73 = scmp.eq.s32.totalorder %s14, 1
    %p74 = por %p72, %p73
    %p75 = scmp.ne.s32.totalorder %s66, %s67
    %p76 = scmp.eq.s32.totalorder %s14, 0
    %p77 = por %p75, %p76
    %p78 = scmp.ne.s32.totalorder %s66, %s67
    %p79 = scmp.eq.s32.totalorder %s15, 1
    %p80 = por %p78, %p79
    %p82 = scmp.ne.s32.totalorder %s67, %s81
    %p83 = scmp.eq.s32.totalorder %s15, 0
    %p84 = por %p82, %p83
    %s85 = ssub.s32 %s9, %s16
    %p86 = scmp.eq.s32.totalorder %s85, 0
    %s88 = sadd.s32 %s87, 1
    %s89 = scalar_select %p86, %s87, %s88
    %p92 = pneg %p86
    %p93 = scmp.eq.s32.totalorder %s9, 1
    %p94 = por %p92, %p93
    %p95 = scmp.ne.s32.totalorder %s87, %s90
    %p96 = scmp.eq.s32.totalorder %s9, 0
    %p97 = por %p95, %p96
    %p98 = scmp.ne.s32.totalorder %s87, %s90
    %p99 = scmp.eq.s32.totalorder %s14, 1
    %p100 = por %p98, %p99
    %p101 = scmp.ne.s32.totalorder %s90, %s91
    %p102 = scmp.eq.s32.totalorder %s14, 0
    %p103 = por %p101, %p102
    %p104 = scmp.ne.s32.totalorder %s90, %s91
    %p105 = scmp.eq.s32.totalorder %s15, 1
    %p106 = por %p104, %p105
    %p108 = scmp.ne.s32.totalorder %s91, %s107
    %p109 = scmp.eq.s32.totalorder %s15, 0
    %p110 = por %p108, %p109
    %p111 = scmp.le.s32.totalorder 1, %s9
    %p112 = scmp.lt.s32.totalorder %s9, 3
    %p113 = pnand %p111, %p112
    %p114 = pneg %p113
    // Predicated region
    $region9: #{vqvae_forward.22} parent=5 // pred_check
      _
    $region10: #{vqvae_forward.22} parent=5 // pred_check_branch
      %116 = sbr.rel (%p113) target = $region12
    $region11: #{vqvae_forward.22} parent=5 // pred_region
      %s117 = ssub.s32 %s9, 1
      // Predicated region
      $region13: #{vqvae_forward.22} parent=11 // pred_check
        %p118 = pneg %p56
      $region14: #{vqvae_forward.22} parent=11 // pred_check_branch
        %120 = sbr.rel (%p118) target = $region16
      $region15: #{vqvae_forward.22} parent=11 // pred_region
        _
      $region16: #{vqvae_forward.22} parent=11 // pred_fallthru
        _
      // Predicated region
      $region17: #{vqvae_forward.22} parent=11 // pred_check
        %p121 = pneg %p77
      $region18: #{vqvae_forward.22} parent=11 // pred_check_branch
        %123 = sbr.rel (%p121) target = $region20
      $region19: #{vqvae_forward.22} parent=11 // pred_region
        _
      $region20: #{vqvae_forward.22} parent=11 // pred_fallthru
        _
    $region12: #{vqvae_forward.22} parent=5 // pred_fallthru
      _
    %p124 = scmp.lt.s32.totalorder %s9, 2
    // Predicated region
    $region21: #{vqvae_forward.22} parent=5 // pred_check
      %p125 = pneg %p124
    $region22: #{vqvae_forward.22} parent=5 // pred_check_branch
      %127 = sbr.rel (%p125) target = $region24
    $region23: #{vqvae_forward.22} parent=5 // pred_region
      // Predicated region
      $region25: #{vqvae_forward.22} parent=23 // pred_check
        %p128 = pneg %p29
      $region26: #{vqvae_forward.22} parent=23 // pred_check_branch
        %130 = sbr.rel (%p128) target = $region28
      $region27: #{vqvae_forward.22} parent=23 // pred_region
        %p131 = scmp.lt.s32.totalorder %s9, 1
        %s132 = scalar_select %p131, %s9, 1
        %s133 = smul.addr %s132, 41
        %s134 = smul.addr %s133, 8
        %s135 = scalar_lea.vmem %s0, %s134
      $region28: #{vqvae_forward.22} parent=23 // pred_fallthru
        _
    $region24: #{vqvae_forward.22} parent=5 // pred_fallthru
      _
    %p136 = scmp.le.s32.totalorder 1, %s9
    %p137 = scmp.lt.s32.totalorder %s9, 3
    %p138 = pnand %p136, %p137
    %p139 = pneg %p138
    // Predicated region
    $region29: #{vqvae_forward.22} parent=5 // pred_check
      _
    $region30: #{vqvae_forward.22} parent=5 // pred_check_branch
      %141 = sbr.rel (%p138) target = $region32
    $region31: #{vqvae_forward.22} parent=5 // pred_region
      %s142 = ssub.s32 %s9, 1
      %p143 = scmp.lt.s32.totalorder %s14, 1
      %s144 = scalar_select %p143, %s14, 1
      %s145 = smul.addr %s144, 41
      %s146 = smul.addr %s145, 8
      %s147 = scalar_lea.vmem %s0, %s146
      %p148 = pneg %p35
      %p149 = pneg %p32
      %p150 = pneg %p56
      %p151 = pneg %p53
      %p152 = pneg %p77
      %p153 = pneg %p74
      %p154 = pneg %p103
      %p155 = pneg %p100
      %p156 = scmp.lt.s32.totalorder %s14, 1
      %s157 = scalar_select %p156, %s14, 1
      %s158 = smul.addr %s157, 32
      %s159 = smul.addr %s158, 8
      %s160 = scalar_lea.vmem %s3, %s159
      %p161 = scmp.lt.s32.totalorder %s14, 1
      %s162 = scalar_select %p161, %s14, 1
      %s163 = smul.addr %s162, 41
      %s164 = smul.addr %s163, 8
      %s165 = scalar_lea.vmem %s0, %s164
      %p166 = scmp.lt.s32.totalorder %s14, 1
      %s167 = scalar_select %p166, %s14, 1
      %s168 = smul.addr %s167, 32
      %s169 = smul.addr %s168, 8
      %s170 = scalar_lea.vmem %s3, %s169
      %v172 = vld [vmem:[%s165] sm:$0xff]
      %v173 = vld [vmem:[%s165 + $0x8] sm:$0xff]
      %v174 = vld [vmem:[%s165 + $0x10] sm:$0xff]
      %v175 = vld [vmem:[%s165 + $0x18] sm:$0xff]
      %v176 = vld [vmem:[%s165 + $0x20] sm:$0xff]
      %v177 = vld [vmem:[%s165 + $0x28] sm:$0xff]
      %v178 = vld [vmem:[%s165 + $0x30] sm:$0xff]
      %v179 = vld [vmem:[%s165 + $0x38] sm:$0xff]
      %v180 = vld [vmem:[%s165 + $0x40] sm:$0xff]
      %v181 = vld [vmem:[%s165 + $0x48] sm:$0xff]
      %v182 = vld [vmem:[%s165 + $0x50] sm:$0xff]
      %v183 = vld [vmem:[%s165 + $0x58] sm:$0xff]
      %v184 = vld [vmem:[%s165 + $0x60] sm:$0xff]
      %v185 = vld [vmem:[%s165 + $0x68] sm:$0xff]
      %v186 = vld [vmem:[%s165 + $0x70] sm:$0xff]
      %v187 = vld [vmem:[%s165 + $0x78] sm:$0xff]
      %v188 = vld [vmem:[%s165 + $0x80] sm:$0xff]
      %v189 = vld [vmem:[%s165 + $0x88] sm:$0xff]
      %v190 = vld [vmem:[%s165 + $0x90] sm:$0xff]
      %v191 = vld [vmem:[%s165 + $0x98] sm:$0xff]
      %v192 = vld [vmem:[%s165 + $0xa0] sm:$0xff]
      %v193 = vld [vmem:[%s165 + $0xa8] sm:$0xff]
      %v194 = vld [vmem:[%s165 + $0xb0] sm:$0xff]
      %v195 = vld [vmem:[%s165 + $0xb8] sm:$0xff]
      %v196 = vld [vmem:[%s165 + $0xc0] sm:$0xff]
      %v197 = vld [vmem:[%s165 + $0xc8] sm:$0xff]
      %v198 = vld [vmem:[%s165 + $0xd0] sm:$0xff]
      %v199 = vld [vmem:[%s165 + $0xd8] sm:$0xff]
      %v200 = vld [vmem:[%s165 + $0xe0] sm:$0xff]
      %v201 = vld [vmem:[%s165 + $0xe8] sm:$0xff]
      %v202 = vld [vmem:[%s165 + $0xf0] sm:$0xff]
      %v203 = vld [vmem:[%s165 + $0xf8] sm:$0xff]
      %v204 = vld [vmem:[%s165 + $0x100] sm:$0xff]
      %v205 = vld [vmem:[%s165 + $0x108] sm:$0xff]
      %v206 = vld [vmem:[%s165 + $0x110] sm:$0xff]
      %v207 = vld [vmem:[%s165 + $0x118] sm:$0xff]
      %v208 = vpack.c.bf16 %v173, %v172
      %v209 = vpack.c.bf16 %v175, %v174
      %v210 = vpack.c.bf16 %v177, %v176
      %v211 = vpack.c.bf16 %v179, %v178
      %v212 = vpack.c.bf16 %v181, %v180
      %v213 = vpack.c.bf16 %v183, %v182
      %v214 = vpack.c.bf16 %v185, %v184
      %v215 = vpack.c.bf16 %v187, %v186
      %v216 = vpack.c.bf16 %v189, %v188
      %v217 = vpack.c.bf16 %v191, %v190
      %v218 = vpack.c.bf16 %v193, %v192
      %v219 = vpack.c.bf16 %v195, %v194
      %v220 = vpack.c.bf16 %v197, %v196
      %v221 = vpack.c.bf16 %v199, %v198
      %v222 = vpack.c.bf16 %v201, %v200
      %v223 = vpack.c.bf16 %v203, %v202
      %v224 = vpack.c.bf16 %v205, %v204
      %v225 = vpack.c.bf16 %v207, %v206
      %v226 = vld [vmem:[%s1] sm:$0xf]
      %v227 = vld [vmem:[%s1 + $0x4] sm:$0xf]
      %v228 = vld [vmem:[%s1 + $0x8] sm:$0xf]
      %v229 = vld [vmem:[%s1 + $0xc] sm:$0xf]
      %v230 = vld [vmem:[%s165 + $0x1] sm:$0xff]
      %v231 = vld [vmem:[%s165 + $0x9] sm:$0xff]
      %v232 = vld [vmem:[%s165 + $0x11] sm:$0xff]
      %v233 = vld [vmem:[%s165 + $0x19] sm:$0xff]
      %v234 = vld [vmem:[%s165 + $0x21] sm:$0xff]
      %v235 = vld [vmem:[%s165 + $0x29] sm:$0xff]
      %v236 = vld [vmem:[%s165 + $0x31] sm:$0xff]
      %v237 = vld [vmem:[%s165 + $0x39] sm:$0xff]
      %v238 = vld [vmem:[%s165 + $0x41] sm:$0xff]
      %v239 = vld [vmem:[%s165 + $0x49] sm:$0xff]
      %v240 = vld [vmem:[%s165 + $0x51] sm:$0xff]
      %v241 = vld [vmem:[%s165 + $0x59] sm:$0xff]
      %v242 = vld [vmem:[%s165 + $0x61] sm:$0xff]
      %v243 = vld [vmem:[%s165 + $0x69] sm:$0xff]
      %v244 = vld [vmem:[%s165 + $0x71] sm:$0xff]
      %v245 = vld [vmem:[%s165 + $0x79] sm:$0xff]
      %v246 = vld [vmem:[%s165 + $0x81] sm:$0xff]
      %v247 = vld [vmem:[%s165 + $0x89] sm:$0xff]
      %v248 = vld [vmem:[%s165 + $0x91] sm:$0xff]
      %v249 = vld [vmem:[%s165 + $0x99] sm:$0xff]
      %v250 = vld [vmem:[%s165 + $0xa1] sm:$0xff]
      %v251 = vld [vmem:[%s165 + $0xa9] sm:$0xff]
      %v252 = vld [vmem:[%s165 + $0xb1] sm:$0xff]
      %v253 = vld [vmem:[%s165 + $0xb9] sm:$0xff]
      %v254 = vld [vmem:[%s165 + $0xc1] sm:$0xff]
      %v255 = vld [vmem:[%s165 + $0xc9] sm:$0xff]
      %v256 = vld [vmem:[%s165 + $0xd1] sm:$0xff]
      %v257 = vld [vmem:[%s165 + $0xd9] sm:$0xff]
      %v258 = vld [vmem:[%s165 + $0xe1] sm:$0xff]
      %v259 = vld [vmem:[%s165 + $0xe9] sm:$0xff]
      %v260 = vld [vmem:[%s165 + $0xf1] sm:$0xff]
      %v261 = vld [vmem:[%s165 + $0xf9] sm:$0xff]
      %v262 = vld [vmem:[%s165 + $0x101] sm:$0xff]
      %v263 = vld [vmem:[%s165 + $0x109] sm:$0xff]
      %v264 = vld [vmem:[%s165 + $0x111] sm:$0xff]
      %v265 = vld [vmem:[%s165 + $0x119] sm:$0xff]
      %v266 = vpack.c.bf16 %v231, %v230
      %v267 = vpack.c.bf16 %v233, %v232
      %v268 = vpack.c.bf16 %v235, %v234
      %v269 = vpack.c.bf16 %v237, %v236
      %v270 = vpack.c.bf16 %v239, %v238
      %v271 = vpack.c.bf16 %v241, %v240
      %v272 = vpack.c.bf16 %v243, %v242
      %v273 = vpack.c.bf16 %v245, %v244
      %v274 = vpack.c.bf16 %v247, %v246
      %v275 = vpack.c.bf16 %v249, %v248
      %v276 = vpack.c.bf16 %v251, %v250
      %v277 = vpack.c.bf16 %v253, %v252
      %v278 = vpack.c.bf16 %v255, %v254
      %v279 = vpack.c.bf16 %v257, %v256
      %v280 = vpack.c.bf16 %v259, %v258
      %v281 = vpack.c.bf16 %v261, %v260
      %v282 = vpack.c.bf16 %v263, %v262
      %v283 = vpack.c.bf16 %v265, %v264
      %s284 = scalar_lea.vmem %s1, 16
      %v285 = vld [vmem:[%s284] sm:$0xf]
      %v286 = vld [vmem:[%s284 + $0x4] sm:$0xf]
      %v287 = vld [vmem:[%s284 + $0x8] sm:$0xf]
      %v288 = vld [vmem:[%s284 + $0xc] sm:$0xf]
      %v293 = vunpack.c.l.b16 %v285
      %v294 = vunpack.c.l.b16 %v286
      %v295 = vunpack.c.l.b16 %v287
      %v296 = vunpack.c.l.b16 %v288
      %v297 = vpack.c.b16 %v294, %v293
      %v298 = vpack.c.b16 %v296, %v295
      %vm301 = vcmask 261120
      %v303 = vsel %vm301, %v266, 0
      %v306 = vsel %vm301, %v267, 0
      %v309 = vsel %vm301, %v268, 0
      %v312 = vsel %vm301, %v269, 0
      %v315 = vsel %vm301, %v270, 0
      %v318 = vsel %vm301, %v271, 0
      %v321 = vsel %vm301, %v272, 0
      %v324 = vsel %vm301, %v273, 0
      %v327 = vsel %vm301, %v274, 0
      %v330 = vsel %vm301, %v275, 0
      %v333 = vsel %vm301, %v276, 0
      %v336 = vsel %vm301, %v277, 0
      %v339 = vsel %vm301, %v278, 0
      %v342 = vsel %vm301, %v279, 0
      %v345 = vsel %vm301, %v280, 0
      %v348 = vsel %vm301, %v281, 0
      %v351 = vsel %vm301, %v282, 0
      %v354 = vsel %vm301, %v283, 0
      %356 = vmatpush.bf16.msra.mxu0 0
      %357 = vmatpush.bf16.msra.mxu0 0
      %358 = vmatpush.bf16.msra.mxu0 0
      %359 = vmatpush.bf16.msra.mxu0 0
      %360 = vmatpush.bf16.msra.mxu0 0
      %361 = vmatpush.bf16.msra.mxu0 0
      %362 = vmatpush.bf16.msra.mxu0 %v298
      %363 = vmatpush.bf16.msra.mxu0 %v297
      %364 = vmatmul.bf16.gmra.mxu0 %v303
      %v365 = vpop.f32.mrf.mxu0
      %v366 = vadd.f32 0.0, %v365
      %v367 = vpop.f32.mrf.mxu0
      %v368 = vadd.f32 0.0, %v367
      %369 = vmatmul.bf16.gmra.mxu0 %v306
      %v370 = vpop.f32.mrf.mxu0
      %v371 = vadd.f32 0.0, %v370
      %v372 = vpop.f32.mrf.mxu0
      %v373 = vadd.f32 0.0, %v372
      %374 = vmatmul.bf16.gmra.mxu0 %v309
      %v375 = vpop.f32.mrf.mxu0
      %v376 = vadd.f32 0.0, %v375
      %v377 = vpop.f32.mrf.mxu0
      %v378 = vadd.f32 0.0, %v377
      %379 = vmatmul.bf16.gmra.mxu0 %v312
      %v380 = vpop.f32.mrf.mxu0
      %v381 = vadd.f32 0.0, %v380
      %v382 = vpop.f32.mrf.mxu0
      %v383 = vadd.f32 0.0, %v382
      %384 = vmatmul.bf16.gmra.mxu0 %v315
      %v385 = vpop.f32.mrf.mxu0
      %v386 = vadd.f32 0.0, %v385
      %v387 = vpop.f32.mrf.mxu0
      %v388 = vadd.f32 0.0, %v387
      %389 = vmatmul.bf16.gmra.mxu0 %v318
      %v390 = vpop.f32.mrf.mxu0
      %v391 = vadd.f32 0.0, %v390
      %v392 = vpop.f32.mrf.mxu0
      %v393 = vadd.f32 0.0, %v392
      %394 = vmatmul.bf16.gmra.mxu0 %v321
      %v395 = vpop.f32.mrf.mxu0
      %v396 = vadd.f32 0.0, %v395
      %v397 = vpop.f32.mrf.mxu0
      %v398 = vadd.f32 0.0, %v397
      %399 = vmatmul.bf16.gmra.mxu0 %v324
      %v400 = vpop.f32.mrf.mxu0
      %v401 = vadd.f32 0.0, %v400
      %v402 = vpop.f32.mrf.mxu0
      %v403 = vadd.f32 0.0, %v402
      %404 = vmatmul.bf16.gmra.mxu0 %v327
      %v405 = vpop.f32.mrf.mxu0
      %v406 = vadd.f32 0.0, %v405
      %v407 = vpop.f32.mrf.mxu0
      %v408 = vadd.f32 0.0, %v407
      %409 = vmatmul.bf16.gmra.mxu0 %v330
      %v410 = vpop.f32.mrf.mxu0
      %v411 = vadd.f32 0.0, %v410
      %v412 = vpop.f32.mrf.mxu0
      %v413 = vadd.f32 0.0, %v412
      %414 = vmatmul.bf16.gmra.mxu0 %v333
      %v415 = vpop.f32.mrf.mxu0
      %v416 = vadd.f32 0.0, %v415
      %v417 = vpop.f32.mrf.mxu0
      %v418 = vadd.f32 0.0, %v417
      %419 = vmatmul.bf16.gmra.mxu0 %v336
      %v420 = vpop.f32.mrf.mxu0
      %v421 = vadd.f32 0.0, %v420
      %v422 = vpop.f32.mrf.mxu0
      %v423 = vadd.f32 0.0, %v422
      %424 = vmatmul.bf16.gmra.mxu0 %v339
      %v425 = vpop.f32.mrf.mxu0
      %v426 = vadd.f32 0.0, %v425
      %v427 = vpop.f32.mrf.mxu0
      %v428 = vadd.f32 0.0, %v427
      %429 = vmatmul.bf16.gmra.mxu0 %v342
      %v430 = vpop.f32.mrf.mxu0
      %v431 = vadd.f32 0.0, %v430
      %v432 = vpop.f32.mrf.mxu0
      %v433 = vadd.f32 0.0, %v432
      %434 = vmatmul.bf16.gmra.mxu0 %v345
      %v435 = vpop.f32.mrf.mxu0
      %v436 = vadd.f32 0.0, %v435
      %v437 = vpop.f32.mrf.mxu0
      %v438 = vadd.f32 0.0, %v437
      %439 = vmatmul.bf16.gmra.mxu0 %v348
      %v440 = vpop.f32.mrf.mxu0
      %v441 = vadd.f32 0.0, %v440
      %v442 = vpop.f32.mrf.mxu0
      %v443 = vadd.f32 0.0, %v442
      %444 = vmatmul.bf16.gmra.mxu0 %v351
      %v445 = vpop.f32.mrf.mxu0
      %v446 = vadd.f32 0.0, %v445
      %v447 = vpop.f32.mrf.mxu0
      %v448 = vadd.f32 0.0, %v447
      %449 = vmatmul.bf16.gmra.mxu0 %v354
      %v450 = vpop.f32.mrf.mxu0
      %v451 = vadd.f32 0.0, %v450
      %v452 = vpop.f32.mrf.mxu0
      %v453 = vadd.f32 0.0, %v452
      %454 = vdwg.mxu0
      %v459 = vunpack.c.l.b16 %v226
      %v460 = vunpack.c.l.b16 %v227
      %v461 = vunpack.c.l.b16 %v228
      %v462 = vunpack.c.l.b16 %v229
      %v463 = vpack.c.b16 %v460, %v459
      %v464 = vpack.c.b16 %v462, %v461
      %v468 = vsel %vm301, %v208, 0
      %v471 = vsel %vm301, %v209, 0
      %v474 = vsel %vm301, %v210, 0
      %v477 = vsel %vm301, %v211, 0
      %v480 = vsel %vm301, %v212, 0
      %v483 = vsel %vm301, %v213, 0
      %v486 = vsel %vm301, %v214, 0
      %v489 = vsel %vm301, %v215, 0
      %v492 = vsel %vm301, %v216, 0
      %v495 = vsel %vm301, %v217, 0
      %v498 = vsel %vm301, %v218, 0
      %v501 = vsel %vm301, %v219, 0
      %v504 = vsel %vm301, %v220, 0
      %v507 = vsel %vm301, %v221, 0
      %v510 = vsel %vm301, %v222, 0
      %v513 = vsel %vm301, %v223, 0
      %v516 = vsel %vm301, %v224, 0
      %v519 = vsel %vm301, %v225, 0
      %521 = vmatpush.bf16.msra.mxu0 0
      %522 = vmatpush.bf16.msra.mxu0 0
      %523 = vmatpush.bf16.msra.mxu0 0
      %524 = vmatpush.bf16.msra.mxu0 0
      %525 = vmatpush.bf16.msra.mxu0 0
      %526 = vmatpush.bf16.msra.mxu0 0
      %527 = vmatpush.bf16.msra.mxu0 %v464
      %528 = vmatpush.bf16.msra.mxu0 %v463
      %529 = vmatmul.bf16.gmra.mxu0 %v468
      %v530 = vpop.f32.mrf.mxu0
      %v531 = vadd.f32 %v366, %v530
      %v532 = vpop.f32.mrf.mxu0
      %v533 = vadd.f32 %v368, %v532
      %534 = vmatmul.bf16.gmra.mxu0 %v471
      %v535 = vpop.f32.mrf.mxu0
      %v536 = vadd.f32 %v371, %v535
      %v537 = vpop.f32.mrf.mxu0
      %v538 = vadd.f32 %v373, %v537
      %539 = vmatmul.bf16.gmra.mxu0 %v474
      %v540 = vpop.f32.mrf.mxu0
      %v541 = vadd.f32 %v376, %v540
      %v542 = vpop.f32.mrf.mxu0
      %v543 = vadd.f32 %v378, %v542
      %544 = vmatmul.bf16.gmra.mxu0 %v477
      %v545 = vpop.f32.mrf.mxu0
      %v546 = vadd.f32 %v381, %v545
      %v547 = vpop.f32.mrf.mxu0
      %v548 = vadd.f32 %v383, %v547
      %549 = vmatmul.bf16.gmra.mxu0 %v480
      %v550 = vpop.f32.mrf.mxu0
      %v551 = vadd.f32 %v386, %v550
      %v552 = vpop.f32.mrf.mxu0
      %v553 = vadd.f32 %v388, %v552
      %554 = vmatmul.bf16.gmra.mxu0 %v483
      %v555 = vpop.f32.mrf.mxu0
      %v556 = vadd.f32 %v391, %v555
      %v557 = vpop.f32.mrf.mxu0
      %v558 = vadd.f32 %v393, %v557
      %559 = vmatmul.bf16.gmra.mxu0 %v486
      %v560 = vpop.f32.mrf.mxu0
      %v561 = vadd.f32 %v396, %v560
      %v562 = vpop.f32.mrf.mxu0
      %v563 = vadd.f32 %v398, %v562
      %564 = vmatmul.bf16.gmra.mxu0 %v489
      %v565 = vpop.f32.mrf.mxu0
      %v566 = vadd.f32 %v401, %v565
      %v567 = vpop.f32.mrf.mxu0
      %v568 = vadd.f32 %v403, %v567
      %569 = vmatmul.bf16.gmra.mxu0 %v492
      %v570 = vpop.f32.mrf.mxu0
      %v571 = vadd.f32 %v406, %v570
      %v572 = vpop.f32.mrf.mxu0
      %v573 = vadd.f32 %v408, %v572
      %574 = vmatmul.bf16.gmra.mxu0 %v495
      %v575 = vpop.f32.mrf.mxu0
      %v576 = vadd.f32 %v411, %v575
      %v577 = vpop.f32.mrf.mxu0
      %v578 = vadd.f32 %v413, %v577
      %579 = vmatmul.bf16.gmra.mxu0 %v498
      %v580 = vpop.f32.mrf.mxu0
      %v581 = vadd.f32 %v416, %v580
      %v582 = vpop.f32.mrf.mxu0
      %v583 = vadd.f32 %v418, %v582
      %584 = vmatmul.bf16.gmra.mxu0 %v501
      %v585 = vpop.f32.mrf.mxu0
      %v586 = vadd.f32 %v421, %v585
      %v587 = vpop.f32.mrf.mxu0
      %v588 = vadd.f32 %v423, %v587
      %589 = vmatmul.bf16.gmra.mxu0 %v504
      %v590 = vpop.f32.mrf.mxu0
      %v591 = vadd.f32 %v426, %v590
      %v592 = vpop.f32.mrf.mxu0
      %v593 = vadd.f32 %v428, %v592
      %594 = vmatmul.bf16.gmra.mxu0 %v507
      %v595 = vpop.f32.mrf.mxu0
      %v596 = vadd.f32 %v431, %v595
      %v597 = vpop.f32.mrf.mxu0
      %v598 = vadd.f32 %v433, %v597
      %599 = vmatmul.bf16.gmra.mxu0 %v510
      %v600 = vpop.f32.mrf.mxu0
      %v601 = vadd.f32 %v436, %v600
      %v602 = vpop.f32.mrf.mxu0
      %v603 = vadd.f32 %v438, %v602
      %604 = vmatmul.bf16.gmra.mxu0 %v513
      %v605 = vpop.f32.mrf.mxu0
      %v606 = vadd.f32 %v441, %v605
      %v607 = vpop.f32.mrf.mxu0
      %v608 = vadd.f32 %v443, %v607
      %609 = vmatmul.bf16.gmra.mxu0 %v516
      %v610 = vpop.f32.mrf.mxu0
      %v611 = vadd.f32 %v446, %v610
      %v612 = vpop.f32.mrf.mxu0
      %v613 = vadd.f32 %v448, %v612
      %614 = vmatmul.bf16.gmra.mxu0 %v519
      %v615 = vpop.f32.mrf.mxu0
      %v616 = vadd.f32 %v451, %v615
      %v617 = vpop.f32.mrf.mxu0
      %v618 = vadd.f32 %v453, %v617
      %619 = vdwg.mxu0
      %v620 = vld [vmem:[%s165 + $0x2] sm:$0xff]
      %v621 = vld [vmem:[%s165 + $0xa] sm:$0xff]
      %v622 = vld [vmem:[%s165 + $0x12] sm:$0xff]
      %v623 = vld [vmem:[%s165 + $0x1a] sm:$0xff]
      %v624 = vld [vmem:[%s165 + $0x22] sm:$0xff]
      %v625 = vld [vmem:[%s165 + $0x2a] sm:$0xff]
      %v626 = vld [vmem:[%s165 + $0x32] sm:$0xff]
      %v627 = vld [vmem:[%s165 + $0x3a] sm:$0xff]
      %v628 = vld [vmem:[%s165 + $0x42] sm:$0xff]
      %v629 = vld [vmem:[%s165 + $0x4a] sm:$0xff]
      %v630 = vld [vmem:[%s165 + $0x52] sm:$0xff]
      %v631 = vld [vmem:[%s165 + $0x5a] sm:$0xff]
      %v632 = vld [vmem:[%s165 + $0x62] sm:$0xff]
      %v633 = vld [vmem:[%s165 + $0x6a] sm:$0xff]
      %v634 = vld [vmem:[%s165 + $0x72] sm:$0xff]
      %v635 = vld [vmem:[%s165 + $0x7a] sm:$0xff]
      %v636 = vld [vmem:[%s165 + $0x82] sm:$0xff]
      %v637 = vld [vmem:[%s165 + $0x8a] sm:$0xff]
      %v638 = vld [vmem:[%s165 + $0x92] sm:$0xff]
      %v639 = vld [vmem:[%s165 + $0x9a] sm:$0xff]
      %v640 = vld [vmem:[%s165 + $0xa2] sm:$0xff]
      %v641 = vld [vmem:[%s165 + $0xaa] sm:$0xff]
      %v642 = vld [vmem:[%s165 + $0xb2] sm:$0xff]
      %v643 = vld [vmem:[%s165 + $0xba] sm:$0xff]
      %v644 = vld [vmem:[%s165 + $0xc2] sm:$0xff]
      %v645 = vld [vmem:[%s165 + $0xca] sm:$0xff]
      %v646 = vld [vmem:[%s165 + $0xd2] sm:$0xff]
      %v647 = vld [vmem:[%s165 + $0xda] sm:$0xff]
      %v648 = vld [vmem:[%s165 + $0xe2] sm:$0xff]
      %v649 = vld [vmem:[%s165 + $0xea] sm:$0xff]
      %v650 = vld [vmem:[%s165 + $0xf2] sm:$0xff]
      %v651 = vld [vmem:[%s165 + $0xfa] sm:$0xff]
      %v652 = vld [vmem:[%s165 + $0x102] sm:$0xff]
      %v653 = vld [vmem:[%s165 + $0x10a] sm:$0xff]
      %v654 = vld [vmem:[%s165 + $0x112] sm:$0xff]
      %v655 = vld [vmem:[%s165 + $0x11a] sm:$0xff]
      %v656 = vpack.c.bf16 %v621, %v620
      %v657 = vpack.c.bf16 %v623, %v622
      %v658 = vpack.c.bf16 %v625, %v624
      %v659 = vpack.c.bf16 %v627, %v626
      %v660 = vpack.c.bf16 %v629, %v628
      %v661 = vpack.c.bf16 %v631, %v630
      %v662 = vpack.c.bf16 %v633, %v632
      %v663 = vpack.c.bf16 %v635, %v634
      %v664 = vpack.c.bf16 %v637, %v636
      %v665 = vpack.c.bf16 %v639, %v638
      %v666 = vpack.c.bf16 %v641, %v640
      %v667 = vpack.c.bf16 %v643, %v642
      %v668 = vpack.c.bf16 %v645, %v644
      %v669 = vpack.c.bf16 %v647, %v646
      %v670 = vpack.c.bf16 %v649, %v648
      %v671 = vpack.c.bf16 %v651, %v650
      %v672 = vpack.c.bf16 %v653, %v652
      %v673 = vpack.c.bf16 %v655, %v654
      %s674 = scalar_lea.vmem %s1, 32
      %v675 = vld [vmem:[%s674] sm:$0xf]
      %v676 = vld [vmem:[%s674 + $0x4] sm:$0xf]
      %v677 = vld [vmem:[%s674 + $0x8] sm:$0xf]
      %v678 = vld [vmem:[%s674 + $0xc] sm:$0xf]
      %v683 = vunpack.c.l.b16 %v675
      %v684 = vunpack.c.l.b16 %v676
      %v685 = vunpack.c.l.b16 %v677
      %v686 = vunpack.c.l.b16 %v678
      %v687 = vpack.c.b16 %v684, %v683
      %v688 = vpack.c.b16 %v686, %v685
      %v692 = vsel %vm301, %v656, 0
      %v695 = vsel %vm301, %v657, 0
      %v698 = vsel %vm301, %v658, 0
      %v701 = vsel %vm301, %v659, 0
      %v704 = vsel %vm301, %v660, 0
      %v707 = vsel %vm301, %v661, 0
      %v710 = vsel %vm301, %v662, 0
      %v713 = vsel %vm301, %v663, 0
      %v716 = vsel %vm301, %v664, 0
      %v719 = vsel %vm301, %v665, 0
      %v722 = vsel %vm301, %v666, 0
      %v725 = vsel %vm301, %v667, 0
      %v728 = vsel %vm301, %v668, 0
      %v731 = vsel %vm301, %v669, 0
      %v734 = vsel %vm301, %v670, 0
      %v737 = vsel %vm301, %v671, 0
      %v740 = vsel %vm301, %v672, 0
      %v743 = vsel %vm301, %v673, 0
      %745 = vmatpush.bf16.msra.mxu0 0
      %746 = vmatpush.bf16.msra.mxu0 0
      %747 = vmatpush.bf16.msra.mxu0 0
      %748 = vmatpush.bf16.msra.mxu0 0
      %749 = vmatpush.bf16.msra.mxu0 0
      %750 = vmatpush.bf16.msra.mxu0 0
      %751 = vmatpush.bf16.msra.mxu0 %v688
      %752 = vmatpush.bf16.msra.mxu0 %v687
      %753 = vmatmul.bf16.gmra.mxu0 %v692
      %v754 = vpop.f32.mrf.mxu0
      %v755 = vadd.f32 0.0, %v754
      %v756 = vpop.f32.mrf.mxu0
      %v757 = vadd.f32 0.0, %v756
      %758 = vmatmul.bf16.gmra.mxu0 %v695
      %v759 = vpop.f32.mrf.mxu0
      %v760 = vadd.f32 0.0, %v759
      %v761 = vpop.f32.mrf.mxu0
      %v762 = vadd.f32 0.0, %v761
      %763 = vmatmul.bf16.gmra.mxu0 %v698
      %v764 = vpop.f32.mrf.mxu0
      %v765 = vadd.f32 0.0, %v764
      %v766 = vpop.f32.mrf.mxu0
      %v767 = vadd.f32 0.0, %v766
      %768 = vmatmul.bf16.gmra.mxu0 %v701
      %v769 = vpop.f32.mrf.mxu0
      %v770 = vadd.f32 0.0, %v769
      %v771 = vpop.f32.mrf.mxu0
      %v772 = vadd.f32 0.0, %v771
      %773 = vmatmul.bf16.gmra.mxu0 %v704
      %v774 = vpop.f32.mrf.mxu0
      %v775 = vadd.f32 0.0, %v774
      %v776 = vpop.f32.mrf.mxu0
      %v777 = vadd.f32 0.0, %v776
      %778 = vmatmul.bf16.gmra.mxu0 %v707
      %v779 = vpop.f32.mrf.mxu0
      %v780 = vadd.f32 0.0, %v779
      %v781 = vpop.f32.mrf.mxu0
      %v782 = vadd.f32 0.0, %v781
      %783 = vmatmul.bf16.gmra.mxu0 %v710
      %v784 = vpop.f32.mrf.mxu0
      %v785 = vadd.f32 0.0, %v784
      %v786 = vpop.f32.mrf.mxu0
      %v787 = vadd.f32 0.0, %v786
      %788 = vmatmul.bf16.gmra.mxu0 %v713
      %v789 = vpop.f32.mrf.mxu0
      %v790 = vadd.f32 0.0, %v789
      %v791 = vpop.f32.mrf.mxu0
      %v792 = vadd.f32 0.0, %v791
      %793 = vmatmul.bf16.gmra.mxu0 %v716
      %v794 = vpop.f32.mrf.mxu0
      %v795 = vadd.f32 0.0, %v794
      %v796 = vpop.f32.mrf.mxu0
      %v797 = vadd.f32 0.0, %v796
      %798 = vmatmul.bf16.gmra.mxu0 %v719
      %v799 = vpop.f32.mrf.mxu0
      %v800 = vadd.f32 0.0, %v799
      %v801 = vpop.f32.mrf.mxu0
      %v802 = vadd.f32 0.0, %v801
      %803 = vmatmul.bf16.gmra.mxu0 %v722
      %v804 = vpop.f32.mrf.mxu0
      %v805 = vadd.f32 0.0, %v804
      %v806 = vpop.f32.mrf.mxu0
      %v807 = vadd.f32 0.0, %v806
      %808 = vmatmul.bf16.gmra.mxu0 %v725
      %v809 = vpop.f32.mrf.mxu0
      %v810 = vadd.f32 0.0, %v809
      %v811 = vpop.f32.mrf.mxu0
      %v812 = vadd.f32 0.0, %v811
      %813 = vmatmul.bf16.gmra.mxu0 %v728
      %v814 = vpop.f32.mrf.mxu0
      %v815 = vadd.f32 0.0, %v814
      %v816 = vpop.f32.mrf.mxu0
      %v817 = vadd.f32 0.0, %v816
      %818 = vmatmul.bf16.gmra.mxu0 %v731
      %v819 = vpop.f32.mrf.mxu0
      %v820 = vadd.f32 0.0, %v819
      %v821 = vpop.f32.mrf.mxu0
      %v822 = vadd.f32 0.0, %v821
      %823 = vmatmul.bf16.gmra.mxu0 %v734
      %v824 = vpop.f32.mrf.mxu0
      %v825 = vadd.f32 0.0, %v824
      %v826 = vpop.f32.mrf.mxu0
      %v827 = vadd.f32 0.0, %v826
      %828 = vmatmul.bf16.gmra.mxu0 %v737
      %v829 = vpop.f32.mrf.mxu0
      %v830 = vadd.f32 0.0, %v829
      %v831 = vpop.f32.mrf.mxu0
      %v832 = vadd.f32 0.0, %v831
      %833 = vmatmul.bf16.gmra.mxu0 %v740
      %v834 = vpop.f32.mrf.mxu0
      %v835 = vadd.f32 0.0, %v834
      %v836 = vpop.f32.mrf.mxu0
      %v837 = vadd.f32 0.0, %v836
      %838 = vmatmul.bf16.gmra.mxu0 %v743
      %v839 = vpop.f32.mrf.mxu0
      %v840 = vadd.f32 0.0, %v839
      %v841 = vpop.f32.mrf.mxu0
      %v842 = vadd.f32 0.0, %v841
      %843 = vdwg.mxu0
      %v844 = vadd.f32 %v531, %v755
      %v845 = vadd.f32 %v533, %v757
      %v846 = vadd.f32 %v536, %v760
      %v847 = vadd.f32 %v538, %v762
      %v848 = vadd.f32 %v541, %v765
      %v849 = vadd.f32 %v543, %v767
      %v850 = vadd.f32 %v546, %v770
      %v851 = vadd.f32 %v548, %v772
      %v852 = vadd.f32 %v551, %v775
      %v853 = vadd.f32 %v553, %v777
      %v854 = vadd.f32 %v556, %v780
      %v855 = vadd.f32 %v558, %v782
      %v856 = vadd.f32 %v561, %v785
      %v857 = vadd.f32 %v563, %v787
      %v858 = vadd.f32 %v566, %v790
      %v859 = vadd.f32 %v568, %v792
      %v860 = vadd.f32 %v571, %v795
      %v861 = vadd.f32 %v573, %v797
      %v862 = vadd.f32 %v576, %v800
      %v863 = vadd.f32 %v578, %v802
      %v864 = vadd.f32 %v581, %v805
      %v865 = vadd.f32 %v583, %v807
      %v866 = vadd.f32 %v586, %v810
      %v867 = vadd.f32 %v588, %v812
      %v868 = vadd.f32 %v591, %v815
      %v869 = vadd.f32 %v593, %v817
      %v870 = vadd.f32 %v596, %v820
      %v871 = vadd.f32 %v598, %v822
      %v872 = vadd.f32 %v601, %v825
      %v873 = vadd.f32 %v603, %v827
      %v874 = vadd.f32 %v606, %v830
      %v875 = vadd.f32 %v608, %v832
      %v876 = vadd.f32 %v611, %v835
      %v877 = vadd.f32 %v613, %v837
      %v878 = vadd.f32 %v616, %v840
      %v879 = vadd.f32 %v618, %v842
      %v880 = vld [vmem:[%s165 + $0x12] sm:$0xff]
      %v881 = vld [vmem:[%s165 + $0x1a] sm:$0xff]
      %v882 = vld [vmem:[%s165 + $0x22] sm:$0xff]
      %v883 = vld [vmem:[%s165 + $0x2a] sm:$0xff]
      %v884 = vld [vmem:[%s165 + $0x32] sm:$0xff]
      %v885 = vld [vmem:[%s165 + $0x3a] sm:$0xff]
      %v886 = vld [vmem:[%s165 + $0x42] sm:$0xff]
      %v887 = vld [vmem:[%s165 + $0x4a] sm:$0xff]
      %v888 = vld [vmem:[%s165 + $0x52] sm:$0xff]
      %v889 = vld [vmem:[%s165 + $0x5a] sm:$0xff]
      %v890 = vld [vmem:[%s165 + $0x62] sm:$0xff]
      %v891 = vld [vmem:[%s165 + $0x6a] sm:$0xff]
      %v892 = vld [vmem:[%s165 + $0x72] sm:$0xff]
      %v893 = vld [vmem:[%s165 + $0x7a] sm:$0xff]
      %v894 = vld [vmem:[%s165 + $0x82] sm:$0xff]
      %v895 = vld [vmem:[%s165 + $0x8a] sm:$0xff]
      %v896 = vld [vmem:[%s165 + $0x92] sm:$0xff]
      %v897 = vld [vmem:[%s165 + $0x9a] sm:$0xff]
      %v898 = vld [vmem:[%s165 + $0xa2] sm:$0xff]
      %v899 = vld [vmem:[%s165 + $0xaa] sm:$0xff]
      %v900 = vld [vmem:[%s165 + $0xb2] sm:$0xff]
      %v901 = vld [vmem:[%s165 + $0xba] sm:$0xff]
      %v902 = vld [vmem:[%s165 + $0xc2] sm:$0xff]
      %v903 = vld [vmem:[%s165 + $0xca] sm:$0xff]
      %v904 = vld [vmem:[%s165 + $0xd2] sm:$0xff]
      %v905 = vld [vmem:[%s165 + $0xda] sm:$0xff]
      %v906 = vld [vmem:[%s165 + $0xe2] sm:$0xff]
      %v907 = vld [vmem:[%s165 + $0xea] sm:$0xff]
      %v908 = vld [vmem:[%s165 + $0xf2] sm:$0xff]
      %v909 = vld [vmem:[%s165 + $0xfa] sm:$0xff]
      %v910 = vld [vmem:[%s165 + $0x102] sm:$0xff]
      %v911 = vld [vmem:[%s165 + $0x10a] sm:$0xff]
      %v912 = vld [vmem:[%s165 + $0x112] sm:$0xff]
      %v913 = vld [vmem:[%s165 + $0x11a] sm:$0xff]
      %v914 = vld [vmem:[%s165 + $0x122] sm:$0xff]
      %v915 = vld [vmem:[%s165 + $0x12a] sm:$0xff]
      %v916 = vpack.c.bf16 %v881, %v880
      %v917 = vpack.c.bf16 %v883, %v882
      %v918 = vpack.c.bf16 %v885, %v884
      %v919 = vpack.c.bf16 %v887, %v886
      %v920 = vpack.c.bf16 %v889, %v888
      %v921 = vpack.c.bf16 %v891, %v890
      %v922 = vpack.c.bf16 %v893, %v892
      %v923 = vpack.c.bf16 %v895, %v894
      %v924 = vpack.c.bf16 %v897, %v896
      %v925 = vpack.c.bf16 %v899, %v898
      %v926 = vpack.c.bf16 %v901, %v900
      %v927 = vpack.c.bf16 %v903, %v902
      %v928 = vpack.c.bf16 %v905, %v904
      %v929 = vpack.c.bf16 %v907, %v906
      %v930 = vpack.c.bf16 %v909, %v908
      %v931 = vpack.c.bf16 %v911, %v910
      %v932 = vpack.c.bf16 %v913, %v912
      %v933 = vpack.c.bf16 %v915, %v914
      %s934 = scalar_lea.vmem %s1, 48
      %v935 = vld [vmem:[%s934] sm:$0xf]
      %v936 = vld [vmem:[%s934 + $0x4] sm:$0xf]
      %v937 = vld [vmem:[%s934 + $0x8] sm:$0xf]
      %v938 = vld [vmem:[%s934 + $0xc] sm:$0xf]
      %v943 = vunpack.c.l.b16 %v935
      %v944 = vunpack.c.l.b16 %v936
      %v945 = vunpack.c.l.b16 %v937
      %v946 = vunpack.c.l.b16 %v938
      %v947 = vpack.c.b16 %v944, %v943
      %v948 = vpack.c.b16 %v946, %v945
      %v952 = vsel %vm301, %v916, 0
      %v955 = vsel %vm301, %v917, 0
      %v958 = vsel %vm301, %v918, 0
      %v961 = vsel %vm301, %v919, 0
      %v964 = vsel %vm301, %v920, 0
      %v967 = vsel %vm301, %v921, 0
      %v970 = vsel %vm301, %v922, 0
      %v973 = vsel %vm301, %v923, 0
      %v976 = vsel %vm301, %v924, 0
      %v979 = vsel %vm301, %v925, 0
      %v982 = vsel %vm301, %v926, 0
      %v985 = vsel %vm301, %v927, 0
      %v988 = vsel %vm301, %v928, 0
      %v991 = vsel %vm301, %v929, 0
      %v994 = vsel %vm301, %v930, 0
      %v997 = vsel %vm301, %v931, 0
      %v1000 = vsel %vm301, %v932, 0
      %v1003 = vsel %vm301, %v933, 0
      %1005 = vmatpush.bf16.msra.mxu0 0
      %1006 = vmatpush.bf16.msra.mxu0 0
      %1007 = vmatpush.bf16.msra.mxu0 0
      %1008 = vmatpush.bf16.msra.mxu0 0
      %1009 = vmatpush.bf16.msra.mxu0 0
      %1010 = vmatpush.bf16.msra.mxu0 0
      %1011 = vmatpush.bf16.msra.mxu0 %v948
      %1012 = vmatpush.bf16.msra.mxu0 %v947
      %1013 = vmatmul.bf16.gmra.mxu0 %v952
      %v1014 = vpop.f32.mrf.mxu0
      %v1015 = vadd.f32 0.0, %v1014
      %v1016 = vpop.f32.mrf.mxu0
      %v1017 = vadd.f32 0.0, %v1016
      %1018 = vmatmul.bf16.gmra.mxu0 %v955
      %v1019 = vpop.f32.mrf.mxu0
      %v1020 = vadd.f32 0.0, %v1019
      %v1021 = vpop.f32.mrf.mxu0
      %v1022 = vadd.f32 0.0, %v1021
      %1023 = vmatmul.bf16.gmra.mxu0 %v958
      %v1024 = vpop.f32.mrf.mxu0
      %v1025 = vadd.f32 0.0, %v1024
      %v1026 = vpop.f32.mrf.mxu0
      %v1027 = vadd.f32 0.0, %v1026
      %1028 = vmatmul.bf16.gmra.mxu0 %v961
      %v1029 = vpop.f32.mrf.mxu0
      %v1030 = vadd.f32 0.0, %v1029
      %v1031 = vpop.f32.mrf.mxu0
      %v1032 = vadd.f32 0.0, %v1031
      %1033 = vmatmul.bf16.gmra.mxu0 %v964
      %v1034 = vpop.f32.mrf.mxu0
      %v1035 = vadd.f32 0.0, %v1034
      %v1036 = vpop.f32.mrf.mxu0
      %v1037 = vadd.f32 0.0, %v1036
      %1038 = vmatmul.bf16.gmra.mxu0 %v967
      %v1039 = vpop.f32.mrf.mxu0
      %v1040 = vadd.f32 0.0, %v1039
      %v1041 = vpop.f32.mrf.mxu0
      %v1042 = vadd.f32 0.0, %v1041
      %1043 = vmatmul.bf16.gmra.mxu0 %v970
      %v1044 = vpop.f32.mrf.mxu0
      %v1045 = vadd.f32 0.0, %v1044
      %v1046 = vpop.f32.mrf.mxu0
      %v1047 = vadd.f32 0.0, %v1046
      %1048 = vmatmul.bf16.gmra.mxu0 %v973
      %v1049 = vpop.f32.mrf.mxu0
      %v1050 = vadd.f32 0.0, %v1049
      %v1051 = vpop.f32.mrf.mxu0
      %v1052 = vadd.f32 0.0, %v1051
      %1053 = vmatmul.bf16.gmra.mxu0 %v976
      %v1054 = vpop.f32.mrf.mxu0
      %v1055 = vadd.f32 0.0, %v1054
      %v1056 = vpop.f32.mrf.mxu0
      %v1057 = vadd.f32 0.0, %v1056
      %1058 = vmatmul.bf16.gmra.mxu0 %v979
      %v1059 = vpop.f32.mrf.mxu0
      %v1060 = vadd.f32 0.0, %v1059
      %v1061 = vpop.f32.mrf.mxu0
      %v1062 = vadd.f32 0.0, %v1061
      %1063 = vmatmul.bf16.gmra.mxu0 %v982
      %v1064 = vpop.f32.mrf.mxu0
      %v1065 = vadd.f32 0.0, %v1064
      %v1066 = vpop.f32.mrf.mxu0
      %v1067 = vadd.f32 0.0, %v1066
      %1068 = vmatmul.bf16.gmra.mxu0 %v985
      %v1069 = vpop.f32.mrf.mxu0
      %v1070 = vadd.f32 0.0, %v1069
      %v1071 = vpop.f32.mrf.mxu0
      %v1072 = vadd.f32 0.0, %v1071
      %1073 = vmatmul.bf16.gmra.mxu0 %v988
      %v1074 = vpop.f32.mrf.mxu0
      %v1075 = vadd.f32 0.0, %v1074
      %v1076 = vpop.f32.mrf.mxu0
      %v1077 = vadd.f32 0.0, %v1076
      %1078 = vmatmul.bf16.gmra.mxu0 %v991
      %v1079 = vpop.f32.mrf.mxu0
      %v1080 = vadd.f32 0.0, %v1079
      %v1081 = vpop.f32.mrf.mxu0
      %v1082 = vadd.f32 0.0, %v1081
      %1083 = vmatmul.bf16.gmra.mxu0 %v994
      %v1084 = vpop.f32.mrf.mxu0
      %v1085 = vadd.f32 0.0, %v1084
      %v1086 = vpop.f32.mrf.mxu0
      %v1087 = vadd.f32 0.0, %v1086
      %1088 = vmatmul.bf16.gmra.mxu0 %v997
      %v1089 = vpop.f32.mrf.mxu0
      %v1090 = vadd.f32 0.0, %v1089
      %v1091 = vpop.f32.mrf.mxu0
      %v1092 = vadd.f32 0.0, %v1091
      %1093 = vmatmul.bf16.gmra.mxu0 %v1000
      %v1094 = vpop.f32.mrf.mxu0
      %v1095 = vadd.f32 0.0, %v1094
      %v1096 = vpop.f32.mrf.mxu0
      %v1097 = vadd.f32 0.0, %v1096
      %1098 = vmatmul.bf16.gmra.mxu0 %v1003
      %v1099 = vpop.f32.mrf.mxu0
      %v1100 = vadd.f32 0.0, %v1099
      %v1101 = vpop.f32.mrf.mxu0
      %v1102 = vadd.f32 0.0, %v1101
      %1103 = vdwg.mxu0
      %v1104 = vadd.f32 %v844, %v1015
      %v1105 = vadd.f32 %v845, %v1017
      %v1106 = vadd.f32 %v846, %v1020
      %v1107 = vadd.f32 %v847, %v1022
      %v1108 = vadd.f32 %v848, %v1025
      %v1109 = vadd.f32 %v849, %v1027
      %v1110 = vadd.f32 %v850, %v1030
      %v1111 = vadd.f32 %v851, %v1032
      %v1112 = vadd.f32 %v852, %v1035
      %v1113 = vadd.f32 %v853, %v1037
      %v1114 = vadd.f32 %v854, %v1040
      %v1115 = vadd.f32 %v855, %v1042
      %v1116 = vadd.f32 %v856, %v1045
      %v1117 = vadd.f32 %v857, %v1047
      %v1118 = vadd.f32 %v858, %v1050
      %v1119 = vadd.f32 %v859, %v1052
      %v1120 = vadd.f32 %v860, %v1055
      %v1121 = vadd.f32 %v861, %v1057
      %v1122 = vadd.f32 %v862, %v1060
      %v1123 = vadd.f32 %v863, %v1062
      %v1124 = vadd.f32 %v864, %v1065
      %v1125 = vadd.f32 %v865, %v1067
      %v1126 = vadd.f32 %v866, %v1070
      %v1127 = vadd.f32 %v867, %v1072
      %v1128 = vadd.f32 %v868, %v1075
      %v1129 = vadd.f32 %v869, %v1077
      %v1130 = vadd.f32 %v870, %v1080
      %v1131 = vadd.f32 %v871, %v1082
      %v1132 = vadd.f32 %v872, %v1085
      %v1133 = vadd.f32 %v873, %v1087
      %v1134 = vadd.f32 %v874, %v1090
      %v1135 = vadd.f32 %v875, %v1092
      %v1136 = vadd.f32 %v876, %v1095
      %v1137 = vadd.f32 %v877, %v1097
      %v1138 = vadd.f32 %v878, %v1100
      %v1139 = vadd.f32 %v879, %v1102
      %v1140 = vld [vmem:[%s165 + $0x13] sm:$0xff]
      %v1141 = vld [vmem:[%s165 + $0x1b] sm:$0xff]
      %v1142 = vld [vmem:[%s165 + $0x23] sm:$0xff]
      %v1143 = vld [vmem:[%s165 + $0x2b] sm:$0xff]
      %v1144 = vld [vmem:[%s165 + $0x33] sm:$0xff]
      %v1145 = vld [vmem:[%s165 + $0x3b] sm:$0xff]
      %v1146 = vld [vmem:[%s165 + $0x43] sm:$0xff]
      %v1147 = vld [vmem:[%s165 + $0x4b] sm:$0xff]
      %v1148 = vld [vmem:[%s165 + $0x53] sm:$0xff]
      %v1149 = vld [vmem:[%s165 + $0x5b] sm:$0xff]
      %v1150 = vld [vmem:[%s165 + $0x63] sm:$0xff]
      %v1151 = vld [vmem:[%s165 + $0x6b] sm:$0xff]
      %v1152 = vld [vmem:[%s165 + $0x73] sm:$0xff]
      %v1153 = vld [vmem:[%s165 + $0x7b] sm:$0xff]
      %v1154 = vld [vmem:[%s165 + $0x83] sm:$0xff]
      %v1155 = vld [vmem:[%s165 + $0x8b] sm:$0xff]
      %v1156 = vld [vmem:[%s165 + $0x93] sm:$0xff]
      %v1157 = vld [vmem:[%s165 + $0x9b] sm:$0xff]
      %v1158 = vld [vmem:[%s165 + $0xa3] sm:$0xff]
      %v1159 = vld [vmem:[%s165 + $0xab] sm:$0xff]
      %v1160 = vld [vmem:[%s165 + $0xb3] sm:$0xff]
      %v1161 = vld [vmem:[%s165 + $0xbb] sm:$0xff]
      %v1162 = vld [vmem:[%s165 + $0xc3] sm:$0xff]
      %v1163 = vld [vmem:[%s165 + $0xcb] sm:$0xff]
      %v1164 = vld [vmem:[%s165 + $0xd3] sm:$0xff]
      %v1165 = vld [vmem:[%s165 + $0xdb] sm:$0xff]
      %v1166 = vld [vmem:[%s165 + $0xe3] sm:$0xff]
      %v1167 = vld [vmem:[%s165 + $0xeb] sm:$0xff]
      %v1168 = vld [vmem:[%s165 + $0xf3] sm:$0xff]
      %v1169 = vld [vmem:[%s165 + $0xfb] sm:$0xff]
      %v1170 = vld [vmem:[%s165 + $0x103] sm:$0xff]
      %v1171 = vld [vmem:[%s165 + $0x10b] sm:$0xff]
      %v1172 = vld [vmem:[%s165 + $0x113] sm:$0xff]
      %v1173 = vld [vmem:[%s165 + $0x11b] sm:$0xff]
      %v1174 = vld [vmem:[%s165 + $0x123] sm:$0xff]
      %v1175 = vld [vmem:[%s165 + $0x12b] sm:$0xff]
      %v1176 = vpack.c.bf16 %v1141, %v1140
      %v1177 = vpack.c.bf16 %v1143, %v1142
      %v1178 = vpack.c.bf16 %v1145, %v1144
      %v1179 = vpack.c.bf16 %v1147, %v1146
      %v1180 = vpack.c.bf16 %v1149, %v1148
      %v1181 = vpack.c.bf16 %v1151, %v1150
      %v1182 = vpack.c.bf16 %v1153, %v1152
      %v1183 = vpack.c.bf16 %v1155, %v1154
      %v1184 = vpack.c.bf16 %v1157, %v1156
      %v1185 = vpack.c.bf16 %v1159, %v1158
      %v1186 = vpack.c.bf16 %v1161, %v1160
      %v1187 = vpack.c.bf16 %v1163, %v1162
      %v1188 = vpack.c.bf16 %v1165, %v1164
      %v1189 = vpack.c.bf16 %v1167, %v1166
      %v1190 = vpack.c.bf16 %v1169, %v1168
      %v1191 = vpack.c.bf16 %v1171, %v1170
      %v1192 = vpack.c.bf16 %v1173, %v1172
      %v1193 = vpack.c.bf16 %v1175, %v1174
      %s1194 = scalar_lea.vmem %s1, 64
      %v1195 = vld [vmem:[%s1194] sm:$0xf]
      %v1196 = vld [vmem:[%s1194 + $0x4] sm:$0xf]
      %v1197 = vld [vmem:[%s1194 + $0x8] sm:$0xf]
      %v1198 = vld [vmem:[%s1194 + $0xc] sm:$0xf]
      %v1203 = vunpack.c.l.b16 %v1195
      %v1204 = vunpack.c.l.b16 %v1196
      %v1205 = vunpack.c.l.b16 %v1197
      %v1206 = vunpack.c.l.b16 %v1198
      %v1207 = vpack.c.b16 %v1204, %v1203
      %v1208 = vpack.c.b16 %v1206, %v1205
      %v1212 = vsel %vm301, %v1176, 0
      %v1215 = vsel %vm301, %v1177, 0
      %v1218 = vsel %vm301, %v1178, 0
      %v1221 = vsel %vm301, %v1179, 0
      %v1224 = vsel %vm301, %v1180, 0
      %v1227 = vsel %vm301, %v1181, 0
      %v1230 = vsel %vm301, %v1182, 0
      %v1233 = vsel %vm301, %v1183, 0
      %v1236 = vsel %vm301, %v1184, 0
      %v1239 = vsel %vm301, %v1185, 0
      %v1242 = vsel %vm301, %v1186, 0
      %v1245 = vsel %vm301, %v1187, 0
      %v1248 = vsel %vm301, %v1188, 0
      %v1251 = vsel %vm301, %v1189, 0
      %v1254 = vsel %vm301, %v1190, 0
      %v1257 = vsel %vm301, %v1191, 0
      %v1260 = vsel %vm301, %v1192, 0
      %v1263 = vsel %vm301, %v1193, 0
      %1265 = vmatpush.bf16.msra.mxu0 0
      %1266 = vmatpush.bf16.msra.mxu0 0
      %1267 = vmatpush.bf16.msra.mxu0 0
      %1268 = vmatpush.bf16.msra.mxu0 0
      %1269 = vmatpush.bf16.msra.mxu0 0
      %1270 = vmatpush.bf16.msra.mxu0 0
      %1271 = vmatpush.bf16.msra.mxu0 %v1208
      %1272 = vmatpush.bf16.msra.mxu0 %v1207
      %1273 = vmatmul.bf16.gmra.mxu0 %v1212
      %v1274 = vpop.f32.mrf.mxu0
      %v1275 = vadd.f32 0.0, %v1274
      %v1276 = vpop.f32.mrf.mxu0
      %v1277 = vadd.f32 0.0, %v1276
      %1278 = vmatmul.bf16.gmra.mxu0 %v1215
      %v1279 = vpop.f32.mrf.mxu0
      %v1280 = vadd.f32 0.0, %v1279
      %v1281 = vpop.f32.mrf.mxu0
      %v1282 = vadd.f32 0.0, %v1281
      %1283 = vmatmul.bf16.gmra.mxu0 %v1218
      %v1284 = vpop.f32.mrf.mxu0
      %v1285 = vadd.f32 0.0, %v1284
      %v1286 = vpop.f32.mrf.mxu0
      %v1287 = vadd.f32 0.0, %v1286
      %1288 = vmatmul.bf16.gmra.mxu0 %v1221
      %v1289 = vpop.f32.mrf.mxu0
      %v1290 = vadd.f32 0.0, %v1289
      %v1291 = vpop.f32.mrf.mxu0
      %v1292 = vadd.f32 0.0, %v1291
      %1293 = vmatmul.bf16.gmra.mxu0 %v1224
      %v1294 = vpop.f32.mrf.mxu0
      %v1295 = vadd.f32 0.0, %v1294
      %v1296 = vpop.f32.mrf.mxu0
      %v1297 = vadd.f32 0.0, %v1296
      %1298 = vmatmul.bf16.gmra.mxu0 %v1227
      %v1299 = vpop.f32.mrf.mxu0
      %v1300 = vadd.f32 0.0, %v1299
      %v1301 = vpop.f32.mrf.mxu0
      %v1302 = vadd.f32 0.0, %v1301
      %1303 = vmatmul.bf16.gmra.mxu0 %v1230
      %v1304 = vpop.f32.mrf.mxu0
      %v1305 = vadd.f32 0.0, %v1304
      %v1306 = vpop.f32.mrf.mxu0
      %v1307 = vadd.f32 0.0, %v1306
      %1308 = vmatmul.bf16.gmra.mxu0 %v1233
      %v1309 = vpop.f32.mrf.mxu0
      %v1310 = vadd.f32 0.0, %v1309
      %v1311 = vpop.f32.mrf.mxu0
      %v1312 = vadd.f32 0.0, %v1311
      %1313 = vmatmul.bf16.gmra.mxu0 %v1236
      %v1314 = vpop.f32.mrf.mxu0
      %v1315 = vadd.f32 0.0, %v1314
      %v1316 = vpop.f32.mrf.mxu0
      %v1317 = vadd.f32 0.0, %v1316
      %1318 = vmatmul.bf16.gmra.mxu0 %v1239
      %v1319 = vpop.f32.mrf.mxu0
      %v1320 = vadd.f32 0.0, %v1319
      %v1321 = vpop.f32.mrf.mxu0
      %v1322 = vadd.f32 0.0, %v1321
      %1323 = vmatmul.bf16.gmra.mxu0 %v1242
      %v1324 = vpop.f32.mrf.mxu0
      %v1325 = vadd.f32 0.0, %v1324
      %v1326 = vpop.f32.mrf.mxu0
      %v1327 = vadd.f32 0.0, %v1326
      %1328 = vmatmul.bf16.gmra.mxu0 %v1245
      %v1329 = vpop.f32.mrf.mxu0
      %v1330 = vadd.f32 0.0, %v1329
      %v1331 = vpop.f32.mrf.mxu0
      %v1332 = vadd.f32 0.0, %v1331
      %1333 = vmatmul.bf16.gmra.mxu0 %v1248
      %v1334 = vpop.f32.mrf.mxu0
      %v1335 = vadd.f32 0.0, %v1334
      %v1336 = vpop.f32.mrf.mxu0
      %v1337 = vadd.f32 0.0, %v1336
      %1338 = vmatmul.bf16.gmra.mxu0 %v1251
      %v1339 = vpop.f32.mrf.mxu0
      %v1340 = vadd.f32 0.0, %v1339
      %v1341 = vpop.f32.mrf.mxu0
      %v1342 = vadd.f32 0.0, %v1341
      %1343 = vmatmul.bf16.gmra.mxu0 %v1254
      %v1344 = vpop.f32.mrf.mxu0
      %v1345 = vadd.f32 0.0, %v1344
      %v1346 = vpop.f32.mrf.mxu0
      %v1347 = vadd.f32 0.0, %v1346
      %1348 = vmatmul.bf16.gmra.mxu0 %v1257
      %v1349 = vpop.f32.mrf.mxu0
      %v1350 = vadd.f32 0.0, %v1349
      %v1351 = vpop.f32.mrf.mxu0
      %v1352 = vadd.f32 0.0, %v1351
      %1353 = vmatmul.bf16.gmra.mxu0 %v1260
      %v1354 = vpop.f32.mrf.mxu0
      %v1355 = vadd.f32 0.0, %v1354
      %v1356 = vpop.f32.mrf.mxu0
      %v1357 = vadd.f32 0.0, %v1356
      %1358 = vmatmul.bf16.gmra.mxu0 %v1263
      %v1359 = vpop.f32.mrf.mxu0
      %v1360 = vadd.f32 0.0, %v1359
      %v1361 = vpop.f32.mrf.mxu0
      %v1362 = vadd.f32 0.0, %v1361
      %1363 = vdwg.mxu0
      %v1364 = vadd.f32 %v1104, %v1275
      %v1365 = vadd.f32 %v1105, %v1277
      %v1366 = vadd.f32 %v1106, %v1280
      %v1367 = vadd.f32 %v1107, %v1282
      %v1368 = vadd.f32 %v1108, %v1285
      %v1369 = vadd.f32 %v1109, %v1287
      %v1370 = vadd.f32 %v1110, %v1290
      %v1371 = vadd.f32 %v1111, %v1292
      %v1372 = vadd.f32 %v1112, %v1295
      %v1373 = vadd.f32 %v1113, %v1297
      %v1374 = vadd.f32 %v1114, %v1300
      %v1375 = vadd.f32 %v1115, %v1302
      %v1376 = vadd.f32 %v1116, %v1305
      %v1377 = vadd.f32 %v1117, %v1307
      %v1378 = vadd.f32 %v1118, %v1310
      %v1379 = vadd.f32 %v1119, %v1312
      %v1380 = vadd.f32 %v1120, %v1315
      %v1381 = vadd.f32 %v1121, %v1317
      %v1382 = vadd.f32 %v1122, %v1320
      %v1383 = vadd.f32 %v1123, %v1322
      %v1384 = vadd.f32 %v1124, %v1325
      %v1385 = vadd.f32 %v1125, %v1327
      %v1386 = vadd.f32 %v1126, %v1330
      %v1387 = vadd.f32 %v1127, %v1332
      %v1388 = vadd.f32 %v1128, %v1335
      %v1389 = vadd.f32 %v1129, %v1337
      %v1390 = vadd.f32 %v1130, %v1340
      %v1391 = vadd.f32 %v1131, %v1342
      %v1392 = vadd.f32 %v1132, %v1345
      %v1393 = vadd.f32 %v1133, %v1347
      %v1394 = vadd.f32 %v1134, %v1350
      %v1395 = vadd.f32 %v1135, %v1352
      %v1396 = vadd.f32 %v1136, %v1355
      %v1397 = vadd.f32 %v1137, %v1357
      %v1398 = vadd.f32 %v1138, %v1360
      %v1399 = vadd.f32 %v1139, %v1362
      %v1400 = vld [vmem:[%s165 + $0x14] sm:$0xff]
      %v1401 = vld [vmem:[%s165 + $0x1c] sm:$0xff]
      %v1402 = vld [vmem:[%s165 + $0x24] sm:$0xff]
      %v1403 = vld [vmem:[%s165 + $0x2c] sm:$0xff]
      %v1404 = vld [vmem:[%s165 + $0x34] sm:$0xff]
      %v1405 = vld [vmem:[%s165 + $0x3c] sm:$0xff]
      %v1406 = vld [vmem:[%s165 + $0x44] sm:$0xff]
      %v1407 = vld [vmem:[%s165 + $0x4c] sm:$0xff]
      %v1408 = vld [vmem:[%s165 + $0x54] sm:$0xff]
      %v1409 = vld [vmem:[%s165 + $0x5c] sm:$0xff]
      %v1410 = vld [vmem:[%s165 + $0x64] sm:$0xff]
      %v1411 = vld [vmem:[%s165 + $0x6c] sm:$0xff]
      %v1412 = vld [vmem:[%s165 + $0x74] sm:$0xff]
      %v1413 = vld [vmem:[%s165 + $0x7c] sm:$0xff]
      %v1414 = vld [vmem:[%s165 + $0x84] sm:$0xff]
      %v1415 = vld [vmem:[%s165 + $0x8c] sm:$0xff]
      %v1416 = vld [vmem:[%s165 + $0x94] sm:$0xff]
      %v1417 = vld [vmem:[%s165 + $0x9c] sm:$0xff]
      %v1418 = vld [vmem:[%s165 + $0xa4] sm:$0xff]
      %v1419 = vld [vmem:[%s165 + $0xac] sm:$0xff]
      %v1420 = vld [vmem:[%s165 + $0xb4] sm:$0xff]
      %v1421 = vld [vmem:[%s165 + $0xbc] sm:$0xff]
      %v1422 = vld [vmem:[%s165 + $0xc4] sm:$0xff]
      %v1423 = vld [vmem:[%s165 + $0xcc] sm:$0xff]
      %v1424 = vld [vmem:[%s165 + $0xd4] sm:$0xff]
      %v1425 = vld [vmem:[%s165 + $0xdc] sm:$0xff]
      %v1426 = vld [vmem:[%s165 + $0xe4] sm:$0xff]
      %v1427 = vld [vmem:[%s165 + $0xec] sm:$0xff]
      %v1428 = vld [vmem:[%s165 + $0xf4] sm:$0xff]
      %v1429 = vld [vmem:[%s165 + $0xfc] sm:$0xff]
      %v1430 = vld [vmem:[%s165 + $0x104] sm:$0xff]
      %v1431 = vld [vmem:[%s165 + $0x10c] sm:$0xff]
      %v1432 = vld [vmem:[%s165 + $0x114] sm:$0xff]
      %v1433 = vld [vmem:[%s165 + $0x11c] sm:$0xff]
      %v1434 = vld [vmem:[%s165 + $0x124] sm:$0xff]
      %v1435 = vld [vmem:[%s165 + $0x12c] sm:$0xff]
      %v1436 = vpack.c.bf16 %v1401, %v1400
      %v1437 = vpack.c.bf16 %v1403, %v1402
      %v1438 = vpack.c.bf16 %v1405, %v1404
      %v1439 = vpack.c.bf16 %v1407, %v1406
      %v1440 = vpack.c.bf16 %v1409, %v1408
      %v1441 = vpack.c.bf16 %v1411, %v1410
      %v1442 = vpack.c.bf16 %v1413, %v1412
      %v1443 = vpack.c.bf16 %v1415, %v1414
      %v1444 = vpack.c.bf16 %v1417, %v1416
      %v1445 = vpack.c.bf16 %v1419, %v1418
      %v1446 = vpack.c.bf16 %v1421, %v1420
      %v1447 = vpack.c.bf16 %v1423, %v1422
      %v1448 = vpack.c.bf16 %v1425, %v1424
      %v1449 = vpack.c.bf16 %v1427, %v1426
      %v1450 = vpack.c.bf16 %v1429, %v1428
      %v1451 = vpack.c.bf16 %v1431, %v1430
      %v1452 = vpack.c.bf16 %v1433, %v1432
      %v1453 = vpack.c.bf16 %v1435, %v1434
      %s1454 = scalar_lea.vmem %s1, 80
      %v1455 = vld [vmem:[%s1454] sm:$0xf]
      %v1456 = vld [vmem:[%s1454 + $0x4] sm:$0xf]
      %v1457 = vld [vmem:[%s1454 + $0x8] sm:$0xf]
      %v1458 = vld [vmem:[%s1454 + $0xc] sm:$0xf]
      %v1463 = vunpack.c.l.b16 %v1455
      %v1464 = vunpack.c.l.b16 %v1456
      %v1465 = vunpack.c.l.b16 %v1457
      %v1466 = vunpack.c.l.b16 %v1458
      %v1467 = vpack.c.b16 %v1464, %v1463
      %v1468 = vpack.c.b16 %v1466, %v1465
      %v1472 = vsel %vm301, %v1436, 0
      %v1475 = vsel %vm301, %v1437, 0
      %v1478 = vsel %vm301, %v1438, 0
      %v1481 = vsel %vm301, %v1439, 0
      %v1484 = vsel %vm301, %v1440, 0
      %v1487 = vsel %vm301, %v1441, 0
      %v1490 = vsel %vm301, %v1442, 0
      %v1493 = vsel %vm301, %v1443, 0
      %v1496 = vsel %vm301, %v1444, 0
      %v1499 = vsel %vm301, %v1445, 0
      %v1502 = vsel %vm301, %v1446, 0
      %v1505 = vsel %vm301, %v1447, 0
      %v1508 = vsel %vm301, %v1448, 0
      %v1511 = vsel %vm301, %v1449, 0
      %v1514 = vsel %vm301, %v1450, 0
      %v1517 = vsel %vm301, %v1451, 0
      %v1520 = vsel %vm301, %v1452, 0
      %v1523 = vsel %vm301, %v1453, 0
      %1525 = vmatpush.bf16.msra.mxu0 0
      %1526 = vmatpush.bf16.msra.mxu0 0
      %1527 = vmatpush.bf16.msra.mxu0 0
      %1528 = vmatpush.bf16.msra.mxu0 0
      %1529 = vmatpush.bf16.msra.mxu0 0
      %1530 = vmatpush.bf16.msra.mxu0 0
      %1531 = vmatpush.bf16.msra.mxu0 %v1468
      %1532 = vmatpush.bf16.msra.mxu0 %v1467
      %1533 = vmatmul.bf16.gmra.mxu0 %v1472
      %v1534 = vpop.f32.mrf.mxu0
      %v1535 = vadd.f32 0.0, %v1534
      %v1536 = vpop.f32.mrf.mxu0
      %v1537 = vadd.f32 0.0, %v1536
      %1538 = vmatmul.bf16.gmra.mxu0 %v1475
      %v1539 = vpop.f32.mrf.mxu0
      %v1540 = vadd.f32 0.0, %v1539
      %v1541 = vpop.f32.mrf.mxu0
      %v1542 = vadd.f32 0.0, %v1541
      %1543 = vmatmul.bf16.gmra.mxu0 %v1478
      %v1544 = vpop.f32.mrf.mxu0
      %v1545 = vadd.f32 0.0, %v1544
      %v1546 = vpop.f32.mrf.mxu0
      %v1547 = vadd.f32 0.0, %v1546
      %1548 = vmatmul.bf16.gmra.mxu0 %v1481
      %v1549 = vpop.f32.mrf.mxu0
      %v1550 = vadd.f32 0.0, %v1549
      %v1551 = vpop.f32.mrf.mxu0
      %v1552 = vadd.f32 0.0, %v1551
      %1553 = vmatmul.bf16.gmra.mxu0 %v1484
      %v1554 = vpop.f32.mrf.mxu0
      %v1555 = vadd.f32 0.0, %v1554
      %v1556 = vpop.f32.mrf.mxu0
      %v1557 = vadd.f32 0.0, %v1556
      %1558 = vmatmul.bf16.gmra.mxu0 %v1487
      %v1559 = vpop.f32.mrf.mxu0
      %v1560 = vadd.f32 0.0, %v1559
      %v1561 = vpop.f32.mrf.mxu0
      %v1562 = vadd.f32 0.0, %v1561
      %1563 = vmatmul.bf16.gmra.mxu0 %v1490
      %v1564 = vpop.f32.mrf.mxu0
      %v1565 = vadd.f32 0.0, %v1564
      %v1566 = vpop.f32.mrf.mxu0
      %v1567 = vadd.f32 0.0, %v1566
      %1568 = vmatmul.bf16.gmra.mxu0 %v1493
      %v1569 = vpop.f32.mrf.mxu0
      %v1570 = vadd.f32 0.0, %v1569
      %v1571 = vpop.f32.mrf.mxu0
      %v1572 = vadd.f32 0.0, %v1571
      %1573 = vmatmul.bf16.gmra.mxu0 %v1496
      %v1574 = vpop.f32.mrf.mxu0
      %v1575 = vadd.f32 0.0, %v1574
      %v1576 = vpop.f32.mrf.mxu0
      %v1577 = vadd.f32 0.0, %v1576
      %1578 = vmatmul.bf16.gmra.mxu0 %v1499
      %v1579 = vpop.f32.mrf.mxu0
      %v1580 = vadd.f32 0.0, %v1579
      %v1581 = vpop.f32.mrf.mxu0
      %v1582 = vadd.f32 0.0, %v1581
      %1583 = vmatmul.bf16.gmra.mxu0 %v1502
      %v1584 = vpop.f32.mrf.mxu0
      %v1585 = vadd.f32 0.0, %v1584
      %v1586 = vpop.f32.mrf.mxu0
      %v1587 = vadd.f32 0.0, %v1586
      %1588 = vmatmul.bf16.gmra.mxu0 %v1505
      %v1589 = vpop.f32.mrf.mxu0
      %v1590 = vadd.f32 0.0, %v1589
      %v1591 = vpop.f32.mrf.mxu0
      %v1592 = vadd.f32 0.0, %v1591
      %1593 = vmatmul.bf16.gmra.mxu0 %v1508
      %v1594 = vpop.f32.mrf.mxu0
      %v1595 = vadd.f32 0.0, %v1594
      %v1596 = vpop.f32.mrf.mxu0
      %v1597 = vadd.f32 0.0, %v1596
      %1598 = vmatmul.bf16.gmra.mxu0 %v1511
      %v1599 = vpop.f32.mrf.mxu0
      %v1600 = vadd.f32 0.0, %v1599
      %v1601 = vpop.f32.mrf.mxu0
      %v1602 = vadd.f32 0.0, %v1601
      %1603 = vmatmul.bf16.gmra.mxu0 %v1514
      %v1604 = vpop.f32.mrf.mxu0
      %v1605 = vadd.f32 0.0, %v1604
      %v1606 = vpop.f32.mrf.mxu0
      %v1607 = vadd.f32 0.0, %v1606
      %1608 = vmatmul.bf16.gmra.mxu0 %v1517
      %v1609 = vpop.f32.mrf.mxu0
      %v1610 = vadd.f32 0.0, %v1609
      %v1611 = vpop.f32.mrf.mxu0
      %v1612 = vadd.f32 0.0, %v1611
      %1613 = vmatmul.bf16.gmra.mxu0 %v1520
      %v1614 = vpop.f32.mrf.mxu0
      %v1615 = vadd.f32 0.0, %v1614
      %v1616 = vpop.f32.mrf.mxu0
      %v1617 = vadd.f32 0.0, %v1616
      %1618 = vmatmul.bf16.gmra.mxu0 %v1523
      %v1619 = vpop.f32.mrf.mxu0
      %v1620 = vadd.f32 0.0, %v1619
      %v1621 = vpop.f32.mrf.mxu0
      %v1622 = vadd.f32 0.0, %v1621
      %1623 = vdwg.mxu0
      %v1624 = vadd.f32 %v1364, %v1535
      %v1625 = vadd.f32 %v1365, %v1537
      %v1626 = vadd.f32 %v1366, %v1540
      %v1627 = vadd.f32 %v1367, %v1542
      %v1628 = vadd.f32 %v1368, %v1545
      %v1629 = vadd.f32 %v1369, %v1547
      %v1630 = vadd.f32 %v1370, %v1550
      %v1631 = vadd.f32 %v1371, %v1552
      %v1632 = vadd.f32 %v1372, %v1555
      %v1633 = vadd.f32 %v1373, %v1557
      %v1634 = vadd.f32 %v1374, %v1560
      %v1635 = vadd.f32 %v1375, %v1562
      %v1636 = vadd.f32 %v1376, %v1565
      %v1637 = vadd.f32 %v1377, %v1567
      %v1638 = vadd.f32 %v1378, %v1570
      %v1639 = vadd.f32 %v1379, %v1572
      %v1640 = vadd.f32 %v1380, %v1575
      %v1641 = vadd.f32 %v1381, %v1577
      %v1642 = vadd.f32 %v1382, %v1580
      %v1643 = vadd.f32 %v1383, %v1582
      %v1644 = vadd.f32 %v1384, %v1585
      %v1645 = vadd.f32 %v1385, %v1587
      %v1646 = vadd.f32 %v1386, %v1590
      %v1647 = vadd.f32 %v1387, %v1592
      %v1648 = vadd.f32 %v1388, %v1595
      %v1649 = vadd.f32 %v1389, %v1597
      %v1650 = vadd.f32 %v1390, %v1600
      %v1651 = vadd.f32 %v1391, %v1602
      %v1652 = vadd.f32 %v1392, %v1605
      %v1653 = vadd.f32 %v1393, %v1607
      %v1654 = vadd.f32 %v1394, %v1610
      %v1655 = vadd.f32 %v1395, %v1612
      %v1656 = vadd.f32 %v1396, %v1615
      %v1657 = vadd.f32 %v1397, %v1617
      %v1658 = vadd.f32 %v1398, %v1620
      %v1659 = vadd.f32 %v1399, %v1622
      %v1660 = vld [vmem:[%s165 + $0x24] sm:$0xff]
      %v1661 = vld [vmem:[%s165 + $0x2c] sm:$0xff]
      %v1662 = vld [vmem:[%s165 + $0x34] sm:$0xff]
      %v1663 = vld [vmem:[%s165 + $0x3c] sm:$0xff]
      %v1664 = vld [vmem:[%s165 + $0x44] sm:$0xff]
      %v1665 = vld [vmem:[%s165 + $0x4c] sm:$0xff]
      %v1666 = vld [vmem:[%s165 + $0x54] sm:$0xff]
      %v1667 = vld [vmem:[%s165 + $0x5c] sm:$0xff]
      %v1668 = vld [vmem:[%s165 + $0x64] sm:$0xff]
      %v1669 = vld [vmem:[%s165 + $0x6c] sm:$0xff]
      %v1670 = vld [vmem:[%s165 + $0x74] sm:$0xff]
      %v1671 = vld [vmem:[%s165 + $0x7c] sm:$0xff]
      %v1672 = vld [vmem:[%s165 + $0x84] sm:$0xff]
      %v1673 = vld [vmem:[%s165 + $0x8c] sm:$0xff]
      %v1674 = vld [vmem:[%s165 + $0x94] sm:$0xff]
      %v1675 = vld [vmem:[%s165 + $0x9c] sm:$0xff]
      %v1676 = vld [vmem:[%s165 + $0xa4] sm:$0xff]
      %v1677 = vld [vmem:[%s165 + $0xac] sm:$0xff]
      %v1678 = vld [vmem:[%s165 + $0xb4] sm:$0xff]
      %v1679 = vld [vmem:[%s165 + $0xbc] sm:$0xff]
      %v1680 = vld [vmem:[%s165 + $0xc4] sm:$0xff]
      %v1681 = vld [vmem:[%s165 + $0xcc] sm:$0xff]
      %v1682 = vld [vmem:[%s165 + $0xd4] sm:$0xff]
      %v1683 = vld [vmem:[%s165 + $0xdc] sm:$0xff]
      %v1684 = vld [vmem:[%s165 + $0xe4] sm:$0xff]
      %v1685 = vld [vmem:[%s165 + $0xec] sm:$0xff]
      %v1686 = vld [vmem:[%s165 + $0xf4] sm:$0xff]
      %v1687 = vld [vmem:[%s165 + $0xfc] sm:$0xff]
      %v1688 = vld [vmem:[%s165 + $0x104] sm:$0xff]
      %v1689 = vld [vmem:[%s165 + $0x10c] sm:$0xff]
      %v1690 = vld [vmem:[%s165 + $0x114] sm:$0xff]
      %v1691 = vld [vmem:[%s165 + $0x11c] sm:$0xff]
      %v1692 = vld [vmem:[%s165 + $0x124] sm:$0xff]
      %v1693 = vld [vmem:[%s165 + $0x12c] sm:$0xff]
      %v1694 = vld [vmem:[%s165 + $0x134] sm:$0xff]
      %v1695 = vld [vmem:[%s165 + $0x13c] sm:$0xff]
      %v1696 = vpack.c.bf16 %v1661, %v1660
      %v1697 = vpack.c.bf16 %v1663, %v1662
      %v1698 = vpack.c.bf16 %v1665, %v1664
      %v1699 = vpack.c.bf16 %v1667, %v1666
      %v1700 = vpack.c.bf16 %v1669, %v1668
      %v1701 = vpack.c.bf16 %v1671, %v1670
      %v1702 = vpack.c.bf16 %v1673, %v1672
      %v1703 = vpack.c.bf16 %v1675, %v1674
      %v1704 = vpack.c.bf16 %v1677, %v1676
      %v1705 = vpack.c.bf16 %v1679, %v1678
      %v1706 = vpack.c.bf16 %v1681, %v1680
      %v1707 = vpack.c.bf16 %v1683, %v1682
      %v1708 = vpack.c.bf16 %v1685, %v1684
      %v1709 = vpack.c.bf16 %v1687, %v1686
      %v1710 = vpack.c.bf16 %v1689, %v1688
      %v1711 = vpack.c.bf16 %v1691, %v1690
      %v1712 = vpack.c.bf16 %v1693, %v1692
      %v1713 = vpack.c.bf16 %v1695, %v1694
      %s1714 = scalar_lea.vmem %s1, 96
      %v1715 = vld [vmem:[%s1714] sm:$0xf]
      %v1716 = vld [vmem:[%s1714 + $0x4] sm:$0xf]
      %v1717 = vld [vmem:[%s1714 + $0x8] sm:$0xf]
      %v1718 = vld [vmem:[%s1714 + $0xc] sm:$0xf]
      %v1723 = vunpack.c.l.b16 %v1715
      %v1724 = vunpack.c.l.b16 %v1716
      %v1725 = vunpack.c.l.b16 %v1717
      %v1726 = vunpack.c.l.b16 %v1718
      %v1727 = vpack.c.b16 %v1724, %v1723
      %v1728 = vpack.c.b16 %v1726, %v1725
      %v1732 = vsel %vm301, %v1696, 0
      %v1735 = vsel %vm301, %v1697, 0
      %v1738 = vsel %vm301, %v1698, 0
      %v1741 = vsel %vm301, %v1699, 0
      %v1744 = vsel %vm301, %v1700, 0
      %v1747 = vsel %vm301, %v1701, 0
      %v1750 = vsel %vm301, %v1702, 0
      %v1753 = vsel %vm301, %v1703, 0
      %v1756 = vsel %vm301, %v1704, 0
      %v1759 = vsel %vm301, %v1705, 0
      %v1762 = vsel %vm301, %v1706, 0
      %v1765 = vsel %vm301, %v1707, 0
      %v1768 = vsel %vm301, %v1708, 0
      %v1771 = vsel %vm301, %v1709, 0
      %v1774 = vsel %vm301, %v1710, 0
      %v1777 = vsel %vm301, %v1711, 0
      %v1780 = vsel %vm301, %v1712, 0
      %v1783 = vsel %vm301, %v1713, 0
      %1785 = vmatpush.bf16.msra.mxu0 0
      %1786 = vmatpush.bf16.msra.mxu0 0
      %1787 = vmatpush.bf16.msra.mxu0 0
      %1788 = vmatpush.bf16.msra.mxu0 0
      %1789 = vmatpush.bf16.msra.mxu0 0
      %1790 = vmatpush.bf16.msra.mxu0 0
      %1791 = vmatpush.bf16.msra.mxu0 %v1728
      %1792 = vmatpush.bf16.msra.mxu0 %v1727
      %1793 = vmatmul.bf16.gmra.mxu0 %v1732
      %v1794 = vpop.f32.mrf.mxu0
      %v1795 = vadd.f32 0.0, %v1794
      %v1796 = vpop.f32.mrf.mxu0
      %v1797 = vadd.f32 0.0, %v1796
      %1798 = vmatmul.bf16.gmra.mxu0 %v1735
      %v1799 = vpop.f32.mrf.mxu0
      %v1800 = vadd.f32 0.0, %v1799
      %v1801 = vpop.f32.mrf.mxu0
      %v1802 = vadd.f32 0.0, %v1801
      %1803 = vmatmul.bf16.gmra.mxu0 %v1738
      %v1804 = vpop.f32.mrf.mxu0
      %v1805 = vadd.f32 0.0, %v1804
      %v1806 = vpop.f32.mrf.mxu0
      %v1807 = vadd.f32 0.0, %v1806
      %1808 = vmatmul.bf16.gmra.mxu0 %v1741
      %v1809 = vpop.f32.mrf.mxu0
      %v1810 = vadd.f32 0.0, %v1809
      %v1811 = vpop.f32.mrf.mxu0
      %v1812 = vadd.f32 0.0, %v1811
      %1813 = vmatmul.bf16.gmra.mxu0 %v1744
      %v1814 = vpop.f32.mrf.mxu0
      %v1815 = vadd.f32 0.0, %v1814
      %v1816 = vpop.f32.mrf.mxu0
      %v1817 = vadd.f32 0.0, %v1816
      %1818 = vmatmul.bf16.gmra.mxu0 %v1747
      %v1819 = vpop.f32.mrf.mxu0
      %v1820 = vadd.f32 0.0, %v1819
      %v1821 = vpop.f32.mrf.mxu0
      %v1822 = vadd.f32 0.0, %v1821
      %1823 = vmatmul.bf16.gmra.mxu0 %v1750
      %v1824 = vpop.f32.mrf.mxu0
      %v1825 = vadd.f32 0.0, %v1824
      %v1826 = vpop.f32.mrf.mxu0
      %v1827 = vadd.f32 0.0, %v1826
      %1828 = vmatmul.bf16.gmra.mxu0 %v1753
      %v1829 = vpop.f32.mrf.mxu0
      %v1830 = vadd.f32 0.0, %v1829
      %v1831 = vpop.f32.mrf.mxu0
      %v1832 = vadd.f32 0.0, %v1831
      %1833 = vmatmul.bf16.gmra.mxu0 %v1756
      %v1834 = vpop.f32.mrf.mxu0
      %v1835 = vadd.f32 0.0, %v1834
      %v1836 = vpop.f32.mrf.mxu0
      %v1837 = vadd.f32 0.0, %v1836
      %1838 = vmatmul.bf16.gmra.mxu0 %v1759
      %v1839 = vpop.f32.mrf.mxu0
      %v1840 = vadd.f32 0.0, %v1839
      %v1841 = vpop.f32.mrf.mxu0
      %v1842 = vadd.f32 0.0, %v1841
      %1843 = vmatmul.bf16.gmra.mxu0 %v1762
      %v1844 = vpop.f32.mrf.mxu0
      %v1845 = vadd.f32 0.0, %v1844
      %v1846 = vpop.f32.mrf.mxu0
      %v1847 = vadd.f32 0.0, %v1846
      %1848 = vmatmul.bf16.gmra.mxu0 %v1765
      %v1849 = vpop.f32.mrf.mxu0
      %v1850 = vadd.f32 0.0, %v1849
      %v1851 = vpop.f32.mrf.mxu0
      %v1852 = vadd.f32 0.0, %v1851
      %1853 = vmatmul.bf16.gmra.mxu0 %v1768
      %v1854 = vpop.f32.mrf.mxu0
      %v1855 = vadd.f32 0.0, %v1854
      %v1856 = vpop.f32.mrf.mxu0
      %v1857 = vadd.f32 0.0, %v1856
      %1858 = vmatmul.bf16.gmra.mxu0 %v1771
      %v1859 = vpop.f32.mrf.mxu0
      %v1860 = vadd.f32 0.0, %v1859
      %v1861 = vpop.f32.mrf.mxu0
      %v1862 = vadd.f32 0.0, %v1861
      %1863 = vmatmul.bf16.gmra.mxu0 %v1774
      %v1864 = vpop.f32.mrf.mxu0
      %v1865 = vadd.f32 0.0, %v1864
      %v1866 = vpop.f32.mrf.mxu0
      %v1867 = vadd.f32 0.0, %v1866
      %1868 = vmatmul.bf16.gmra.mxu0 %v1777
      %v1869 = vpop.f32.mrf.mxu0
      %v1870 = vadd.f32 0.0, %v1869
      %v1871 = vpop.f32.mrf.mxu0
      %v1872 = vadd.f32 0.0, %v1871
      %1873 = vmatmul.bf16.gmra.mxu0 %v1780
      %v1874 = vpop.f32.mrf.mxu0
      %v1875 = vadd.f32 0.0, %v1874
      %v1876 = vpop.f32.mrf.mxu0
      %v1877 = vadd.f32 0.0, %v1876
      %1878 = vmatmul.bf16.gmra.mxu0 %v1783
      %v1879 = vpop.f32.mrf.mxu0
      %v1880 = vadd.f32 0.0, %v1879
      %v1881 = vpop.f32.mrf.mxu0
      %v1882 = vadd.f32 0.0, %v1881
      %1883 = vdwg.mxu0
      %v1884 = vadd.f32 %v1624, %v1795
      %v1885 = vadd.f32 %v1625, %v1797
      %v1886 = vadd.f32 %v1626, %v1800
      %v1887 = vadd.f32 %v1627, %v1802
      %v1888 = vadd.f32 %v1628, %v1805
      %v1889 = vadd.f32 %v1629, %v1807
      %v1890 = vadd.f32 %v1630, %v1810
      %v1891 = vadd.f32 %v1631, %v1812
      %v1892 = vadd.f32 %v1632, %v1815
      %v1893 = vadd.f32 %v1633, %v1817
      %v1894 = vadd.f32 %v1634, %v1820
      %v1895 = vadd.f32 %v1635, %v1822
      %v1896 = vadd.f32 %v1636, %v1825
      %v1897 = vadd.f32 %v1637, %v1827
      %v1898 = vadd.f32 %v1638, %v1830
      %v1899 = vadd.f32 %v1639, %v1832
      %v1900 = vadd.f32 %v1640, %v1835
      %v1901 = vadd.f32 %v1641, %v1837
      %v1902 = vadd.f32 %v1642, %v1840
      %v1903 = vadd.f32 %v1643, %v1842
      %v1904 = vadd.f32 %v1644, %v1845
      %v1905 = vadd.f32 %v1645, %v1847
      %v1906 = vadd.f32 %v1646, %v1850
      %v1907 = vadd.f32 %v1647, %v1852
      %v1908 = vadd.f32 %v1648, %v1855
      %v1909 = vadd.f32 %v1649, %v1857
      %v1910 = vadd.f32 %v1650, %v1860
      %v1911 = vadd.f32 %v1651, %v1862
      %v1912 = vadd.f32 %v1652, %v1865
      %v1913 = vadd.f32 %v1653, %v1867
      %v1914 = vadd.f32 %v1654, %v1870
      %v1915 = vadd.f32 %v1655, %v1872
      %v1916 = vadd.f32 %v1656, %v1875
      %v1917 = vadd.f32 %v1657, %v1877
      %v1918 = vadd.f32 %v1658, %v1880
      %v1919 = vadd.f32 %v1659, %v1882
      %v1920 = vld [vmem:[%s165 + $0x25] sm:$0xff]
      %v1921 = vld [vmem:[%s165 + $0x2d] sm:$0xff]
      %v1922 = vld [vmem:[%s165 + $0x35] sm:$0xff]
      %v1923 = vld [vmem:[%s165 + $0x3d] sm:$0xff]
      %v1924 = vld [vmem:[%s165 + $0x45] sm:$0xff]
      %v1925 = vld [vmem:[%s165 + $0x4d] sm:$0xff]
      %v1926 = vld [vmem:[%s165 + $0x55] sm:$0xff]
      %v1927 = vld [vmem:[%s165 + $0x5d] sm:$0xff]
      %v1928 = vld [vmem:[%s165 + $0x65] sm:$0xff]
      %v1929 = vld [vmem:[%s165 + $0x6d] sm:$0xff]
      %v1930 = vld [vmem:[%s165 + $0x75] sm:$0xff]
      %v1931 = vld [vmem:[%s165 + $0x7d] sm:$0xff]
      %v1932 = vld [vmem:[%s165 + $0x85] sm:$0xff]
      %v1933 = vld [vmem:[%s165 + $0x8d] sm:$0xff]
      %v1934 = vld [vmem:[%s165 + $0x95] sm:$0xff]
      %v1935 = vld [vmem:[%s165 + $0x9d] sm:$0xff]
      %v1936 = vld [vmem:[%s165 + $0xa5] sm:$0xff]
      %v1937 = vld [vmem:[%s165 + $0xad] sm:$0xff]
      %v1938 = vld [vmem:[%s165 + $0xb5] sm:$0xff]
      %v1939 = vld [vmem:[%s165 + $0xbd] sm:$0xff]
      %v1940 = vld [vmem:[%s165 + $0xc5] sm:$0xff]
      %v1941 = vld [vmem:[%s165 + $0xcd] sm:$0xff]
      %v1942 = vld [vmem:[%s165 + $0xd5] sm:$0xff]
      %v1943 = vld [vmem:[%s165 + $0xdd] sm:$0xff]
      %v1944 = vld [vmem:[%s165 + $0xe5] sm:$0xff]
      %v1945 = vld [vmem:[%s165 + $0xed] sm:$0xff]
      %v1946 = vld [vmem:[%s165 + $0xf5] sm:$0xff]
      %v1947 = vld [vmem:[%s165 + $0xfd] sm:$0xff]
      %v1948 = vld [vmem:[%s165 + $0x105] sm:$0xff]
      %v1949 = vld [vmem:[%s165 + $0x10d] sm:$0xff]
      %v1950 = vld [vmem:[%s165 + $0x115] sm:$0xff]
      %v1951 = vld [vmem:[%s165 + $0x11d] sm:$0xff]
      %v1952 = vld [vmem:[%s165 + $0x125] sm:$0xff]
      %v1953 = vld [vmem:[%s165 + $0x12d] sm:$0xff]
      %v1954 = vld [vmem:[%s165 + $0x135] sm:$0xff]
      %v1955 = vld [vmem:[%s165 + $0x13d] sm:$0xff]
      %v1956 = vpack.c.bf16 %v1921, %v1920
      %v1957 = vpack.c.bf16 %v1923, %v1922
      %v1958 = vpack.c.bf16 %v1925, %v1924
      %v1959 = vpack.c.bf16 %v1927, %v1926
      %v1960 = vpack.c.bf16 %v1929, %v1928
      %v1961 = vpack.c.bf16 %v1931, %v1930
      %v1962 = vpack.c.bf16 %v1933, %v1932
      %v1963 = vpack.c.bf16 %v1935, %v1934
      %v1964 = vpack.c.bf16 %v1937, %v1936
      %v1965 = vpack.c.bf16 %v1939, %v1938
      %v1966 = vpack.c.bf16 %v1941, %v1940
      %v1967 = vpack.c.bf16 %v1943, %v1942
      %v1968 = vpack.c.bf16 %v1945, %v1944
      %v1969 = vpack.c.bf16 %v1947, %v1946
      %v1970 = vpack.c.bf16 %v1949, %v1948
      %v1971 = vpack.c.bf16 %v1951, %v1950
      %v1972 = vpack.c.bf16 %v1953, %v1952
      %v1973 = vpack.c.bf16 %v1955, %v1954
      %s1974 = scalar_lea.vmem %s1, 112
      %v1975 = vld [vmem:[%s1974] sm:$0xf]
      %v1976 = vld [vmem:[%s1974 + $0x4] sm:$0xf]
      %v1977 = vld [vmem:[%s1974 + $0x8] sm:$0xf]
      %v1978 = vld [vmem:[%s1974 + $0xc] sm:$0xf]
      %v1983 = vunpack.c.l.b16 %v1975
      %v1984 = vunpack.c.l.b16 %v1976
      %v1985 = vunpack.c.l.b16 %v1977
      %v1986 = vunpack.c.l.b16 %v1978
      %v1987 = vpack.c.b16 %v1984, %v1983
      %v1988 = vpack.c.b16 %v1986, %v1985
      %v1992 = vsel %vm301, %v1956, 0
      %v1995 = vsel %vm301, %v1957, 0
      %v1998 = vsel %vm301, %v1958, 0
      %v2001 = vsel %vm301, %v1959, 0
      %v2004 = vsel %vm301, %v1960, 0
      %v2007 = vsel %vm301, %v1961, 0
      %v2010 = vsel %vm301, %v1962, 0
      %v2013 = vsel %vm301, %v1963, 0
      %v2016 = vsel %vm301, %v1964, 0
      %v2019 = vsel %vm301, %v1965, 0
      %v2022 = vsel %vm301, %v1966, 0
      %v2025 = vsel %vm301, %v1967, 0
      %v2028 = vsel %vm301, %v1968, 0
      %v2031 = vsel %vm301, %v1969, 0
      %v2034 = vsel %vm301, %v1970, 0
      %v2037 = vsel %vm301, %v1971, 0
      %v2040 = vsel %vm301, %v1972, 0
      %v2043 = vsel %vm301, %v1973, 0
      %2045 = vmatpush.bf16.msra.mxu0 0
      %2046 = vmatpush.bf16.msra.mxu0 0
      %2047 = vmatpush.bf16.msra.mxu0 0
      %2048 = vmatpush.bf16.msra.mxu0 0
      %2049 = vmatpush.bf16.msra.mxu0 0
      %2050 = vmatpush.bf16.msra.mxu0 0
      %2051 = vmatpush.bf16.msra.mxu0 %v1988
      %2052 = vmatpush.bf16.msra.mxu0 %v1987
      %2053 = vmatmul.bf16.gmra.mxu0 %v1992
      %v2054 = vpop.f32.mrf.mxu0
      %v2055 = vadd.f32 0.0, %v2054
      %v2056 = vpop.f32.mrf.mxu0
      %v2057 = vadd.f32 0.0, %v2056
      %2058 = vmatmul.bf16.gmra.mxu0 %v1995
      %v2059 = vpop.f32.mrf.mxu0
      %v2060 = vadd.f32 0.0, %v2059
      %v2061 = vpop.f32.mrf.mxu0
      %v2062 = vadd.f32 0.0, %v2061
      %2063 = vmatmul.bf16.gmra.mxu0 %v1998
      %v2064 = vpop.f32.mrf.mxu0
      %v2065 = vadd.f32 0.0, %v2064
      %v2066 = vpop.f32.mrf.mxu0
      %v2067 = vadd.f32 0.0, %v2066
      %2068 = vmatmul.bf16.gmra.mxu0 %v2001
      %v2069 = vpop.f32.mrf.mxu0
      %v2070 = vadd.f32 0.0, %v2069
      %v2071 = vpop.f32.mrf.mxu0
      %v2072 = vadd.f32 0.0, %v2071
      %2073 = vmatmul.bf16.gmra.mxu0 %v2004
      %v2074 = vpop.f32.mrf.mxu0
      %v2075 = vadd.f32 0.0, %v2074
      %v2076 = vpop.f32.mrf.mxu0
      %v2077 = vadd.f32 0.0, %v2076
      %2078 = vmatmul.bf16.gmra.mxu0 %v2007
      %v2079 = vpop.f32.mrf.mxu0
      %v2080 = vadd.f32 0.0, %v2079
      %v2081 = vpop.f32.mrf.mxu0
      %v2082 = vadd.f32 0.0, %v2081
      %2083 = vmatmul.bf16.gmra.mxu0 %v2010
      %v2084 = vpop.f32.mrf.mxu0
      %v2085 = vadd.f32 0.0, %v2084
      %v2086 = vpop.f32.mrf.mxu0
      %v2087 = vadd.f32 0.0, %v2086
      %2088 = vmatmul.bf16.gmra.mxu0 %v2013
      %v2089 = vpop.f32.mrf.mxu0
      %v2090 = vadd.f32 0.0, %v2089
      %v2091 = vpop.f32.mrf.mxu0
      %v2092 = vadd.f32 0.0, %v2091
      %2093 = vmatmul.bf16.gmra.mxu0 %v2016
      %v2094 = vpop.f32.mrf.mxu0
      %v2095 = vadd.f32 0.0, %v2094
      %v2096 = vpop.f32.mrf.mxu0
      %v2097 = vadd.f32 0.0, %v2096
      %2098 = vmatmul.bf16.gmra.mxu0 %v2019
      %v2099 = vpop.f32.mrf.mxu0
      %v2100 = vadd.f32 0.0, %v2099
      %v2101 = vpop.f32.mrf.mxu0
      %v2102 = vadd.f32 0.0, %v2101
      %2103 = vmatmul.bf16.gmra.mxu0 %v2022
      %v2104 = vpop.f32.mrf.mxu0
      %v2105 = vadd.f32 0.0, %v2104
      %v2106 = vpop.f32.mrf.mxu0
      %v2107 = vadd.f32 0.0, %v2106
      %2108 = vmatmul.bf16.gmra.mxu0 %v2025
      %v2109 = vpop.f32.mrf.mxu0
      %v2110 = vadd.f32 0.0, %v2109
      %v2111 = vpop.f32.mrf.mxu0
      %v2112 = vadd.f32 0.0, %v2111
      %2113 = vmatmul.bf16.gmra.mxu0 %v2028
      %v2114 = vpop.f32.mrf.mxu0
      %v2115 = vadd.f32 0.0, %v2114
      %v2116 = vpop.f32.mrf.mxu0
      %v2117 = vadd.f32 0.0, %v2116
      %2118 = vmatmul.bf16.gmra.mxu0 %v2031
      %v2119 = vpop.f32.mrf.mxu0
      %v2120 = vadd.f32 0.0, %v2119
      %v2121 = vpop.f32.mrf.mxu0
      %v2122 = vadd.f32 0.0, %v2121
      %2123 = vmatmul.bf16.gmra.mxu0 %v2034
      %v2124 = vpop.f32.mrf.mxu0
      %v2125 = vadd.f32 0.0, %v2124
      %v2126 = vpop.f32.mrf.mxu0
      %v2127 = vadd.f32 0.0, %v2126
      %2128 = vmatmul.bf16.gmra.mxu0 %v2037
      %v2129 = vpop.f32.mrf.mxu0
      %v2130 = vadd.f32 0.0, %v2129
      %v2131 = vpop.f32.mrf.mxu0
      %v2132 = vadd.f32 0.0, %v2131
      %2133 = vmatmul.bf16.gmra.mxu0 %v2040
      %v2134 = vpop.f32.mrf.mxu0
      %v2135 = vadd.f32 0.0, %v2134
      %v2136 = vpop.f32.mrf.mxu0
      %v2137 = vadd.f32 0.0, %v2136
      %2138 = vmatmul.bf16.gmra.mxu0 %v2043
      %v2139 = vpop.f32.mrf.mxu0
      %v2140 = vadd.f32 0.0, %v2139
      %v2141 = vpop.f32.mrf.mxu0
      %v2142 = vadd.f32 0.0, %v2141
      %2143 = vdwg.mxu0
      %v2144 = vadd.f32 %v1884, %v2055
      %v2145 = vadd.f32 %v1885, %v2057
      %v2146 = vadd.f32 %v1886, %v2060
      %v2147 = vadd.f32 %v1887, %v2062
      %v2148 = vadd.f32 %v1888, %v2065
      %v2149 = vadd.f32 %v1889, %v2067
      %v2150 = vadd.f32 %v1890, %v2070
      %v2151 = vadd.f32 %v1891, %v2072
      %v2152 = vadd.f32 %v1892, %v2075
      %v2153 = vadd.f32 %v1893, %v2077
      %v2154 = vadd.f32 %v1894, %v2080
      %v2155 = vadd.f32 %v1895, %v2082
      %v2156 = vadd.f32 %v1896, %v2085
      %v2157 = vadd.f32 %v1897, %v2087
      %v2158 = vadd.f32 %v1898, %v2090
      %v2159 = vadd.f32 %v1899, %v2092
      %v2160 = vadd.f32 %v1900, %v2095
      %v2161 = vadd.f32 %v1901, %v2097
      %v2162 = vadd.f32 %v1902, %v2100
      %v2163 = vadd.f32 %v1903, %v2102
      %v2164 = vadd.f32 %v1904, %v2105
      %v2165 = vadd.f32 %v1905, %v2107
      %v2166 = vadd.f32 %v1906, %v2110
      %v2167 = vadd.f32 %v1907, %v2112
      %v2168 = vadd.f32 %v1908, %v2115
      %v2169 = vadd.f32 %v1909, %v2117
      %v2170 = vadd.f32 %v1910, %v2120
      %v2171 = vadd.f32 %v1911, %v2122
      %v2172 = vadd.f32 %v1912, %v2125
      %v2173 = vadd.f32 %v1913, %v2127
      %v2174 = vadd.f32 %v1914, %v2130
      %v2175 = vadd.f32 %v1915, %v2132
      %v2176 = vadd.f32 %v1916, %v2135
      %v2177 = vadd.f32 %v1917, %v2137
      %v2178 = vadd.f32 %v1918, %v2140
      %v2179 = vadd.f32 %v1919, %v2142
      %v2180 = vld [vmem:[%s165 + $0x26] sm:$0xff]
      %v2181 = vld [vmem:[%s165 + $0x2e] sm:$0xff]
      %v2182 = vld [vmem:[%s165 + $0x36] sm:$0xff]
      %v2183 = vld [vmem:[%s165 + $0x3e] sm:$0xff]
      %v2184 = vld [vmem:[%s165 + $0x46] sm:$0xff]
      %v2185 = vld [vmem:[%s165 + $0x4e] sm:$0xff]
      %v2186 = vld [vmem:[%s165 + $0x56] sm:$0xff]
      %v2187 = vld [vmem:[%s165 + $0x5e] sm:$0xff]
      %v2188 = vld [vmem:[%s165 + $0x66] sm:$0xff]
      %v2189 = vld [vmem:[%s165 + $0x6e] sm:$0xff]
      %v2190 = vld [vmem:[%s165 + $0x76] sm:$0xff]
      %v2191 = vld [vmem:[%s165 + $0x7e] sm:$0xff]
      %v2192 = vld [vmem:[%s165 + $0x86] sm:$0xff]
      %v2193 = vld [vmem:[%s165 + $0x8e] sm:$0xff]
      %v2194 = vld [vmem:[%s165 + $0x96] sm:$0xff]
      %v2195 = vld [vmem:[%s165 + $0x9e] sm:$0xff]
      %v2196 = vld [vmem:[%s165 + $0xa6] sm:$0xff]
      %v2197 = vld [vmem:[%s165 + $0xae] sm:$0xff]
      %v2198 = vld [vmem:[%s165 + $0xb6] sm:$0xff]
      %v2199 = vld [vmem:[%s165 + $0xbe] sm:$0xff]
      %v2200 = vld [vmem:[%s165 + $0xc6] sm:$0xff]
      %v2201 = vld [vmem:[%s165 + $0xce] sm:$0xff]
      %v2202 = vld [vmem:[%s165 + $0xd6] sm:$0xff]
      %v2203 = vld [vmem:[%s165 + $0xde] sm:$0xff]
      %v2204 = vld [vmem:[%s165 + $0xe6] sm:$0xff]
      %v2205 = vld [vmem:[%s165 + $0xee] sm:$0xff]
      %v2206 = vld [vmem:[%s165 + $0xf6] sm:$0xff]
      %v2207 = vld [vmem:[%s165 + $0xfe] sm:$0xff]
      %v2208 = vld [vmem:[%s165 + $0x106] sm:$0xff]
      %v2209 = vld [vmem:[%s165 + $0x10e] sm:$0xff]
      %v2210 = vld [vmem:[%s165 + $0x116] sm:$0xff]
      %v2211 = vld [vmem:[%s165 + $0x11e] sm:$0xff]
      %v2212 = vld [vmem:[%s165 + $0x126] sm:$0xff]
      %v2213 = vld [vmem:[%s165 + $0x12e] sm:$0xff]
      %v2214 = vld [vmem:[%s165 + $0x136] sm:$0xff]
      %v2215 = vld [vmem:[%s165 + $0x13e] sm:$0xff]
      %v2216 = vpack.c.bf16 %v2181, %v2180
      %v2217 = vpack.c.bf16 %v2183, %v2182
      %v2218 = vpack.c.bf16 %v2185, %v2184
      %v2219 = vpack.c.bf16 %v2187, %v2186
      %v2220 = vpack.c.bf16 %v2189, %v2188
      %v2221 = vpack.c.bf16 %v2191, %v2190
      %v2222 = vpack.c.bf16 %v2193, %v2192
      %v2223 = vpack.c.bf16 %v2195, %v2194
      %v2224 = vpack.c.bf16 %v2197, %v2196
      %v2225 = vpack.c.bf16 %v2199, %v2198
      %v2226 = vpack.c.bf16 %v2201, %v2200
      %v2227 = vpack.c.bf16 %v2203, %v2202
      %v2228 = vpack.c.bf16 %v2205, %v2204
      %v2229 = vpack.c.bf16 %v2207, %v2206
      %v2230 = vpack.c.bf16 %v2209, %v2208
      %v2231 = vpack.c.bf16 %v2211, %v2210
      %v2232 = vpack.c.bf16 %v2213, %v2212
      %v2233 = vpack.c.bf16 %v2215, %v2214
      %s2234 = scalar_lea.vmem %s1, 128
      %v2235 = vld [vmem:[%s2234] sm:$0xf]
      %v2236 = vld [vmem:[%s2234 + $0x4] sm:$0xf]
      %v2237 = vld [vmem:[%s2234 + $0x8] sm:$0xf]
      %v2238 = vld [vmem:[%s2234 + $0xc] sm:$0xf]
      %v2243 = vunpack.c.l.b16 %v2235
      %v2244 = vunpack.c.l.b16 %v2236
      %v2245 = vunpack.c.l.b16 %v2237
      %v2246 = vunpack.c.l.b16 %v2238
      %v2247 = vpack.c.b16 %v2244, %v2243
      %v2248 = vpack.c.b16 %v2246, %v2245
      %v2252 = vsel %vm301, %v2216, 0
      %v2255 = vsel %vm301, %v2217, 0
      %v2258 = vsel %vm301, %v2218, 0
      %v2261 = vsel %vm301, %v2219, 0
      %v2264 = vsel %vm301, %v2220, 0
      %v2267 = vsel %vm301, %v2221, 0
      %v2270 = vsel %vm301, %v2222, 0
      %v2273 = vsel %vm301, %v2223, 0
      %v2276 = vsel %vm301, %v2224, 0
      %v2279 = vsel %vm301, %v2225, 0
      %v2282 = vsel %vm301, %v2226, 0
      %v2285 = vsel %vm301, %v2227, 0
      %v2288 = vsel %vm301, %v2228, 0
      %v2291 = vsel %vm301, %v2229, 0
      %v2294 = vsel %vm301, %v2230, 0
      %v2297 = vsel %vm301, %v2231, 0
      %v2300 = vsel %vm301, %v2232, 0
      %v2303 = vsel %vm301, %v2233, 0
      %2305 = vmatpush.bf16.msra.mxu0 0
      %2306 = vmatpush.bf16.msra.mxu0 0
      %2307 = vmatpush.bf16.msra.mxu0 0
      %2308 = vmatpush.bf16.msra.mxu0 0
      %2309 = vmatpush.bf16.msra.mxu0 0
      %2310 = vmatpush.bf16.msra.mxu0 0
      %2311 = vmatpush.bf16.msra.mxu0 %v2248
      %2312 = vmatpush.bf16.msra.mxu0 %v2247
      %2313 = vmatmul.bf16.gmra.mxu0 %v2252
      %v2314 = vpop.f32.mrf.mxu0
      %v2315 = vadd.f32 0.0, %v2314
      %v2316 = vpop.f32.mrf.mxu0
      %v2317 = vadd.f32 0.0, %v2316
      %2318 = vmatmul.bf16.gmra.mxu0 %v2255
      %v2319 = vpop.f32.mrf.mxu0
      %v2320 = vadd.f32 0.0, %v2319
      %v2321 = vpop.f32.mrf.mxu0
      %v2322 = vadd.f32 0.0, %v2321
      %2323 = vmatmul.bf16.gmra.mxu0 %v2258
      %v2324 = vpop.f32.mrf.mxu0
      %v2325 = vadd.f32 0.0, %v2324
      %v2326 = vpop.f32.mrf.mxu0
      %v2327 = vadd.f32 0.0, %v2326
      %2328 = vmatmul.bf16.gmra.mxu0 %v2261
      %v2329 = vpop.f32.mrf.mxu0
      %v2330 = vadd.f32 0.0, %v2329
      %v2331 = vpop.f32.mrf.mxu0
      %v2332 = vadd.f32 0.0, %v2331
      %2333 = vmatmul.bf16.gmra.mxu0 %v2264
      %v2334 = vpop.f32.mrf.mxu0
      %v2335 = vadd.f32 0.0, %v2334
      %v2336 = vpop.f32.mrf.mxu0
      %v2337 = vadd.f32 0.0, %v2336
      %2338 = vmatmul.bf16.gmra.mxu0 %v2267
      %v2339 = vpop.f32.mrf.mxu0
      %v2340 = vadd.f32 0.0, %v2339
      %v2341 = vpop.f32.mrf.mxu0
      %v2342 = vadd.f32 0.0, %v2341
      %2343 = vmatmul.bf16.gmra.mxu0 %v2270
      %v2344 = vpop.f32.mrf.mxu0
      %v2345 = vadd.f32 0.0, %v2344
      %v2346 = vpop.f32.mrf.mxu0
      %v2347 = vadd.f32 0.0, %v2346
      %2348 = vmatmul.bf16.gmra.mxu0 %v2273
      %v2349 = vpop.f32.mrf.mxu0
      %v2350 = vadd.f32 0.0, %v2349
      %v2351 = vpop.f32.mrf.mxu0
      %v2352 = vadd.f32 0.0, %v2351
      %2353 = vmatmul.bf16.gmra.mxu0 %v2276
      %v2354 = vpop.f32.mrf.mxu0
      %v2355 = vadd.f32 0.0, %v2354
      %v2356 = vpop.f32.mrf.mxu0
      %v2357 = vadd.f32 0.0, %v2356
      %2358 = vmatmul.bf16.gmra.mxu0 %v2279
      %v2359 = vpop.f32.mrf.mxu0
      %v2360 = vadd.f32 0.0, %v2359
      %v2361 = vpop.f32.mrf.mxu0
      %v2362 = vadd.f32 0.0, %v2361
      %2363 = vmatmul.bf16.gmra.mxu0 %v2282
      %v2364 = vpop.f32.mrf.mxu0
      %v2365 = vadd.f32 0.0, %v2364
      %v2366 = vpop.f32.mrf.mxu0
      %v2367 = vadd.f32 0.0, %v2366
      %2368 = vmatmul.bf16.gmra.mxu0 %v2285
      %v2369 = vpop.f32.mrf.mxu0
      %v2370 = vadd.f32 0.0, %v2369
      %v2371 = vpop.f32.mrf.mxu0
      %v2372 = vadd.f32 0.0, %v2371
      %2373 = vmatmul.bf16.gmra.mxu0 %v2288
      %v2374 = vpop.f32.mrf.mxu0
      %v2375 = vadd.f32 0.0, %v2374
      %v2376 = vpop.f32.mrf.mxu0
      %v2377 = vadd.f32 0.0, %v2376
      %2378 = vmatmul.bf16.gmra.mxu0 %v2291
      %v2379 = vpop.f32.mrf.mxu0
      %v2380 = vadd.f32 0.0, %v2379
      %v2381 = vpop.f32.mrf.mxu0
      %v2382 = vadd.f32 0.0, %v2381
      %2383 = vmatmul.bf16.gmra.mxu0 %v2294
      %v2384 = vpop.f32.mrf.mxu0
      %v2385 = vadd.f32 0.0, %v2384
      %v2386 = vpop.f32.mrf.mxu0
      %v2387 = vadd.f32 0.0, %v2386
      %2388 = vmatmul.bf16.gmra.mxu0 %v2297
      %v2389 = vpop.f32.mrf.mxu0
      %v2390 = vadd.f32 0.0, %v2389
      %v2391 = vpop.f32.mrf.mxu0
      %v2392 = vadd.f32 0.0, %v2391
      %2393 = vmatmul.bf16.gmra.mxu0 %v2300
      %v2394 = vpop.f32.mrf.mxu0
      %v2395 = vadd.f32 0.0, %v2394
      %v2396 = vpop.f32.mrf.mxu0
      %v2397 = vadd.f32 0.0, %v2396
      %2398 = vmatmul.bf16.gmra.mxu0 %v2303
      %v2399 = vpop.f32.mrf.mxu0
      %v2400 = vadd.f32 0.0, %v2399
      %v2401 = vpop.f32.mrf.mxu0
      %v2402 = vadd.f32 0.0, %v2401
      %2403 = vdwg.mxu0
      %v2404 = vadd.f32 %v2144, %v2315
      %v2405 = vadd.f32 %v2145, %v2317
      %v2406 = vadd.f32 %v2146, %v2320
      %v2407 = vadd.f32 %v2147, %v2322
      %v2408 = vadd.f32 %v2148, %v2325
      %v2409 = vadd.f32 %v2149, %v2327
      %v2410 = vadd.f32 %v2150, %v2330
      %v2411 = vadd.f32 %v2151, %v2332
      %v2412 = vadd.f32 %v2152, %v2335
      %v2413 = vadd.f32 %v2153, %v2337
      %v2414 = vadd.f32 %v2154, %v2340
      %v2415 = vadd.f32 %v2155, %v2342
      %v2416 = vadd.f32 %v2156, %v2345
      %v2417 = vadd.f32 %v2157, %v2347
      %v2418 = vadd.f32 %v2158, %v2350
      %v2419 = vadd.f32 %v2159, %v2352
      %v2420 = vadd.f32 %v2160, %v2355
      %v2421 = vadd.f32 %v2161, %v2357
      %v2422 = vadd.f32 %v2162, %v2360
      %v2423 = vadd.f32 %v2163, %v2362
      %v2424 = vadd.f32 %v2164, %v2365
      %v2425 = vadd.f32 %v2165, %v2367
      %v2426 = vadd.f32 %v2166, %v2370
      %v2427 = vadd.f32 %v2167, %v2372
      %v2428 = vadd.f32 %v2168, %v2375
      %v2429 = vadd.f32 %v2169, %v2377
      %v2430 = vadd.f32 %v2170, %v2380
      %v2431 = vadd.f32 %v2171, %v2382
      %v2432 = vadd.f32 %v2172, %v2385
      %v2433 = vadd.f32 %v2173, %v2387
      %v2434 = vadd.f32 %v2174, %v2390
      %v2435 = vadd.f32 %v2175, %v2392
      %v2436 = vadd.f32 %v2176, %v2395
      %v2437 = vadd.f32 %v2177, %v2397
      %v2438 = vadd.f32 %v2178, %v2400
      %v2439 = vadd.f32 %v2179, %v2402
      %v2440 = vld [vmem:[%s2] sm:$0x1]
      %v2442 = vperm.slane %v2440, 0
      %v2444 = vadd.f32 %v2404, %v2442
      %v2445 = vadd.f32 %v2405, %v2442
      %v2446 = vadd.f32 %v2406, %v2442
      %v2447 = vadd.f32 %v2407, %v2442
      %v2448 = vadd.f32 %v2408, %v2442
      %v2449 = vadd.f32 %v2409, %v2442
      %v2450 = vadd.f32 %v2410, %v2442
      %v2451 = vadd.f32 %v2411, %v2442
      %v2452 = vadd.f32 %v2412, %v2442
      %v2453 = vadd.f32 %v2413, %v2442
      %v2454 = vadd.f32 %v2414, %v2442
      %v2455 = vadd.f32 %v2415, %v2442
      %v2456 = vadd.f32 %v2416, %v2442
      %v2457 = vadd.f32 %v2417, %v2442
      %v2458 = vadd.f32 %v2418, %v2442
      %v2459 = vadd.f32 %v2419, %v2442
      %v2460 = vadd.f32 %v2420, %v2442
      %v2461 = vadd.f32 %v2421, %v2442
      %v2462 = vadd.f32 %v2422, %v2442
      %v2463 = vadd.f32 %v2423, %v2442
      %v2464 = vadd.f32 %v2424, %v2442
      %v2465 = vadd.f32 %v2425, %v2442
      %v2466 = vadd.f32 %v2426, %v2442
      %v2467 = vadd.f32 %v2427, %v2442
      %v2468 = vadd.f32 %v2428, %v2442
      %v2469 = vadd.f32 %v2429, %v2442
      %v2470 = vadd.f32 %v2430, %v2442
      %v2471 = vadd.f32 %v2431, %v2442
      %v2472 = vadd.f32 %v2432, %v2442
      %v2473 = vadd.f32 %v2433, %v2442
      %v2474 = vadd.f32 %v2434, %v2442
      %v2475 = vadd.f32 %v2435, %v2442
      %v2476 = vadd.f32 %v2436, %v2442
      %v2477 = vadd.f32 %v2437, %v2442
      %v2478 = vadd.f32 %v2438, %v2442
      %v2479 = vadd.f32 %v2439, %v2442
      %vm2480 = vcmask 31744
      %2481 = vst.msk [vmem:[%s170] sm:$0xff] %vm2480, %v2444
      %2482 = vst.msk [vmem:[%s170 + $0x8] sm:$0xff] %vm2480, %v2445
      %s2483 = scalar_lea.vmem %s170, 16
      %vm2484 = vcmask 31746
      %2485 = vst.msk [vmem:[%s2483 - $0x2] sm:$0xfc] %vm2484, %v2446
      %2486 = vst.msk [vmem:[%s2483 + $0x6] sm:$0xff] %vm2480, %v2447
      %vm2487 = vcmask 25600
      %2488 = vst.msk [vmem:[%s2483 + $0xe] sm:$0x3] %vm2487, %v2448
      %s2489 = scalar_lea.vmem %s170, 32
      %vm2490 = vcmask 31748
      %2491 = vst.msk [vmem:[%s2489 - $0x4] sm:$0xf0] %vm2490, %v2448
      %2492 = vst.msk [vmem:[%s2489 + $0x4] sm:$0xff] %vm2480, %v2449
      %vm2493 = vcmask 27648
      %2494 = vst.msk [vmem:[%s2489 + $0xc] sm:$0xf] %vm2493, %v2450
      %s2495 = scalar_lea.vmem %s170, 48
      %vm2496 = vcmask 31750
      %2497 = vst.msk [vmem:[%s2495 - $0x6] sm:$0xc0] %vm2496, %v2450
      %2498 = vst.msk [vmem:[%s2495 + $0x2] sm:$0xff] %vm2480, %v2451
      %vm2499 = vcmask 29696
      %2500 = vst.msk [vmem:[%s2495 + $0xa] sm:$0x3f] %vm2499, %v2452
      %s2501 = scalar_lea.vmem %s170, 64
      %2502 = vst.msk [vmem:[%s2501] sm:$0xff] %vm2480, %v2453
      %2503 = vst.msk [vmem:[%s2501 + $0x8] sm:$0xff] %vm2480, %v2454
      %s2504 = scalar_lea.vmem %s170, 80
      %2505 = vst.msk [vmem:[%s2504 - $0x2] sm:$0xfc] %vm2484, %v2455
      %2506 = vst.msk [vmem:[%s2504 + $0x6] sm:$0xff] %vm2480, %v2456
      %2507 = vst.msk [vmem:[%s2504 + $0xe] sm:$0x3] %vm2487, %v2457
      %s2508 = scalar_lea.vmem %s170, 96
      %2509 = vst.msk [vmem:[%s2508 - $0x4] sm:$0xf0] %vm2490, %v2457
      %2510 = vst.msk [vmem:[%s2508 + $0x4] sm:$0xff] %vm2480, %v2458
      %2511 = vst.msk [vmem:[%s2508 + $0xc] sm:$0xf] %vm2493, %v2459
      %s2512 = scalar_lea.vmem %s170, 112
      %2513 = vst.msk [vmem:[%s2512 - $0x6] sm:$0xc0] %vm2496, %v2459
      %2514 = vst.msk [vmem:[%s2512 + $0x2] sm:$0xff] %vm2480, %v2460
      %2515 = vst.msk [vmem:[%s2512 + $0xa] sm:$0x3f] %vm2499, %v2461
      %s2516 = scalar_lea.vmem %s170, 128
      %2517 = vst.msk [vmem:[%s2516] sm:$0xff] %vm2480, %v2462
      %2518 = vst.msk [vmem:[%s2516 + $0x8] sm:$0xff] %vm2480, %v2463
      %s2519 = scalar_lea.vmem %s170, 144
      %2520 = vst.msk [vmem:[%s2519 - $0x2] sm:$0xfc] %vm2484, %v2464
      %2521 = vst.msk [vmem:[%s2519 + $0x6] sm:$0xff] %vm2480, %v2465
      %2522 = vst.msk [vmem:[%s2519 + $0xe] sm:$0x3] %vm2487, %v2466
      %s2523 = scalar_lea.vmem %s170, 160
      %2524 = vst.msk [vmem:[%s2523 - $0x4] sm:$0xf0] %vm2490, %v2466
      %2525 = vst.msk [vmem:[%s2523 + $0x4] sm:$0xff] %vm2480, %v2467
      %2526 = vst.msk [vmem:[%s2523 + $0xc] sm:$0xf] %vm2493, %v2468
      %s2527 = scalar_lea.vmem %s170, 176
      %2528 = vst.msk [vmem:[%s2527 - $0x6] sm:$0xc0] %vm2496, %v2468
      %2529 = vst.msk [vmem:[%s2527 + $0x2] sm:$0xff] %vm2480, %v2469
      %2530 = vst.msk [vmem:[%s2527 + $0xa] sm:$0x3f] %vm2499, %v2470
      %s2531 = scalar_lea.vmem %s170, 192
      %2532 = vst.msk [vmem:[%s2531] sm:$0xff] %vm2480, %v2471
      %2533 = vst.msk [vmem:[%s2531 + $0x8] sm:$0xff] %vm2480, %v2472
      %s2534 = scalar_lea.vmem %s170, 208
      %2535 = vst.msk [vmem:[%s2534 - $0x2] sm:$0xfc] %vm2484, %v2473
      %2536 = vst.msk [vmem:[%s2534 + $0x6] sm:$0xff] %vm2480, %v2474
      %2537 = vst.msk [vmem:[%s2534 + $0xe] sm:$0x3] %vm2487, %v2475
      %s2538 = scalar_lea.vmem %s170, 224
      %2539 = vst.msk [vmem:[%s2538 - $0x4] sm:$0xf0] %vm2490, %v2475
      %2540 = vst.msk [vmem:[%s2538 + $0x4] sm:$0xff] %vm2480, %v2476
      %2541 = vst.msk [vmem:[%s2538 + $0xc] sm:$0xf] %vm2493, %v2477
      %s2542 = scalar_lea.vmem %s170, 240
      %2543 = vst.msk [vmem:[%s2542 - $0x6] sm:$0xc0] %vm2496, %v2477
      %2544 = vst.msk [vmem:[%s2542 + $0x2] sm:$0xff] %vm2480, %v2478
      %2545 = vst.msk [vmem:[%s2542 + $0xa] sm:$0x3f] %vm2499, %v2479
      %p2546 = scmp.lt.s32.totalorder %s14, 1
      %s2547 = scalar_select %p2546, %s14, 1
      %s2548 = smul.addr %s2547, 32
      %s2549 = smul.addr %s2548, 8
      %s2550 = scalar_lea.vmem %s3, %s2549
      // Predicated region
      $region33: #{vqvae_forward.22} parent=31 // pred_check
        %p2551 = pneg %p100
      $region34: #{vqvae_forward.22} parent=31 // pred_check_branch
        %2553 = sbr.rel (%p2551) target = $region36
      $region35: #{vqvae_forward.22} parent=31 // pred_region
        _
      $region36: #{vqvae_forward.22} parent=31 // pred_fallthru
        _
    $region32: #{vqvae_forward.22} parent=5 // pred_fallthru
      _
    %p2554 = scmp.le.s32.totalorder 2, %s9
    // Predicated region
    $region37: #{vqvae_forward.22} parent=5 // pred_check
      %p2555 = pneg %p2554
    $region38: #{vqvae_forward.22} parent=5 // pred_check_branch
      %2557 = sbr.rel (%p2555) target = $region40
    $region39: #{vqvae_forward.22} parent=5 // pred_region
      %s2558 = ssub.s32 %s9, 2
      // Predicated region
      $region41: #{vqvae_forward.22} parent=39 // pred_check
        %p2559 = pneg %p106
      $region42: #{vqvae_forward.22} parent=39 // pred_check_branch
        %2561 = sbr.rel (%p2559) target = $region44
      $region43: #{vqvae_forward.22} parent=39 // pred_region
        %p2562 = scmp.lt.s32.totalorder %s15, 1
        %s2563 = scalar_select %p2562, %s15, 1
        %s2564 = smul.addr %s2563, 32
        %s2565 = smul.addr %s2564, 8
        %s2566 = scalar_lea.vmem %s3, %s2565
      $region44: #{vqvae_forward.22} parent=39 // pred_fallthru
        _
    $region40: #{vqvae_forward.22} parent=5 // pred_fallthru
      _
  $region6: #{vqvae_forward.22} parent=0 // loop_footer
    %s13 = sadd.s32 1, %s9
  $region7: #{vqvae_forward.22} parent=0 // loop_footer_branch
    %8 = sbr.rel target = $region3
  $region8: #{vqvae_forward.22} parent=0 // loop_exit
    _

</llo_original>
